<compile_context>
chip_gen: v6e
topology: v6e:2x2x1
jax: 0.10.0
libtpu: 0.0.40
codegen_flags: <defaults>
</compile_context>

<pallas_src>
import jax
import jax.numpy as jnp
from jax import lax
from jax.experimental import pallas as pl
from jax.experimental.pallas import tpu as pltpu


# ----------------------------- fused Pallas kernel ---------------------------

def _make_sharc_kernel(num_conv):
    def kernel(*refs):
        x_ref, mask_ref, aff_row_ref, mask_row_ref = refs[:4]
        off = 4
        conv_refs = [refs[off + 6 * i: off + 6 * (i + 1)] for i in range(num_conv)]
        off += 6 * num_conv
        (w_src_ref, b_src_ref, w_dst_ref, b_dst_ref,
         a1_ref, w1_ref, b1_ref, a2_ref, w2t_ref, b2t_ref) = refs[off:off + 10]
        off += 10
        feat_ref, conn_ref, prob_ref, den_ref = refs[off:off + 4]

        n = x_ref.shape[0]
        mask = mask_ref[...]                      # [N, N]  (dst, src)
        edge = mask > 0.0

        # ---- num_conv x GraphConv: single-head GAT + ReLU(Linear([x | agg])) ----
        x = x_ref[...]
        for (wg_ref, asrc_ref, adst_ref, wx_ref, wagg_ref, b_ref) in conv_refs:
            h = jnp.dot(x, wg_ref[...], preferred_element_type=jnp.float32)        # [N, D]
            s_dst = jnp.dot(h, adst_ref[...], preferred_element_type=jnp.float32)  # [N, 1]
            s_src = lax.dot_general(asrc_ref[...], h, (((1,), (1,)), ((), ())),
                                    preferred_element_type=jnp.float32)            # [1, N]
            e = s_dst + s_src                                                      # [N, N]
            e = jnp.where(e > 0, e, 0.2 * e)                  # LeakyReLU(0.2)
            e = jnp.where(edge, e, jnp.float32(-1e30))        # mask non-edges
            # softmax over incoming edges; masked entries underflow to exactly 0
            # (every dst node has a self loop, so the denominator is >= 1).
            p = jnp.exp(e - jnp.max(e, axis=1, keepdims=True))
            inv_den = pl.reciprocal(jnp.sum(p, axis=1, keepdims=True), approx=True)
            agg = jnp.dot(p, h, preferred_element_type=jnp.float32) * inv_den      # [N, D]
            x = jnp.maximum(
                jnp.dot(x, wx_ref[...], preferred_element_type=jnp.float32)
                + jnp.dot(agg, wagg_ref[...], preferred_element_type=jnp.float32)
                + b_ref[...], 0.0)
        feat_ref[...] = x                                                          # [N, C]

        # ---- edge head: pred_conn = classifier(src_mlp(f_src) + dst_mlp(f_dst)) ----
        c = w_src_ref.shape[1]
        src_feat = (jnp.dot(x, w_src_ref[...], preferred_element_type=jnp.float32)
                    + b_src_ref[...])                                              # [N, C]
        dst_feat = (jnp.dot(x, w_dst_ref[...], preferred_element_type=jnp.float32)
                    + b_dst_ref[...])                                              # [N, C]
        # z[e = dst*N + src, :] = dst_feat[dst] + src_feat[src]  (no gather matrices)
        z = (dst_feat[:, None, :] + src_feat[None, :, :]).reshape(n * n, c)        # [E, C]
        a1 = a1_ref[...]
        z = jnp.where(z > 0, z, a1 * z)                                            # PReLU
        hmid = jnp.dot(z, w1_ref[...], preferred_element_type=jnp.float32) + b1_ref[...]
        a2 = a2_ref[...]
        hmid = jnp.where(hmid > 0, hmid, a2 * hmid)                                # PReLU
        # logits emitted class-major [2, E] (lane-dense stores); w2t is the
        # PyTorch Linear weight [2, C], so this is exactly hmid @ w2t.T + b2.
        conn_t = (lax.dot_general(w2t_ref[...], hmid, (((1,), (1,)), ((), ())),
                                  preferred_element_type=jnp.float32)
                  + b2t_ref[...])                                                  # [2, E]
        conn_ref[...] = conn_t

        # 2-class softmax in closed form: p1 = sigmoid(d) = 0.5*(1+tanh(d/2)),
        # p0 = 0.5*(1-tanh(d/2)), p1 - p0 = tanh(d/2)   (EUP, no cross-lane reduce)
        d = conn_t[1:2, :] - conn_t[0:1, :]                                        # [1, E]
        t = jnp.tanh(0.5 * d)
        prob_ref[0:1, :] = 0.5 * (1.0 - t)
        prob_ref[1:2, :] = 0.5 * (1.0 + t)

        # pred_den[dst] = mean over incoming edges of raw_affine * (p1 - p0).
        # Per-dst segmented sum of the flat edge row via an iota-built VMEM
        # selection matrix (built in-kernel: no HBM traffic, no host build).
        msg = aff_row_ref[...] * mask_row_ref[...] * t                             # [1, E]
        e_idx = lax.broadcasted_iota(jnp.int32, (n * n, n), 0)                     # edge id
        d_idx = lax.broadcasted_iota(jnp.int32, (n * n, n), 1)                     # dst id
        lo = d_idx * n
        sel = jnp.logical_and(e_idx >= lo, e_idx < lo + n).astype(jnp.float32)     # [E, N]
        den_sum = jnp.dot(msg, sel, preferred_element_type=jnp.float32)            # [1, N]
        deg = jnp.dot(mask_row_ref[...], sel, preferred_element_type=jnp.float32)  # [1, N]
        den_ref[...] = jnp.where(deg > 0, den_sum / jnp.maximum(deg, 1.0), 0.0)

    return kernel


# ------------------------------ wrapper --------------------------------------

_VMEM = pl.BlockSpec(memory_space=pltpu.MemorySpace.VMEM)


@jax.jit
def sharc_forward(features, cluster_features, affine, mask, convs, head):
    """SHARC forward (homogeneous-graph branch), dense edge representation."""
    n = features.shape[0]
    e = n * n
    # use_cluster_feat=True
    x0 = jnp.concatenate([features, cluster_features], axis=1)
    c_out = convs[-1]["w_x"].shape[1]

    args = [x0, mask, affine.reshape(1, e), mask.reshape(1, e)]
    for p in convs:
        args += [p["w_gat"], p["a_src"], p["a_dst"], p["w_x"], p["w_agg"], p["b"]]
    args += [head[k] for k in ("w_src", "b_src", "w_dst", "b_dst",
                               "a1", "w1", "b1", "a2", "w2t", "b2t")]

    out_shapes = (
        jax.ShapeDtypeStruct((n, c_out), jnp.float32),   # conv_features
        jax.ShapeDtypeStruct((2, e), jnp.float32),       # pred_conn  (class-major)
        jax.ShapeDtypeStruct((2, e), jnp.float32),       # prob_conn  (class-major)
        jax.ShapeDtypeStruct((1, n), jnp.float32),       # pred_den
    )
    feat, conn_t, prob_t, den = pl.pallas_call(
        _make_sharc_kernel(len(convs)),
        out_shape=out_shapes,
        in_specs=[_VMEM] * len(args),
        out_specs=(_VMEM, _VMEM, _VMEM, _VMEM),
    )(*args)

    # flat edge order e = dst * N + src; back to [dst, src, class] outside the kernel
    pred_conn = conn_t.reshape(2, n, n).transpose(1, 2, 0)
    prob_conn = prob_t.reshape(2, n, n).transpose(1, 2, 0)
    return feat, pred_conn, prob_conn, den.reshape(n)


# --------------------------- parameter init ---------------------------------

def init_params(key, feature_dim=32, nhid=32, num_conv=4):
    nhid_half = nhid // 2
    fdim = feature_dim * 2                      # use_cluster_feat=True
    in_dims = (fdim, nhid, nhid, nhid_half)
    out_dims = (nhid, nhid, nhid_half, nhid_half)
    keys = iter(jax.random.split(key, 64))

    def lin(k, fi, fo):
        return jax.random.normal(k, (fi, fo), jnp.float32) / jnp.sqrt(float(fi))

    convs = []
    for i in range(num_conv):
        din, dout = in_dims[i], out_dims[i]
        convs.append(dict(
            w_gat=lin(next(keys), din, din),
            a_src=jax.random.normal(next(keys), (1, din), jnp.float32) * 0.1,
            a_dst=jax.random.normal(next(keys), (din, 1), jnp.float32) * 0.1,
            w_x=lin(next(keys), din, dout),      # Linear weight acting on dst x
            w_agg=lin(next(keys), din, dout),    # Linear weight acting on aggregation
            b=jnp.zeros((1, dout), jnp.float32),
        ))
    c = nhid_half
    head = dict(
        w_src=lin(next(keys), c, c),
        b_src=jnp.zeros((1, c), jnp.float32),
        w_dst=lin(next(keys), c, c),
        b_dst=jnp.zeros((1, c), jnp.float32),
        a1=jnp.full((1, c), 0.25, jnp.float32),     # PReLU init
        w1=lin(next(keys), c, c),
        b1=jnp.zeros((1, c), jnp.float32),
        a2=jnp.full((1, c), 0.25, jnp.float32),
        w2t=jax.random.normal(next(keys), (2, c), jnp.float32) / jnp.sqrt(float(c)),
        b2t=jnp.zeros((2, 1), jnp.float32),
    )
    return convs, head


# ---------------------------------- main -------------------------------------

if __name__ == "__main__":
    key = jax.random.PRNGKey(0)
    k_feat, k_cf, k_adj, k_aff, k_params = jax.random.split(key, 5)

    N, feature_dim, nhid = 32, 32, 32
    features = jax.random.normal(k_feat, (N, feature_dim), jnp.float32)
    cluster_features = jax.random.normal(k_cf, (N, feature_dim), jnp.float32)
    mask = (jax.random.uniform(k_adj, (N, N)) < 0.3).astype(jnp.float32)
    mask = jnp.maximum(mask, jnp.eye(N, dtype=jnp.float32))   # self loops -> deg >= 1
    affine = jax.random.uniform(k_aff, (N, N), dtype=jnp.float32)

    convs, head = init_params(k_params, feature_dim, nhid)

    outs = sharc_forward(features, cluster_features, affine, mask, convs, head)
    conv_feats, pred_conn, prob_conn, pred_den = jax.block_until_ready(outs)

    assert conv_feats.shape == (N, nhid // 2)
    assert pred_conn.shape == (N, N, 2)
    assert prob_conn.shape == (N, N, 2)
    assert pred_den.shape == (N,)
    assert bool(jnp.all(jnp.isfinite(conv_feats)))
    assert bool(jnp.all(jnp.isfinite(pred_conn)))
    assert bool(jnp.all(jnp.isfinite(pred_den)))
    assert bool(jnp.allclose(jnp.sum(prob_conn, axis=-1), 1.0, atol=1e-5))
    print("KERNEL_OK")
</pallas_src>

<mosaic_0001>
module attributes {stable_mosaic.version = 11 : i64} {
  func.func @kernel(%arg0: memref<32x64xf32, #tpu.memory_space<vmem>>, %arg1: memref<32x32xf32, #tpu.memory_space<vmem>>, %arg2: memref<1x1024xf32, #tpu.memory_space<vmem>>, %arg3: memref<1x1024xf32, #tpu.memory_space<vmem>>, %arg4: memref<64x64xf32, #tpu.memory_space<vmem>>, %arg5: memref<1x64xf32, #tpu.memory_space<vmem>>, %arg6: memref<64x1xf32, #tpu.memory_space<vmem>>, %arg7: memref<64x32xf32, #tpu.memory_space<vmem>>, %arg8: memref<64x32xf32, #tpu.memory_space<vmem>>, %arg9: memref<1x32xf32, #tpu.memory_space<vmem>>, %arg10: memref<32x32xf32, #tpu.memory_space<vmem>>, %arg11: memref<1x32xf32, #tpu.memory_space<vmem>>, %arg12: memref<32x1xf32, #tpu.memory_space<vmem>>, %arg13: memref<32x32xf32, #tpu.memory_space<vmem>>, %arg14: memref<32x32xf32, #tpu.memory_space<vmem>>, %arg15: memref<1x32xf32, #tpu.memory_space<vmem>>, %arg16: memref<32x32xf32, #tpu.memory_space<vmem>>, %arg17: memref<1x32xf32, #tpu.memory_space<vmem>>, %arg18: memref<32x1xf32, #tpu.memory_space<vmem>>, %arg19: memref<32x16xf32, #tpu.memory_space<vmem>>, %arg20: memref<32x16xf32, #tpu.memory_space<vmem>>, %arg21: memref<1x16xf32, #tpu.memory_space<vmem>>, %arg22: memref<16x16xf32, #tpu.memory_space<vmem>>, %arg23: memref<1x16xf32, #tpu.memory_space<vmem>>, %arg24: memref<16x1xf32, #tpu.memory_space<vmem>>, %arg25: memref<16x16xf32, #tpu.memory_space<vmem>>, %arg26: memref<16x16xf32, #tpu.memory_space<vmem>>, %arg27: memref<1x16xf32, #tpu.memory_space<vmem>>, %arg28: memref<16x16xf32, #tpu.memory_space<vmem>>, %arg29: memref<1x16xf32, #tpu.memory_space<vmem>>, %arg30: memref<16x16xf32, #tpu.memory_space<vmem>>, %arg31: memref<1x16xf32, #tpu.memory_space<vmem>>, %arg32: memref<1x16xf32, #tpu.memory_space<vmem>>, %arg33: memref<16x16xf32, #tpu.memory_space<vmem>>, %arg34: memref<1x16xf32, #tpu.memory_space<vmem>>, %arg35: memref<1x16xf32, #tpu.memory_space<vmem>>, %arg36: memref<2x16xf32, #tpu.memory_space<vmem>>, %arg37: memref<2x1xf32, #tpu.memory_space<vmem>>, %arg38: memref<32x16xf32, #tpu.memory_space<vmem>>, %arg39: memref<2x1024xf32, #tpu.memory_space<vmem>>, %arg40: memref<2x1024xf32, #tpu.memory_space<vmem>>, %arg41: memref<1x32xf32, #tpu.memory_space<vmem>>) attributes {dimension_semantics = [], scalar_prefetch = 0 : i64, scratch_operands = 0 : i64, tpu.core_type = #tpu.core_type<tc>} {
    %c0 = arith.constant 0 : index
    %c0_0 = arith.constant 0 : index
    %0 = vector.load %arg1[%c0, %c0_0] : memref<32x32xf32, #tpu.memory_space<vmem>>, vector<32x32xf32>
    %cst = arith.constant 0.000000e+00 : f32
    %1 = vector.broadcast %cst : f32 to vector<32x32xf32>
    %2 = arith.cmpf ogt, %0, %1 : vector<32x32xf32>
    %c0_1 = arith.constant 0 : index
    %c0_2 = arith.constant 0 : index
    %3 = vector.load %arg0[%c0_1, %c0_2] : memref<32x64xf32, #tpu.memory_space<vmem>>, vector<32x64xf32>
    %c0_3 = arith.constant 0 : index
    %c0_4 = arith.constant 0 : index
    %4 = vector.load %arg4[%c0_3, %c0_4] : memref<64x64xf32, #tpu.memory_space<vmem>>, vector<64x64xf32>
    %cst_5 = arith.constant dense<0.000000e+00> : vector<32x64xf32>
    %5 = tpu.matmul %3, %4, %cst_5 {dimension_numbers = #tpu.dot_dimension_numbers<[1], [0], [0], [1], [0, 0, 1, 1], [], []>} : vector<32x64xf32>, vector<64x64xf32>, vector<32x64xf32> -> vector<32x64xf32>
    %c0_6 = arith.constant 0 : index
    %c0_7 = arith.constant 0 : index
    %6 = vector.load %arg6[%c0_6, %c0_7] : memref<64x1xf32, #tpu.memory_space<vmem>>, vector<64x1xf32>
    %cst_8 = arith.constant dense<0.000000e+00> : vector<32x1xf32>
    %7 = tpu.matmul %5, %6, %cst_8 {dimension_numbers = #tpu.dot_dimension_numbers<[1], [0], [0], [1], [0, 0, 1, 1], [], []>} : vector<32x64xf32>, vector<64x1xf32>, vector<32x1xf32> -> vector<32x1xf32>
    %c0_9 = arith.constant 0 : index
    %c0_10 = arith.constant 0 : index
    %8 = vector.load %arg5[%c0_9, %c0_10] : memref<1x64xf32, #tpu.memory_space<vmem>>, vector<1x64xf32>
    %cst_11 = arith.constant dense<0.000000e+00> : vector<1x32xf32>
    %9 = tpu.matmul %8, %5, %cst_11 {dimension_numbers = #tpu.dot_dimension_numbers<[1], [1], [0], [0], [0, 0, 1, 0], [], []>} : vector<1x64xf32>, vector<32x64xf32>, vector<1x32xf32> -> vector<1x32xf32>
    %10 = vector.broadcast %7 : vector<32x1xf32> to vector<32x32xf32>
    %11 = vector.broadcast %9 : vector<1x32xf32> to vector<32x32xf32>
    %12 = arith.addf %10, %11 : vector<32x32xf32>
    %cst_12 = arith.constant 0.000000e+00 : f32
    %13 = vector.broadcast %cst_12 : f32 to vector<32x32xf32>
    %14 = arith.cmpf ogt, %12, %13 : vector<32x32xf32>
    %cst_13 = arith.constant 2.000000e-01 : f32
    %15 = vector.broadcast %cst_13 : f32 to vector<32x32xf32>
    %16 = arith.mulf %15, %12 : vector<32x32xf32>
    %17 = arith.select %14, %12, %16 : vector<32x32xi1>, vector<32x32xf32>
    %cst_14 = arith.constant -1.000000e+30 : f32
    %18 = vector.broadcast %cst_14 : f32 to vector<32x32xf32>
    %19 = arith.select %2, %17, %18 : vector<32x32xi1>, vector<32x32xf32>
    %cst_15 = arith.constant dense<0xFF800000> : vector<32xf32>
    %20 = vector.multi_reduction <maximumf>, %19, %cst_15 [1] : vector<32x32xf32> to vector<32xf32>
    %21 = vector.shape_cast %20 : vector<32xf32> to vector<32x1xf32>
    %22 = vector.broadcast %21 : vector<32x1xf32> to vector<32x32xf32>
    %23 = arith.subf %19, %22 : vector<32x32xf32>
    %24 = math.exp %23 : vector<32x32xf32>
    %cst_16 = arith.constant dense<0.000000e+00> : vector<32xf32>
    %25 = vector.multi_reduction <add>, %24, %cst_16 [1] : vector<32x32xf32> to vector<32xf32>
    %26 = vector.shape_cast %25 : vector<32xf32> to vector<32x1xf32>
    %27 = tpu.reciprocal %26 {approx = true} : vector<32x1xf32> -> vector<32x1xf32>
    %cst_17 = arith.constant dense<0.000000e+00> : vector<32x64xf32>
    %28 = tpu.matmul %24, %5, %cst_17 {dimension_numbers = #tpu.dot_dimension_numbers<[1], [0], [0], [1], [0, 0, 1, 1], [], []>} : vector<32x32xf32>, vector<32x64xf32>, vector<32x64xf32> -> vector<32x64xf32>
    %29 = vector.broadcast %27 : vector<32x1xf32> to vector<32x64xf32>
    %30 = arith.mulf %28, %29 : vector<32x64xf32>
    %c0_18 = arith.constant 0 : index
    %c0_19 = arith.constant 0 : index
    %31 = vector.load %arg7[%c0_18, %c0_19] : memref<64x32xf32, #tpu.memory_space<vmem>>, vector<64x32xf32>
    %cst_20 = arith.constant dense<0.000000e+00> : vector<32x32xf32>
    %32 = tpu.matmul %3, %31, %cst_20 {dimension_numbers = #tpu.dot_dimension_numbers<[1], [0], [0], [1], [0, 0, 1, 1], [], []>} : vector<32x64xf32>, vector<64x32xf32>, vector<32x32xf32> -> vector<32x32xf32>
    %c0_21 = arith.constant 0 : index
    %c0_22 = arith.constant 0 : index
    %33 = vector.load %arg8[%c0_21, %c0_22] : memref<64x32xf32, #tpu.memory_space<vmem>>, vector<64x32xf32>
    %cst_23 = arith.constant dense<0.000000e+00> : vector<32x32xf32>
    %34 = tpu.matmul %30, %33, %cst_23 {dimension_numbers = #tpu.dot_dimension_numbers<[1], [0], [0], [1], [0, 0, 1, 1], [], []>} : vector<32x64xf32>, vector<64x32xf32>, vector<32x32xf32> -> vector<32x32xf32>
    %35 = arith.addf %32, %34 : vector<32x32xf32>
    %c0_24 = arith.constant 0 : index
    %c0_25 = arith.constant 0 : index
    %36 = vector.load %arg9[%c0_24, %c0_25] : memref<1x32xf32, #tpu.memory_space<vmem>>, vector<1x32xf32>
    %37 = vector.broadcast %36 : vector<1x32xf32> to vector<32x32xf32>
    %38 = arith.addf %35, %37 : vector<32x32xf32>
    %cst_26 = arith.constant 0.000000e+00 : f32
    %39 = vector.broadcast %cst_26 : f32 to vector<32x32xf32>
    %40 = arith.maximumf %38, %39 : vector<32x32xf32>
    %c0_27 = arith.constant 0 : index
    %c0_28 = arith.constant 0 : index
    %41 = vector.load %arg10[%c0_27, %c0_28] : memref<32x32xf32, #tpu.memory_space<vmem>>, vector<32x32xf32>
    %cst_29 = arith.constant dense<0.000000e+00> : vector<32x32xf32>
    %42 = tpu.matmul %40, %41, %cst_29 {dimension_numbers = #tpu.dot_dimension_numbers<[1], [0], [0], [1], [0, 0, 1, 1], [], []>} : vector<32x32xf32>, vector<32x32xf32>, vector<32x32xf32> -> vector<32x32xf32>
    %c0_30 = arith.constant 0 : index
    %c0_31 = arith.constant 0 : index
    %43 = vector.load %arg12[%c0_30, %c0_31] : memref<32x1xf32, #tpu.memory_space<vmem>>, vector<32x1xf32>
    %cst_32 = arith.constant dense<0.000000e+00> : vector<32x1xf32>
    %44 = tpu.matmul %42, %43, %cst_32 {dimension_numbers = #tpu.dot_dimension_numbers<[1], [0], [0], [1], [0, 0, 1, 1], [], []>} : vector<32x32xf32>, vector<32x1xf32>, vector<32x1xf32> -> vector<32x1xf32>
    %c0_33 = arith.constant 0 : index
    %c0_34 = arith.constant 0 : index
    %45 = vector.load %arg11[%c0_33, %c0_34] : memref<1x32xf32, #tpu.memory_space<vmem>>, vector<1x32xf32>
    %cst_35 = arith.constant dense<0.000000e+00> : vector<1x32xf32>
    %46 = tpu.matmul %45, %42, %cst_35 {dimension_numbers = #tpu.dot_dimension_numbers<[1], [1], [0], [0], [0, 0, 1, 0], [], []>} : vector<1x32xf32>, vector<32x32xf32>, vector<1x32xf32> -> vector<1x32xf32>
    %47 = vector.broadcast %44 : vector<32x1xf32> to vector<32x32xf32>
    %48 = vector.broadcast %46 : vector<1x32xf32> to vector<32x32xf32>
    %49 = arith.addf %47, %48 : vector<32x32xf32>
    %cst_36 = arith.constant 0.000000e+00 : f32
    %50 = vector.broadcast %cst_36 : f32 to vector<32x32xf32>
    %51 = arith.cmpf ogt, %49, %50 : vector<32x32xf32>
    %cst_37 = arith.constant 2.000000e-01 : f32
    %52 = vector.broadcast %cst_37 : f32 to vector<32x32xf32>
    %53 = arith.mulf %52, %49 : vector<32x32xf32>
    %54 = arith.select %51, %49, %53 : vector<32x32xi1>, vector<32x32xf32>
    %cst_38 = arith.constant -1.000000e+30 : f32
    %55 = vector.broadcast %cst_38 : f32 to vector<32x32xf32>
    %56 = arith.select %2, %54, %55 : vector<32x32xi1>, vector<32x32xf32>
    %cst_39 = arith.constant dense<0xFF800000> : vector<32xf32>
    %57 = vector.multi_reduction <maximumf>, %56, %cst_39 [1] : vector<32x32xf32> to vector<32xf32>
    %58 = vector.shape_cast %57 : vector<32xf32> to vector<32x1xf32>
    %59 = vector.broadcast %58 : vector<32x1xf32> to vector<32x32xf32>
    %60 = arith.subf %56, %59 : vector<32x32xf32>
    %61 = math.exp %60 : vector<32x32xf32>
    %cst_40 = arith.constant dense<0.000000e+00> : vector<32xf32>
    %62 = vector.multi_reduction <add>, %61, %cst_40 [1] : vector<32x32xf32> to vector<32xf32>
    %63 = vector.shape_cast %62 : vector<32xf32> to vector<32x1xf32>
    %64 = tpu.reciprocal %63 {approx = true} : vector<32x1xf32> -> vector<32x1xf32>
    %cst_41 = arith.constant dense<0.000000e+00> : vector<32x32xf32>
    %65 = tpu.matmul %61, %42, %cst_41 {dimension_numbers = #tpu.dot_dimension_numbers<[1], [0], [0], [1], [0, 0, 1, 1], [], []>} : vector<32x32xf32>, vector<32x32xf32>, vector<32x32xf32> -> vector<32x32xf32>
    %66 = vector.broadcast %64 : vector<32x1xf32> to vector<32x32xf32>
    %67 = arith.mulf %65, %66 : vector<32x32xf32>
    %c0_42 = arith.constant 0 : index
    %c0_43 = arith.constant 0 : index
    %68 = vector.load %arg13[%c0_42, %c0_43] : memref<32x32xf32, #tpu.memory_space<vmem>>, vector<32x32xf32>
    %cst_44 = arith.constant dense<0.000000e+00> : vector<32x32xf32>
    %69 = tpu.matmul %40, %68, %cst_44 {dimension_numbers = #tpu.dot_dimension_numbers<[1], [0], [0], [1], [0, 0, 1, 1], [], []>} : vector<32x32xf32>, vector<32x32xf32>, vector<32x32xf32> -> vector<32x32xf32>
    %c0_45 = arith.constant 0 : index
    %c0_46 = arith.constant 0 : index
    %70 = vector.load %arg14[%c0_45, %c0_46] : memref<32x32xf32, #tpu.memory_space<vmem>>, vector<32x32xf32>
    %cst_47 = arith.constant dense<0.000000e+00> : vector<32x32xf32>
    %71 = tpu.matmul %67, %70, %cst_47 {dimension_numbers = #tpu.dot_dimension_numbers<[1], [0], [0], [1], [0, 0, 1, 1], [], []>} : vector<32x32xf32>, vector<32x32xf32>, vector<32x32xf32> -> vector<32x32xf32>
    %72 = arith.addf %69, %71 : vector<32x32xf32>
    %c0_48 = arith.constant 0 : index
    %c0_49 = arith.constant 0 : index
    %73 = vector.load %arg15[%c0_48, %c0_49] : memref<1x32xf32, #tpu.memory_space<vmem>>, vector<1x32xf32>
    %74 = vector.broadcast %73 : vector<1x32xf32> to vector<32x32xf32>
    %75 = arith.addf %72, %74 : vector<32x32xf32>
    %cst_50 = arith.constant 0.000000e+00 : f32
    %76 = vector.broadcast %cst_50 : f32 to vector<32x32xf32>
    %77 = arith.maximumf %75, %76 : vector<32x32xf32>
    %c0_51 = arith.constant 0 : index
    %c0_52 = arith.constant 0 : index
    %78 = vector.load %arg16[%c0_51, %c0_52] : memref<32x32xf32, #tpu.memory_space<vmem>>, vector<32x32xf32>
    %cst_53 = arith.constant dense<0.000000e+00> : vector<32x32xf32>
    %79 = tpu.matmul %77, %78, %cst_53 {dimension_numbers = #tpu.dot_dimension_numbers<[1], [0], [0], [1], [0, 0, 1, 1], [], []>} : vector<32x32xf32>, vector<32x32xf32>, vector<32x32xf32> -> vector<32x32xf32>
    %c0_54 = arith.constant 0 : index
    %c0_55 = arith.constant 0 : index
    %80 = vector.load %arg18[%c0_54, %c0_55] : memref<32x1xf32, #tpu.memory_space<vmem>>, vector<32x1xf32>
    %cst_56 = arith.constant dense<0.000000e+00> : vector<32x1xf32>
    %81 = tpu.matmul %79, %80, %cst_56 {dimension_numbers = #tpu.dot_dimension_numbers<[1], [0], [0], [1], [0, 0, 1, 1], [], []>} : vector<32x32xf32>, vector<32x1xf32>, vector<32x1xf32> -> vector<32x1xf32>
    %c0_57 = arith.constant 0 : index
    %c0_58 = arith.constant 0 : index
    %82 = vector.load %arg17[%c0_57, %c0_58] : memref<1x32xf32, #tpu.memory_space<vmem>>, vector<1x32xf32>
    %cst_59 = arith.constant dense<0.000000e+00> : vector<1x32xf32>
    %83 = tpu.matmul %82, %79, %cst_59 {dimension_numbers = #tpu.dot_dimension_numbers<[1], [1], [0], [0], [0, 0, 1, 0], [], []>} : vector<1x32xf32>, vector<32x32xf32>, vector<1x32xf32> -> vector<1x32xf32>
    %84 = vector.broadcast %81 : vector<32x1xf32> to vector<32x32xf32>
    %85 = vector.broadcast %83 : vector<1x32xf32> to vector<32x32xf32>
    %86 = arith.addf %84, %85 : vector<32x32xf32>
    %cst_60 = arith.constant 0.000000e+00 : f32
    %87 = vector.broadcast %cst_60 : f32 to vector<32x32xf32>
    %88 = arith.cmpf ogt, %86, %87 : vector<32x32xf32>
    %cst_61 = arith.constant 2.000000e-01 : f32
    %89 = vector.broadcast %cst_61 : f32 to vector<32x32xf32>
    %90 = arith.mulf %89, %86 : vector<32x32xf32>
    %91 = arith.select %88, %86, %90 : vector<32x32xi1>, vector<32x32xf32>
    %cst_62 = arith.constant -1.000000e+30 : f32
    %92 = vector.broadcast %cst_62 : f32 to vector<32x32xf32>
    %93 = arith.select %2, %91, %92 : vector<32x32xi1>, vector<32x32xf32>
    %cst_63 = arith.constant dense<0xFF800000> : vector<32xf32>
    %94 = vector.multi_reduction <maximumf>, %93, %cst_63 [1] : vector<32x32xf32> to vector<32xf32>
    %95 = vector.shape_cast %94 : vector<32xf32> to vector<32x1xf32>
    %96 = vector.broadcast %95 : vector<32x1xf32> to vector<32x32xf32>
    %97 = arith.subf %93, %96 : vector<32x32xf32>
    %98 = math.exp %97 : vector<32x32xf32>
    %cst_64 = arith.constant dense<0.000000e+00> : vector<32xf32>
    %99 = vector.multi_reduction <add>, %98, %cst_64 [1] : vector<32x32xf32> to vector<32xf32>
    %100 = vector.shape_cast %99 : vector<32xf32> to vector<32x1xf32>
    %101 = tpu.reciprocal %100 {approx = true} : vector<32x1xf32> -> vector<32x1xf32>
    %cst_65 = arith.constant dense<0.000000e+00> : vector<32x32xf32>
    %102 = tpu.matmul %98, %79, %cst_65 {dimension_numbers = #tpu.dot_dimension_numbers<[1], [0], [0], [1], [0, 0, 1, 1], [], []>} : vector<32x32xf32>, vector<32x32xf32>, vector<32x32xf32> -> vector<32x32xf32>
    %103 = vector.broadcast %101 : vector<32x1xf32> to vector<32x32xf32>
    %104 = arith.mulf %102, %103 : vector<32x32xf32>
    %c0_66 = arith.constant 0 : index
    %c0_67 = arith.constant 0 : index
    %105 = vector.load %arg19[%c0_66, %c0_67] : memref<32x16xf32, #tpu.memory_space<vmem>>, vector<32x16xf32>
    %cst_68 = arith.constant dense<0.000000e+00> : vector<32x16xf32>
    %106 = tpu.matmul %77, %105, %cst_68 {dimension_numbers = #tpu.dot_dimension_numbers<[1], [0], [0], [1], [0, 0, 1, 1], [], []>} : vector<32x32xf32>, vector<32x16xf32>, vector<32x16xf32> -> vector<32x16xf32>
    %c0_69 = arith.constant 0 : index
    %c0_70 = arith.constant 0 : index
    %107 = vector.load %arg20[%c0_69, %c0_70] : memref<32x16xf32, #tpu.memory_space<vmem>>, vector<32x16xf32>
    %cst_71 = arith.constant dense<0.000000e+00> : vector<32x16xf32>
    %108 = tpu.matmul %104, %107, %cst_71 {dimension_numbers = #tpu.dot_dimension_numbers<[1], [0], [0], [1], [0, 0, 1, 1], [], []>} : vector<32x32xf32>, vector<32x16xf32>, vector<32x16xf32> -> vector<32x16xf32>
    %109 = arith.addf %106, %108 : vector<32x16xf32>
    %c0_72 = arith.constant 0 : index
    %c0_73 = arith.constant 0 : index
    %110 = vector.load %arg21[%c0_72, %c0_73] : memref<1x16xf32, #tpu.memory_space<vmem>>, vector<1x16xf32>
    %111 = vector.broadcast %110 : vector<1x16xf32> to vector<32x16xf32>
    %112 = arith.addf %109, %111 : vector<32x16xf32>
    %cst_74 = arith.constant 0.000000e+00 : f32
    %113 = vector.broadcast %cst_74 : f32 to vector<32x16xf32>
    %114 = arith.maximumf %112, %113 : vector<32x16xf32>
    %c0_75 = arith.constant 0 : index
    %c0_76 = arith.constant 0 : index
    %115 = vector.load %arg22[%c0_75, %c0_76] : memref<16x16xf32, #tpu.memory_space<vmem>>, vector<16x16xf32>
    %cst_77 = arith.constant dense<0.000000e+00> : vector<32x16xf32>
    %116 = tpu.matmul %114, %115, %cst_77 {dimension_numbers = #tpu.dot_dimension_numbers<[1], [0], [0], [1], [0, 0, 1, 1], [], []>} : vector<32x16xf32>, vector<16x16xf32>, vector<32x16xf32> -> vector<32x16xf32>
    %c0_78 = arith.constant 0 : index
    %c0_79 = arith.constant 0 : index
    %117 = vector.load %arg24[%c0_78, %c0_79] : memref<16x1xf32, #tpu.memory_space<vmem>>, vector<16x1xf32>
    %cst_80 = arith.constant dense<0.000000e+00> : vector<32x1xf32>
    %118 = tpu.matmul %116, %117, %cst_80 {dimension_numbers = #tpu.dot_dimension_numbers<[1], [0], [0], [1], [0, 0, 1, 1], [], []>} : vector<32x16xf32>, vector<16x1xf32>, vector<32x1xf32> -> vector<32x1xf32>
    %c0_81 = arith.constant 0 : index
    %c0_82 = arith.constant 0 : index
    %119 = vector.load %arg23[%c0_81, %c0_82] : memref<1x16xf32, #tpu.memory_space<vmem>>, vector<1x16xf32>
    %cst_83 = arith.constant dense<0.000000e+00> : vector<1x32xf32>
    %120 = tpu.matmul %119, %116, %cst_83 {dimension_numbers = #tpu.dot_dimension_numbers<[1], [1], [0], [0], [0, 0, 1, 0], [], []>} : vector<1x16xf32>, vector<32x16xf32>, vector<1x32xf32> -> vector<1x32xf32>
    %121 = vector.broadcast %118 : vector<32x1xf32> to vector<32x32xf32>
    %122 = vector.broadcast %120 : vector<1x32xf32> to vector<32x32xf32>
    %123 = arith.addf %121, %122 : vector<32x32xf32>
    %cst_84 = arith.constant 0.000000e+00 : f32
    %124 = vector.broadcast %cst_84 : f32 to vector<32x32xf32>
    %125 = arith.cmpf ogt, %123, %124 : vector<32x32xf32>
    %cst_85 = arith.constant 2.000000e-01 : f32
    %126 = vector.broadcast %cst_85 : f32 to vector<32x32xf32>
    %127 = arith.mulf %126, %123 : vector<32x32xf32>
    %128 = arith.select %125, %123, %127 : vector<32x32xi1>, vector<32x32xf32>
    %cst_86 = arith.constant -1.000000e+30 : f32
    %129 = vector.broadcast %cst_86 : f32 to vector<32x32xf32>
    %130 = arith.select %2, %128, %129 : vector<32x32xi1>, vector<32x32xf32>
    %cst_87 = arith.constant dense<0xFF800000> : vector<32xf32>
    %131 = vector.multi_reduction <maximumf>, %130, %cst_87 [1] : vector<32x32xf32> to vector<32xf32>
    %132 = vector.shape_cast %131 : vector<32xf32> to vector<32x1xf32>
    %133 = vector.broadcast %132 : vector<32x1xf32> to vector<32x32xf32>
    %134 = arith.subf %130, %133 : vector<32x32xf32>
    %135 = math.exp %134 : vector<32x32xf32>
    %cst_88 = arith.constant dense<0.000000e+00> : vector<32xf32>
    %136 = vector.multi_reduction <add>, %135, %cst_88 [1] : vector<32x32xf32> to vector<32xf32>
    %137 = vector.shape_cast %136 : vector<32xf32> to vector<32x1xf32>
    %138 = tpu.reciprocal %137 {approx = true} : vector<32x1xf32> -> vector<32x1xf32>
    %cst_89 = arith.constant dense<0.000000e+00> : vector<32x16xf32>
    %139 = tpu.matmul %135, %116, %cst_89 {dimension_numbers = #tpu.dot_dimension_numbers<[1], [0], [0], [1], [0, 0, 1, 1], [], []>} : vector<32x32xf32>, vector<32x16xf32>, vector<32x16xf32> -> vector<32x16xf32>
    %140 = vector.broadcast %138 : vector<32x1xf32> to vector<32x16xf32>
    %141 = arith.mulf %139, %140 : vector<32x16xf32>
    %c0_90 = arith.constant 0 : index
    %c0_91 = arith.constant 0 : index
    %142 = vector.load %arg25[%c0_90, %c0_91] : memref<16x16xf32, #tpu.memory_space<vmem>>, vector<16x16xf32>
    %cst_92 = arith.constant dense<0.000000e+00> : vector<32x16xf32>
    %143 = tpu.matmul %114, %142, %cst_92 {dimension_numbers = #tpu.dot_dimension_numbers<[1], [0], [0], [1], [0, 0, 1, 1], [], []>} : vector<32x16xf32>, vector<16x16xf32>, vector<32x16xf32> -> vector<32x16xf32>
    %c0_93 = arith.constant 0 : index
    %c0_94 = arith.constant 0 : index
    %144 = vector.load %arg26[%c0_93, %c0_94] : memref<16x16xf32, #tpu.memory_space<vmem>>, vector<16x16xf32>
    %cst_95 = arith.constant dense<0.000000e+00> : vector<32x16xf32>
    %145 = tpu.matmul %141, %144, %cst_95 {dimension_numbers = #tpu.dot_dimension_numbers<[1], [0], [0], [1], [0, 0, 1, 1], [], []>} : vector<32x16xf32>, vector<16x16xf32>, vector<32x16xf32> -> vector<32x16xf32>
    %146 = arith.addf %143, %145 : vector<32x16xf32>
    %c0_96 = arith.constant 0 : index
    %c0_97 = arith.constant 0 : index
    %147 = vector.load %arg27[%c0_96, %c0_97] : memref<1x16xf32, #tpu.memory_space<vmem>>, vector<1x16xf32>
    %148 = vector.broadcast %147 : vector<1x16xf32> to vector<32x16xf32>
    %149 = arith.addf %146, %148 : vector<32x16xf32>
    %cst_98 = arith.constant 0.000000e+00 : f32
    %150 = vector.broadcast %cst_98 : f32 to vector<32x16xf32>
    %151 = arith.maximumf %149, %150 : vector<32x16xf32>
    %c0_99 = arith.constant 0 : index
    %c0_100 = arith.constant 0 : index
    %152 = vector.load %arg38[%c0_99, %c0_100] : memref<32x16xf32, #tpu.memory_space<vmem>>, vector<32x16xf32>
    tpu.vector_store %arg38[%c0_99, %c0_100], %151 {strides = array<i32>} : memref<32x16xf32, #tpu.memory_space<vmem>>, vector<32x16xf32>,
    %c0_101 = arith.constant 0 : index
    %c0_102 = arith.constant 0 : index
    %153 = vector.load %arg28[%c0_101, %c0_102] : memref<16x16xf32, #tpu.memory_space<vmem>>, vector<16x16xf32>
    %cst_103 = arith.constant dense<0.000000e+00> : vector<32x16xf32>
    %154 = tpu.matmul %151, %153, %cst_103 {dimension_numbers = #tpu.dot_dimension_numbers<[1], [0], [0], [1], [0, 0, 1, 1], [], []>} : vector<32x16xf32>, vector<16x16xf32>, vector<32x16xf32> -> vector<32x16xf32>
    %c0_104 = arith.constant 0 : index
    %c0_105 = arith.constant 0 : index
    %155 = vector.load %arg29[%c0_104, %c0_105] : memref<1x16xf32, #tpu.memory_space<vmem>>, vector<1x16xf32>
    %156 = vector.broadcast %155 : vector<1x16xf32> to vector<32x16xf32>
    %157 = arith.addf %154, %156 : vector<32x16xf32>
    %c0_106 = arith.constant 0 : index
    %c0_107 = arith.constant 0 : index
    %158 = vector.load %arg30[%c0_106, %c0_107] : memref<16x16xf32, #tpu.memory_space<vmem>>, vector<16x16xf32>
    %cst_108 = arith.constant dense<0.000000e+00> : vector<32x16xf32>
    %159 = tpu.matmul %151, %158, %cst_108 {dimension_numbers = #tpu.dot_dimension_numbers<[1], [0], [0], [1], [0, 0, 1, 1], [], []>} : vector<32x16xf32>, vector<16x16xf32>, vector<32x16xf32> -> vector<32x16xf32>
    %c0_109 = arith.constant 0 : index
    %c0_110 = arith.constant 0 : index
    %160 = vector.load %arg31[%c0_109, %c0_110] : memref<1x16xf32, #tpu.memory_space<vmem>>, vector<1x16xf32>
    %161 = vector.broadcast %160 : vector<1x16xf32> to vector<32x16xf32>
    %162 = arith.addf %159, %161 : vector<32x16xf32>
    %163 = vector.shape_cast %162 : vector<32x16xf32> to vector<32x1x16xf32>
    %164 = vector.shape_cast %157 : vector<32x16xf32> to vector<1x32x16xf32>
    %165 = vector.broadcast %163 : vector<32x1x16xf32> to vector<32x32x16xf32>
    %166 = vector.broadcast %164 : vector<1x32x16xf32> to vector<32x32x16xf32>
    %167 = arith.addf %165, %166 : vector<32x32x16xf32>
    %168 = vector.shape_cast %167 : vector<32x32x16xf32> to vector<1024x16xf32>
    %c0_111 = arith.constant 0 : index
    %c0_112 = arith.constant 0 : index
    %169 = vector.load %arg32[%c0_111, %c0_112] : memref<1x16xf32, #tpu.memory_space<vmem>>, vector<1x16xf32>
    %cst_113 = arith.constant 0.000000e+00 : f32
    %170 = vector.broadcast %cst_113 : f32 to vector<1024x16xf32>
    %171 = arith.cmpf ogt, %168, %170 : vector<1024x16xf32>
    %172 = vector.broadcast %169 : vector<1x16xf32> to vector<1024x16xf32>
    %173 = arith.mulf %172, %168 : vector<1024x16xf32>
    %174 = arith.select %171, %168, %173 : vector<1024x16xi1>, vector<1024x16xf32>
    %c0_114 = arith.constant 0 : index
    %c0_115 = arith.constant 0 : index
    %175 = vector.load %arg33[%c0_114, %c0_115] : memref<16x16xf32, #tpu.memory_space<vmem>>, vector<16x16xf32>
    %cst_116 = arith.constant dense<0.000000e+00> : vector<1024x16xf32>
    %176 = tpu.matmul %174, %175, %cst_116 {dimension_numbers = #tpu.dot_dimension_numbers<[1], [0], [0], [1], [0, 0, 1, 1], [], []>} : vector<1024x16xf32>, vector<16x16xf32>, vector<1024x16xf32> -> vector<1024x16xf32>
    %c0_117 = arith.constant 0 : index
    %c0_118 = arith.constant 0 : index
    %177 = vector.load %arg34[%c0_117, %c0_118] : memref<1x16xf32, #tpu.memory_space<vmem>>, vector<1x16xf32>
    %178 = vector.broadcast %177 : vector<1x16xf32> to vector<1024x16xf32>
    %179 = arith.addf %176, %178 : vector<1024x16xf32>
    %c0_119 = arith.constant 0 : index
    %c0_120 = arith.constant 0 : index
    %180 = vector.load %arg35[%c0_119, %c0_120] : memref<1x16xf32, #tpu.memory_space<vmem>>, vector<1x16xf32>
    %cst_121 = arith.constant 0.000000e+00 : f32
    %181 = vector.broadcast %cst_121 : f32 to vector<1024x16xf32>
    %182 = arith.cmpf ogt, %179, %181 : vector<1024x16xf32>
    %183 = vector.broadcast %180 : vector<1x16xf32> to vector<1024x16xf32>
    %184 = arith.mulf %183, %179 : vector<1024x16xf32>
    %185 = arith.select %182, %179, %184 : vector<1024x16xi1>, vector<1024x16xf32>
    %c0_122 = arith.constant 0 : index
    %c0_123 = arith.constant 0 : index
    %186 = vector.load %arg36[%c0_122, %c0_123] : memref<2x16xf32, #tpu.memory_space<vmem>>, vector<2x16xf32>
    %cst_124 = arith.constant dense<0.000000e+00> : vector<2x1024xf32>
    %187 = tpu.matmul %186, %185, %cst_124 {dimension_numbers = #tpu.dot_dimension_numbers<[1], [1], [0], [0], [0, 0, 1, 0], [], []>} : vector<2x16xf32>, vector<1024x16xf32>, vector<2x1024xf32> -> vector<2x1024xf32>
    %c0_125 = arith.constant 0 : index
    %c0_126 = arith.constant 0 : index
    %188 = vector.load %arg37[%c0_125, %c0_126] : memref<2x1xf32, #tpu.memory_space<vmem>>, vector<2x1xf32>
    %189 = vector.broadcast %188 : vector<2x1xf32> to vector<2x1024xf32>
    %190 = arith.addf %187, %189 : vector<2x1024xf32>
    %c0_127 = arith.constant 0 : index
    %c0_128 = arith.constant 0 : index
    %191 = vector.load %arg39[%c0_127, %c0_128] : memref<2x1024xf32, #tpu.memory_space<vmem>>, vector<2x1024xf32>
    tpu.vector_store %arg39[%c0_127, %c0_128], %190 {strides = array<i32>} : memref<2x1024xf32, #tpu.memory_space<vmem>>, vector<2x1024xf32>,
    %192 = vector.extract_strided_slice %190 {offsets = [1, 0], sizes = [1, 1024], strides = [1, 1]} : vector<2x1024xf32> to vector<1x1024xf32>
    %193 = vector.extract_strided_slice %190 {offsets = [0, 0], sizes = [1, 1024], strides = [1, 1]} : vector<2x1024xf32> to vector<1x1024xf32>
    %194 = arith.subf %192, %193 : vector<1x1024xf32>
    %cst_129 = arith.constant 5.000000e-01 : f32
    %195 = vector.broadcast %cst_129 : f32 to vector<1x1024xf32>
    %196 = arith.mulf %195, %194 : vector<1x1024xf32>
    %197 = math.tanh %196 : vector<1x1024xf32>
    %cst_130 = arith.constant 1.000000e+00 : f32
    %198 = vector.broadcast %cst_130 : f32 to vector<1x1024xf32>
    %199 = arith.subf %198, %197 : vector<1x1024xf32>
    %cst_131 = arith.constant 5.000000e-01 : f32
    %200 = vector.broadcast %cst_131 : f32 to vector<1x1024xf32>
    %201 = arith.mulf %200, %199 : vector<1x1024xf32>
    %c0_132 = arith.constant 0 : index
    %c0_133 = arith.constant 0 : index
    %202 = vector.load %arg40[%c0_132, %c0_133] : memref<2x1024xf32, #tpu.memory_space<vmem>>, vector<1x1024xf32>
    tpu.vector_store %arg40[%c0_132, %c0_133], %201 {strides = array<i32>} : memref<2x1024xf32, #tpu.memory_space<vmem>>, vector<1x1024xf32>,
    %cst_134 = arith.constant 1.000000e+00 : f32
    %203 = vector.broadcast %cst_134 : f32 to vector<1x1024xf32>
    %204 = arith.addf %203, %197 : vector<1x1024xf32>
    %cst_135 = arith.constant 5.000000e-01 : f32
    %205 = vector.broadcast %cst_135 : f32 to vector<1x1024xf32>
    %206 = arith.mulf %205, %204 : vector<1x1024xf32>
    %c1 = arith.constant 1 : index
    %c0_136 = arith.constant 0 : index
    %207 = vector.load %arg40[%c1, %c0_136] : memref<2x1024xf32, #tpu.memory_space<vmem>>, vector<1x1024xf32>
    tpu.vector_store %arg40[%c1, %c0_136], %206 {strides = array<i32>} : memref<2x1024xf32, #tpu.memory_space<vmem>>, vector<1x1024xf32>,
    %c0_137 = arith.constant 0 : index
    %c0_138 = arith.constant 0 : index
    %208 = vector.load %arg2[%c0_137, %c0_138] : memref<1x1024xf32, #tpu.memory_space<vmem>>, vector<1x1024xf32>
    %c0_139 = arith.constant 0 : index
    %c0_140 = arith.constant 0 : index
    %209 = vector.load %arg3[%c0_139, %c0_140] : memref<1x1024xf32, #tpu.memory_space<vmem>>, vector<1x1024xf32>
    %210 = arith.mulf %208, %209 : vector<1x1024xf32>
    %211 = arith.mulf %210, %197 : vector<1x1024xf32>
    %212 = tpu.iota {dimensions = array<i32: 0>} : vector<1024x32xi32>
    %213 = tpu.iota {dimensions = array<i32: 1>} : vector<1024x32xi32>
    %c32_i32 = arith.constant 32 : i32
    %214 = vector.broadcast %c32_i32 : i32 to vector<1024x32xi32>
    %215 = arith.muli %213, %214 : vector<1024x32xi32>
    %216 = arith.cmpi sge, %212, %215 : vector<1024x32xi32>
    %c32_i32_141 = arith.constant 32 : i32
    %217 = vector.broadcast %c32_i32_141 : i32 to vector<1024x32xi32>
    %218 = arith.addi %215, %217 : vector<1024x32xi32>
    %219 = arith.cmpi slt, %212, %218 : vector<1024x32xi32>
    %220 = arith.andi %216, %219 : vector<1024x32xi1>
    %221 = arith.extui %220 : vector<1024x32xi1> to vector<1024x32xi32>
    %222 = arith.sitofp %221 : vector<1024x32xi32> to vector<1024x32xf32>
    %cst_142 = arith.constant dense<0.000000e+00> : vector<1x32xf32>
    %223 = tpu.matmul %211, %222, %cst_142 {dimension_numbers = #tpu.dot_dimension_numbers<[1], [0], [0], [1], [0, 0, 1, 1], [], []>} : vector<1x1024xf32>, vector<1024x32xf32>, vector<1x32xf32> -> vector<1x32xf32>
    %c0_143 = arith.constant 0 : index
    %c0_144 = arith.constant 0 : index
    %224 = vector.load %arg3[%c0_143, %c0_144] : memref<1x1024xf32, #tpu.memory_space<vmem>>, vector<1x1024xf32>
    %cst_145 = arith.constant dense<0.000000e+00> : vector<1x32xf32>
    %225 = tpu.matmul %224, %222, %cst_145 {dimension_numbers = #tpu.dot_dimension_numbers<[1], [0], [0], [1], [0, 0, 1, 1], [], []>} : vector<1x1024xf32>, vector<1024x32xf32>, vector<1x32xf32> -> vector<1x32xf32>
    %cst_146 = arith.constant 0.000000e+00 : f32
    %226 = vector.broadcast %cst_146 : f32 to vector<1x32xf32>
    %227 = arith.cmpf ogt, %225, %226 : vector<1x32xf32>
    %cst_147 = arith.constant 1.000000e+00 : f32
    %228 = vector.broadcast %cst_147 : f32 to vector<1x32xf32>
    %229 = arith.maximumf %225, %228 : vector<1x32xf32>
    %230 = arith.divf %223, %229 : vector<1x32xf32>
    %cst_148 = arith.constant 0.000000e+00 : f32
    %231 = vector.broadcast %cst_148 : f32 to vector<1x32xf32>
    %232 = arith.select %227, %230, %231 : vector<1x32xi1>, vector<1x32xf32>
    %c0_149 = arith.constant 0 : index
    %c0_150 = arith.constant 0 : index
    %233 = vector.load %arg41[%c0_149, %c0_150] : memref<1x32xf32, #tpu.memory_space<vmem>>, vector<1x32xf32>
    tpu.vector_store %arg41[%c0_149, %c0_150], %232 {strides = array<i32>} : memref<1x32xf32, #tpu.memory_space<vmem>>, vector<1x32xf32>,
    return
  }
}

</mosaic_0001>

<llo_original>
// kernel: sharc_forward.1
$region0: #{sharc_forward.1}
  #allocation0 [shape = 'u32[]', space=smem, size = 0x4, offset = 0x4, fixed_abs, tag = 'smem constant byte address 0x4 - core index']
  #allocation1 [shape = 'u32[144,128]{1,0:T(1,128)}', space=vmem, size = 0x12000, scoped, tag = 'internal scratch']
  %s0 = inlined_call_operand.smem [shape: u32[42], index: -1, kind: input, shape index: {}]
  %s1 = sld [smem:[%s0]]
  %s2 = scalar_lea.smem %s0, 1
  %s3 = sld [smem:[%s2]]
  %s4 = scalar_lea.smem %s0, 2
  %s5 = sld [smem:[%s4]]
  %s6 = scalar_lea.smem %s0, 3
  %s7 = sld [smem:[%s6]]
  %s8 = scalar_lea.smem %s0, 4
  %s9 = sld [smem:[%s8]]
  %s10 = scalar_lea.smem %s0, 5
  %s11 = sld [smem:[%s10]]
  %s12 = scalar_lea.smem %s0, 6
  %s13 = sld [smem:[%s12]]
  %s14 = scalar_lea.smem %s0, 7
  %s15 = sld [smem:[%s14]]
  %s16 = scalar_lea.smem %s0, 8
  %s17 = sld [smem:[%s16]]
  %s18 = scalar_lea.smem %s0, 9
  %s19 = sld [smem:[%s18]]
  %s20 = scalar_lea.smem %s0, 10
  %s21 = sld [smem:[%s20]]
  %s22 = scalar_lea.smem %s0, 11
  %s23 = sld [smem:[%s22]]
  %s24 = scalar_lea.smem %s0, 12
  %s25 = sld [smem:[%s24]]
  %s26 = scalar_lea.smem %s0, 13
  %s27 = sld [smem:[%s26]]
  %s28 = scalar_lea.smem %s0, 14
  %s29 = sld [smem:[%s28]]
  %s30 = scalar_lea.smem %s0, 15
  %s31 = sld [smem:[%s30]]
  %s32 = scalar_lea.smem %s0, 16
  %s33 = sld [smem:[%s32]]
  %s34 = scalar_lea.smem %s0, 17
  %s35 = sld [smem:[%s34]]
  %s36 = scalar_lea.smem %s0, 18
  %s37 = sld [smem:[%s36]]
  %s38 = scalar_lea.smem %s0, 19
  %s39 = sld [smem:[%s38]]
  %s40 = scalar_lea.smem %s0, 20
  %s41 = sld [smem:[%s40]]
  %s42 = scalar_lea.smem %s0, 21
  %s43 = sld [smem:[%s42]]
  %s44 = scalar_lea.smem %s0, 22
  %s45 = sld [smem:[%s44]]
  %s46 = scalar_lea.smem %s0, 23
  %s47 = sld [smem:[%s46]]
  %s48 = scalar_lea.smem %s0, 24
  %s49 = sld [smem:[%s48]]
  %s50 = scalar_lea.smem %s0, 25
  %s51 = sld [smem:[%s50]]
  %s52 = scalar_lea.smem %s0, 26
  %s53 = sld [smem:[%s52]]
  %s54 = scalar_lea.smem %s0, 27
  %s55 = sld [smem:[%s54]]
  %s56 = scalar_lea.smem %s0, 28
  %s57 = sld [smem:[%s56]]
  %s58 = scalar_lea.smem %s0, 29
  %s59 = sld [smem:[%s58]]
  %s60 = scalar_lea.smem %s0, 30
  %s61 = sld [smem:[%s60]]
  %s62 = scalar_lea.smem %s0, 31
  %s63 = sld [smem:[%s62]]
  %s64 = scalar_lea.smem %s0, 32
  %s65 = sld [smem:[%s64]]
  %s66 = scalar_lea.smem %s0, 33
  %s67 = sld [smem:[%s66]]
  %s68 = scalar_lea.smem %s0, 34
  %s69 = sld [smem:[%s68]]
  %s70 = scalar_lea.smem %s0, 35
  %s71 = sld [smem:[%s70]]
  %s72 = scalar_lea.smem %s0, 36
  %s73 = sld [smem:[%s72]]
  %s74 = scalar_lea.smem %s0, 37
  %s75 = sld [smem:[%s74]]
  %s76 = scalar_lea.smem %s0, 38
  %s77 = sld [smem:[%s76]]
  %s78 = scalar_lea.smem %s0, 39
  %s79 = sld [smem:[%s78]]
  %s80 = scalar_lea.smem %s0, 40
  %s81 = sld [smem:[%s80]]
  %s82 = scalar_lea.smem %s0, 41
  %s83 = sld [smem:[%s82]]
  %84 = xla_tuple %s77, %s79, %s81, %s83
  %s85 = sld [smem:[#allocation0]]
  $region186: #{sharc_forward.1} parent=0
    _
  %s87 = ssub.s32 1, %s85
  %s88 = scalar_select 0, %s87, %s85
  $region1: #{sharc_forward.1} parent=0
    #allocation2 [shape = 'u8[512]{0}', space=vmem, size = 0x400, scoped, tag = 'output window, operand 3, single buffered']
    #allocation3 [shape = 's32[1]{0}', space=sflag, size = 0x4, scoped, tag = 'scoped memory for sharc_forward.1']
    %89 = vsyncpa [#allocation3], 0
    // Predicated region
    $region2: #{sharc_forward.1} parent=1 // pred_check
      _
    $region3: #{sharc_forward.1} parent=1 // pred_check_branch
      %91 = sbr.rel (0) target = $region5
    $region4: #{sharc_forward.1} parent=1 // pred_region
      _
    $region5: #{sharc_forward.1} parent=1 // pred_fallthru
      _
    // Predicated region
    $region6: #{sharc_forward.1} parent=1 // pred_check
      _
    $region7: #{sharc_forward.1} parent=1 // pred_check_branch
      %93 = sbr.rel (0) target = $region9
    $region8: #{sharc_forward.1} parent=1 // pred_region
      _
    $region9: #{sharc_forward.1} parent=1 // pred_fallthru
      _
    // Predicated region
    $region10: #{sharc_forward.1} parent=1 // pred_check
      _
    $region11: #{sharc_forward.1} parent=1 // pred_check_branch
      %95 = sbr.rel (0) target = $region13
    $region12: #{sharc_forward.1} parent=1 // pred_region
      _
    $region13: #{sharc_forward.1} parent=1 // pred_fallthru
      _
    // Predicated region
    $region14: #{sharc_forward.1} parent=1 // pred_check
      _
    $region15: #{sharc_forward.1} parent=1 // pred_check_branch
      %97 = sbr.rel (0) target = $region17
    $region16: #{sharc_forward.1} parent=1 // pred_region
      _
    $region17: #{sharc_forward.1} parent=1 // pred_fallthru
      _
    // Predicated region
    $region18: #{sharc_forward.1} parent=1 // pred_check
      _
    $region19: #{sharc_forward.1} parent=1 // pred_check_branch
      %99 = sbr.rel (0) target = $region21
    $region20: #{sharc_forward.1} parent=1 // pred_region
      _
    $region21: #{sharc_forward.1} parent=1 // pred_fallthru
      _
    // Predicated region
    $region22: #{sharc_forward.1} parent=1 // pred_check
      _
    $region23: #{sharc_forward.1} parent=1 // pred_check_branch
      %101 = sbr.rel (0) target = $region25
    $region24: #{sharc_forward.1} parent=1 // pred_region
      _
    $region25: #{sharc_forward.1} parent=1 // pred_fallthru
      _
    // Predicated region
    $region26: #{sharc_forward.1} parent=1 // pred_check
      _
    $region27: #{sharc_forward.1} parent=1 // pred_check_branch
      %103 = sbr.rel (0) target = $region29
    $region28: #{sharc_forward.1} parent=1 // pred_region
      _
    $region29: #{sharc_forward.1} parent=1 // pred_fallthru
      _
    // Predicated region
    $region30: #{sharc_forward.1} parent=1 // pred_check
      _
    $region31: #{sharc_forward.1} parent=1 // pred_check_branch
      %105 = sbr.rel (0) target = $region33
    $region32: #{sharc_forward.1} parent=1 // pred_region
      _
    $region33: #{sharc_forward.1} parent=1 // pred_fallthru
      _
    // Predicated region
    $region34: #{sharc_forward.1} parent=1 // pred_check
      _
    $region35: #{sharc_forward.1} parent=1 // pred_check_branch
      %107 = sbr.rel (0) target = $region37
    $region36: #{sharc_forward.1} parent=1 // pred_region
      _
    $region37: #{sharc_forward.1} parent=1 // pred_fallthru
      _
    // Predicated region
    $region38: #{sharc_forward.1} parent=1 // pred_check
      _
    $region39: #{sharc_forward.1} parent=1 // pred_check_branch
      %109 = sbr.rel (0) target = $region41
    $region40: #{sharc_forward.1} parent=1 // pred_region
      _
    $region41: #{sharc_forward.1} parent=1 // pred_fallthru
      _
    // Predicated region
    $region42: #{sharc_forward.1} parent=1 // pred_check
      _
    $region43: #{sharc_forward.1} parent=1 // pred_check_branch
      %111 = sbr.rel (0) target = $region45
    $region44: #{sharc_forward.1} parent=1 // pred_region
      _
    $region45: #{sharc_forward.1} parent=1 // pred_fallthru
      _
    // Predicated region
    $region46: #{sharc_forward.1} parent=1 // pred_check
      _
    $region47: #{sharc_forward.1} parent=1 // pred_check_branch
      %113 = sbr.rel (0) target = $region49
    $region48: #{sharc_forward.1} parent=1 // pred_region
      _
    $region49: #{sharc_forward.1} parent=1 // pred_fallthru
      _
    // Predicated region
    $region50: #{sharc_forward.1} parent=1 // pred_check
      _
    $region51: #{sharc_forward.1} parent=1 // pred_check_branch
      %115 = sbr.rel (0) target = $region53
    $region52: #{sharc_forward.1} parent=1 // pred_region
      _
    $region53: #{sharc_forward.1} parent=1 // pred_fallthru
      _
    // Predicated region
    $region54: #{sharc_forward.1} parent=1 // pred_check
      _
    $region55: #{sharc_forward.1} parent=1 // pred_check_branch
      %117 = sbr.rel (0) target = $region57
    $region56: #{sharc_forward.1} parent=1 // pred_region
      _
    $region57: #{sharc_forward.1} parent=1 // pred_fallthru
      _
    // Predicated region
    $region58: #{sharc_forward.1} parent=1 // pred_check
      _
    $region59: #{sharc_forward.1} parent=1 // pred_check_branch
      %119 = sbr.rel (0) target = $region61
    $region60: #{sharc_forward.1} parent=1 // pred_region
      _
    $region61: #{sharc_forward.1} parent=1 // pred_fallthru
      _
    // Predicated region
    $region62: #{sharc_forward.1} parent=1 // pred_check
      _
    $region63: #{sharc_forward.1} parent=1 // pred_check_branch
      %121 = sbr.rel (0) target = $region65
    $region64: #{sharc_forward.1} parent=1 // pred_region
      _
    $region65: #{sharc_forward.1} parent=1 // pred_fallthru
      _
    // Predicated region
    $region66: #{sharc_forward.1} parent=1 // pred_check
      _
    $region67: #{sharc_forward.1} parent=1 // pred_check_branch
      %123 = sbr.rel (0) target = $region69
    $region68: #{sharc_forward.1} parent=1 // pred_region
      _
    $region69: #{sharc_forward.1} parent=1 // pred_fallthru
      _
    // Predicated region
    $region70: #{sharc_forward.1} parent=1 // pred_check
      _
    $region71: #{sharc_forward.1} parent=1 // pred_check_branch
      %125 = sbr.rel (0) target = $region73
    $region72: #{sharc_forward.1} parent=1 // pred_region
      _
    $region73: #{sharc_forward.1} parent=1 // pred_fallthru
      _
    // Predicated region
    $region74: #{sharc_forward.1} parent=1 // pred_check
      _
    $region75: #{sharc_forward.1} parent=1 // pred_check_branch
      %127 = sbr.rel (0) target = $region77
    $region76: #{sharc_forward.1} parent=1 // pred_region
      _
    $region77: #{sharc_forward.1} parent=1 // pred_fallthru
      _
    // Predicated region
    $region78: #{sharc_forward.1} parent=1 // pred_check
      _
    $region79: #{sharc_forward.1} parent=1 // pred_check_branch
      %129 = sbr.rel (0) target = $region81
    $region80: #{sharc_forward.1} parent=1 // pred_region
      _
    $region81: #{sharc_forward.1} parent=1 // pred_fallthru
      _
    // Predicated region
    $region82: #{sharc_forward.1} parent=1 // pred_check
      _
    $region83: #{sharc_forward.1} parent=1 // pred_check_branch
      %131 = sbr.rel (0) target = $region85
    $region84: #{sharc_forward.1} parent=1 // pred_region
      _
    $region85: #{sharc_forward.1} parent=1 // pred_fallthru
      _
    // Predicated region
    $region86: #{sharc_forward.1} parent=1 // pred_check
      _
    $region87: #{sharc_forward.1} parent=1 // pred_check_branch
      %133 = sbr.rel (0) target = $region89
    $region88: #{sharc_forward.1} parent=1 // pred_region
      _
    $region89: #{sharc_forward.1} parent=1 // pred_fallthru
      _
    // Predicated region
    $region90: #{sharc_forward.1} parent=1 // pred_check
      _
    $region91: #{sharc_forward.1} parent=1 // pred_check_branch
      %135 = sbr.rel (0) target = $region93
    $region92: #{sharc_forward.1} parent=1 // pred_region
      _
    $region93: #{sharc_forward.1} parent=1 // pred_fallthru
      _
    // Predicated region
    $region94: #{sharc_forward.1} parent=1 // pred_check
      _
    $region95: #{sharc_forward.1} parent=1 // pred_check_branch
      %137 = sbr.rel (0) target = $region97
    $region96: #{sharc_forward.1} parent=1 // pred_region
      _
    $region97: #{sharc_forward.1} parent=1 // pred_fallthru
      _
    // Predicated region
    $region98: #{sharc_forward.1} parent=1 // pred_check
      _
    $region99: #{sharc_forward.1} parent=1 // pred_check_branch
      %139 = sbr.rel (0) target = $region101
    $region100: #{sharc_forward.1} parent=1 // pred_region
      _
    $region101: #{sharc_forward.1} parent=1 // pred_fallthru
      _
    // Predicated region
    $region102: #{sharc_forward.1} parent=1 // pred_check
      _
    $region103: #{sharc_forward.1} parent=1 // pred_check_branch
      %141 = sbr.rel (0) target = $region105
    $region104: #{sharc_forward.1} parent=1 // pred_region
      _
    $region105: #{sharc_forward.1} parent=1 // pred_fallthru
      _
    // Predicated region
    $region106: #{sharc_forward.1} parent=1 // pred_check
      _
    $region107: #{sharc_forward.1} parent=1 // pred_check_branch
      %143 = sbr.rel (0) target = $region109
    $region108: #{sharc_forward.1} parent=1 // pred_region
      _
    $region109: #{sharc_forward.1} parent=1 // pred_fallthru
      _
    // Predicated region
    $region110: #{sharc_forward.1} parent=1 // pred_check
      _
    $region111: #{sharc_forward.1} parent=1 // pred_check_branch
      %145 = sbr.rel (0) target = $region113
    $region112: #{sharc_forward.1} parent=1 // pred_region
      _
    $region113: #{sharc_forward.1} parent=1 // pred_fallthru
      _
    // Predicated region
    $region114: #{sharc_forward.1} parent=1 // pred_check
      _
    $region115: #{sharc_forward.1} parent=1 // pred_check_branch
      %147 = sbr.rel (0) target = $region117
    $region116: #{sharc_forward.1} parent=1 // pred_region
      _
    $region117: #{sharc_forward.1} parent=1 // pred_fallthru
      _
    // Predicated region
    $region118: #{sharc_forward.1} parent=1 // pred_check
      _
    $region119: #{sharc_forward.1} parent=1 // pred_check_branch
      %149 = sbr.rel (0) target = $region121
    $region120: #{sharc_forward.1} parent=1 // pred_region
      _
    $region121: #{sharc_forward.1} parent=1 // pred_fallthru
      _
    // Predicated region
    $region122: #{sharc_forward.1} parent=1 // pred_check
      _
    $region123: #{sharc_forward.1} parent=1 // pred_check_branch
      %151 = sbr.rel (0) target = $region125
    $region124: #{sharc_forward.1} parent=1 // pred_region
      _
    $region125: #{sharc_forward.1} parent=1 // pred_fallthru
      _
    // Predicated region
    $region126: #{sharc_forward.1} parent=1 // pred_check
      _
    $region127: #{sharc_forward.1} parent=1 // pred_check_branch
      %153 = sbr.rel (0) target = $region129
    $region128: #{sharc_forward.1} parent=1 // pred_region
      _
    $region129: #{sharc_forward.1} parent=1 // pred_fallthru
      _
    // Predicated region
    $region130: #{sharc_forward.1} parent=1 // pred_check
      _
    $region131: #{sharc_forward.1} parent=1 // pred_check_branch
      %155 = sbr.rel (0) target = $region133
    $region132: #{sharc_forward.1} parent=1 // pred_region
      _
    $region133: #{sharc_forward.1} parent=1 // pred_fallthru
      _
    // Predicated region
    $region134: #{sharc_forward.1} parent=1 // pred_check
      _
    $region135: #{sharc_forward.1} parent=1 // pred_check_branch
      %157 = sbr.rel (0) target = $region137
    $region136: #{sharc_forward.1} parent=1 // pred_region
      _
    $region137: #{sharc_forward.1} parent=1 // pred_fallthru
      _
    // Predicated region
    $region138: #{sharc_forward.1} parent=1 // pred_check
      _
    $region139: #{sharc_forward.1} parent=1 // pred_check_branch
      %159 = sbr.rel (0) target = $region141
    $region140: #{sharc_forward.1} parent=1 // pred_region
      _
    $region141: #{sharc_forward.1} parent=1 // pred_fallthru
      _
    // Predicated region
    $region142: #{sharc_forward.1} parent=1 // pred_check
      _
    $region143: #{sharc_forward.1} parent=1 // pred_check_branch
      %161 = sbr.rel (0) target = $region145
    $region144: #{sharc_forward.1} parent=1 // pred_region
      _
    $region145: #{sharc_forward.1} parent=1 // pred_fallthru
      _
    // Predicated region
    $region146: #{sharc_forward.1} parent=1 // pred_check
      _
    $region147: #{sharc_forward.1} parent=1 // pred_check_branch
      %163 = sbr.rel (0) target = $region149
    $region148: #{sharc_forward.1} parent=1 // pred_region
      _
    $region149: #{sharc_forward.1} parent=1 // pred_fallthru
      _
    // Predicated region
    $region150: #{sharc_forward.1} parent=1 // pred_check
      _
    $region151: #{sharc_forward.1} parent=1 // pred_check_branch
      %165 = sbr.rel (0) target = $region153
    $region152: #{sharc_forward.1} parent=1 // pred_region
      _
    $region153: #{sharc_forward.1} parent=1 // pred_fallthru
      _
    %v166 = vld [vmem:[%s3] sm:$0xff]
    %v167 = vld [vmem:[%s3 + $0x8] sm:$0xff]
    %v168 = vld [vmem:[%s3 + $0x10] sm:$0xff]
    %v169 = vld [vmem:[%s3 + $0x18] sm:$0xff]
    %vm170 = vcmp.gt.f32.partialorder %v166, 0.0
    %vm171 = vcmp.gt.f32.partialorder %v167, 0.0
    %vm172 = vcmp.gt.f32.partialorder %v168, 0.0
    %vm173 = vcmp.gt.f32.partialorder %v169, 0.0
    %v174 = vld [vmem:[%s1] sm:$0xff]
    %v175 = vld [vmem:[%s1 + $0x8] sm:$0xff]
    %v176 = vld [vmem:[%s1 + $0x10] sm:$0xff]
    %v177 = vld [vmem:[%s1 + $0x18] sm:$0xff]
    %v178 = vld [vmem:[%s9] sm:$0xff]
    %v179 = vld [vmem:[%s9 + $0x8] sm:$0xff]
    %v180 = vld [vmem:[%s9 + $0x10] sm:$0xff]
    %v181 = vld [vmem:[%s9 + $0x18] sm:$0xff]
    %v182 = vld [vmem:[%s9 + $0x20] sm:$0xff]
    %v183 = vld [vmem:[%s9 + $0x28] sm:$0xff]
    %v184 = vld [vmem:[%s9 + $0x30] sm:$0xff]
    %v185 = vld [vmem:[%s9 + $0x38] sm:$0xff]
    %vm186 = vcmask 523264
    %v188 = vsel %vm186, %v174, 0
    %v191 = vsel %vm186, %v175, 0
    %v194 = vsel %vm186, %v176, 0
    %v197 = vsel %vm186, %v177, 0
    %199 = vmatprep.subr.mxu0 0.0
    %200 = vmatpush1.msra.mxu0 0.0
    %201 = vmatprep.subr.mxu0 0.0
    %202 = vmatpush1.msra.mxu0 0.0
    %203 = vmatprep.subr.mxu0 0.0
    %204 = vmatpush1.msra.mxu0 0.0
    %205 = vmatprep.subr.mxu0 0.0
    %206 = vmatpush1.msra.mxu0 0.0
    %207 = vmatprep.subr.mxu0 0.0
    %208 = vmatpush1.msra.mxu0 0.0
    %209 = vmatprep.subr.mxu0 0.0
    %210 = vmatpush1.msra.mxu0 0.0
    %211 = vmatprep.subr.mxu0 0.0
    %212 = vmatpush1.msra.mxu0 0.0
    %213 = vmatprep.subr.mxu0 0.0
    %214 = vmatpush1.msra.mxu0 0.0
    %215 = vmatprep.subr.mxu0 0.0
    %216 = vmatpush1.msra.mxu0 %v185
    %217 = vmatprep.subr.mxu0 0.0
    %218 = vmatpush1.msra.mxu0 %v184
    %219 = vmatprep.subr.mxu0 0.0
    %220 = vmatpush1.msra.mxu0 %v183
    %221 = vmatprep.subr.mxu0 0.0
    %222 = vmatpush1.msra.mxu0 %v182
    %223 = vmatprep.subr.mxu0 0.0
    %224 = vmatpush1.msra.mxu0 %v181
    %225 = vmatprep.subr.mxu0 0.0
    %226 = vmatpush1.msra.mxu0 %v180
    %227 = vmatprep.subr.mxu0 0.0
    %228 = vmatpush1.msra.mxu0 %v179
    %229 = vmatprep.subr.mxu0 0.0
    %230 = vmatpush1.msra.mxu0 %v178
    %231 = vmatprep.subr.mxu0 0.0
    %232 = vmatpush2.msra.mxu0 0.0
    %233 = vmatprep.subr.mxu0 0.0
    %234 = vmatpush2.msra.mxu0 0.0
    %235 = vmatprep.subr.mxu0 0.0
    %236 = vmatpush2.msra.mxu0 0.0
    %237 = vmatprep.subr.mxu0 0.0
    %238 = vmatpush2.msra.mxu0 0.0
    %239 = vmatprep.subr.mxu0 0.0
    %240 = vmatpush2.msra.mxu0 0.0
    %241 = vmatprep.subr.mxu0 0.0
    %242 = vmatpush2.msra.mxu0 0.0
    %243 = vmatprep.subr.mxu0 0.0
    %244 = vmatpush2.msra.mxu0 0.0
    %245 = vmatprep.subr.mxu0 0.0
    %246 = vmatpush2.msra.mxu0 0.0
    %247 = vmatprep.subr.mxu0 0.0
    %248 = vmatpush2.msra.mxu0 0.0
    %249 = vmatprep.subr.mxu0 0.0
    %250 = vmatpush2.msra.mxu0 0.0
    %251 = vmatprep.subr.mxu0 0.0
    %252 = vmatpush2.msra.mxu0 0.0
    %253 = vmatprep.subr.mxu0 0.0
    %254 = vmatpush2.msra.mxu0 0.0
    %255 = vmatprep.subr.mxu0 0.0
    %256 = vmatpush2.msra.mxu0 0.0
    %257 = vmatprep.subr.mxu0 0.0
    %258 = vmatpush2.msra.mxu0 0.0
    %259 = vmatprep.subr.mxu0 0.0
    %260 = vmatpush2.msra.mxu0 0.0
    %261 = vmatprep.subr.mxu0 0.0
    %262 = vmatpush2.msra.mxu0 0.0
    %263 = vmatprep.mubr.f32.mxu0 0.0
    %264 = vmatmul.mubr.f32.gmra.mxu0 %v188
    %v265 = vpop.f32.mrf.mxu0
    %v266 = vadd.f32 0.0, %v265
    %v267 = vpop.f32.mrf.mxu0
    %268 = vmatprep.mubr.f32.mxu0 0.0
    %269 = vmatmul.mubr.f32.gmra.mxu0 %v191
    %v270 = vpop.f32.mrf.mxu0
    %v271 = vadd.f32 0.0, %v270
    %v272 = vpop.f32.mrf.mxu0
    %273 = vmatprep.mubr.f32.mxu0 0.0
    %274 = vmatmul.mubr.f32.gmra.mxu0 %v194
    %v275 = vpop.f32.mrf.mxu0
    %v276 = vadd.f32 0.0, %v275
    %v277 = vpop.f32.mrf.mxu0
    %278 = vmatprep.mubr.f32.mxu0 0.0
    %279 = vmatmul.mubr.f32.gmra.mxu0 %v197
    %v280 = vpop.f32.mrf.mxu0
    %v281 = vadd.f32 0.0, %v280
    %v282 = vpop.f32.mrf.mxu0
    %283 = vdwg.mxu0
    %v284 = vld [vmem:[%s13] sm:$0xff]
    %v285 = vld [vmem:[%s13 + $0x8] sm:$0xff]
    %v286 = vld [vmem:[%s13 + $0x10] sm:$0xff]
    %v287 = vld [vmem:[%s13 + $0x18] sm:$0xff]
    %v288 = vld [vmem:[%s13 + $0x20] sm:$0xff]
    %v289 = vld [vmem:[%s13 + $0x28] sm:$0xff]
    %v290 = vld [vmem:[%s13 + $0x30] sm:$0xff]
    %v291 = vld [vmem:[%s13 + $0x38] sm:$0xff]
    %v293 = vsel %vm186, %v266, 0
    %v296 = vsel %vm186, %v271, 0
    %v299 = vsel %vm186, %v276, 0
    %v302 = vsel %vm186, %v281, 0
    %304 = vmatprep.subr.mxu0 0.0
    %305 = vmatpush1.msra.mxu0 0.0
    %306 = vmatprep.subr.mxu0 0.0
    %307 = vmatpush1.msra.mxu0 0.0
    %308 = vmatprep.subr.mxu0 0.0
    %309 = vmatpush1.msra.mxu0 0.0
    %310 = vmatprep.subr.mxu0 0.0
    %311 = vmatpush1.msra.mxu0 0.0
    %312 = vmatprep.subr.mxu0 0.0
    %313 = vmatpush1.msra.mxu0 0.0
    %314 = vmatprep.subr.mxu0 0.0
    %315 = vmatpush1.msra.mxu0 0.0
    %316 = vmatprep.subr.mxu0 0.0
    %317 = vmatpush1.msra.mxu0 0.0
    %318 = vmatprep.subr.mxu0 0.0
    %319 = vmatpush1.msra.mxu0 0.0
    %320 = vmatprep.subr.mxu0 0.0
    %321 = vmatpush1.msra.mxu0 %v291
    %322 = vmatprep.subr.mxu0 0.0
    %323 = vmatpush1.msra.mxu0 %v290
    %324 = vmatprep.subr.mxu0 0.0
    %325 = vmatpush1.msra.mxu0 %v289
    %326 = vmatprep.subr.mxu0 0.0
    %327 = vmatpush1.msra.mxu0 %v288
    %328 = vmatprep.subr.mxu0 0.0
    %329 = vmatpush1.msra.mxu0 %v287
    %330 = vmatprep.subr.mxu0 0.0
    %331 = vmatpush1.msra.mxu0 %v286
    %332 = vmatprep.subr.mxu0 0.0
    %333 = vmatpush1.msra.mxu0 %v285
    %334 = vmatprep.subr.mxu0 0.0
    %335 = vmatpush1.msra.mxu0 %v284
    %336 = vmatprep.subr.mxu0 0.0
    %337 = vmatpush2.msra.mxu0 0.0
    %338 = vmatprep.subr.mxu0 0.0
    %339 = vmatpush2.msra.mxu0 0.0
    %340 = vmatprep.subr.mxu0 0.0
    %341 = vmatpush2.msra.mxu0 0.0
    %342 = vmatprep.subr.mxu0 0.0
    %343 = vmatpush2.msra.mxu0 0.0
    %344 = vmatprep.subr.mxu0 0.0
    %345 = vmatpush2.msra.mxu0 0.0
    %346 = vmatprep.subr.mxu0 0.0
    %347 = vmatpush2.msra.mxu0 0.0
    %348 = vmatprep.subr.mxu0 0.0
    %349 = vmatpush2.msra.mxu0 0.0
    %350 = vmatprep.subr.mxu0 0.0
    %351 = vmatpush2.msra.mxu0 0.0
    %352 = vmatprep.subr.mxu0 0.0
    %353 = vmatpush2.msra.mxu0 0.0
    %354 = vmatprep.subr.mxu0 0.0
    %355 = vmatpush2.msra.mxu0 0.0
    %356 = vmatprep.subr.mxu0 0.0
    %357 = vmatpush2.msra.mxu0 0.0
    %358 = vmatprep.subr.mxu0 0.0
    %359 = vmatpush2.msra.mxu0 0.0
    %360 = vmatprep.subr.mxu0 0.0
    %361 = vmatpush2.msra.mxu0 0.0
    %362 = vmatprep.subr.mxu0 0.0
    %363 = vmatpush2.msra.mxu0 0.0
    %364 = vmatprep.subr.mxu0 0.0
    %365 = vmatpush2.msra.mxu0 0.0
    %366 = vmatprep.subr.mxu0 0.0
    %367 = vmatpush2.msra.mxu0 0.0
    %368 = vmatprep.mubr.f32.mxu0 0.0
    %369 = vmatmul.mubr.f32.gmra.mxu0 %v293
    %v370 = vpop.f32.mrf.mxu0
    %v371 = vadd.f32 0.0, %v370
    %v372 = vpop.f32.mrf.mxu0
    %373 = vmatprep.mubr.f32.mxu0 0.0
    %374 = vmatmul.mubr.f32.gmra.mxu0 %v296
    %v375 = vpop.f32.mrf.mxu0
    %v376 = vadd.f32 0.0, %v375
    %v377 = vpop.f32.mrf.mxu0
    %378 = vmatprep.mubr.f32.mxu0 0.0
    %379 = vmatmul.mubr.f32.gmra.mxu0 %v299
    %v380 = vpop.f32.mrf.mxu0
    %v381 = vadd.f32 0.0, %v380
    %v382 = vpop.f32.mrf.mxu0
    %383 = vmatprep.mubr.f32.mxu0 0.0
    %384 = vmatmul.mubr.f32.gmra.mxu0 %v302
    %v385 = vpop.f32.mrf.mxu0
    %v386 = vadd.f32 0.0, %v385
    %v387 = vpop.f32.mrf.mxu0
    %388 = vdwg.mxu0
    %v389 = vld [vmem:[%s11] sm:$0x1]
    %v391 = vsel %vm186, %v389, 0
    %393 = vmatprep.subr.mxu0 0.0
    %394 = vmatpush1.xpose.msra.mxu0 0.0
    %395 = vmatprep.subr.mxu0 0.0
    %396 = vmatpush1.xpose.msra.mxu0 0.0
    %397 = vmatprep.subr.mxu0 0.0
    %398 = vmatpush1.xpose.msra.mxu0 0.0
    %399 = vmatprep.subr.mxu0 0.0
    %400 = vmatpush1.xpose.msra.mxu0 0.0
    %401 = vmatprep.subr.mxu0 0.0
    %402 = vmatpush1.xpose.msra.mxu0 0.0
    %403 = vmatprep.subr.mxu0 0.0
    %404 = vmatpush1.xpose.msra.mxu0 0.0
    %405 = vmatprep.subr.mxu0 0.0
    %406 = vmatpush1.xpose.msra.mxu0 0.0
    %407 = vmatprep.subr.mxu0 0.0
    %408 = vmatpush1.xpose.msra.mxu0 0.0
    %409 = vmatprep.subr.mxu0 0.0
    %410 = vmatpush1.xpose.msra.mxu0 0.0
    %411 = vmatprep.subr.mxu0 0.0
    %412 = vmatpush1.xpose.msra.mxu0 0.0
    %413 = vmatprep.subr.mxu0 0.0
    %414 = vmatpush1.xpose.msra.mxu0 0.0
    %415 = vmatprep.subr.mxu0 0.0
    %416 = vmatpush1.xpose.msra.mxu0 0.0
    %417 = vmatprep.subr.mxu0 0.0
    %418 = vmatpush1.xpose.msra.mxu0 %v302
    %419 = vmatprep.subr.mxu0 0.0
    %420 = vmatpush1.xpose.msra.mxu0 %v299
    %421 = vmatprep.subr.mxu0 0.0
    %422 = vmatpush1.xpose.msra.mxu0 %v296
    %423 = vmatprep.subr.mxu0 0.0
    %424 = vmatpush1.xpose.msra.mxu0 %v293
    %425 = vmatprep.subr.mxu0 0.0
    %426 = vmatpush2.xpose.msra.mxu0 0.0
    %427 = vmatprep.subr.mxu0 0.0
    %428 = vmatpush2.xpose.msra.mxu0 0.0
    %429 = vmatprep.subr.mxu0 0.0
    %430 = vmatpush2.xpose.msra.mxu0 0.0
    %431 = vmatprep.subr.mxu0 0.0
    %432 = vmatpush2.xpose.msra.mxu0 0.0
    %433 = vmatprep.subr.mxu0 0.0
    %434 = vmatpush2.xpose.msra.mxu0 0.0
    %435 = vmatprep.subr.mxu0 0.0
    %436 = vmatpush2.xpose.msra.mxu0 0.0
    %437 = vmatprep.subr.mxu0 0.0
    %438 = vmatpush2.xpose.msra.mxu0 0.0
    %439 = vmatprep.subr.mxu0 0.0
    %440 = vmatpush2.xpose.msra.mxu0 0.0
    %441 = vmatprep.subr.mxu0 0.0
    %442 = vmatpush2.xpose.msra.mxu0 0.0
    %443 = vmatprep.subr.mxu0 0.0
    %444 = vmatpush2.xpose.msra.mxu0 0.0
    %445 = vmatprep.subr.mxu0 0.0
    %446 = vmatpush2.xpose.msra.mxu0 0.0
    %447 = vmatprep.subr.mxu0 0.0
    %448 = vmatpush2.xpose.msra.mxu0 0.0
    %449 = vmatprep.subr.mxu0 0.0
    %450 = vmatpush2.xpose.msra.mxu0 0.0
    %451 = vmatprep.subr.mxu0 0.0
    %452 = vmatpush2.xpose.msra.mxu0 0.0
    %453 = vmatprep.subr.mxu0 0.0
    %454 = vmatpush2.xpose.msra.mxu0 0.0
    %455 = vmatprep.subr.mxu0 0.0
    %456 = vmatpush2.xpose.msra.mxu0 0.0
    %457 = vmatprep.mubr.f32.mxu0 0.0
    %458 = vmatmul.mubr.f32.gmra.mxu0 %v391
    %v459 = vpop.f32.mrf.mxu0
    %v460 = vadd.f32 0.0, %v459
    %v461 = vpop.f32.mrf.mxu0
    %462 = vdwg.mxu0
    %464 = vset.pattern.permute.xlu0 0
    %465 = vperm.xlu0 %464, %v371
    %v466 = vpop.permute.xlu0 %465
    %469 = vset.pattern.permute.xlu0 0
    %470 = vperm.xlu0 %469, %v376
    %v471 = vpop.permute.xlu0 %470
    %474 = vset.pattern.permute.xlu0 0
    %475 = vperm.xlu0 %474, %v381
    %v476 = vpop.permute.xlu0 %475
    %479 = vset.pattern.permute.xlu0 0
    %480 = vperm.xlu0 %479, %v386
    %v481 = vpop.permute.xlu0 %480
    %v483 = vlaneseq
    %v484 = vshrl.u32 %v483, 7
    %v485 = vsub.s32 0, %v484
    %v486 = vrot.slane %v460, %v485
    %v487 = vadd.f32 %v466, %v486
    %v488 = vadd.f32 %v471, %v486
    %v489 = vadd.f32 %v476, %v486
    %v490 = vadd.f32 %v481, %v486
    %vm491 = vcmp.gt.f32.partialorder %v487, 0.0
    %vm492 = vcmp.gt.f32.partialorder %v488, 0.0
    %vm493 = vcmp.gt.f32.partialorder %v489, 0.0
    %vm494 = vcmp.gt.f32.partialorder %v490, 0.0
    %v495 = vmul.f32 %v487, 0.2
    %v496 = vmul.f32 %v488, 0.2
    %v497 = vmul.f32 %v489, 0.2
    %v498 = vmul.f32 %v490, 0.2
    %v499 = vsel %vm491, %v487, %v495
    %v500 = vsel %vm492, %v488, %v496
    %v501 = vsel %vm493, %v489, %v497
    %v502 = vsel %vm494, %v490, %v498
    %v503 = vsel %vm170, %v499, -1e+30
    %v504 = vsel %vm171, %v500, -1e+30
    %v505 = vsel %vm172, %v501, -1e+30
    %v506 = vsel %vm173, %v502, -1e+30
    %vm507 = vcmask 261120
    %v508 = vsel %vm507, %v503, -inf
    %509 = vmax.xlane.f32.xlu0 %v508
    %v510 = vpop.xlane.xlu0 %509
    %v511 = vsel %vm507, %v504, -inf
    %512 = vmax.xlane.f32.xlu0 %v511
    %v513 = vpop.xlane.xlu0 %512
    %v514 = vsel %vm507, %v505, -inf
    %515 = vmax.xlane.f32.xlu0 %v514
    %v516 = vpop.xlane.xlu0 %515
    %v517 = vsel %vm507, %v506, -inf
    %518 = vmax.xlane.f32.xlu0 %v517
    %v519 = vpop.xlane.xlu0 %518
    %v520 = vsub.f32 %v503, %v510
    %v521 = vsub.f32 %v504, %v513
    %v522 = vsub.f32 %v505, %v516
    %v523 = vsub.f32 %v506, %v519
    %v524 = vmul.f32 %v520, 1.442695
    %v525 = vpow.pop %v524
    %v526 = vmul.f32 %v521, 1.442695
    %v527 = vpow.pop %v526
    %v528 = vmul.f32 %v522, 1.442695
    %v529 = vpow.pop %v528
    %v530 = vmul.f32 %v523, 1.442695
    %v531 = vpow.pop %v530
    %v532 = vsel %vm507, %v525, 0.0
    %533 = vadd.xlane.f32.xlu0 %v532
    %v534 = vpop.xlane.xlu0 %533
    %v535 = vsel %vm507, %v527, 0.0
    %536 = vadd.xlane.f32.xlu0 %v535
    %v537 = vpop.xlane.xlu0 %536
    %v538 = vsel %vm507, %v529, 0.0
    %539 = vadd.xlane.f32.xlu0 %v538
    %v540 = vpop.xlane.xlu0 %539
    %v541 = vsel %vm507, %v531, 0.0
    %542 = vadd.xlane.f32.xlu0 %v541
    %v543 = vpop.xlane.xlu0 %542
    %v544 = vrcp.pop %v534
    %v545 = vrcp.pop %v537
    %v546 = vrcp.pop %v540
    %v547 = vrcp.pop %v543
    %v549 = vsel %vm507, %v525, 0
    %v552 = vsel %vm507, %v527, 0
    %v555 = vsel %vm507, %v529, 0
    %v558 = vsel %vm507, %v531, 0
    %560 = vmatprep.subr.mxu0 0.0
    %561 = vmatpush1.msra.mxu0 0.0
    %562 = vmatprep.subr.mxu0 0.0
    %563 = vmatpush1.msra.mxu0 0.0
    %564 = vmatprep.subr.mxu0 0.0
    %565 = vmatpush1.msra.mxu0 0.0
    %566 = vmatprep.subr.mxu0 0.0
    %567 = vmatpush1.msra.mxu0 0.0
    %568 = vmatprep.subr.mxu0 0.0
    %569 = vmatpush1.msra.mxu0 0.0
    %570 = vmatprep.subr.mxu0 0.0
    %571 = vmatpush1.msra.mxu0 0.0
    %572 = vmatprep.subr.mxu0 0.0
    %573 = vmatpush1.msra.mxu0 0.0
    %574 = vmatprep.subr.mxu0 0.0
    %575 = vmatpush1.msra.mxu0 0.0
    %576 = vmatprep.subr.mxu0 0.0
    %577 = vmatpush1.msra.mxu0 0.0
    %578 = vmatprep.subr.mxu0 0.0
    %579 = vmatpush1.msra.mxu0 0.0
    %580 = vmatprep.subr.mxu0 0.0
    %581 = vmatpush1.msra.mxu0 0.0
    %582 = vmatprep.subr.mxu0 0.0
    %583 = vmatpush1.msra.mxu0 0.0
    %584 = vmatprep.subr.mxu0 0.0
    %585 = vmatpush1.msra.mxu0 %v281
    %586 = vmatprep.subr.mxu0 0.0
    %587 = vmatpush1.msra.mxu0 %v276
    %588 = vmatprep.subr.mxu0 0.0
    %589 = vmatpush1.msra.mxu0 %v271
    %590 = vmatprep.subr.mxu0 0.0
    %591 = vmatpush1.msra.mxu0 %v266
    %592 = vmatprep.subr.mxu0 0.0
    %593 = vmatpush2.msra.mxu0 0.0
    %594 = vmatprep.subr.mxu0 0.0
    %595 = vmatpush2.msra.mxu0 0.0
    %596 = vmatprep.subr.mxu0 0.0
    %597 = vmatpush2.msra.mxu0 0.0
    %598 = vmatprep.subr.mxu0 0.0
    %599 = vmatpush2.msra.mxu0 0.0
    %600 = vmatprep.subr.mxu0 0.0
    %601 = vmatpush2.msra.mxu0 0.0
    %602 = vmatprep.subr.mxu0 0.0
    %603 = vmatpush2.msra.mxu0 0.0
    %604 = vmatprep.subr.mxu0 0.0
    %605 = vmatpush2.msra.mxu0 0.0
    %606 = vmatprep.subr.mxu0 0.0
    %607 = vmatpush2.msra.mxu0 0.0
    %608 = vmatprep.subr.mxu0 0.0
    %609 = vmatpush2.msra.mxu0 0.0
    %610 = vmatprep.subr.mxu0 0.0
    %611 = vmatpush2.msra.mxu0 0.0
    %612 = vmatprep.subr.mxu0 0.0
    %613 = vmatpush2.msra.mxu0 0.0
    %614 = vmatprep.subr.mxu0 0.0
    %615 = vmatpush2.msra.mxu0 0.0
    %616 = vmatprep.subr.mxu0 0.0
    %617 = vmatpush2.msra.mxu0 0.0
    %618 = vmatprep.subr.mxu0 0.0
    %619 = vmatpush2.msra.mxu0 0.0
    %620 = vmatprep.subr.mxu0 0.0
    %621 = vmatpush2.msra.mxu0 0.0
    %622 = vmatprep.subr.mxu0 0.0
    %623 = vmatpush2.msra.mxu0 0.0
    %624 = vmatprep.mubr.f32.mxu0 0.0
    %625 = vmatmul.mubr.f32.gmra.mxu0 %v549
    %v626 = vpop.f32.mrf.mxu0
    %v627 = vadd.f32 0.0, %v626
    %v628 = vpop.f32.mrf.mxu0
    %629 = vmatprep.mubr.f32.mxu0 0.0
    %630 = vmatmul.mubr.f32.gmra.mxu0 %v552
    %v631 = vpop.f32.mrf.mxu0
    %v632 = vadd.f32 0.0, %v631
    %v633 = vpop.f32.mrf.mxu0
    %634 = vmatprep.mubr.f32.mxu0 0.0
    %635 = vmatmul.mubr.f32.gmra.mxu0 %v555
    %v636 = vpop.f32.mrf.mxu0
    %v637 = vadd.f32 0.0, %v636
    %v638 = vpop.f32.mrf.mxu0
    %639 = vmatprep.mubr.f32.mxu0 0.0
    %640 = vmatmul.mubr.f32.gmra.mxu0 %v558
    %v641 = vpop.f32.mrf.mxu0
    %v642 = vadd.f32 0.0, %v641
    %v643 = vpop.f32.mrf.mxu0
    %644 = vdwg.mxu0
    %v645 = vmul.f32 %v627, %v544
    %v646 = vmul.f32 %v632, %v545
    %v647 = vmul.f32 %v637, %v546
    %v648 = vmul.f32 %v642, %v547
    %v649 = vld [vmem:[%s15] sm:$0xff]
    %v650 = vld [vmem:[%s15 + $0x8] sm:$0xff]
    %v651 = vld [vmem:[%s15 + $0x10] sm:$0xff]
    %v652 = vld [vmem:[%s15 + $0x18] sm:$0xff]
    %v653 = vld [vmem:[%s15 + $0x20] sm:$0xff]
    %v654 = vld [vmem:[%s15 + $0x28] sm:$0xff]
    %v655 = vld [vmem:[%s15 + $0x30] sm:$0xff]
    %v656 = vld [vmem:[%s15 + $0x38] sm:$0xff]
    %v657 = vld [vmem:[%s17] sm:$0xff]
    %v658 = vld [vmem:[%s17 + $0x8] sm:$0xff]
    %v659 = vld [vmem:[%s17 + $0x10] sm:$0xff]
    %v660 = vld [vmem:[%s17 + $0x18] sm:$0xff]
    %v661 = vld [vmem:[%s17 + $0x20] sm:$0xff]
    %v662 = vld [vmem:[%s17 + $0x28] sm:$0xff]
    %v663 = vld [vmem:[%s17 + $0x30] sm:$0xff]
    %v664 = vld [vmem:[%s17 + $0x38] sm:$0xff]
    %v666 = vsel %vm186, %v645, 0
    %v669 = vsel %vm186, %v646, 0
    %v672 = vsel %vm186, %v647, 0
    %v675 = vsel %vm186, %v648, 0
    %677 = vmatprep.subr.mxu0 0.0
    %678 = vmatpush1.msra.mxu0 0.0
    %679 = vmatprep.subr.mxu0 0.0
    %680 = vmatpush1.msra.mxu0 0.0
    %681 = vmatprep.subr.mxu0 0.0
    %682 = vmatpush1.msra.mxu0 0.0
    %683 = vmatprep.subr.mxu0 0.0
    %684 = vmatpush1.msra.mxu0 0.0
    %685 = vmatprep.subr.mxu0 0.0
    %686 = vmatpush1.msra.mxu0 0.0
    %687 = vmatprep.subr.mxu0 0.0
    %688 = vmatpush1.msra.mxu0 0.0
    %689 = vmatprep.subr.mxu0 0.0
    %690 = vmatpush1.msra.mxu0 0.0
    %691 = vmatprep.subr.mxu0 0.0
    %692 = vmatpush1.msra.mxu0 0.0
    %693 = vmatprep.subr.mxu0 0.0
    %694 = vmatpush1.msra.mxu0 %v664
    %695 = vmatprep.subr.mxu0 0.0
    %696 = vmatpush1.msra.mxu0 %v663
    %697 = vmatprep.subr.mxu0 0.0
    %698 = vmatpush1.msra.mxu0 %v662
    %699 = vmatprep.subr.mxu0 0.0
    %700 = vmatpush1.msra.mxu0 %v661
    %701 = vmatprep.subr.mxu0 0.0
    %702 = vmatpush1.msra.mxu0 %v660
    %703 = vmatprep.subr.mxu0 0.0
    %704 = vmatpush1.msra.mxu0 %v659
    %705 = vmatprep.subr.mxu0 0.0
    %706 = vmatpush1.msra.mxu0 %v658
    %707 = vmatprep.subr.mxu0 0.0
    %708 = vmatpush1.msra.mxu0 %v657
    %709 = vmatprep.subr.mxu0 0.0
    %710 = vmatpush2.msra.mxu0 0.0
    %711 = vmatprep.subr.mxu0 0.0
    %712 = vmatpush2.msra.mxu0 0.0
    %713 = vmatprep.subr.mxu0 0.0
    %714 = vmatpush2.msra.mxu0 0.0
    %715 = vmatprep.subr.mxu0 0.0
    %716 = vmatpush2.msra.mxu0 0.0
    %717 = vmatprep.subr.mxu0 0.0
    %718 = vmatpush2.msra.mxu0 0.0
    %719 = vmatprep.subr.mxu0 0.0
    %720 = vmatpush2.msra.mxu0 0.0
    %721 = vmatprep.subr.mxu0 0.0
    %722 = vmatpush2.msra.mxu0 0.0
    %723 = vmatprep.subr.mxu0 0.0
    %724 = vmatpush2.msra.mxu0 0.0
    %725 = vmatprep.subr.mxu0 0.0
    %726 = vmatpush2.msra.mxu0 0.0
    %727 = vmatprep.subr.mxu0 0.0
    %728 = vmatpush2.msra.mxu0 0.0
    %729 = vmatprep.subr.mxu0 0.0
    %730 = vmatpush2.msra.mxu0 0.0
    %731 = vmatprep.subr.mxu0 0.0
    %732 = vmatpush2.msra.mxu0 0.0
    %733 = vmatprep.subr.mxu0 0.0
    %734 = vmatpush2.msra.mxu0 0.0
    %735 = vmatprep.subr.mxu0 0.0
    %736 = vmatpush2.msra.mxu0 0.0
    %737 = vmatprep.subr.mxu0 0.0
    %738 = vmatpush2.msra.mxu0 0.0
    %739 = vmatprep.subr.mxu0 0.0
    %740 = vmatpush2.msra.mxu0 0.0
    %741 = vmatprep.mubr.f32.mxu0 0.0
    %742 = vmatmul.mubr.f32.gmra.mxu0 %v666
    %v743 = vpop.f32.mrf.mxu0
    %v744 = vadd.f32 0.0, %v743
    %v745 = vpop.f32.mrf.mxu0
    %746 = vmatprep.mubr.f32.mxu0 0.0
    %747 = vmatmul.mubr.f32.gmra.mxu0 %v669
    %v748 = vpop.f32.mrf.mxu0
    %v749 = vadd.f32 0.0, %v748
    %v750 = vpop.f32.mrf.mxu0
    %751 = vmatprep.mubr.f32.mxu0 0.0
    %752 = vmatmul.mubr.f32.gmra.mxu0 %v672
    %v753 = vpop.f32.mrf.mxu0
    %v754 = vadd.f32 0.0, %v753
    %v755 = vpop.f32.mrf.mxu0
    %756 = vmatprep.mubr.f32.mxu0 0.0
    %757 = vmatmul.mubr.f32.gmra.mxu0 %v675
    %v758 = vpop.f32.mrf.mxu0
    %v759 = vadd.f32 0.0, %v758
    %v760 = vpop.f32.mrf.mxu0
    %761 = vdwg.mxu0
    %762 = vmatprep.subr.mxu0 0.0
    %763 = vmatpush1.msra.mxu0 0.0
    %764 = vmatprep.subr.mxu0 0.0
    %765 = vmatpush1.msra.mxu0 0.0
    %766 = vmatprep.subr.mxu0 0.0
    %767 = vmatpush1.msra.mxu0 0.0
    %768 = vmatprep.subr.mxu0 0.0
    %769 = vmatpush1.msra.mxu0 0.0
    %770 = vmatprep.subr.mxu0 0.0
    %771 = vmatpush1.msra.mxu0 0.0
    %772 = vmatprep.subr.mxu0 0.0
    %773 = vmatpush1.msra.mxu0 0.0
    %774 = vmatprep.subr.mxu0 0.0
    %775 = vmatpush1.msra.mxu0 0.0
    %776 = vmatprep.subr.mxu0 0.0
    %777 = vmatpush1.msra.mxu0 0.0
    %778 = vmatprep.subr.mxu0 0.0
    %779 = vmatpush1.msra.mxu0 %v656
    %780 = vmatprep.subr.mxu0 0.0
    %781 = vmatpush1.msra.mxu0 %v655
    %782 = vmatprep.subr.mxu0 0.0
    %783 = vmatpush1.msra.mxu0 %v654
    %784 = vmatprep.subr.mxu0 0.0
    %785 = vmatpush1.msra.mxu0 %v653
    %786 = vmatprep.subr.mxu0 0.0
    %787 = vmatpush1.msra.mxu0 %v652
    %788 = vmatprep.subr.mxu0 0.0
    %789 = vmatpush1.msra.mxu0 %v651
    %790 = vmatprep.subr.mxu0 0.0
    %791 = vmatpush1.msra.mxu0 %v650
    %792 = vmatprep.subr.mxu0 0.0
    %793 = vmatpush1.msra.mxu0 %v649
    %794 = vmatprep.subr.mxu0 0.0
    %795 = vmatpush2.msra.mxu0 0.0
    %796 = vmatprep.subr.mxu0 0.0
    %797 = vmatpush2.msra.mxu0 0.0
    %798 = vmatprep.subr.mxu0 0.0
    %799 = vmatpush2.msra.mxu0 0.0
    %800 = vmatprep.subr.mxu0 0.0
    %801 = vmatpush2.msra.mxu0 0.0
    %802 = vmatprep.subr.mxu0 0.0
    %803 = vmatpush2.msra.mxu0 0.0
    %804 = vmatprep.subr.mxu0 0.0
    %805 = vmatpush2.msra.mxu0 0.0
    %806 = vmatprep.subr.mxu0 0.0
    %807 = vmatpush2.msra.mxu0 0.0
    %808 = vmatprep.subr.mxu0 0.0
    %809 = vmatpush2.msra.mxu0 0.0
    %810 = vmatprep.subr.mxu0 0.0
    %811 = vmatpush2.msra.mxu0 0.0
    %812 = vmatprep.subr.mxu0 0.0
    %813 = vmatpush2.msra.mxu0 0.0
    %814 = vmatprep.subr.mxu0 0.0
    %815 = vmatpush2.msra.mxu0 0.0
    %816 = vmatprep.subr.mxu0 0.0
    %817 = vmatpush2.msra.mxu0 0.0
    %818 = vmatprep.subr.mxu0 0.0
    %819 = vmatpush2.msra.mxu0 0.0
    %820 = vmatprep.subr.mxu0 0.0
    %821 = vmatpush2.msra.mxu0 0.0
    %822 = vmatprep.subr.mxu0 0.0
    %823 = vmatpush2.msra.mxu0 0.0
    %824 = vmatprep.subr.mxu0 0.0
    %825 = vmatpush2.msra.mxu0 0.0
    %826 = vmatprep.mubr.f32.mxu0 0.0
    %827 = vmatmul.mubr.f32.gmra.mxu0 %v188
    %v828 = vpop.f32.mrf.mxu0
    %v829 = vadd.f32 %v744, %v828
    %v830 = vpop.f32.mrf.mxu0
    %831 = vmatprep.mubr.f32.mxu0 0.0
    %832 = vmatmul.mubr.f32.gmra.mxu0 %v191
    %v833 = vpop.f32.mrf.mxu0
    %v834 = vadd.f32 %v749, %v833
    %v835 = vpop.f32.mrf.mxu0
    %836 = vmatprep.mubr.f32.mxu0 0.0
    %837 = vmatmul.mubr.f32.gmra.mxu0 %v194
    %v838 = vpop.f32.mrf.mxu0
    %v839 = vadd.f32 %v754, %v838
    %v840 = vpop.f32.mrf.mxu0
    %841 = vmatprep.mubr.f32.mxu0 0.0
    %842 = vmatmul.mubr.f32.gmra.mxu0 %v197
    %v843 = vpop.f32.mrf.mxu0
    %v844 = vadd.f32 %v759, %v843
    %v845 = vpop.f32.mrf.mxu0
    %846 = vdwg.mxu0
    %v847 = vld [vmem:[%s19] sm:$0x1]
    %v849 = vlaneseq
    %v850 = vshrl.u32 %v849, 7
    %v851 = vsub.s32 0, %v850
    %v852 = vrot.slane %v847, %v851
    %v854 = vadd.f32 %v829, %v852
    %v855 = vadd.f32 %v834, %v852
    %v856 = vadd.f32 %v839, %v852
    %v857 = vadd.f32 %v844, %v852
    %v858 = vmax.f32 %v854, 0.0
    %v859 = vmax.f32 %v855, 0.0
    %v860 = vmax.f32 %v856, 0.0
    %v861 = vmax.f32 %v857, 0.0
    %v862 = vld [vmem:[%s21] sm:$0xff]
    %v863 = vld [vmem:[%s21 + $0x8] sm:$0xff]
    %v864 = vld [vmem:[%s21 + $0x10] sm:$0xff]
    %v865 = vld [vmem:[%s21 + $0x18] sm:$0xff]
    %v867 = vsel %vm507, %v858, 0
    %v870 = vsel %vm507, %v859, 0
    %v873 = vsel %vm507, %v860, 0
    %v876 = vsel %vm507, %v861, 0
    %878 = vmatprep.subr.mxu0 0.0
    %879 = vmatpush1.msra.mxu0 0.0
    %880 = vmatprep.subr.mxu0 0.0
    %881 = vmatpush1.msra.mxu0 0.0
    %882 = vmatprep.subr.mxu0 0.0
    %883 = vmatpush1.msra.mxu0 0.0
    %884 = vmatprep.subr.mxu0 0.0
    %885 = vmatpush1.msra.mxu0 0.0
    %886 = vmatprep.subr.mxu0 0.0
    %887 = vmatpush1.msra.mxu0 0.0
    %888 = vmatprep.subr.mxu0 0.0
    %889 = vmatpush1.msra.mxu0 0.0
    %890 = vmatprep.subr.mxu0 0.0
    %891 = vmatpush1.msra.mxu0 0.0
    %892 = vmatprep.subr.mxu0 0.0
    %893 = vmatpush1.msra.mxu0 0.0
    %894 = vmatprep.subr.mxu0 0.0
    %895 = vmatpush1.msra.mxu0 0.0
    %896 = vmatprep.subr.mxu0 0.0
    %897 = vmatpush1.msra.mxu0 0.0
    %898 = vmatprep.subr.mxu0 0.0
    %899 = vmatpush1.msra.mxu0 0.0
    %900 = vmatprep.subr.mxu0 0.0
    %901 = vmatpush1.msra.mxu0 0.0
    %902 = vmatprep.subr.mxu0 0.0
    %903 = vmatpush1.msra.mxu0 %v865
    %904 = vmatprep.subr.mxu0 0.0
    %905 = vmatpush1.msra.mxu0 %v864
    %906 = vmatprep.subr.mxu0 0.0
    %907 = vmatpush1.msra.mxu0 %v863
    %908 = vmatprep.subr.mxu0 0.0
    %909 = vmatpush1.msra.mxu0 %v862
    %910 = vmatprep.subr.mxu0 0.0
    %911 = vmatpush2.msra.mxu0 0.0
    %912 = vmatprep.subr.mxu0 0.0
    %913 = vmatpush2.msra.mxu0 0.0
    %914 = vmatprep.subr.mxu0 0.0
    %915 = vmatpush2.msra.mxu0 0.0
    %916 = vmatprep.subr.mxu0 0.0
    %917 = vmatpush2.msra.mxu0 0.0
    %918 = vmatprep.subr.mxu0 0.0
    %919 = vmatpush2.msra.mxu0 0.0
    %920 = vmatprep.subr.mxu0 0.0
    %921 = vmatpush2.msra.mxu0 0.0
    %922 = vmatprep.subr.mxu0 0.0
    %923 = vmatpush2.msra.mxu0 0.0
    %924 = vmatprep.subr.mxu0 0.0
    %925 = vmatpush2.msra.mxu0 0.0
    %926 = vmatprep.subr.mxu0 0.0
    %927 = vmatpush2.msra.mxu0 0.0
    %928 = vmatprep.subr.mxu0 0.0
    %929 = vmatpush2.msra.mxu0 0.0
    %930 = vmatprep.subr.mxu0 0.0
    %931 = vmatpush2.msra.mxu0 0.0
    %932 = vmatprep.subr.mxu0 0.0
    %933 = vmatpush2.msra.mxu0 0.0
    %934 = vmatprep.subr.mxu0 0.0
    %935 = vmatpush2.msra.mxu0 0.0
    %936 = vmatprep.subr.mxu0 0.0
    %937 = vmatpush2.msra.mxu0 0.0
    %938 = vmatprep.subr.mxu0 0.0
    %939 = vmatpush2.msra.mxu0 0.0
    %940 = vmatprep.subr.mxu0 0.0
    %941 = vmatpush2.msra.mxu0 0.0
    %942 = vmatprep.mubr.f32.mxu0 0.0
    %943 = vmatmul.mubr.f32.gmra.mxu0 %v867
    %v944 = vpop.f32.mrf.mxu0
    %v945 = vadd.f32 0.0, %v944
    %v946 = vpop.f32.mrf.mxu0
    %947 = vmatprep.mubr.f32.mxu0 0.0
    %948 = vmatmul.mubr.f32.gmra.mxu0 %v870
    %v949 = vpop.f32.mrf.mxu0
    %v950 = vadd.f32 0.0, %v949
    %v951 = vpop.f32.mrf.mxu0
    %952 = vmatprep.mubr.f32.mxu0 0.0
    %953 = vmatmul.mubr.f32.gmra.mxu0 %v873
    %v954 = vpop.f32.mrf.mxu0
    %v955 = vadd.f32 0.0, %v954
    %v956 = vpop.f32.mrf.mxu0
    %957 = vmatprep.mubr.f32.mxu0 0.0
    %958 = vmatmul.mubr.f32.gmra.mxu0 %v876
    %v959 = vpop.f32.mrf.mxu0
    %v960 = vadd.f32 0.0, %v959
    %v961 = vpop.f32.mrf.mxu0
    %962 = vdwg.mxu0
    %v963 = vld [vmem:[%s25] sm:$0xff]
    %v964 = vld [vmem:[%s25 + $0x8] sm:$0xff]
    %v965 = vld [vmem:[%s25 + $0x10] sm:$0xff]
    %v966 = vld [vmem:[%s25 + $0x18] sm:$0xff]
    %v968 = vsel %vm507, %v945, 0
    %v971 = vsel %vm507, %v950, 0
    %v974 = vsel %vm507, %v955, 0
    %v977 = vsel %vm507, %v960, 0
    %979 = vmatprep.subr.mxu0 0.0
    %980 = vmatpush1.msra.mxu0 0.0
    %981 = vmatprep.subr.mxu0 0.0
    %982 = vmatpush1.msra.mxu0 0.0
    %983 = vmatprep.subr.mxu0 0.0
    %984 = vmatpush1.msra.mxu0 0.0
    %985 = vmatprep.subr.mxu0 0.0
    %986 = vmatpush1.msra.mxu0 0.0
    %987 = vmatprep.subr.mxu0 0.0
    %988 = vmatpush1.msra.mxu0 0.0
    %989 = vmatprep.subr.mxu0 0.0
    %990 = vmatpush1.msra.mxu0 0.0
    %991 = vmatprep.subr.mxu0 0.0
    %992 = vmatpush1.msra.mxu0 0.0
    %993 = vmatprep.subr.mxu0 0.0
    %994 = vmatpush1.msra.mxu0 0.0
    %995 = vmatprep.subr.mxu0 0.0
    %996 = vmatpush1.msra.mxu0 0.0
    %997 = vmatprep.subr.mxu0 0.0
    %998 = vmatpush1.msra.mxu0 0.0
    %999 = vmatprep.subr.mxu0 0.0
    %1000 = vmatpush1.msra.mxu0 0.0
    %1001 = vmatprep.subr.mxu0 0.0
    %1002 = vmatpush1.msra.mxu0 0.0
    %1003 = vmatprep.subr.mxu0 0.0
    %1004 = vmatpush1.msra.mxu0 %v966
    %1005 = vmatprep.subr.mxu0 0.0
    %1006 = vmatpush1.msra.mxu0 %v965
    %1007 = vmatprep.subr.mxu0 0.0
    %1008 = vmatpush1.msra.mxu0 %v964
    %1009 = vmatprep.subr.mxu0 0.0
    %1010 = vmatpush1.msra.mxu0 %v963
    %1011 = vmatprep.subr.mxu0 0.0
    %1012 = vmatpush2.msra.mxu0 0.0
    %1013 = vmatprep.subr.mxu0 0.0
    %1014 = vmatpush2.msra.mxu0 0.0
    %1015 = vmatprep.subr.mxu0 0.0
    %1016 = vmatpush2.msra.mxu0 0.0
    %1017 = vmatprep.subr.mxu0 0.0
    %1018 = vmatpush2.msra.mxu0 0.0
    %1019 = vmatprep.subr.mxu0 0.0
    %1020 = vmatpush2.msra.mxu0 0.0
    %1021 = vmatprep.subr.mxu0 0.0
    %1022 = vmatpush2.msra.mxu0 0.0
    %1023 = vmatprep.subr.mxu0 0.0
    %1024 = vmatpush2.msra.mxu0 0.0
    %1025 = vmatprep.subr.mxu0 0.0
    %1026 = vmatpush2.msra.mxu0 0.0
    %1027 = vmatprep.subr.mxu0 0.0
    %1028 = vmatpush2.msra.mxu0 0.0
    %1029 = vmatprep.subr.mxu0 0.0
    %1030 = vmatpush2.msra.mxu0 0.0
    %1031 = vmatprep.subr.mxu0 0.0
    %1032 = vmatpush2.msra.mxu0 0.0
    %1033 = vmatprep.subr.mxu0 0.0
    %1034 = vmatpush2.msra.mxu0 0.0
    %1035 = vmatprep.subr.mxu0 0.0
    %1036 = vmatpush2.msra.mxu0 0.0
    %1037 = vmatprep.subr.mxu0 0.0
    %1038 = vmatpush2.msra.mxu0 0.0
    %1039 = vmatprep.subr.mxu0 0.0
    %1040 = vmatpush2.msra.mxu0 0.0
    %1041 = vmatprep.subr.mxu0 0.0
    %1042 = vmatpush2.msra.mxu0 0.0
    %1043 = vmatprep.mubr.f32.mxu0 0.0
    %1044 = vmatmul.mubr.f32.gmra.mxu0 %v968
    %v1045 = vpop.f32.mrf.mxu0
    %v1046 = vadd.f32 0.0, %v1045
    %v1047 = vpop.f32.mrf.mxu0
    %1048 = vmatprep.mubr.f32.mxu0 0.0
    %1049 = vmatmul.mubr.f32.gmra.mxu0 %v971
    %v1050 = vpop.f32.mrf.mxu0
    %v1051 = vadd.f32 0.0, %v1050
    %v1052 = vpop.f32.mrf.mxu0
    %1053 = vmatprep.mubr.f32.mxu0 0.0
    %1054 = vmatmul.mubr.f32.gmra.mxu0 %v974
    %v1055 = vpop.f32.mrf.mxu0
    %v1056 = vadd.f32 0.0, %v1055
    %v1057 = vpop.f32.mrf.mxu0
    %1058 = vmatprep.mubr.f32.mxu0 0.0
    %1059 = vmatmul.mubr.f32.gmra.mxu0 %v977
    %v1060 = vpop.f32.mrf.mxu0
    %v1061 = vadd.f32 0.0, %v1060
    %v1062 = vpop.f32.mrf.mxu0
    %1063 = vdwg.mxu0
    %v1064 = vld [vmem:[%s23] sm:$0x1]
    %v1066 = vsel %vm507, %v1064, 0
    %1068 = vmatprep.subr.mxu0 0.0
    %1069 = vmatpush1.xpose.msra.mxu0 0.0
    %1070 = vmatprep.subr.mxu0 0.0
    %1071 = vmatpush1.xpose.msra.mxu0 0.0
    %1072 = vmatprep.subr.mxu0 0.0
    %1073 = vmatpush1.xpose.msra.mxu0 0.0
    %1074 = vmatprep.subr.mxu0 0.0
    %1075 = vmatpush1.xpose.msra.mxu0 0.0
    %1076 = vmatprep.subr.mxu0 0.0
    %1077 = vmatpush1.xpose.msra.mxu0 0.0
    %1078 = vmatprep.subr.mxu0 0.0
    %1079 = vmatpush1.xpose.msra.mxu0 0.0
    %1080 = vmatprep.subr.mxu0 0.0
    %1081 = vmatpush1.xpose.msra.mxu0 0.0
    %1082 = vmatprep.subr.mxu0 0.0
    %1083 = vmatpush1.xpose.msra.mxu0 0.0
    %1084 = vmatprep.subr.mxu0 0.0
    %1085 = vmatpush1.xpose.msra.mxu0 0.0
    %1086 = vmatprep.subr.mxu0 0.0
    %1087 = vmatpush1.xpose.msra.mxu0 0.0
    %1088 = vmatprep.subr.mxu0 0.0
    %1089 = vmatpush1.xpose.msra.mxu0 0.0
    %1090 = vmatprep.subr.mxu0 0.0
    %1091 = vmatpush1.xpose.msra.mxu0 0.0
    %1092 = vmatprep.subr.mxu0 0.0
    %1093 = vmatpush1.xpose.msra.mxu0 %v977
    %1094 = vmatprep.subr.mxu0 0.0
    %1095 = vmatpush1.xpose.msra.mxu0 %v974
    %1096 = vmatprep.subr.mxu0 0.0
    %1097 = vmatpush1.xpose.msra.mxu0 %v971
    %1098 = vmatprep.subr.mxu0 0.0
    %1099 = vmatpush1.xpose.msra.mxu0 %v968
    %1100 = vmatprep.subr.mxu0 0.0
    %1101 = vmatpush2.xpose.msra.mxu0 0.0
    %1102 = vmatprep.subr.mxu0 0.0
    %1103 = vmatpush2.xpose.msra.mxu0 0.0
    %1104 = vmatprep.subr.mxu0 0.0
    %1105 = vmatpush2.xpose.msra.mxu0 0.0
    %1106 = vmatprep.subr.mxu0 0.0
    %1107 = vmatpush2.xpose.msra.mxu0 0.0
    %1108 = vmatprep.subr.mxu0 0.0
    %1109 = vmatpush2.xpose.msra.mxu0 0.0
    %1110 = vmatprep.subr.mxu0 0.0
    %1111 = vmatpush2.xpose.msra.mxu0 0.0
    %1112 = vmatprep.subr.mxu0 0.0
    %1113 = vmatpush2.xpose.msra.mxu0 0.0
    %1114 = vmatprep.subr.mxu0 0.0
    %1115 = vmatpush2.xpose.msra.mxu0 0.0
    %1116 = vmatprep.subr.mxu0 0.0
    %1117 = vmatpush2.xpose.msra.mxu0 0.0
    %1118 = vmatprep.subr.mxu0 0.0
    %1119 = vmatpush2.xpose.msra.mxu0 0.0
    %1120 = vmatprep.subr.mxu0 0.0
    %1121 = vmatpush2.xpose.msra.mxu0 0.0
    %1122 = vmatprep.subr.mxu0 0.0
    %1123 = vmatpush2.xpose.msra.mxu0 0.0
    %1124 = vmatprep.subr.mxu0 0.0
    %1125 = vmatpush2.xpose.msra.mxu0 0.0
    %1126 = vmatprep.subr.mxu0 0.0
    %1127 = vmatpush2.xpose.msra.mxu0 0.0
    %1128 = vmatprep.subr.mxu0 0.0
    %1129 = vmatpush2.xpose.msra.mxu0 0.0
    %1130 = vmatprep.subr.mxu0 0.0
    %1131 = vmatpush2.xpose.msra.mxu0 0.0
    %1132 = vmatprep.mubr.f32.mxu0 0.0
    %1133 = vmatmul.mubr.f32.gmra.mxu0 %v1066
    %v1134 = vpop.f32.mrf.mxu0
    %v1135 = vadd.f32 0.0, %v1134
    %v1136 = vpop.f32.mrf.mxu0
    %1137 = vdwg.mxu0
    %1139 = vset.pattern.permute.xlu0 0
    %1140 = vperm.xlu0 %1139, %v1046
    %v1141 = vpop.permute.xlu0 %1140
    %1144 = vset.pattern.permute.xlu0 0
    %1145 = vperm.xlu0 %1144, %v1051
    %v1146 = vpop.permute.xlu0 %1145
    %1149 = vset.pattern.permute.xlu0 0
    %1150 = vperm.xlu0 %1149, %v1056
    %v1151 = vpop.permute.xlu0 %1150
    %1154 = vset.pattern.permute.xlu0 0
    %1155 = vperm.xlu0 %1154, %v1061
    %v1156 = vpop.permute.xlu0 %1155
    %v1158 = vlaneseq
    %v1159 = vshrl.u32 %v1158, 7
    %v1160 = vsub.s32 0, %v1159
    %v1161 = vrot.slane %v1135, %v1160
    %v1162 = vadd.f32 %v1141, %v1161
    %v1163 = vadd.f32 %v1146, %v1161
    %v1164 = vadd.f32 %v1151, %v1161
    %v1165 = vadd.f32 %v1156, %v1161
    %vm1166 = vcmp.gt.f32.partialorder %v1162, 0.0
    %vm1167 = vcmp.gt.f32.partialorder %v1163, 0.0
    %vm1168 = vcmp.gt.f32.partialorder %v1164, 0.0
    %vm1169 = vcmp.gt.f32.partialorder %v1165, 0.0
    %v1170 = vmul.f32 %v1162, 0.2
    %v1171 = vmul.f32 %v1163, 0.2
    %v1172 = vmul.f32 %v1164, 0.2
    %v1173 = vmul.f32 %v1165, 0.2
    %v1174 = vsel %vm1166, %v1162, %v1170
    %v1175 = vsel %vm1167, %v1163, %v1171
    %v1176 = vsel %vm1168, %v1164, %v1172
    %v1177 = vsel %vm1169, %v1165, %v1173
    %v1178 = vsel %vm170, %v1174, -1e+30
    %v1179 = vsel %vm171, %v1175, -1e+30
    %v1180 = vsel %vm172, %v1176, -1e+30
    %v1181 = vsel %vm173, %v1177, -1e+30
    %v1182 = vsel %vm507, %v1178, -inf
    %1183 = vmax.xlane.f32.xlu0 %v1182
    %v1184 = vpop.xlane.xlu0 %1183
    %v1185 = vsel %vm507, %v1179, -inf
    %1186 = vmax.xlane.f32.xlu0 %v1185
    %v1187 = vpop.xlane.xlu0 %1186
    %v1188 = vsel %vm507, %v1180, -inf
    %1189 = vmax.xlane.f32.xlu0 %v1188
    %v1190 = vpop.xlane.xlu0 %1189
    %v1191 = vsel %vm507, %v1181, -inf
    %1192 = vmax.xlane.f32.xlu0 %v1191
    %v1193 = vpop.xlane.xlu0 %1192
    %v1194 = vsub.f32 %v1178, %v1184
    %v1195 = vsub.f32 %v1179, %v1187
    %v1196 = vsub.f32 %v1180, %v1190
    %v1197 = vsub.f32 %v1181, %v1193
    %v1198 = vmul.f32 %v1194, 1.442695
    %v1199 = vpow.pop %v1198
    %v1200 = vmul.f32 %v1195, 1.442695
    %v1201 = vpow.pop %v1200
    %v1202 = vmul.f32 %v1196, 1.442695
    %v1203 = vpow.pop %v1202
    %v1204 = vmul.f32 %v1197, 1.442695
    %v1205 = vpow.pop %v1204
    %v1206 = vsel %vm507, %v1199, 0.0
    %1207 = vadd.xlane.f32.xlu0 %v1206
    %v1208 = vpop.xlane.xlu0 %1207
    %v1209 = vsel %vm507, %v1201, 0.0
    %1210 = vadd.xlane.f32.xlu0 %v1209
    %v1211 = vpop.xlane.xlu0 %1210
    %v1212 = vsel %vm507, %v1203, 0.0
    %1213 = vadd.xlane.f32.xlu0 %v1212
    %v1214 = vpop.xlane.xlu0 %1213
    %v1215 = vsel %vm507, %v1205, 0.0
    %1216 = vadd.xlane.f32.xlu0 %v1215
    %v1217 = vpop.xlane.xlu0 %1216
    %v1218 = vrcp.pop %v1208
    %v1219 = vrcp.pop %v1211
    %v1220 = vrcp.pop %v1214
    %v1221 = vrcp.pop %v1217
    %v1223 = vsel %vm507, %v1199, 0
    %v1226 = vsel %vm507, %v1201, 0
    %v1229 = vsel %vm507, %v1203, 0
    %v1232 = vsel %vm507, %v1205, 0
    %1234 = vmatprep.subr.mxu0 0.0
    %1235 = vmatpush1.msra.mxu0 0.0
    %1236 = vmatprep.subr.mxu0 0.0
    %1237 = vmatpush1.msra.mxu0 0.0
    %1238 = vmatprep.subr.mxu0 0.0
    %1239 = vmatpush1.msra.mxu0 0.0
    %1240 = vmatprep.subr.mxu0 0.0
    %1241 = vmatpush1.msra.mxu0 0.0
    %1242 = vmatprep.subr.mxu0 0.0
    %1243 = vmatpush1.msra.mxu0 0.0
    %1244 = vmatprep.subr.mxu0 0.0
    %1245 = vmatpush1.msra.mxu0 0.0
    %1246 = vmatprep.subr.mxu0 0.0
    %1247 = vmatpush1.msra.mxu0 0.0
    %1248 = vmatprep.subr.mxu0 0.0
    %1249 = vmatpush1.msra.mxu0 0.0
    %1250 = vmatprep.subr.mxu0 0.0
    %1251 = vmatpush1.msra.mxu0 0.0
    %1252 = vmatprep.subr.mxu0 0.0
    %1253 = vmatpush1.msra.mxu0 0.0
    %1254 = vmatprep.subr.mxu0 0.0
    %1255 = vmatpush1.msra.mxu0 0.0
    %1256 = vmatprep.subr.mxu0 0.0
    %1257 = vmatpush1.msra.mxu0 0.0
    %1258 = vmatprep.subr.mxu0 0.0
    %1259 = vmatpush1.msra.mxu0 %v960
    %1260 = vmatprep.subr.mxu0 0.0
    %1261 = vmatpush1.msra.mxu0 %v955
    %1262 = vmatprep.subr.mxu0 0.0
    %1263 = vmatpush1.msra.mxu0 %v950
    %1264 = vmatprep.subr.mxu0 0.0
    %1265 = vmatpush1.msra.mxu0 %v945
    %1266 = vmatprep.subr.mxu0 0.0
    %1267 = vmatpush2.msra.mxu0 0.0
    %1268 = vmatprep.subr.mxu0 0.0
    %1269 = vmatpush2.msra.mxu0 0.0
    %1270 = vmatprep.subr.mxu0 0.0
    %1271 = vmatpush2.msra.mxu0 0.0
    %1272 = vmatprep.subr.mxu0 0.0
    %1273 = vmatpush2.msra.mxu0 0.0
    %1274 = vmatprep.subr.mxu0 0.0
    %1275 = vmatpush2.msra.mxu0 0.0
    %1276 = vmatprep.subr.mxu0 0.0
    %1277 = vmatpush2.msra.mxu0 0.0
    %1278 = vmatprep.subr.mxu0 0.0
    %1279 = vmatpush2.msra.mxu0 0.0
    %1280 = vmatprep.subr.mxu0 0.0
    %1281 = vmatpush2.msra.mxu0 0.0
    %1282 = vmatprep.subr.mxu0 0.0
    %1283 = vmatpush2.msra.mxu0 0.0
    %1284 = vmatprep.subr.mxu0 0.0
    %1285 = vmatpush2.msra.mxu0 0.0
    %1286 = vmatprep.subr.mxu0 0.0
    %1287 = vmatpush2.msra.mxu0 0.0
    %1288 = vmatprep.subr.mxu0 0.0
    %1289 = vmatpush2.msra.mxu0 0.0
    %1290 = vmatprep.subr.mxu0 0.0
    %1291 = vmatpush2.msra.mxu0 0.0
    %1292 = vmatprep.subr.mxu0 0.0
    %1293 = vmatpush2.msra.mxu0 0.0
    %1294 = vmatprep.subr.mxu0 0.0
    %1295 = vmatpush2.msra.mxu0 0.0
    %1296 = vmatprep.subr.mxu0 0.0
    %1297 = vmatpush2.msra.mxu0 0.0
    %1298 = vmatprep.mubr.f32.mxu0 0.0
    %1299 = vmatmul.mubr.f32.gmra.mxu0 %v1223
    %v1300 = vpop.f32.mrf.mxu0
    %v1301 = vadd.f32 0.0, %v1300
    %v1302 = vpop.f32.mrf.mxu0
    %1303 = vmatprep.mubr.f32.mxu0 0.0
    %1304 = vmatmul.mubr.f32.gmra.mxu0 %v1226
    %v1305 = vpop.f32.mrf.mxu0
    %v1306 = vadd.f32 0.0, %v1305
    %v1307 = vpop.f32.mrf.mxu0
    %1308 = vmatprep.mubr.f32.mxu0 0.0
    %1309 = vmatmul.mubr.f32.gmra.mxu0 %v1229
    %v1310 = vpop.f32.mrf.mxu0
    %v1311 = vadd.f32 0.0, %v1310
    %v1312 = vpop.f32.mrf.mxu0
    %1313 = vmatprep.mubr.f32.mxu0 0.0
    %1314 = vmatmul.mubr.f32.gmra.mxu0 %v1232
    %v1315 = vpop.f32.mrf.mxu0
    %v1316 = vadd.f32 0.0, %v1315
    %v1317 = vpop.f32.mrf.mxu0
    %1318 = vdwg.mxu0
    %v1319 = vmul.f32 %v1301, %v1218
    %v1320 = vmul.f32 %v1306, %v1219
    %v1321 = vmul.f32 %v1311, %v1220
    %v1322 = vmul.f32 %v1316, %v1221
    %v1323 = vld [vmem:[%s27] sm:$0xff]
    %v1324 = vld [vmem:[%s27 + $0x8] sm:$0xff]
    %v1325 = vld [vmem:[%s27 + $0x10] sm:$0xff]
    %v1326 = vld [vmem:[%s27 + $0x18] sm:$0xff]
    %v1327 = vld [vmem:[%s29] sm:$0xff]
    %v1328 = vld [vmem:[%s29 + $0x8] sm:$0xff]
    %v1329 = vld [vmem:[%s29 + $0x10] sm:$0xff]
    %v1330 = vld [vmem:[%s29 + $0x18] sm:$0xff]
    %v1332 = vsel %vm507, %v1319, 0
    %v1335 = vsel %vm507, %v1320, 0
    %v1338 = vsel %vm507, %v1321, 0
    %v1341 = vsel %vm507, %v1322, 0
    %1343 = vmatprep.subr.mxu0 0.0
    %1344 = vmatpush1.msra.mxu0 0.0
    %1345 = vmatprep.subr.mxu0 0.0
    %1346 = vmatpush1.msra.mxu0 0.0
    %1347 = vmatprep.subr.mxu0 0.0
    %1348 = vmatpush1.msra.mxu0 0.0
    %1349 = vmatprep.subr.mxu0 0.0
    %1350 = vmatpush1.msra.mxu0 0.0
    %1351 = vmatprep.subr.mxu0 0.0
    %1352 = vmatpush1.msra.mxu0 0.0
    %1353 = vmatprep.subr.mxu0 0.0
    %1354 = vmatpush1.msra.mxu0 0.0
    %1355 = vmatprep.subr.mxu0 0.0
    %1356 = vmatpush1.msra.mxu0 0.0
    %1357 = vmatprep.subr.mxu0 0.0
    %1358 = vmatpush1.msra.mxu0 0.0
    %1359 = vmatprep.subr.mxu0 0.0
    %1360 = vmatpush1.msra.mxu0 0.0
    %1361 = vmatprep.subr.mxu0 0.0
    %1362 = vmatpush1.msra.mxu0 0.0
    %1363 = vmatprep.subr.mxu0 0.0
    %1364 = vmatpush1.msra.mxu0 0.0
    %1365 = vmatprep.subr.mxu0 0.0
    %1366 = vmatpush1.msra.mxu0 0.0
    %1367 = vmatprep.subr.mxu0 0.0
    %1368 = vmatpush1.msra.mxu0 %v1330
    %1369 = vmatprep.subr.mxu0 0.0
    %1370 = vmatpush1.msra.mxu0 %v1329
    %1371 = vmatprep.subr.mxu0 0.0
    %1372 = vmatpush1.msra.mxu0 %v1328
    %1373 = vmatprep.subr.mxu0 0.0
    %1374 = vmatpush1.msra.mxu0 %v1327
    %1375 = vmatprep.subr.mxu0 0.0
    %1376 = vmatpush2.msra.mxu0 0.0
    %1377 = vmatprep.subr.mxu0 0.0
    %1378 = vmatpush2.msra.mxu0 0.0
    %1379 = vmatprep.subr.mxu0 0.0
    %1380 = vmatpush2.msra.mxu0 0.0
    %1381 = vmatprep.subr.mxu0 0.0
    %1382 = vmatpush2.msra.mxu0 0.0
    %1383 = vmatprep.subr.mxu0 0.0
    %1384 = vmatpush2.msra.mxu0 0.0
    %1385 = vmatprep.subr.mxu0 0.0
    %1386 = vmatpush2.msra.mxu0 0.0
    %1387 = vmatprep.subr.mxu0 0.0
    %1388 = vmatpush2.msra.mxu0 0.0
    %1389 = vmatprep.subr.mxu0 0.0
    %1390 = vmatpush2.msra.mxu0 0.0
    %1391 = vmatprep.subr.mxu0 0.0
    %1392 = vmatpush2.msra.mxu0 0.0
    %1393 = vmatprep.subr.mxu0 0.0
    %1394 = vmatpush2.msra.mxu0 0.0
    %1395 = vmatprep.subr.mxu0 0.0
    %1396 = vmatpush2.msra.mxu0 0.0
    %1397 = vmatprep.subr.mxu0 0.0
    %1398 = vmatpush2.msra.mxu0 0.0
    %1399 = vmatprep.subr.mxu0 0.0
    %1400 = vmatpush2.msra.mxu0 0.0
    %1401 = vmatprep.subr.mxu0 0.0
    %1402 = vmatpush2.msra.mxu0 0.0
    %1403 = vmatprep.subr.mxu0 0.0
    %1404 = vmatpush2.msra.mxu0 0.0
    %1405 = vmatprep.subr.mxu0 0.0
    %1406 = vmatpush2.msra.mxu0 0.0
    %1407 = vmatprep.mubr.f32.mxu0 0.0
    %1408 = vmatmul.mubr.f32.gmra.mxu0 %v1332
    %v1409 = vpop.f32.mrf.mxu0
    %v1410 = vadd.f32 0.0, %v1409
    %v1411 = vpop.f32.mrf.mxu0
    %1412 = vmatprep.mubr.f32.mxu0 0.0
    %1413 = vmatmul.mubr.f32.gmra.mxu0 %v1335
    %v1414 = vpop.f32.mrf.mxu0
    %v1415 = vadd.f32 0.0, %v1414
    %v1416 = vpop.f32.mrf.mxu0
    %1417 = vmatprep.mubr.f32.mxu0 0.0
    %1418 = vmatmul.mubr.f32.gmra.mxu0 %v1338
    %v1419 = vpop.f32.mrf.mxu0
    %v1420 = vadd.f32 0.0, %v1419
    %v1421 = vpop.f32.mrf.mxu0
    %1422 = vmatprep.mubr.f32.mxu0 0.0
    %1423 = vmatmul.mubr.f32.gmra.mxu0 %v1341
    %v1424 = vpop.f32.mrf.mxu0
    %v1425 = vadd.f32 0.0, %v1424
    %v1426 = vpop.f32.mrf.mxu0
    %1427 = vdwg.mxu0
    %1428 = vmatprep.subr.mxu0 0.0
    %1429 = vmatpush1.msra.mxu0 0.0
    %1430 = vmatprep.subr.mxu0 0.0
    %1431 = vmatpush1.msra.mxu0 0.0
    %1432 = vmatprep.subr.mxu0 0.0
    %1433 = vmatpush1.msra.mxu0 0.0
    %1434 = vmatprep.subr.mxu0 0.0
    %1435 = vmatpush1.msra.mxu0 0.0
    %1436 = vmatprep.subr.mxu0 0.0
    %1437 = vmatpush1.msra.mxu0 0.0
    %1438 = vmatprep.subr.mxu0 0.0
    %1439 = vmatpush1.msra.mxu0 0.0
    %1440 = vmatprep.subr.mxu0 0.0
    %1441 = vmatpush1.msra.mxu0 0.0
    %1442 = vmatprep.subr.mxu0 0.0
    %1443 = vmatpush1.msra.mxu0 0.0
    %1444 = vmatprep.subr.mxu0 0.0
    %1445 = vmatpush1.msra.mxu0 0.0
    %1446 = vmatprep.subr.mxu0 0.0
    %1447 = vmatpush1.msra.mxu0 0.0
    %1448 = vmatprep.subr.mxu0 0.0
    %1449 = vmatpush1.msra.mxu0 0.0
    %1450 = vmatprep.subr.mxu0 0.0
    %1451 = vmatpush1.msra.mxu0 0.0
    %1452 = vmatprep.subr.mxu0 0.0
    %1453 = vmatpush1.msra.mxu0 %v1326
    %1454 = vmatprep.subr.mxu0 0.0
    %1455 = vmatpush1.msra.mxu0 %v1325
    %1456 = vmatprep.subr.mxu0 0.0
    %1457 = vmatpush1.msra.mxu0 %v1324
    %1458 = vmatprep.subr.mxu0 0.0
    %1459 = vmatpush1.msra.mxu0 %v1323
    %1460 = vmatprep.subr.mxu0 0.0
    %1461 = vmatpush2.msra.mxu0 0.0
    %1462 = vmatprep.subr.mxu0 0.0
    %1463 = vmatpush2.msra.mxu0 0.0
    %1464 = vmatprep.subr.mxu0 0.0
    %1465 = vmatpush2.msra.mxu0 0.0
    %1466 = vmatprep.subr.mxu0 0.0
    %1467 = vmatpush2.msra.mxu0 0.0
    %1468 = vmatprep.subr.mxu0 0.0
    %1469 = vmatpush2.msra.mxu0 0.0
    %1470 = vmatprep.subr.mxu0 0.0
    %1471 = vmatpush2.msra.mxu0 0.0
    %1472 = vmatprep.subr.mxu0 0.0
    %1473 = vmatpush2.msra.mxu0 0.0
    %1474 = vmatprep.subr.mxu0 0.0
    %1475 = vmatpush2.msra.mxu0 0.0
    %1476 = vmatprep.subr.mxu0 0.0
    %1477 = vmatpush2.msra.mxu0 0.0
    %1478 = vmatprep.subr.mxu0 0.0
    %1479 = vmatpush2.msra.mxu0 0.0
    %1480 = vmatprep.subr.mxu0 0.0
    %1481 = vmatpush2.msra.mxu0 0.0
    %1482 = vmatprep.subr.mxu0 0.0
    %1483 = vmatpush2.msra.mxu0 0.0
    %1484 = vmatprep.subr.mxu0 0.0
    %1485 = vmatpush2.msra.mxu0 0.0
    %1486 = vmatprep.subr.mxu0 0.0
    %1487 = vmatpush2.msra.mxu0 0.0
    %1488 = vmatprep.subr.mxu0 0.0
    %1489 = vmatpush2.msra.mxu0 0.0
    %1490 = vmatprep.subr.mxu0 0.0
    %1491 = vmatpush2.msra.mxu0 0.0
    %1492 = vmatprep.mubr.f32.mxu0 0.0
    %1493 = vmatmul.mubr.f32.gmra.mxu0 %v867
    %v1494 = vpop.f32.mrf.mxu0
    %v1495 = vadd.f32 %v1410, %v1494
    %v1496 = vpop.f32.mrf.mxu0
    %1497 = vmatprep.mubr.f32.mxu0 0.0
    %1498 = vmatmul.mubr.f32.gmra.mxu0 %v870
    %v1499 = vpop.f32.mrf.mxu0
    %v1500 = vadd.f32 %v1415, %v1499
    %v1501 = vpop.f32.mrf.mxu0
    %1502 = vmatprep.mubr.f32.mxu0 0.0
    %1503 = vmatmul.mubr.f32.gmra.mxu0 %v873
    %v1504 = vpop.f32.mrf.mxu0
    %v1505 = vadd.f32 %v1420, %v1504
    %v1506 = vpop.f32.mrf.mxu0
    %1507 = vmatprep.mubr.f32.mxu0 0.0
    %1508 = vmatmul.mubr.f32.gmra.mxu0 %v876
    %v1509 = vpop.f32.mrf.mxu0
    %v1510 = vadd.f32 %v1425, %v1509
    %v1511 = vpop.f32.mrf.mxu0
    %1512 = vdwg.mxu0
    %v1513 = vld [vmem:[%s31] sm:$0x1]
    %v1515 = vlaneseq
    %v1516 = vshrl.u32 %v1515, 7
    %v1517 = vsub.s32 0, %v1516
    %v1518 = vrot.slane %v1513, %v1517
    %v1520 = vadd.f32 %v1495, %v1518
    %v1521 = vadd.f32 %v1500, %v1518
    %v1522 = vadd.f32 %v1505, %v1518
    %v1523 = vadd.f32 %v1510, %v1518
    %v1524 = vmax.f32 %v1520, 0.0
    %v1525 = vmax.f32 %v1521, 0.0
    %v1526 = vmax.f32 %v1522, 0.0
    %v1527 = vmax.f32 %v1523, 0.0
    %v1528 = vld [vmem:[%s33] sm:$0xff]
    %v1529 = vld [vmem:[%s33 + $0x8] sm:$0xff]
    %v1530 = vld [vmem:[%s33 + $0x10] sm:$0xff]
    %v1531 = vld [vmem:[%s33 + $0x18] sm:$0xff]
    %v1533 = vsel %vm507, %v1524, 0
    %v1536 = vsel %vm507, %v1525, 0
    %v1539 = vsel %vm507, %v1526, 0
    %v1542 = vsel %vm507, %v1527, 0
    %1544 = vmatprep.subr.mxu0 0.0
    %1545 = vmatpush1.msra.mxu0 0.0
    %1546 = vmatprep.subr.mxu0 0.0
    %1547 = vmatpush1.msra.mxu0 0.0
    %1548 = vmatprep.subr.mxu0 0.0
    %1549 = vmatpush1.msra.mxu0 0.0
    %1550 = vmatprep.subr.mxu0 0.0
    %1551 = vmatpush1.msra.mxu0 0.0
    %1552 = vmatprep.subr.mxu0 0.0
    %1553 = vmatpush1.msra.mxu0 0.0
    %1554 = vmatprep.subr.mxu0 0.0
    %1555 = vmatpush1.msra.mxu0 0.0
    %1556 = vmatprep.subr.mxu0 0.0
    %1557 = vmatpush1.msra.mxu0 0.0
    %1558 = vmatprep.subr.mxu0 0.0
    %1559 = vmatpush1.msra.mxu0 0.0
    %1560 = vmatprep.subr.mxu0 0.0
    %1561 = vmatpush1.msra.mxu0 0.0
    %1562 = vmatprep.subr.mxu0 0.0
    %1563 = vmatpush1.msra.mxu0 0.0
    %1564 = vmatprep.subr.mxu0 0.0
    %1565 = vmatpush1.msra.mxu0 0.0
    %1566 = vmatprep.subr.mxu0 0.0
    %1567 = vmatpush1.msra.mxu0 0.0
    %1568 = vmatprep.subr.mxu0 0.0
    %1569 = vmatpush1.msra.mxu0 %v1531
    %1570 = vmatprep.subr.mxu0 0.0
    %1571 = vmatpush1.msra.mxu0 %v1530
    %1572 = vmatprep.subr.mxu0 0.0
    %1573 = vmatpush1.msra.mxu0 %v1529
    %1574 = vmatprep.subr.mxu0 0.0
    %1575 = vmatpush1.msra.mxu0 %v1528
    %1576 = vmatprep.subr.mxu0 0.0
    %1577 = vmatpush2.msra.mxu0 0.0
    %1578 = vmatprep.subr.mxu0 0.0
    %1579 = vmatpush2.msra.mxu0 0.0
    %1580 = vmatprep.subr.mxu0 0.0
    %1581 = vmatpush2.msra.mxu0 0.0
    %1582 = vmatprep.subr.mxu0 0.0
    %1583 = vmatpush2.msra.mxu0 0.0
    %1584 = vmatprep.subr.mxu0 0.0
    %1585 = vmatpush2.msra.mxu0 0.0
    %1586 = vmatprep.subr.mxu0 0.0
    %1587 = vmatpush2.msra.mxu0 0.0
    %1588 = vmatprep.subr.mxu0 0.0
    %1589 = vmatpush2.msra.mxu0 0.0
    %1590 = vmatprep.subr.mxu0 0.0
    %1591 = vmatpush2.msra.mxu0 0.0
    %1592 = vmatprep.subr.mxu0 0.0
    %1593 = vmatpush2.msra.mxu0 0.0
    %1594 = vmatprep.subr.mxu0 0.0
    %1595 = vmatpush2.msra.mxu0 0.0
    %1596 = vmatprep.subr.mxu0 0.0
    %1597 = vmatpush2.msra.mxu0 0.0
    %1598 = vmatprep.subr.mxu0 0.0
    %1599 = vmatpush2.msra.mxu0 0.0
    %1600 = vmatprep.subr.mxu0 0.0
    %1601 = vmatpush2.msra.mxu0 0.0
    %1602 = vmatprep.subr.mxu0 0.0
    %1603 = vmatpush2.msra.mxu0 0.0
    %1604 = vmatprep.subr.mxu0 0.0
    %1605 = vmatpush2.msra.mxu0 0.0
    %1606 = vmatprep.subr.mxu0 0.0
    %1607 = vmatpush2.msra.mxu0 0.0
    %1608 = vmatprep.mubr.f32.mxu0 0.0
    %1609 = vmatmul.mubr.f32.gmra.mxu0 %v1533
    %v1610 = vpop.f32.mrf.mxu0
    %v1611 = vadd.f32 0.0, %v1610
    %v1612 = vpop.f32.mrf.mxu0
    %1613 = vmatprep.mubr.f32.mxu0 0.0
    %1614 = vmatmul.mubr.f32.gmra.mxu0 %v1536
    %v1615 = vpop.f32.mrf.mxu0
    %v1616 = vadd.f32 0.0, %v1615
    %v1617 = vpop.f32.mrf.mxu0
    %1618 = vmatprep.mubr.f32.mxu0 0.0
    %1619 = vmatmul.mubr.f32.gmra.mxu0 %v1539
    %v1620 = vpop.f32.mrf.mxu0
    %v1621 = vadd.f32 0.0, %v1620
    %v1622 = vpop.f32.mrf.mxu0
    %1623 = vmatprep.mubr.f32.mxu0 0.0
    %1624 = vmatmul.mubr.f32.gmra.mxu0 %v1542
    %v1625 = vpop.f32.mrf.mxu0
    %v1626 = vadd.f32 0.0, %v1625
    %v1627 = vpop.f32.mrf.mxu0
    %1628 = vdwg.mxu0
    %v1629 = vld [vmem:[%s37] sm:$0xff]
    %v1630 = vld [vmem:[%s37 + $0x8] sm:$0xff]
    %v1631 = vld [vmem:[%s37 + $0x10] sm:$0xff]
    %v1632 = vld [vmem:[%s37 + $0x18] sm:$0xff]
    %v1634 = vsel %vm507, %v1611, 0
    %v1637 = vsel %vm507, %v1616, 0
    %v1640 = vsel %vm507, %v1621, 0
    %v1643 = vsel %vm507, %v1626, 0
    %1645 = vmatprep.subr.mxu0 0.0
    %1646 = vmatpush1.msra.mxu0 0.0
    %1647 = vmatprep.subr.mxu0 0.0
    %1648 = vmatpush1.msra.mxu0 0.0
    %1649 = vmatprep.subr.mxu0 0.0
    %1650 = vmatpush1.msra.mxu0 0.0
    %1651 = vmatprep.subr.mxu0 0.0
    %1652 = vmatpush1.msra.mxu0 0.0
    %1653 = vmatprep.subr.mxu0 0.0
    %1654 = vmatpush1.msra.mxu0 0.0
    %1655 = vmatprep.subr.mxu0 0.0
    %1656 = vmatpush1.msra.mxu0 0.0
    %1657 = vmatprep.subr.mxu0 0.0
    %1658 = vmatpush1.msra.mxu0 0.0
    %1659 = vmatprep.subr.mxu0 0.0
    %1660 = vmatpush1.msra.mxu0 0.0
    %1661 = vmatprep.subr.mxu0 0.0
    %1662 = vmatpush1.msra.mxu0 0.0
    %1663 = vmatprep.subr.mxu0 0.0
    %1664 = vmatpush1.msra.mxu0 0.0
    %1665 = vmatprep.subr.mxu0 0.0
    %1666 = vmatpush1.msra.mxu0 0.0
    %1667 = vmatprep.subr.mxu0 0.0
    %1668 = vmatpush1.msra.mxu0 0.0
    %1669 = vmatprep.subr.mxu0 0.0
    %1670 = vmatpush1.msra.mxu0 %v1632
    %1671 = vmatprep.subr.mxu0 0.0
    %1672 = vmatpush1.msra.mxu0 %v1631
    %1673 = vmatprep.subr.mxu0 0.0
    %1674 = vmatpush1.msra.mxu0 %v1630
    %1675 = vmatprep.subr.mxu0 0.0
    %1676 = vmatpush1.msra.mxu0 %v1629
    %1677 = vmatprep.subr.mxu0 0.0
    %1678 = vmatpush2.msra.mxu0 0.0
    %1679 = vmatprep.subr.mxu0 0.0
    %1680 = vmatpush2.msra.mxu0 0.0
    %1681 = vmatprep.subr.mxu0 0.0
    %1682 = vmatpush2.msra.mxu0 0.0
    %1683 = vmatprep.subr.mxu0 0.0
    %1684 = vmatpush2.msra.mxu0 0.0
    %1685 = vmatprep.subr.mxu0 0.0
    %1686 = vmatpush2.msra.mxu0 0.0
    %1687 = vmatprep.subr.mxu0 0.0
    %1688 = vmatpush2.msra.mxu0 0.0
    %1689 = vmatprep.subr.mxu0 0.0
    %1690 = vmatpush2.msra.mxu0 0.0
    %1691 = vmatprep.subr.mxu0 0.0
    %1692 = vmatpush2.msra.mxu0 0.0
    %1693 = vmatprep.subr.mxu0 0.0
    %1694 = vmatpush2.msra.mxu0 0.0
    %1695 = vmatprep.subr.mxu0 0.0
    %1696 = vmatpush2.msra.mxu0 0.0
    %1697 = vmatprep.subr.mxu0 0.0
    %1698 = vmatpush2.msra.mxu0 0.0
    %1699 = vmatprep.subr.mxu0 0.0
    %1700 = vmatpush2.msra.mxu0 0.0
    %1701 = vmatprep.subr.mxu0 0.0
    %1702 = vmatpush2.msra.mxu0 0.0
    %1703 = vmatprep.subr.mxu0 0.0
    %1704 = vmatpush2.msra.mxu0 0.0
    %1705 = vmatprep.subr.mxu0 0.0
    %1706 = vmatpush2.msra.mxu0 0.0
    %1707 = vmatprep.subr.mxu0 0.0
    %1708 = vmatpush2.msra.mxu0 0.0
    %1709 = vmatprep.mubr.f32.mxu0 0.0
    %1710 = vmatmul.mubr.f32.gmra.mxu0 %v1634
    %v1711 = vpop.f32.mrf.mxu0
    %v1712 = vadd.f32 0.0, %v1711
    %v1713 = vpop.f32.mrf.mxu0
    %1714 = vmatprep.mubr.f32.mxu0 0.0
    %1715 = vmatmul.mubr.f32.gmra.mxu0 %v1637
    %v1716 = vpop.f32.mrf.mxu0
    %v1717 = vadd.f32 0.0, %v1716
    %v1718 = vpop.f32.mrf.mxu0
    %1719 = vmatprep.mubr.f32.mxu0 0.0
    %1720 = vmatmul.mubr.f32.gmra.mxu0 %v1640
    %v1721 = vpop.f32.mrf.mxu0
    %v1722 = vadd.f32 0.0, %v1721
    %v1723 = vpop.f32.mrf.mxu0
    %1724 = vmatprep.mubr.f32.mxu0 0.0
    %1725 = vmatmul.mubr.f32.gmra.mxu0 %v1643
    %v1726 = vpop.f32.mrf.mxu0
    %v1727 = vadd.f32 0.0, %v1726
    %v1728 = vpop.f32.mrf.mxu0
    %1729 = vdwg.mxu0
    %v1730 = vld [vmem:[%s35] sm:$0x1]
    %v1732 = vsel %vm507, %v1730, 0
    %1734 = vmatprep.subr.mxu0 0.0
    %1735 = vmatpush1.xpose.msra.mxu0 0.0
    %1736 = vmatprep.subr.mxu0 0.0
    %1737 = vmatpush1.xpose.msra.mxu0 0.0
    %1738 = vmatprep.subr.mxu0 0.0
    %1739 = vmatpush1.xpose.msra.mxu0 0.0
    %1740 = vmatprep.subr.mxu0 0.0
    %1741 = vmatpush1.xpose.msra.mxu0 0.0
    %1742 = vmatprep.subr.mxu0 0.0
    %1743 = vmatpush1.xpose.msra.mxu0 0.0
    %1744 = vmatprep.subr.mxu0 0.0
    %1745 = vmatpush1.xpose.msra.mxu0 0.0
    %1746 = vmatprep.subr.mxu0 0.0
    %1747 = vmatpush1.xpose.msra.mxu0 0.0
    %1748 = vmatprep.subr.mxu0 0.0
    %1749 = vmatpush1.xpose.msra.mxu0 0.0
    %1750 = vmatprep.subr.mxu0 0.0
    %1751 = vmatpush1.xpose.msra.mxu0 0.0
    %1752 = vmatprep.subr.mxu0 0.0
    %1753 = vmatpush1.xpose.msra.mxu0 0.0
    %1754 = vmatprep.subr.mxu0 0.0
    %1755 = vmatpush1.xpose.msra.mxu0 0.0
    %1756 = vmatprep.subr.mxu0 0.0
    %1757 = vmatpush1.xpose.msra.mxu0 0.0
    %1758 = vmatprep.subr.mxu0 0.0
    %1759 = vmatpush1.xpose.msra.mxu0 %v1643
    %1760 = vmatprep.subr.mxu0 0.0
    %1761 = vmatpush1.xpose.msra.mxu0 %v1640
    %1762 = vmatprep.subr.mxu0 0.0
    %1763 = vmatpush1.xpose.msra.mxu0 %v1637
    %1764 = vmatprep.subr.mxu0 0.0
    %1765 = vmatpush1.xpose.msra.mxu0 %v1634
    %1766 = vmatprep.subr.mxu0 0.0
    %1767 = vmatpush2.xpose.msra.mxu0 0.0
    %1768 = vmatprep.subr.mxu0 0.0
    %1769 = vmatpush2.xpose.msra.mxu0 0.0
    %1770 = vmatprep.subr.mxu0 0.0
    %1771 = vmatpush2.xpose.msra.mxu0 0.0
    %1772 = vmatprep.subr.mxu0 0.0
    %1773 = vmatpush2.xpose.msra.mxu0 0.0
    %1774 = vmatprep.subr.mxu0 0.0
    %1775 = vmatpush2.xpose.msra.mxu0 0.0
    %1776 = vmatprep.subr.mxu0 0.0
    %1777 = vmatpush2.xpose.msra.mxu0 0.0
    %1778 = vmatprep.subr.mxu0 0.0
    %1779 = vmatpush2.xpose.msra.mxu0 0.0
    %1780 = vmatprep.subr.mxu0 0.0
    %1781 = vmatpush2.xpose.msra.mxu0 0.0
    %1782 = vmatprep.subr.mxu0 0.0
    %1783 = vmatpush2.xpose.msra.mxu0 0.0
    %1784 = vmatprep.subr.mxu0 0.0
    %1785 = vmatpush2.xpose.msra.mxu0 0.0
    %1786 = vmatprep.subr.mxu0 0.0
    %1787 = vmatpush2.xpose.msra.mxu0 0.0
    %1788 = vmatprep.subr.mxu0 0.0
    %1789 = vmatpush2.xpose.msra.mxu0 0.0
    %1790 = vmatprep.subr.mxu0 0.0
    %1791 = vmatpush2.xpose.msra.mxu0 0.0
    %1792 = vmatprep.subr.mxu0 0.0
    %1793 = vmatpush2.xpose.msra.mxu0 0.0
    %1794 = vmatprep.subr.mxu0 0.0
    %1795 = vmatpush2.xpose.msra.mxu0 0.0
    %1796 = vmatprep.subr.mxu0 0.0
    %1797 = vmatpush2.xpose.msra.mxu0 0.0
    %1798 = vmatprep.mubr.f32.mxu0 0.0
    %1799 = vmatmul.mubr.f32.gmra.mxu0 %v1732
    %v1800 = vpop.f32.mrf.mxu0
    %v1801 = vadd.f32 0.0, %v1800
    %v1802 = vpop.f32.mrf.mxu0
    %1803 = vdwg.mxu0
    %1805 = vset.pattern.permute.xlu0 0
    %1806 = vperm.xlu0 %1805, %v1712
    %v1807 = vpop.permute.xlu0 %1806
    %1810 = vset.pattern.permute.xlu0 0
    %1811 = vperm.xlu0 %1810, %v1717
    %v1812 = vpop.permute.xlu0 %1811
    %1815 = vset.pattern.permute.xlu0 0
    %1816 = vperm.xlu0 %1815, %v1722
    %v1817 = vpop.permute.xlu0 %1816
    %1820 = vset.pattern.permute.xlu0 0
    %1821 = vperm.xlu0 %1820, %v1727
    %v1822 = vpop.permute.xlu0 %1821
    %v1824 = vlaneseq
    %v1825 = vshrl.u32 %v1824, 7
    %v1826 = vsub.s32 0, %v1825
    %v1827 = vrot.slane %v1801, %v1826
    %v1828 = vadd.f32 %v1807, %v1827
    %v1829 = vadd.f32 %v1812, %v1827
    %v1830 = vadd.f32 %v1817, %v1827
    %v1831 = vadd.f32 %v1822, %v1827
    %vm1832 = vcmp.gt.f32.partialorder %v1828, 0.0
    %vm1833 = vcmp.gt.f32.partialorder %v1829, 0.0
    %vm1834 = vcmp.gt.f32.partialorder %v1830, 0.0
    %vm1835 = vcmp.gt.f32.partialorder %v1831, 0.0
    %v1836 = vmul.f32 %v1828, 0.2
    %v1837 = vmul.f32 %v1829, 0.2
    %v1838 = vmul.f32 %v1830, 0.2
    %v1839 = vmul.f32 %v1831, 0.2
    %v1840 = vsel %vm1832, %v1828, %v1836
    %v1841 = vsel %vm1833, %v1829, %v1837
    %v1842 = vsel %vm1834, %v1830, %v1838
    %v1843 = vsel %vm1835, %v1831, %v1839
    %v1844 = vsel %vm170, %v1840, -1e+30
    %v1845 = vsel %vm171, %v1841, -1e+30
    %v1846 = vsel %vm172, %v1842, -1e+30
    %v1847 = vsel %vm173, %v1843, -1e+30
    %v1848 = vsel %vm507, %v1844, -inf
    %1849 = vmax.xlane.f32.xlu0 %v1848
    %v1850 = vpop.xlane.xlu0 %1849
    %v1851 = vsel %vm507, %v1845, -inf
    %1852 = vmax.xlane.f32.xlu0 %v1851
    %v1853 = vpop.xlane.xlu0 %1852
    %v1854 = vsel %vm507, %v1846, -inf
    %1855 = vmax.xlane.f32.xlu0 %v1854
    %v1856 = vpop.xlane.xlu0 %1855
    %v1857 = vsel %vm507, %v1847, -inf
    %1858 = vmax.xlane.f32.xlu0 %v1857
    %v1859 = vpop.xlane.xlu0 %1858
    %v1860 = vsub.f32 %v1844, %v1850
    %v1861 = vsub.f32 %v1845, %v1853
    %v1862 = vsub.f32 %v1846, %v1856
    %v1863 = vsub.f32 %v1847, %v1859
    %v1864 = vmul.f32 %v1860, 1.442695
    %v1865 = vpow.pop %v1864
    %v1866 = vmul.f32 %v1861, 1.442695
    %v1867 = vpow.pop %v1866
    %v1868 = vmul.f32 %v1862, 1.442695
    %v1869 = vpow.pop %v1868
    %v1870 = vmul.f32 %v1863, 1.442695
    %v1871 = vpow.pop %v1870
    %v1872 = vsel %vm507, %v1865, 0.0
    %1873 = vadd.xlane.f32.xlu0 %v1872
    %v1874 = vpop.xlane.xlu0 %1873
    %v1875 = vsel %vm507, %v1867, 0.0
    %1876 = vadd.xlane.f32.xlu0 %v1875
    %v1877 = vpop.xlane.xlu0 %1876
    %v1878 = vsel %vm507, %v1869, 0.0
    %1879 = vadd.xlane.f32.xlu0 %v1878
    %v1880 = vpop.xlane.xlu0 %1879
    %v1881 = vsel %vm507, %v1871, 0.0
    %1882 = vadd.xlane.f32.xlu0 %v1881
    %v1883 = vpop.xlane.xlu0 %1882
    %v1884 = vrcp.pop %v1874
    %v1885 = vrcp.pop %v1877
    %v1886 = vrcp.pop %v1880
    %v1887 = vrcp.pop %v1883
    %v1889 = vsel %vm507, %v1865, 0
    %v1892 = vsel %vm507, %v1867, 0
    %v1895 = vsel %vm507, %v1869, 0
    %v1898 = vsel %vm507, %v1871, 0
    %1900 = vmatprep.subr.mxu0 0.0
    %1901 = vmatpush1.msra.mxu0 0.0
    %1902 = vmatprep.subr.mxu0 0.0
    %1903 = vmatpush1.msra.mxu0 0.0
    %1904 = vmatprep.subr.mxu0 0.0
    %1905 = vmatpush1.msra.mxu0 0.0
    %1906 = vmatprep.subr.mxu0 0.0
    %1907 = vmatpush1.msra.mxu0 0.0
    %1908 = vmatprep.subr.mxu0 0.0
    %1909 = vmatpush1.msra.mxu0 0.0
    %1910 = vmatprep.subr.mxu0 0.0
    %1911 = vmatpush1.msra.mxu0 0.0
    %1912 = vmatprep.subr.mxu0 0.0
    %1913 = vmatpush1.msra.mxu0 0.0
    %1914 = vmatprep.subr.mxu0 0.0
    %1915 = vmatpush1.msra.mxu0 0.0
    %1916 = vmatprep.subr.mxu0 0.0
    %1917 = vmatpush1.msra.mxu0 0.0
    %1918 = vmatprep.subr.mxu0 0.0
    %1919 = vmatpush1.msra.mxu0 0.0
    %1920 = vmatprep.subr.mxu0 0.0
    %1921 = vmatpush1.msra.mxu0 0.0
    %1922 = vmatprep.subr.mxu0 0.0
    %1923 = vmatpush1.msra.mxu0 0.0
    %1924 = vmatprep.subr.mxu0 0.0
    %1925 = vmatpush1.msra.mxu0 %v1626
    %1926 = vmatprep.subr.mxu0 0.0
    %1927 = vmatpush1.msra.mxu0 %v1621
    %1928 = vmatprep.subr.mxu0 0.0
    %1929 = vmatpush1.msra.mxu0 %v1616
    %1930 = vmatprep.subr.mxu0 0.0
    %1931 = vmatpush1.msra.mxu0 %v1611
    %1932 = vmatprep.subr.mxu0 0.0
    %1933 = vmatpush2.msra.mxu0 0.0
    %1934 = vmatprep.subr.mxu0 0.0
    %1935 = vmatpush2.msra.mxu0 0.0
    %1936 = vmatprep.subr.mxu0 0.0
    %1937 = vmatpush2.msra.mxu0 0.0
    %1938 = vmatprep.subr.mxu0 0.0
    %1939 = vmatpush2.msra.mxu0 0.0
    %1940 = vmatprep.subr.mxu0 0.0
    %1941 = vmatpush2.msra.mxu0 0.0
    %1942 = vmatprep.subr.mxu0 0.0
    %1943 = vmatpush2.msra.mxu0 0.0
    %1944 = vmatprep.subr.mxu0 0.0
    %1945 = vmatpush2.msra.mxu0 0.0
    %1946 = vmatprep.subr.mxu0 0.0
    %1947 = vmatpush2.msra.mxu0 0.0
    %1948 = vmatprep.subr.mxu0 0.0
    %1949 = vmatpush2.msra.mxu0 0.0
    %1950 = vmatprep.subr.mxu0 0.0
    %1951 = vmatpush2.msra.mxu0 0.0
    %1952 = vmatprep.subr.mxu0 0.0
    %1953 = vmatpush2.msra.mxu0 0.0
    %1954 = vmatprep.subr.mxu0 0.0
    %1955 = vmatpush2.msra.mxu0 0.0
    %1956 = vmatprep.subr.mxu0 0.0
    %1957 = vmatpush2.msra.mxu0 0.0
    %1958 = vmatprep.subr.mxu0 0.0
    %1959 = vmatpush2.msra.mxu0 0.0
    %1960 = vmatprep.subr.mxu0 0.0
    %1961 = vmatpush2.msra.mxu0 0.0
    %1962 = vmatprep.subr.mxu0 0.0
    %1963 = vmatpush2.msra.mxu0 0.0
    %1964 = vmatprep.mubr.f32.mxu0 0.0
    %1965 = vmatmul.mubr.f32.gmra.mxu0 %v1889
    %v1966 = vpop.f32.mrf.mxu0
    %v1967 = vadd.f32 0.0, %v1966
    %v1968 = vpop.f32.mrf.mxu0
    %1969 = vmatprep.mubr.f32.mxu0 0.0
    %1970 = vmatmul.mubr.f32.gmra.mxu0 %v1892
    %v1971 = vpop.f32.mrf.mxu0
    %v1972 = vadd.f32 0.0, %v1971
    %v1973 = vpop.f32.mrf.mxu0
    %1974 = vmatprep.mubr.f32.mxu0 0.0
    %1975 = vmatmul.mubr.f32.gmra.mxu0 %v1895
    %v1976 = vpop.f32.mrf.mxu0
    %v1977 = vadd.f32 0.0, %v1976
    %v1978 = vpop.f32.mrf.mxu0
    %1979 = vmatprep.mubr.f32.mxu0 0.0
    %1980 = vmatmul.mubr.f32.gmra.mxu0 %v1898
    %v1981 = vpop.f32.mrf.mxu0
    %v1982 = vadd.f32 0.0, %v1981
    %v1983 = vpop.f32.mrf.mxu0
    %1984 = vdwg.mxu0
    %v1985 = vmul.f32 %v1967, %v1884
    %v1986 = vmul.f32 %v1972, %v1885
    %v1987 = vmul.f32 %v1977, %v1886
    %v1988 = vmul.f32 %v1982, %v1887
    %v1989 = vld [vmem:[%s39] sm:$0xff]
    %v1990 = vld [vmem:[%s39 + $0x8] sm:$0xff]
    %v1991 = vld [vmem:[%s39 + $0x10] sm:$0xff]
    %v1992 = vld [vmem:[%s39 + $0x18] sm:$0xff]
    %v1993 = vld [vmem:[%s41] sm:$0xff]
    %v1994 = vld [vmem:[%s41 + $0x8] sm:$0xff]
    %v1995 = vld [vmem:[%s41 + $0x10] sm:$0xff]
    %v1996 = vld [vmem:[%s41 + $0x18] sm:$0xff]
    %v1998 = vsel %vm507, %v1985, 0
    %v2001 = vsel %vm507, %v1986, 0
    %v2004 = vsel %vm507, %v1987, 0
    %v2007 = vsel %vm507, %v1988, 0
    %2009 = vmatprep.subr.mxu0 0.0
    %2010 = vmatpush1.msra.mxu0 0.0
    %2011 = vmatprep.subr.mxu0 0.0
    %2012 = vmatpush1.msra.mxu0 0.0
    %2013 = vmatprep.subr.mxu0 0.0
    %2014 = vmatpush1.msra.mxu0 0.0
    %2015 = vmatprep.subr.mxu0 0.0
    %2016 = vmatpush1.msra.mxu0 0.0
    %2017 = vmatprep.subr.mxu0 0.0
    %2018 = vmatpush1.msra.mxu0 0.0
    %2019 = vmatprep.subr.mxu0 0.0
    %2020 = vmatpush1.msra.mxu0 0.0
    %2021 = vmatprep.subr.mxu0 0.0
    %2022 = vmatpush1.msra.mxu0 0.0
    %2023 = vmatprep.subr.mxu0 0.0
    %2024 = vmatpush1.msra.mxu0 0.0
    %2025 = vmatprep.subr.mxu0 0.0
    %2026 = vmatpush1.msra.mxu0 0.0
    %2027 = vmatprep.subr.mxu0 0.0
    %2028 = vmatpush1.msra.mxu0 0.0
    %2029 = vmatprep.subr.mxu0 0.0
    %2030 = vmatpush1.msra.mxu0 0.0
    %2031 = vmatprep.subr.mxu0 0.0
    %2032 = vmatpush1.msra.mxu0 0.0
    %2033 = vmatprep.subr.mxu0 0.0
    %2034 = vmatpush1.msra.mxu0 %v1996
    %2035 = vmatprep.subr.mxu0 0.0
    %2036 = vmatpush1.msra.mxu0 %v1995
    %2037 = vmatprep.subr.mxu0 0.0
    %2038 = vmatpush1.msra.mxu0 %v1994
    %2039 = vmatprep.subr.mxu0 0.0
    %2040 = vmatpush1.msra.mxu0 %v1993
    %2041 = vmatprep.subr.mxu0 0.0
    %2042 = vmatpush2.msra.mxu0 0.0
    %2043 = vmatprep.subr.mxu0 0.0
    %2044 = vmatpush2.msra.mxu0 0.0
    %2045 = vmatprep.subr.mxu0 0.0
    %2046 = vmatpush2.msra.mxu0 0.0
    %2047 = vmatprep.subr.mxu0 0.0
    %2048 = vmatpush2.msra.mxu0 0.0
    %2049 = vmatprep.subr.mxu0 0.0
    %2050 = vmatpush2.msra.mxu0 0.0
    %2051 = vmatprep.subr.mxu0 0.0
    %2052 = vmatpush2.msra.mxu0 0.0
    %2053 = vmatprep.subr.mxu0 0.0
    %2054 = vmatpush2.msra.mxu0 0.0
    %2055 = vmatprep.subr.mxu0 0.0
    %2056 = vmatpush2.msra.mxu0 0.0
    %2057 = vmatprep.subr.mxu0 0.0
    %2058 = vmatpush2.msra.mxu0 0.0
    %2059 = vmatprep.subr.mxu0 0.0
    %2060 = vmatpush2.msra.mxu0 0.0
    %2061 = vmatprep.subr.mxu0 0.0
    %2062 = vmatpush2.msra.mxu0 0.0
    %2063 = vmatprep.subr.mxu0 0.0
    %2064 = vmatpush2.msra.mxu0 0.0
    %2065 = vmatprep.subr.mxu0 0.0
    %2066 = vmatpush2.msra.mxu0 0.0
    %2067 = vmatprep.subr.mxu0 0.0
    %2068 = vmatpush2.msra.mxu0 0.0
    %2069 = vmatprep.subr.mxu0 0.0
    %2070 = vmatpush2.msra.mxu0 0.0
    %2071 = vmatprep.subr.mxu0 0.0
    %2072 = vmatpush2.msra.mxu0 0.0
    %2073 = vmatprep.mubr.f32.mxu0 0.0
    %2074 = vmatmul.mubr.f32.gmra.mxu0 %v1998
    %v2075 = vpop.f32.mrf.mxu0
    %v2076 = vadd.f32 0.0, %v2075
    %v2077 = vpop.f32.mrf.mxu0
    %2078 = vmatprep.mubr.f32.mxu0 0.0
    %2079 = vmatmul.mubr.f32.gmra.mxu0 %v2001
    %v2080 = vpop.f32.mrf.mxu0
    %v2081 = vadd.f32 0.0, %v2080
    %v2082 = vpop.f32.mrf.mxu0
    %2083 = vmatprep.mubr.f32.mxu0 0.0
    %2084 = vmatmul.mubr.f32.gmra.mxu0 %v2004
    %v2085 = vpop.f32.mrf.mxu0
    %v2086 = vadd.f32 0.0, %v2085
    %v2087 = vpop.f32.mrf.mxu0
    %2088 = vmatprep.mubr.f32.mxu0 0.0
    %2089 = vmatmul.mubr.f32.gmra.mxu0 %v2007
    %v2090 = vpop.f32.mrf.mxu0
    %v2091 = vadd.f32 0.0, %v2090
    %v2092 = vpop.f32.mrf.mxu0
    %2093 = vdwg.mxu0
    %2094 = vmatprep.subr.mxu0 0.0
    %2095 = vmatpush1.msra.mxu0 0.0
    %2096 = vmatprep.subr.mxu0 0.0
    %2097 = vmatpush1.msra.mxu0 0.0
    %2098 = vmatprep.subr.mxu0 0.0
    %2099 = vmatpush1.msra.mxu0 0.0
    %2100 = vmatprep.subr.mxu0 0.0
    %2101 = vmatpush1.msra.mxu0 0.0
    %2102 = vmatprep.subr.mxu0 0.0
    %2103 = vmatpush1.msra.mxu0 0.0
    %2104 = vmatprep.subr.mxu0 0.0
    %2105 = vmatpush1.msra.mxu0 0.0
    %2106 = vmatprep.subr.mxu0 0.0
    %2107 = vmatpush1.msra.mxu0 0.0
    %2108 = vmatprep.subr.mxu0 0.0
    %2109 = vmatpush1.msra.mxu0 0.0
    %2110 = vmatprep.subr.mxu0 0.0
    %2111 = vmatpush1.msra.mxu0 0.0
    %2112 = vmatprep.subr.mxu0 0.0
    %2113 = vmatpush1.msra.mxu0 0.0
    %2114 = vmatprep.subr.mxu0 0.0
    %2115 = vmatpush1.msra.mxu0 0.0
    %2116 = vmatprep.subr.mxu0 0.0
    %2117 = vmatpush1.msra.mxu0 0.0
    %2118 = vmatprep.subr.mxu0 0.0
    %2119 = vmatpush1.msra.mxu0 %v1992
    %2120 = vmatprep.subr.mxu0 0.0
    %2121 = vmatpush1.msra.mxu0 %v1991
    %2122 = vmatprep.subr.mxu0 0.0
    %2123 = vmatpush1.msra.mxu0 %v1990
    %2124 = vmatprep.subr.mxu0 0.0
    %2125 = vmatpush1.msra.mxu0 %v1989
    %2126 = vmatprep.subr.mxu0 0.0
    %2127 = vmatpush2.msra.mxu0 0.0
    %2128 = vmatprep.subr.mxu0 0.0
    %2129 = vmatpush2.msra.mxu0 0.0
    %2130 = vmatprep.subr.mxu0 0.0
    %2131 = vmatpush2.msra.mxu0 0.0
    %2132 = vmatprep.subr.mxu0 0.0
    %2133 = vmatpush2.msra.mxu0 0.0
    %2134 = vmatprep.subr.mxu0 0.0
    %2135 = vmatpush2.msra.mxu0 0.0
    %2136 = vmatprep.subr.mxu0 0.0
    %2137 = vmatpush2.msra.mxu0 0.0
    %2138 = vmatprep.subr.mxu0 0.0
    %2139 = vmatpush2.msra.mxu0 0.0
    %2140 = vmatprep.subr.mxu0 0.0
    %2141 = vmatpush2.msra.mxu0 0.0
    %2142 = vmatprep.subr.mxu0 0.0
    %2143 = vmatpush2.msra.mxu0 0.0
    %2144 = vmatprep.subr.mxu0 0.0
    %2145 = vmatpush2.msra.mxu0 0.0
    %2146 = vmatprep.subr.mxu0 0.0
    %2147 = vmatpush2.msra.mxu0 0.0
    %2148 = vmatprep.subr.mxu0 0.0
    %2149 = vmatpush2.msra.mxu0 0.0
    %2150 = vmatprep.subr.mxu0 0.0
    %2151 = vmatpush2.msra.mxu0 0.0
    %2152 = vmatprep.subr.mxu0 0.0
    %2153 = vmatpush2.msra.mxu0 0.0
    %2154 = vmatprep.subr.mxu0 0.0
    %2155 = vmatpush2.msra.mxu0 0.0
    %2156 = vmatprep.subr.mxu0 0.0
    %2157 = vmatpush2.msra.mxu0 0.0
    %2158 = vmatprep.mubr.f32.mxu0 0.0
    %2159 = vmatmul.mubr.f32.gmra.mxu0 %v1533
    %v2160 = vpop.f32.mrf.mxu0
    %v2161 = vadd.f32 %v2076, %v2160
    %v2162 = vpop.f32.mrf.mxu0
    %2163 = vmatprep.mubr.f32.mxu0 0.0
    %2164 = vmatmul.mubr.f32.gmra.mxu0 %v1536
    %v2165 = vpop.f32.mrf.mxu0
    %v2166 = vadd.f32 %v2081, %v2165
    %v2167 = vpop.f32.mrf.mxu0
    %2168 = vmatprep.mubr.f32.mxu0 0.0
    %2169 = vmatmul.mubr.f32.gmra.mxu0 %v1539
    %v2170 = vpop.f32.mrf.mxu0
    %v2171 = vadd.f32 %v2086, %v2170
    %v2172 = vpop.f32.mrf.mxu0
    %2173 = vmatprep.mubr.f32.mxu0 0.0
    %2174 = vmatmul.mubr.f32.gmra.mxu0 %v1542
    %v2175 = vpop.f32.mrf.mxu0
    %v2176 = vadd.f32 %v2091, %v2175
    %v2177 = vpop.f32.mrf.mxu0
    %2178 = vdwg.mxu0
    %v2179 = vld [vmem:[%s43] sm:$0x1]
    %v2181 = vlaneseq
    %v2182 = vshrl.u32 %v2181, 7
    %v2183 = vsub.s32 0, %v2182
    %v2184 = vrot.slane %v2179, %v2183
    %v2186 = vadd.f32 %v2161, %v2184
    %v2187 = vadd.f32 %v2166, %v2184
    %v2188 = vadd.f32 %v2171, %v2184
    %v2189 = vadd.f32 %v2176, %v2184
    %v2190 = vmax.f32 %v2186, 0.0
    %v2191 = vmax.f32 %v2187, 0.0
    %v2192 = vmax.f32 %v2188, 0.0
    %v2193 = vmax.f32 %v2189, 0.0
    %v2194 = vld [vmem:[%s45] sm:$0xff]
    %v2195 = vld [vmem:[%s45 + $0x8] sm:$0xff]
    %vm2196 = vcmask 130048
    %v2198 = vsel %vm2196, %v2190, 0
    %v2201 = vsel %vm2196, %v2191, 0
    %v2204 = vsel %vm2196, %v2192, 0
    %v2207 = vsel %vm2196, %v2193, 0
    %2209 = vmatprep.subr.mxu0 0.0
    %2210 = vmatpush1.msra.mxu0 0.0
    %2211 = vmatprep.subr.mxu0 0.0
    %2212 = vmatpush1.msra.mxu0 0.0
    %2213 = vmatprep.subr.mxu0 0.0
    %2214 = vmatpush1.msra.mxu0 0.0
    %2215 = vmatprep.subr.mxu0 0.0
    %2216 = vmatpush1.msra.mxu0 0.0
    %2217 = vmatprep.subr.mxu0 0.0
    %2218 = vmatpush1.msra.mxu0 0.0
    %2219 = vmatprep.subr.mxu0 0.0
    %2220 = vmatpush1.msra.mxu0 0.0
    %2221 = vmatprep.subr.mxu0 0.0
    %2222 = vmatpush1.msra.mxu0 0.0
    %2223 = vmatprep.subr.mxu0 0.0
    %2224 = vmatpush1.msra.mxu0 0.0
    %2225 = vmatprep.subr.mxu0 0.0
    %2226 = vmatpush1.msra.mxu0 0.0
    %2227 = vmatprep.subr.mxu0 0.0
    %2228 = vmatpush1.msra.mxu0 0.0
    %2229 = vmatprep.subr.mxu0 0.0
    %2230 = vmatpush1.msra.mxu0 0.0
    %2231 = vmatprep.subr.mxu0 0.0
    %2232 = vmatpush1.msra.mxu0 0.0
    %2233 = vmatprep.subr.mxu0 0.0
    %2234 = vmatpush1.msra.mxu0 0.0
    %2235 = vmatprep.subr.mxu0 0.0
    %2236 = vmatpush1.msra.mxu0 0.0
    %2237 = vmatprep.subr.mxu0 0.0
    %2238 = vmatpush1.msra.mxu0 %v2195
    %2239 = vmatprep.subr.mxu0 0.0
    %2240 = vmatpush1.msra.mxu0 %v2194
    %2241 = vmatprep.subr.mxu0 0.0
    %2242 = vmatpush2.msra.mxu0 0.0
    %2243 = vmatprep.subr.mxu0 0.0
    %2244 = vmatpush2.msra.mxu0 0.0
    %2245 = vmatprep.subr.mxu0 0.0
    %2246 = vmatpush2.msra.mxu0 0.0
    %2247 = vmatprep.subr.mxu0 0.0
    %2248 = vmatpush2.msra.mxu0 0.0
    %2249 = vmatprep.subr.mxu0 0.0
    %2250 = vmatpush2.msra.mxu0 0.0
    %2251 = vmatprep.subr.mxu0 0.0
    %2252 = vmatpush2.msra.mxu0 0.0
    %2253 = vmatprep.subr.mxu0 0.0
    %2254 = vmatpush2.msra.mxu0 0.0
    %2255 = vmatprep.subr.mxu0 0.0
    %2256 = vmatpush2.msra.mxu0 0.0
    %2257 = vmatprep.subr.mxu0 0.0
    %2258 = vmatpush2.msra.mxu0 0.0
    %2259 = vmatprep.subr.mxu0 0.0
    %2260 = vmatpush2.msra.mxu0 0.0
    %2261 = vmatprep.subr.mxu0 0.0
    %2262 = vmatpush2.msra.mxu0 0.0
    %2263 = vmatprep.subr.mxu0 0.0
    %2264 = vmatpush2.msra.mxu0 0.0
    %2265 = vmatprep.subr.mxu0 0.0
    %2266 = vmatpush2.msra.mxu0 0.0
    %2267 = vmatprep.subr.mxu0 0.0
    %2268 = vmatpush2.msra.mxu0 0.0
    %2269 = vmatprep.subr.mxu0 0.0
    %2270 = vmatpush2.msra.mxu0 0.0
    %2271 = vmatprep.subr.mxu0 0.0
    %2272 = vmatpush2.msra.mxu0 0.0
    %2273 = vmatprep.mubr.f32.mxu0 0.0
    %2274 = vmatmul.mubr.f32.gmra.mxu0 %v2198
    %v2275 = vpop.f32.mrf.mxu0
    %v2276 = vadd.f32 0.0, %v2275
    %v2277 = vpop.f32.mrf.mxu0
    %2278 = vmatprep.mubr.f32.mxu0 0.0
    %2279 = vmatmul.mubr.f32.gmra.mxu0 %v2201
    %v2280 = vpop.f32.mrf.mxu0
    %v2281 = vadd.f32 0.0, %v2280
    %v2282 = vpop.f32.mrf.mxu0
    %2283 = vmatprep.mubr.f32.mxu0 0.0
    %2284 = vmatmul.mubr.f32.gmra.mxu0 %v2204
    %v2285 = vpop.f32.mrf.mxu0
    %v2286 = vadd.f32 0.0, %v2285
    %v2287 = vpop.f32.mrf.mxu0
    %2288 = vmatprep.mubr.f32.mxu0 0.0
    %2289 = vmatmul.mubr.f32.gmra.mxu0 %v2207
    %v2290 = vpop.f32.mrf.mxu0
    %v2291 = vadd.f32 0.0, %v2290
    %v2292 = vpop.f32.mrf.mxu0
    %2293 = vdwg.mxu0
    %v2294 = vld [vmem:[%s49] sm:$0xff]
    %v2295 = vld [vmem:[%s49 + $0x8] sm:$0xff]
    %v2297 = vsel %vm2196, %v2276, 0
    %v2300 = vsel %vm2196, %v2281, 0
    %v2303 = vsel %vm2196, %v2286, 0
    %v2306 = vsel %vm2196, %v2291, 0
    %2308 = vmatprep.subr.mxu0 0.0
    %2309 = vmatpush1.msra.mxu0 0.0
    %2310 = vmatprep.subr.mxu0 0.0
    %2311 = vmatpush1.msra.mxu0 0.0
    %2312 = vmatprep.subr.mxu0 0.0
    %2313 = vmatpush1.msra.mxu0 0.0
    %2314 = vmatprep.subr.mxu0 0.0
    %2315 = vmatpush1.msra.mxu0 0.0
    %2316 = vmatprep.subr.mxu0 0.0
    %2317 = vmatpush1.msra.mxu0 0.0
    %2318 = vmatprep.subr.mxu0 0.0
    %2319 = vmatpush1.msra.mxu0 0.0
    %2320 = vmatprep.subr.mxu0 0.0
    %2321 = vmatpush1.msra.mxu0 0.0
    %2322 = vmatprep.subr.mxu0 0.0
    %2323 = vmatpush1.msra.mxu0 0.0
    %2324 = vmatprep.subr.mxu0 0.0
    %2325 = vmatpush1.msra.mxu0 0.0
    %2326 = vmatprep.subr.mxu0 0.0
    %2327 = vmatpush1.msra.mxu0 0.0
    %2328 = vmatprep.subr.mxu0 0.0
    %2329 = vmatpush1.msra.mxu0 0.0
    %2330 = vmatprep.subr.mxu0 0.0
    %2331 = vmatpush1.msra.mxu0 0.0
    %2332 = vmatprep.subr.mxu0 0.0
    %2333 = vmatpush1.msra.mxu0 0.0
    %2334 = vmatprep.subr.mxu0 0.0
    %2335 = vmatpush1.msra.mxu0 0.0
    %2336 = vmatprep.subr.mxu0 0.0
    %2337 = vmatpush1.msra.mxu0 %v2295
    %2338 = vmatprep.subr.mxu0 0.0
    %2339 = vmatpush1.msra.mxu0 %v2294
    %2340 = vmatprep.subr.mxu0 0.0
    %2341 = vmatpush2.msra.mxu0 0.0
    %2342 = vmatprep.subr.mxu0 0.0
    %2343 = vmatpush2.msra.mxu0 0.0
    %2344 = vmatprep.subr.mxu0 0.0
    %2345 = vmatpush2.msra.mxu0 0.0
    %2346 = vmatprep.subr.mxu0 0.0
    %2347 = vmatpush2.msra.mxu0 0.0
    %2348 = vmatprep.subr.mxu0 0.0
    %2349 = vmatpush2.msra.mxu0 0.0
    %2350 = vmatprep.subr.mxu0 0.0
    %2351 = vmatpush2.msra.mxu0 0.0
    %2352 = vmatprep.subr.mxu0 0.0
    %2353 = vmatpush2.msra.mxu0 0.0
    %2354 = vmatprep.subr.mxu0 0.0
    %2355 = vmatpush2.msra.mxu0 0.0
    %2356 = vmatprep.subr.mxu0 0.0
    %2357 = vmatpush2.msra.mxu0 0.0
    %2358 = vmatprep.subr.mxu0 0.0
    %2359 = vmatpush2.msra.mxu0 0.0
    %2360 = vmatprep.subr.mxu0 0.0
    %2361 = vmatpush2.msra.mxu0 0.0
    %2362 = vmatprep.subr.mxu0 0.0
    %2363 = vmatpush2.msra.mxu0 0.0
    %2364 = vmatprep.subr.mxu0 0.0
    %2365 = vmatpush2.msra.mxu0 0.0
    %2366 = vmatprep.subr.mxu0 0.0
    %2367 = vmatpush2.msra.mxu0 0.0
    %2368 = vmatprep.subr.mxu0 0.0
    %2369 = vmatpush2.msra.mxu0 0.0
    %2370 = vmatprep.subr.mxu0 0.0
    %2371 = vmatpush2.msra.mxu0 0.0
    %2372 = vmatprep.mubr.f32.mxu0 0.0
    %2373 = vmatmul.mubr.f32.gmra.mxu0 %v2297
    %v2374 = vpop.f32.mrf.mxu0
    %v2375 = vadd.f32 0.0, %v2374
    %v2376 = vpop.f32.mrf.mxu0
    %2377 = vmatprep.mubr.f32.mxu0 0.0
    %2378 = vmatmul.mubr.f32.gmra.mxu0 %v2300
    %v2379 = vpop.f32.mrf.mxu0
    %v2380 = vadd.f32 0.0, %v2379
    %v2381 = vpop.f32.mrf.mxu0
    %2382 = vmatprep.mubr.f32.mxu0 0.0
    %2383 = vmatmul.mubr.f32.gmra.mxu0 %v2303
    %v2384 = vpop.f32.mrf.mxu0
    %v2385 = vadd.f32 0.0, %v2384
    %v2386 = vpop.f32.mrf.mxu0
    %2387 = vmatprep.mubr.f32.mxu0 0.0
    %2388 = vmatmul.mubr.f32.gmra.mxu0 %v2306
    %v2389 = vpop.f32.mrf.mxu0
    %v2390 = vadd.f32 0.0, %v2389
    %v2391 = vpop.f32.mrf.mxu0
    %2392 = vdwg.mxu0
    %v2393 = vld [vmem:[%s47] sm:$0x1]
    %v2395 = vsel %vm2196, %v2393, 0
    %2397 = vmatprep.subr.mxu0 0.0
    %2398 = vmatpush1.xpose.msra.mxu0 0.0
    %2399 = vmatprep.subr.mxu0 0.0
    %2400 = vmatpush1.xpose.msra.mxu0 0.0
    %2401 = vmatprep.subr.mxu0 0.0
    %2402 = vmatpush1.xpose.msra.mxu0 0.0
    %2403 = vmatprep.subr.mxu0 0.0
    %2404 = vmatpush1.xpose.msra.mxu0 0.0
    %2405 = vmatprep.subr.mxu0 0.0
    %2406 = vmatpush1.xpose.msra.mxu0 0.0
    %2407 = vmatprep.subr.mxu0 0.0
    %2408 = vmatpush1.xpose.msra.mxu0 0.0
    %2409 = vmatprep.subr.mxu0 0.0
    %2410 = vmatpush1.xpose.msra.mxu0 0.0
    %2411 = vmatprep.subr.mxu0 0.0
    %2412 = vmatpush1.xpose.msra.mxu0 0.0
    %2413 = vmatprep.subr.mxu0 0.0
    %2414 = vmatpush1.xpose.msra.mxu0 0.0
    %2415 = vmatprep.subr.mxu0 0.0
    %2416 = vmatpush1.xpose.msra.mxu0 0.0
    %2417 = vmatprep.subr.mxu0 0.0
    %2418 = vmatpush1.xpose.msra.mxu0 0.0
    %2419 = vmatprep.subr.mxu0 0.0
    %2420 = vmatpush1.xpose.msra.mxu0 0.0
    %2421 = vmatprep.subr.mxu0 0.0
    %2422 = vmatpush1.xpose.msra.mxu0 %v2306
    %2423 = vmatprep.subr.mxu0 0.0
    %2424 = vmatpush1.xpose.msra.mxu0 %v2303
    %2425 = vmatprep.subr.mxu0 0.0
    %2426 = vmatpush1.xpose.msra.mxu0 %v2300
    %2427 = vmatprep.subr.mxu0 0.0
    %2428 = vmatpush1.xpose.msra.mxu0 %v2297
    %2429 = vmatprep.subr.mxu0 0.0
    %2430 = vmatpush2.xpose.msra.mxu0 0.0
    %2431 = vmatprep.subr.mxu0 0.0
    %2432 = vmatpush2.xpose.msra.mxu0 0.0
    %2433 = vmatprep.subr.mxu0 0.0
    %2434 = vmatpush2.xpose.msra.mxu0 0.0
    %2435 = vmatprep.subr.mxu0 0.0
    %2436 = vmatpush2.xpose.msra.mxu0 0.0
    %2437 = vmatprep.subr.mxu0 0.0
    %2438 = vmatpush2.xpose.msra.mxu0 0.0
    %2439 = vmatprep.subr.mxu0 0.0
    %2440 = vmatpush2.xpose.msra.mxu0 0.0
    %2441 = vmatprep.subr.mxu0 0.0
    %2442 = vmatpush2.xpose.msra.mxu0 0.0
    %2443 = vmatprep.subr.mxu0 0.0
    %2444 = vmatpush2.xpose.msra.mxu0 0.0
    %2445 = vmatprep.subr.mxu0 0.0
    %2446 = vmatpush2.xpose.msra.mxu0 0.0
    %2447 = vmatprep.subr.mxu0 0.0
    %2448 = vmatpush2.xpose.msra.mxu0 0.0
    %2449 = vmatprep.subr.mxu0 0.0
    %2450 = vmatpush2.xpose.msra.mxu0 0.0
    %2451 = vmatprep.subr.mxu0 0.0
    %2452 = vmatpush2.xpose.msra.mxu0 0.0
    %2453 = vmatprep.subr.mxu0 0.0
    %2454 = vmatpush2.xpose.msra.mxu0 0.0
    %2455 = vmatprep.subr.mxu0 0.0
    %2456 = vmatpush2.xpose.msra.mxu0 0.0
    %2457 = vmatprep.subr.mxu0 0.0
    %2458 = vmatpush2.xpose.msra.mxu0 0.0
    %2459 = vmatprep.subr.mxu0 0.0
    %2460 = vmatpush2.xpose.msra.mxu0 0.0
    %2461 = vmatprep.mubr.f32.mxu0 0.0
    %2462 = vmatmul.mubr.f32.gmra.mxu0 %v2395
    %v2463 = vpop.f32.mrf.mxu0
    %v2464 = vadd.f32 0.0, %v2463
    %v2465 = vpop.f32.mrf.mxu0
    %2466 = vdwg.mxu0
    %2468 = vset.pattern.permute.xlu0 0
    %2469 = vperm.xlu0 %2468, %v2375
    %v2470 = vpop.permute.xlu0 %2469
    %2473 = vset.pattern.permute.xlu0 0
    %2474 = vperm.xlu0 %2473, %v2380
    %v2475 = vpop.permute.xlu0 %2474
    %2478 = vset.pattern.permute.xlu0 0
    %2479 = vperm.xlu0 %2478, %v2385
    %v2480 = vpop.permute.xlu0 %2479
    %2483 = vset.pattern.permute.xlu0 0
    %2484 = vperm.xlu0 %2483, %v2390
    %v2485 = vpop.permute.xlu0 %2484
    %v2487 = vlaneseq
    %v2488 = vshrl.u32 %v2487, 7
    %v2489 = vsub.s32 0, %v2488
    %v2490 = vrot.slane %v2464, %v2489
    %v2491 = vadd.f32 %v2470, %v2490
    %v2492 = vadd.f32 %v2475, %v2490
    %v2493 = vadd.f32 %v2480, %v2490
    %v2494 = vadd.f32 %v2485, %v2490
    %vm2495 = vcmp.gt.f32.partialorder %v2491, 0.0
    %vm2496 = vcmp.gt.f32.partialorder %v2492, 0.0
    %vm2497 = vcmp.gt.f32.partialorder %v2493, 0.0
    %vm2498 = vcmp.gt.f32.partialorder %v2494, 0.0
    %v2499 = vmul.f32 %v2491, 0.2
    %v2500 = vmul.f32 %v2492, 0.2
    %v2501 = vmul.f32 %v2493, 0.2
    %v2502 = vmul.f32 %v2494, 0.2
    %v2503 = vsel %vm2495, %v2491, %v2499
    %v2504 = vsel %vm2496, %v2492, %v2500
    %v2505 = vsel %vm2497, %v2493, %v2501
    %v2506 = vsel %vm2498, %v2494, %v2502
    %v2507 = vsel %vm170, %v2503, -1e+30
    %v2508 = vsel %vm171, %v2504, -1e+30
    %v2509 = vsel %vm172, %v2505, -1e+30
    %v2510 = vsel %vm173, %v2506, -1e+30
    %v2511 = vsel %vm507, %v2507, -inf
    %2512 = vmax.xlane.f32.xlu0 %v2511
    %v2513 = vpop.xlane.xlu0 %2512
    %v2514 = vsel %vm507, %v2508, -inf
    %2515 = vmax.xlane.f32.xlu0 %v2514
    %v2516 = vpop.xlane.xlu0 %2515
    %v2517 = vsel %vm507, %v2509, -inf
    %2518 = vmax.xlane.f32.xlu0 %v2517
    %v2519 = vpop.xlane.xlu0 %2518
    %v2520 = vsel %vm507, %v2510, -inf
    %2521 = vmax.xlane.f32.xlu0 %v2520
    %v2522 = vpop.xlane.xlu0 %2521
    %v2523 = vsub.f32 %v2507, %v2513
    %v2524 = vsub.f32 %v2508, %v2516
    %v2525 = vsub.f32 %v2509, %v2519
    %v2526 = vsub.f32 %v2510, %v2522
    %v2527 = vmul.f32 %v2523, 1.442695
    %v2528 = vpow.pop %v2527
    %v2529 = vmul.f32 %v2524, 1.442695
    %v2530 = vpow.pop %v2529
    %v2531 = vmul.f32 %v2525, 1.442695
    %v2532 = vpow.pop %v2531
    %v2533 = vmul.f32 %v2526, 1.442695
    %v2534 = vpow.pop %v2533
    %v2535 = vsel %vm507, %v2528, 0.0
    %2536 = vadd.xlane.f32.xlu0 %v2535
    %v2537 = vpop.xlane.xlu0 %2536
    %v2538 = vsel %vm507, %v2530, 0.0
    %2539 = vadd.xlane.f32.xlu0 %v2538
    %v2540 = vpop.xlane.xlu0 %2539
    %v2541 = vsel %vm507, %v2532, 0.0
    %2542 = vadd.xlane.f32.xlu0 %v2541
    %v2543 = vpop.xlane.xlu0 %2542
    %v2544 = vsel %vm507, %v2534, 0.0
    %2545 = vadd.xlane.f32.xlu0 %v2544
    %v2546 = vpop.xlane.xlu0 %2545
    %v2547 = vrcp.pop %v2537
    %v2548 = vrcp.pop %v2540
    %v2549 = vrcp.pop %v2543
    %v2550 = vrcp.pop %v2546
    %v2552 = vsel %vm507, %v2528, 0
    %v2555 = vsel %vm507, %v2530, 0
    %v2558 = vsel %vm507, %v2532, 0
    %v2561 = vsel %vm507, %v2534, 0
    %2563 = vmatprep.subr.mxu0 0.0
    %2564 = vmatpush1.msra.mxu0 0.0
    %2565 = vmatprep.subr.mxu0 0.0
    %2566 = vmatpush1.msra.mxu0 0.0
    %2567 = vmatprep.subr.mxu0 0.0
    %2568 = vmatpush1.msra.mxu0 0.0
    %2569 = vmatprep.subr.mxu0 0.0
    %2570 = vmatpush1.msra.mxu0 0.0
    %2571 = vmatprep.subr.mxu0 0.0
    %2572 = vmatpush1.msra.mxu0 0.0
    %2573 = vmatprep.subr.mxu0 0.0
    %2574 = vmatpush1.msra.mxu0 0.0
    %2575 = vmatprep.subr.mxu0 0.0
    %2576 = vmatpush1.msra.mxu0 0.0
    %2577 = vmatprep.subr.mxu0 0.0
    %2578 = vmatpush1.msra.mxu0 0.0
    %2579 = vmatprep.subr.mxu0 0.0
    %2580 = vmatpush1.msra.mxu0 0.0
    %2581 = vmatprep.subr.mxu0 0.0
    %2582 = vmatpush1.msra.mxu0 0.0
    %2583 = vmatprep.subr.mxu0 0.0
    %2584 = vmatpush1.msra.mxu0 0.0
    %2585 = vmatprep.subr.mxu0 0.0
    %2586 = vmatpush1.msra.mxu0 0.0
    %2587 = vmatprep.subr.mxu0 0.0
    %2588 = vmatpush1.msra.mxu0 %v2291
    %2589 = vmatprep.subr.mxu0 0.0
    %2590 = vmatpush1.msra.mxu0 %v2286
    %2591 = vmatprep.subr.mxu0 0.0
    %2592 = vmatpush1.msra.mxu0 %v2281
    %2593 = vmatprep.subr.mxu0 0.0
    %2594 = vmatpush1.msra.mxu0 %v2276
    %2595 = vmatprep.subr.mxu0 0.0
    %2596 = vmatpush2.msra.mxu0 0.0
    %2597 = vmatprep.subr.mxu0 0.0
    %2598 = vmatpush2.msra.mxu0 0.0
    %2599 = vmatprep.subr.mxu0 0.0
    %2600 = vmatpush2.msra.mxu0 0.0
    %2601 = vmatprep.subr.mxu0 0.0
    %2602 = vmatpush2.msra.mxu0 0.0
    %2603 = vmatprep.subr.mxu0 0.0
    %2604 = vmatpush2.msra.mxu0 0.0
    %2605 = vmatprep.subr.mxu0 0.0
    %2606 = vmatpush2.msra.mxu0 0.0
    %2607 = vmatprep.subr.mxu0 0.0
    %2608 = vmatpush2.msra.mxu0 0.0
    %2609 = vmatprep.subr.mxu0 0.0
    %2610 = vmatpush2.msra.mxu0 0.0
    %2611 = vmatprep.subr.mxu0 0.0
    %2612 = vmatpush2.msra.mxu0 0.0
    %2613 = vmatprep.subr.mxu0 0.0
    %2614 = vmatpush2.msra.mxu0 0.0
    %2615 = vmatprep.subr.mxu0 0.0
    %2616 = vmatpush2.msra.mxu0 0.0
    %2617 = vmatprep.subr.mxu0 0.0
    %2618 = vmatpush2.msra.mxu0 0.0
    %2619 = vmatprep.subr.mxu0 0.0
    %2620 = vmatpush2.msra.mxu0 0.0
    %2621 = vmatprep.subr.mxu0 0.0
    %2622 = vmatpush2.msra.mxu0 0.0
    %2623 = vmatprep.subr.mxu0 0.0
    %2624 = vmatpush2.msra.mxu0 0.0
    %2625 = vmatprep.subr.mxu0 0.0
    %2626 = vmatpush2.msra.mxu0 0.0
    %2627 = vmatprep.mubr.f32.mxu0 0.0
    %2628 = vmatmul.mubr.f32.gmra.mxu0 %v2552
    %v2629 = vpop.f32.mrf.mxu0
    %v2630 = vadd.f32 0.0, %v2629
    %v2631 = vpop.f32.mrf.mxu0
    %2632 = vmatprep.mubr.f32.mxu0 0.0
    %2633 = vmatmul.mubr.f32.gmra.mxu0 %v2555
    %v2634 = vpop.f32.mrf.mxu0
    %v2635 = vadd.f32 0.0, %v2634
    %v2636 = vpop.f32.mrf.mxu0
    %2637 = vmatprep.mubr.f32.mxu0 0.0
    %2638 = vmatmul.mubr.f32.gmra.mxu0 %v2558
    %v2639 = vpop.f32.mrf.mxu0
    %v2640 = vadd.f32 0.0, %v2639
    %v2641 = vpop.f32.mrf.mxu0
    %2642 = vmatprep.mubr.f32.mxu0 0.0
    %2643 = vmatmul.mubr.f32.gmra.mxu0 %v2561
    %v2644 = vpop.f32.mrf.mxu0
    %v2645 = vadd.f32 0.0, %v2644
    %v2646 = vpop.f32.mrf.mxu0
    %2647 = vdwg.mxu0
    %v2648 = vmul.f32 %v2630, %v2547
    %v2649 = vmul.f32 %v2635, %v2548
    %v2650 = vmul.f32 %v2640, %v2549
    %v2651 = vmul.f32 %v2645, %v2550
    %v2652 = vld [vmem:[%s51] sm:$0xff]
    %v2653 = vld [vmem:[%s51 + $0x8] sm:$0xff]
    %v2654 = vld [vmem:[%s53] sm:$0xff]
    %v2655 = vld [vmem:[%s53 + $0x8] sm:$0xff]
    %v2657 = vsel %vm2196, %v2648, 0
    %v2660 = vsel %vm2196, %v2649, 0
    %v2663 = vsel %vm2196, %v2650, 0
    %v2666 = vsel %vm2196, %v2651, 0
    %2668 = vmatprep.subr.mxu0 0.0
    %2669 = vmatpush1.msra.mxu0 0.0
    %2670 = vmatprep.subr.mxu0 0.0
    %2671 = vmatpush1.msra.mxu0 0.0
    %2672 = vmatprep.subr.mxu0 0.0
    %2673 = vmatpush1.msra.mxu0 0.0
    %2674 = vmatprep.subr.mxu0 0.0
    %2675 = vmatpush1.msra.mxu0 0.0
    %2676 = vmatprep.subr.mxu0 0.0
    %2677 = vmatpush1.msra.mxu0 0.0
    %2678 = vmatprep.subr.mxu0 0.0
    %2679 = vmatpush1.msra.mxu0 0.0
    %2680 = vmatprep.subr.mxu0 0.0
    %2681 = vmatpush1.msra.mxu0 0.0
    %2682 = vmatprep.subr.mxu0 0.0
    %2683 = vmatpush1.msra.mxu0 0.0
    %2684 = vmatprep.subr.mxu0 0.0
    %2685 = vmatpush1.msra.mxu0 0.0
    %2686 = vmatprep.subr.mxu0 0.0
    %2687 = vmatpush1.msra.mxu0 0.0
    %2688 = vmatprep.subr.mxu0 0.0
    %2689 = vmatpush1.msra.mxu0 0.0
    %2690 = vmatprep.subr.mxu0 0.0
    %2691 = vmatpush1.msra.mxu0 0.0
    %2692 = vmatprep.subr.mxu0 0.0
    %2693 = vmatpush1.msra.mxu0 0.0
    %2694 = vmatprep.subr.mxu0 0.0
    %2695 = vmatpush1.msra.mxu0 0.0
    %2696 = vmatprep.subr.mxu0 0.0
    %2697 = vmatpush1.msra.mxu0 %v2655
    %2698 = vmatprep.subr.mxu0 0.0
    %2699 = vmatpush1.msra.mxu0 %v2654
    %2700 = vmatprep.subr.mxu0 0.0
    %2701 = vmatpush2.msra.mxu0 0.0
    %2702 = vmatprep.subr.mxu0 0.0
    %2703 = vmatpush2.msra.mxu0 0.0
    %2704 = vmatprep.subr.mxu0 0.0
    %2705 = vmatpush2.msra.mxu0 0.0
    %2706 = vmatprep.subr.mxu0 0.0
    %2707 = vmatpush2.msra.mxu0 0.0
    %2708 = vmatprep.subr.mxu0 0.0
    %2709 = vmatpush2.msra.mxu0 0.0
    %2710 = vmatprep.subr.mxu0 0.0
    %2711 = vmatpush2.msra.mxu0 0.0
    %2712 = vmatprep.subr.mxu0 0.0
    %2713 = vmatpush2.msra.mxu0 0.0
    %2714 = vmatprep.subr.mxu0 0.0
    %2715 = vmatpush2.msra.mxu0 0.0
    %2716 = vmatprep.subr.mxu0 0.0
    %2717 = vmatpush2.msra.mxu0 0.0
    %2718 = vmatprep.subr.mxu0 0.0
    %2719 = vmatpush2.msra.mxu0 0.0
    %2720 = vmatprep.subr.mxu0 0.0
    %2721 = vmatpush2.msra.mxu0 0.0
    %2722 = vmatprep.subr.mxu0 0.0
    %2723 = vmatpush2.msra.mxu0 0.0
    %2724 = vmatprep.subr.mxu0 0.0
    %2725 = vmatpush2.msra.mxu0 0.0
    %2726 = vmatprep.subr.mxu0 0.0
    %2727 = vmatpush2.msra.mxu0 0.0
    %2728 = vmatprep.subr.mxu0 0.0
    %2729 = vmatpush2.msra.mxu0 0.0
    %2730 = vmatprep.subr.mxu0 0.0
    %2731 = vmatpush2.msra.mxu0 0.0
    %2732 = vmatprep.mubr.f32.mxu0 0.0
    %2733 = vmatmul.mubr.f32.gmra.mxu0 %v2657
    %v2734 = vpop.f32.mrf.mxu0
    %v2735 = vadd.f32 0.0, %v2734
    %v2736 = vpop.f32.mrf.mxu0
    %2737 = vmatprep.mubr.f32.mxu0 0.0
    %2738 = vmatmul.mubr.f32.gmra.mxu0 %v2660
    %v2739 = vpop.f32.mrf.mxu0
    %v2740 = vadd.f32 0.0, %v2739
    %v2741 = vpop.f32.mrf.mxu0
    %2742 = vmatprep.mubr.f32.mxu0 0.0
    %2743 = vmatmul.mubr.f32.gmra.mxu0 %v2663
    %v2744 = vpop.f32.mrf.mxu0
    %v2745 = vadd.f32 0.0, %v2744
    %v2746 = vpop.f32.mrf.mxu0
    %2747 = vmatprep.mubr.f32.mxu0 0.0
    %2748 = vmatmul.mubr.f32.gmra.mxu0 %v2666
    %v2749 = vpop.f32.mrf.mxu0
    %v2750 = vadd.f32 0.0, %v2749
    %v2751 = vpop.f32.mrf.mxu0
    %2752 = vdwg.mxu0
    %2753 = vmatprep.subr.mxu0 0.0
    %2754 = vmatpush1.msra.mxu0 0.0
    %2755 = vmatprep.subr.mxu0 0.0
    %2756 = vmatpush1.msra.mxu0 0.0
    %2757 = vmatprep.subr.mxu0 0.0
    %2758 = vmatpush1.msra.mxu0 0.0
    %2759 = vmatprep.subr.mxu0 0.0
    %2760 = vmatpush1.msra.mxu0 0.0
    %2761 = vmatprep.subr.mxu0 0.0
    %2762 = vmatpush1.msra.mxu0 0.0
    %2763 = vmatprep.subr.mxu0 0.0
    %2764 = vmatpush1.msra.mxu0 0.0
    %2765 = vmatprep.subr.mxu0 0.0
    %2766 = vmatpush1.msra.mxu0 0.0
    %2767 = vmatprep.subr.mxu0 0.0
    %2768 = vmatpush1.msra.mxu0 0.0
    %2769 = vmatprep.subr.mxu0 0.0
    %2770 = vmatpush1.msra.mxu0 0.0
    %2771 = vmatprep.subr.mxu0 0.0
    %2772 = vmatpush1.msra.mxu0 0.0
    %2773 = vmatprep.subr.mxu0 0.0
    %2774 = vmatpush1.msra.mxu0 0.0
    %2775 = vmatprep.subr.mxu0 0.0
    %2776 = vmatpush1.msra.mxu0 0.0
    %2777 = vmatprep.subr.mxu0 0.0
    %2778 = vmatpush1.msra.mxu0 0.0
    %2779 = vmatprep.subr.mxu0 0.0
    %2780 = vmatpush1.msra.mxu0 0.0
    %2781 = vmatprep.subr.mxu0 0.0
    %2782 = vmatpush1.msra.mxu0 %v2653
    %2783 = vmatprep.subr.mxu0 0.0
    %2784 = vmatpush1.msra.mxu0 %v2652
    %2785 = vmatprep.subr.mxu0 0.0
    %2786 = vmatpush2.msra.mxu0 0.0
    %2787 = vmatprep.subr.mxu0 0.0
    %2788 = vmatpush2.msra.mxu0 0.0
    %2789 = vmatprep.subr.mxu0 0.0
    %2790 = vmatpush2.msra.mxu0 0.0
    %2791 = vmatprep.subr.mxu0 0.0
    %2792 = vmatpush2.msra.mxu0 0.0
    %2793 = vmatprep.subr.mxu0 0.0
    %2794 = vmatpush2.msra.mxu0 0.0
    %2795 = vmatprep.subr.mxu0 0.0
    %2796 = vmatpush2.msra.mxu0 0.0
    %2797 = vmatprep.subr.mxu0 0.0
    %2798 = vmatpush2.msra.mxu0 0.0
    %2799 = vmatprep.subr.mxu0 0.0
    %2800 = vmatpush2.msra.mxu0 0.0
    %2801 = vmatprep.subr.mxu0 0.0
    %2802 = vmatpush2.msra.mxu0 0.0
    %2803 = vmatprep.subr.mxu0 0.0
    %2804 = vmatpush2.msra.mxu0 0.0
    %2805 = vmatprep.subr.mxu0 0.0
    %2806 = vmatpush2.msra.mxu0 0.0
    %2807 = vmatprep.subr.mxu0 0.0
    %2808 = vmatpush2.msra.mxu0 0.0
    %2809 = vmatprep.subr.mxu0 0.0
    %2810 = vmatpush2.msra.mxu0 0.0
    %2811 = vmatprep.subr.mxu0 0.0
    %2812 = vmatpush2.msra.mxu0 0.0
    %2813 = vmatprep.subr.mxu0 0.0
    %2814 = vmatpush2.msra.mxu0 0.0
    %2815 = vmatprep.subr.mxu0 0.0
    %2816 = vmatpush2.msra.mxu0 0.0
    %2817 = vmatprep.mubr.f32.mxu0 0.0
    %2818 = vmatmul.mubr.f32.gmra.mxu0 %v2198
    %v2819 = vpop.f32.mrf.mxu0
    %v2820 = vadd.f32 %v2735, %v2819
    %v2821 = vpop.f32.mrf.mxu0
    %2822 = vmatprep.mubr.f32.mxu0 0.0
    %2823 = vmatmul.mubr.f32.gmra.mxu0 %v2201
    %v2824 = vpop.f32.mrf.mxu0
    %v2825 = vadd.f32 %v2740, %v2824
    %v2826 = vpop.f32.mrf.mxu0
    %2827 = vmatprep.mubr.f32.mxu0 0.0
    %2828 = vmatmul.mubr.f32.gmra.mxu0 %v2204
    %v2829 = vpop.f32.mrf.mxu0
    %v2830 = vadd.f32 %v2745, %v2829
    %v2831 = vpop.f32.mrf.mxu0
    %2832 = vmatprep.mubr.f32.mxu0 0.0
    %2833 = vmatmul.mubr.f32.gmra.mxu0 %v2207
    %v2834 = vpop.f32.mrf.mxu0
    %v2835 = vadd.f32 %v2750, %v2834
    %v2836 = vpop.f32.mrf.mxu0
    %2837 = vdwg.mxu0
    %v2838 = vld [vmem:[%s55] sm:$0x1]
    %v2840 = vlaneseq
    %v2841 = vshrl.u32 %v2840, 7
    %v2842 = vsub.s32 0, %v2841
    %v2843 = vrot.slane %v2838, %v2842
    %v2845 = vadd.f32 %v2820, %v2843
    %v2846 = vadd.f32 %v2825, %v2843
    %v2847 = vadd.f32 %v2830, %v2843
    %v2848 = vadd.f32 %v2835, %v2843
    %v2849 = vmax.f32 %v2845, 0.0
    %v2850 = vmax.f32 %v2846, 0.0
    %v2851 = vmax.f32 %v2847, 0.0
    %v2852 = vmax.f32 %v2848, 0.0
    %2853 = vst.msk [vmem:[%s77] sm:$0xff] %vm2196, %v2849
    %2854 = vst.msk [vmem:[%s77 + $0x8] sm:$0xff] %vm2196, %v2850
    %2855 = vst.msk [vmem:[%s77 + $0x10] sm:$0xff] %vm2196, %v2851
    %2856 = vst.msk [vmem:[%s77 + $0x18] sm:$0xff] %vm2196, %v2852
    %v2857 = vld [vmem:[%s57] sm:$0xff]
    %v2858 = vld [vmem:[%s57 + $0x8] sm:$0xff]
    %v2859 = vld [vmem:[%s59] sm:$0x1]
    %v2861 = vlaneseq
    %v2862 = vshrl.u32 %v2861, 7
    %v2863 = vsub.s32 0, %v2862
    %v2864 = vrot.slane %v2859, %v2863
    %v2867 = vsel %vm2196, %v2849, 0
    %v2870 = vsel %vm2196, %v2850, 0
    %v2873 = vsel %vm2196, %v2851, 0
    %v2876 = vsel %vm2196, %v2852, 0
    %2878 = vmatprep.subr.mxu0 0.0
    %2879 = vmatpush1.msra.mxu0 0.0
    %2880 = vmatprep.subr.mxu0 0.0
    %2881 = vmatpush1.msra.mxu0 0.0
    %2882 = vmatprep.subr.mxu0 0.0
    %2883 = vmatpush1.msra.mxu0 0.0
    %2884 = vmatprep.subr.mxu0 0.0
    %2885 = vmatpush1.msra.mxu0 0.0
    %2886 = vmatprep.subr.mxu0 0.0
    %2887 = vmatpush1.msra.mxu0 0.0
    %2888 = vmatprep.subr.mxu0 0.0
    %2889 = vmatpush1.msra.mxu0 0.0
    %2890 = vmatprep.subr.mxu0 0.0
    %2891 = vmatpush1.msra.mxu0 0.0
    %2892 = vmatprep.subr.mxu0 0.0
    %2893 = vmatpush1.msra.mxu0 0.0
    %2894 = vmatprep.subr.mxu0 0.0
    %2895 = vmatpush1.msra.mxu0 0.0
    %2896 = vmatprep.subr.mxu0 0.0
    %2897 = vmatpush1.msra.mxu0 0.0
    %2898 = vmatprep.subr.mxu0 0.0
    %2899 = vmatpush1.msra.mxu0 0.0
    %2900 = vmatprep.subr.mxu0 0.0
    %2901 = vmatpush1.msra.mxu0 0.0
    %2902 = vmatprep.subr.mxu0 0.0
    %2903 = vmatpush1.msra.mxu0 0.0
    %2904 = vmatprep.subr.mxu0 0.0
    %2905 = vmatpush1.msra.mxu0 0.0
    %2906 = vmatprep.subr.mxu0 0.0
    %2907 = vmatpush1.msra.mxu0 %v2858
    %2908 = vmatprep.subr.mxu0 0.0
    %2909 = vmatpush1.msra.mxu0 %v2857
    %2910 = vmatprep.subr.mxu0 0.0
    %2911 = vmatpush2.msra.mxu0 0.0
    %2912 = vmatprep.subr.mxu0 0.0
    %2913 = vmatpush2.msra.mxu0 0.0
    %2914 = vmatprep.subr.mxu0 0.0
    %2915 = vmatpush2.msra.mxu0 0.0
    %2916 = vmatprep.subr.mxu0 0.0
    %2917 = vmatpush2.msra.mxu0 0.0
    %2918 = vmatprep.subr.mxu0 0.0
    %2919 = vmatpush2.msra.mxu0 0.0
    %2920 = vmatprep.subr.mxu0 0.0
    %2921 = vmatpush2.msra.mxu0 0.0
    %2922 = vmatprep.subr.mxu0 0.0
    %2923 = vmatpush2.msra.mxu0 0.0
    %2924 = vmatprep.subr.mxu0 0.0
    %2925 = vmatpush2.msra.mxu0 0.0
    %2926 = vmatprep.subr.mxu0 0.0
    %2927 = vmatpush2.msra.mxu0 0.0
    %2928 = vmatprep.subr.mxu0 0.0
    %2929 = vmatpush2.msra.mxu0 0.0
    %2930 = vmatprep.subr.mxu0 0.0
    %2931 = vmatpush2.msra.mxu0 0.0
    %2932 = vmatprep.subr.mxu0 0.0
    %2933 = vmatpush2.msra.mxu0 0.0
    %2934 = vmatprep.subr.mxu0 0.0
    %2935 = vmatpush2.msra.mxu0 0.0
    %2936 = vmatprep.subr.mxu0 0.0
    %2937 = vmatpush2.msra.mxu0 0.0
    %2938 = vmatprep.subr.mxu0 0.0
    %2939 = vmatpush2.msra.mxu0 0.0
    %2940 = vmatprep.subr.mxu0 0.0
    %2941 = vmatpush2.msra.mxu0 0.0
    %2942 = vmatprep.mubr.f32.mxu0 0.0
    %2943 = vmatmul.mubr.f32.gmra.mxu0 %v2867
    %v2944 = vpop.f32.mrf.mxu0
    %v2945 = vadd.f32 %v2864, %v2944
    %v2946 = vpop.f32.mrf.mxu0
    %2947 = vmatprep.mubr.f32.mxu0 0.0
    %2948 = vmatmul.mubr.f32.gmra.mxu0 %v2870
    %v2949 = vpop.f32.mrf.mxu0
    %v2950 = vadd.f32 %v2864, %v2949
    %v2951 = vpop.f32.mrf.mxu0
    %2952 = vmatprep.mubr.f32.mxu0 0.0
    %2953 = vmatmul.mubr.f32.gmra.mxu0 %v2873
    %v2954 = vpop.f32.mrf.mxu0
    %v2955 = vadd.f32 %v2864, %v2954
    %v2956 = vpop.f32.mrf.mxu0
    %2957 = vmatprep.mubr.f32.mxu0 0.0
    %2958 = vmatmul.mubr.f32.gmra.mxu0 %v2876
    %v2959 = vpop.f32.mrf.mxu0
    %v2960 = vadd.f32 %v2864, %v2959
    %v2961 = vpop.f32.mrf.mxu0
    %2962 = vdwg.mxu0
    %v2963 = vld [vmem:[%s61] sm:$0xff]
    %v2964 = vld [vmem:[%s61 + $0x8] sm:$0xff]
    %v2965 = vld [vmem:[%s63] sm:$0x1]
    %v2967 = vlaneseq
    %v2968 = vshrl.u32 %v2967, 7
    %v2969 = vsub.s32 0, %v2968
    %v2970 = vrot.slane %v2965, %v2969
    %2972 = vmatprep.subr.mxu0 0.0
    %2973 = vmatpush1.msra.mxu0 0.0
    %2974 = vmatprep.subr.mxu0 0.0
    %2975 = vmatpush1.msra.mxu0 0.0
    %2976 = vmatprep.subr.mxu0 0.0
    %2977 = vmatpush1.msra.mxu0 0.0
    %2978 = vmatprep.subr.mxu0 0.0
    %2979 = vmatpush1.msra.mxu0 0.0
    %2980 = vmatprep.subr.mxu0 0.0
    %2981 = vmatpush1.msra.mxu0 0.0
    %2982 = vmatprep.subr.mxu0 0.0
    %2983 = vmatpush1.msra.mxu0 0.0
    %2984 = vmatprep.subr.mxu0 0.0
    %2985 = vmatpush1.msra.mxu0 0.0
    %2986 = vmatprep.subr.mxu0 0.0
    %2987 = vmatpush1.msra.mxu0 0.0
    %2988 = vmatprep.subr.mxu0 0.0
    %2989 = vmatpush1.msra.mxu0 0.0
    %2990 = vmatprep.subr.mxu0 0.0
    %2991 = vmatpush1.msra.mxu0 0.0
    %2992 = vmatprep.subr.mxu0 0.0
    %2993 = vmatpush1.msra.mxu0 0.0
    %2994 = vmatprep.subr.mxu0 0.0
    %2995 = vmatpush1.msra.mxu0 0.0
    %2996 = vmatprep.subr.mxu0 0.0
    %2997 = vmatpush1.msra.mxu0 0.0
    %2998 = vmatprep.subr.mxu0 0.0
    %2999 = vmatpush1.msra.mxu0 0.0
    %3000 = vmatprep.subr.mxu0 0.0
    %3001 = vmatpush1.msra.mxu0 %v2964
    %3002 = vmatprep.subr.mxu0 0.0
    %3003 = vmatpush1.msra.mxu0 %v2963
    %3004 = vmatprep.subr.mxu0 0.0
    %3005 = vmatpush2.msra.mxu0 0.0
    %3006 = vmatprep.subr.mxu0 0.0
    %3007 = vmatpush2.msra.mxu0 0.0
    %3008 = vmatprep.subr.mxu0 0.0
    %3009 = vmatpush2.msra.mxu0 0.0
    %3010 = vmatprep.subr.mxu0 0.0
    %3011 = vmatpush2.msra.mxu0 0.0
    %3012 = vmatprep.subr.mxu0 0.0
    %3013 = vmatpush2.msra.mxu0 0.0
    %3014 = vmatprep.subr.mxu0 0.0
    %3015 = vmatpush2.msra.mxu0 0.0
    %3016 = vmatprep.subr.mxu0 0.0
    %3017 = vmatpush2.msra.mxu0 0.0
    %3018 = vmatprep.subr.mxu0 0.0
    %3019 = vmatpush2.msra.mxu0 0.0
    %3020 = vmatprep.subr.mxu0 0.0
    %3021 = vmatpush2.msra.mxu0 0.0
    %3022 = vmatprep.subr.mxu0 0.0
    %3023 = vmatpush2.msra.mxu0 0.0
    %3024 = vmatprep.subr.mxu0 0.0
    %3025 = vmatpush2.msra.mxu0 0.0
    %3026 = vmatprep.subr.mxu0 0.0
    %3027 = vmatpush2.msra.mxu0 0.0
    %3028 = vmatprep.subr.mxu0 0.0
    %3029 = vmatpush2.msra.mxu0 0.0
    %3030 = vmatprep.subr.mxu0 0.0
    %3031 = vmatpush2.msra.mxu0 0.0
    %3032 = vmatprep.subr.mxu0 0.0
    %3033 = vmatpush2.msra.mxu0 0.0
    %3034 = vmatprep.subr.mxu0 0.0
    %3035 = vmatpush2.msra.mxu0 0.0
    %3036 = vmatprep.mubr.f32.mxu0 0.0
    %3037 = vmatmul.mubr.f32.gmra.mxu0 %v2867
    %v3038 = vpop.f32.mrf.mxu0
    %v3039 = vadd.f32 %v2970, %v3038
    %v3040 = vpop.f32.mrf.mxu0
    %3041 = vmatprep.mubr.f32.mxu0 0.0
    %3042 = vmatmul.mubr.f32.gmra.mxu0 %v2870
    %v3043 = vpop.f32.mrf.mxu0
    %v3044 = vadd.f32 %v2970, %v3043
    %v3045 = vpop.f32.mrf.mxu0
    %3046 = vmatprep.mubr.f32.mxu0 0.0
    %3047 = vmatmul.mubr.f32.gmra.mxu0 %v2873
    %v3048 = vpop.f32.mrf.mxu0
    %v3049 = vadd.f32 %v2970, %v3048
    %v3050 = vpop.f32.mrf.mxu0
    %3051 = vmatprep.mubr.f32.mxu0 0.0
    %3052 = vmatmul.mubr.f32.gmra.mxu0 %v2876
    %v3053 = vpop.f32.mrf.mxu0
    %v3054 = vadd.f32 %v2970, %v3053
    %v3055 = vpop.f32.mrf.mxu0
    %3056 = vdwg.mxu0
    %v3061 = vcombine.high %v3039, %v3039
    %v3063 = vunpack.c.l.s4 1966171168
    %v3064 = vunpack.c.0.s8 %v3063
    %v3065 = vlaneseq
    %v3066 = vshrl.u32 %v3065, 7
    %v3067 = vsub.s32 %v3064, %v3066
    %v3068 = vrot.slane %v3039, %v3067
    %v3070 = vunpack.c.l.s4 1966171168
    %v3071 = vunpack.c.0.s8 %v3070
    %v3072 = vlaneseq
    %v3073 = vshrl.u32 %v3072, 7
    %v3074 = vsub.s32 %v3071, %v3073
    %v3075 = vrot.slane %v3061, %v3074
    %v3076 = vcombine.high %v3068, %v3068
    %v3077 = vcombine.high %v3075, %v3075
    %v3079 = vunpack.c.l.s4 1966171168
    %v3080 = vunpack.c.0.s8 %v3079
    %v3081 = vlaneseq
    %v3082 = vshrl.u32 %v3081, 7
    %v3083 = vsub.s32 %v3080, %v3082
    %v3084 = vrot.slane %v3068, %v3083
    %v3086 = vunpack.c.l.s4 1966171168
    %v3087 = vunpack.c.0.s8 %v3086
    %v3088 = vlaneseq
    %v3089 = vshrl.u32 %v3088, 7
    %v3090 = vsub.s32 %v3087, %v3089
    %v3091 = vrot.slane %v3075, %v3090
    %v3093 = vunpack.c.l.s4 1966171168
    %v3094 = vunpack.c.0.s8 %v3093
    %v3095 = vlaneseq
    %v3096 = vshrl.u32 %v3095, 7
    %v3097 = vsub.s32 %v3094, %v3096
    %v3098 = vrot.slane %v3076, %v3097
    %v3100 = vunpack.c.l.s4 1966171168
    %v3101 = vunpack.c.0.s8 %v3100
    %v3102 = vlaneseq
    %v3103 = vshrl.u32 %v3102, 7
    %v3104 = vsub.s32 %v3101, %v3103
    %v3105 = vrot.slane %v3077, %v3104
    %v3106 = vcombine.high %v3084, %v3084
    %v3107 = vcombine.high %v3091, %v3091
    %v3108 = vcombine.high %v3098, %v3098
    %v3109 = vcombine.high %v3105, %v3105
    %v3110 = vcombine.high %v3044, %v3044
    %v3112 = vunpack.c.l.s4 1966171168
    %v3113 = vunpack.c.0.s8 %v3112
    %v3114 = vlaneseq
    %v3115 = vshrl.u32 %v3114, 7
    %v3116 = vsub.s32 %v3113, %v3115
    %v3117 = vrot.slane %v3044, %v3116
    %v3119 = vunpack.c.l.s4 1966171168
    %v3120 = vunpack.c.0.s8 %v3119
    %v3121 = vlaneseq
    %v3122 = vshrl.u32 %v3121, 7
    %v3123 = vsub.s32 %v3120, %v3122
    %v3124 = vrot.slane %v3110, %v3123
    %v3125 = vcombine.high %v3117, %v3117
    %v3126 = vcombine.high %v3124, %v3124
    %v3128 = vunpack.c.l.s4 1966171168
    %v3129 = vunpack.c.0.s8 %v3128
    %v3130 = vlaneseq
    %v3131 = vshrl.u32 %v3130, 7
    %v3132 = vsub.s32 %v3129, %v3131
    %v3133 = vrot.slane %v3117, %v3132
    %v3135 = vunpack.c.l.s4 1966171168
    %v3136 = vunpack.c.0.s8 %v3135
    %v3137 = vlaneseq
    %v3138 = vshrl.u32 %v3137, 7
    %v3139 = vsub.s32 %v3136, %v3138
    %v3140 = vrot.slane %v3124, %v3139
    %v3142 = vunpack.c.l.s4 1966171168
    %v3143 = vunpack.c.0.s8 %v3142
    %v3144 = vlaneseq
    %v3145 = vshrl.u32 %v3144, 7
    %v3146 = vsub.s32 %v3143, %v3145
    %v3147 = vrot.slane %v3125, %v3146
    %v3149 = vunpack.c.l.s4 1966171168
    %v3150 = vunpack.c.0.s8 %v3149
    %v3151 = vlaneseq
    %v3152 = vshrl.u32 %v3151, 7
    %v3153 = vsub.s32 %v3150, %v3152
    %v3154 = vrot.slane %v3126, %v3153
    %v3155 = vcombine.high %v3133, %v3133
    %v3156 = vcombine.high %v3140, %v3140
    %v3157 = vcombine.high %v3147, %v3147
    %v3158 = vcombine.high %v3154, %v3154
    %v3159 = vcombine.high %v3049, %v3049
    %v3161 = vunpack.c.l.s4 1966171168
    %v3162 = vunpack.c.0.s8 %v3161
    %v3163 = vlaneseq
    %v3164 = vshrl.u32 %v3163, 7
    %v3165 = vsub.s32 %v3162, %v3164
    %v3166 = vrot.slane %v3049, %v3165
    %v3168 = vunpack.c.l.s4 1966171168
    %v3169 = vunpack.c.0.s8 %v3168
    %v3170 = vlaneseq
    %v3171 = vshrl.u32 %v3170, 7
    %v3172 = vsub.s32 %v3169, %v3171
    %v3173 = vrot.slane %v3159, %v3172
    %v3174 = vcombine.high %v3166, %v3166
    %v3175 = vcombine.high %v3173, %v3173
    %v3177 = vunpack.c.l.s4 1966171168
    %v3178 = vunpack.c.0.s8 %v3177
    %v3179 = vlaneseq
    %v3180 = vshrl.u32 %v3179, 7
    %v3181 = vsub.s32 %v3178, %v3180
    %v3182 = vrot.slane %v3166, %v3181
    %v3184 = vunpack.c.l.s4 1966171168
    %v3185 = vunpack.c.0.s8 %v3184
    %v3186 = vlaneseq
    %v3187 = vshrl.u32 %v3186, 7
    %v3188 = vsub.s32 %v3185, %v3187
    %v3189 = vrot.slane %v3173, %v3188
    %v3191 = vunpack.c.l.s4 1966171168
    %v3192 = vunpack.c.0.s8 %v3191
    %v3193 = vlaneseq
    %v3194 = vshrl.u32 %v3193, 7
    %v3195 = vsub.s32 %v3192, %v3194
    %v3196 = vrot.slane %v3174, %v3195
    %v3198 = vunpack.c.l.s4 1966171168
    %v3199 = vunpack.c.0.s8 %v3198
    %v3200 = vlaneseq
    %v3201 = vshrl.u32 %v3200, 7
    %v3202 = vsub.s32 %v3199, %v3201
    %v3203 = vrot.slane %v3175, %v3202
    %v3204 = vcombine.high %v3182, %v3182
    %v3205 = vcombine.high %v3189, %v3189
    %v3206 = vcombine.high %v3196, %v3196
    %v3207 = vcombine.high %v3203, %v3203
    %v3208 = vcombine.high %v3054, %v3054
    %v3210 = vunpack.c.l.s4 1966171168
    %v3211 = vunpack.c.0.s8 %v3210
    %v3212 = vlaneseq
    %v3213 = vshrl.u32 %v3212, 7
    %v3214 = vsub.s32 %v3211, %v3213
    %v3215 = vrot.slane %v3054, %v3214
    %v3217 = vunpack.c.l.s4 1966171168
    %v3218 = vunpack.c.0.s8 %v3217
    %v3219 = vlaneseq
    %v3220 = vshrl.u32 %v3219, 7
    %v3221 = vsub.s32 %v3218, %v3220
    %v3222 = vrot.slane %v3208, %v3221
    %v3223 = vcombine.high %v3215, %v3215
    %v3224 = vcombine.high %v3222, %v3222
    %v3226 = vunpack.c.l.s4 1966171168
    %v3227 = vunpack.c.0.s8 %v3226
    %v3228 = vlaneseq
    %v3229 = vshrl.u32 %v3228, 7
    %v3230 = vsub.s32 %v3227, %v3229
    %v3231 = vrot.slane %v3215, %v3230
    %v3233 = vunpack.c.l.s4 1966171168
    %v3234 = vunpack.c.0.s8 %v3233
    %v3235 = vlaneseq
    %v3236 = vshrl.u32 %v3235, 7
    %v3237 = vsub.s32 %v3234, %v3236
    %v3238 = vrot.slane %v3222, %v3237
    %v3240 = vunpack.c.l.s4 1966171168
    %v3241 = vunpack.c.0.s8 %v3240
    %v3242 = vlaneseq
    %v3243 = vshrl.u32 %v3242, 7
    %v3244 = vsub.s32 %v3241, %v3243
    %v3245 = vrot.slane %v3223, %v3244
    %v3247 = vunpack.c.l.s4 1966171168
    %v3248 = vunpack.c.0.s8 %v3247
    %v3249 = vlaneseq
    %v3250 = vshrl.u32 %v3249, 7
    %v3251 = vsub.s32 %v3248, %v3250
    %v3252 = vrot.slane %v3224, %v3251
    %v3253 = vcombine.high %v3231, %v3231
    %v3254 = vcombine.high %v3238, %v3238
    %v3255 = vcombine.high %v3245, %v3245
    %v3256 = vcombine.high %v3252, %v3252
    %v3257 = vlaneseq
    %v3258 = vshrl.u32 %v3257, 7
    %v3259 = vsub.s32 0, %v3258
    %v3260 = vrot.slane %v3084, %v3259
    %v3261 = vlaneseq
    %v3262 = vshrl.u32 %v3261, 7
    %v3263 = vsub.s32 0, %v3262
    %v3264 = vrot.slane %v3098, %v3263
    %v3265 = vlaneseq
    %v3266 = vshrl.u32 %v3265, 7
    %v3267 = vsub.s32 0, %v3266
    %v3268 = vrot.slane %v3106, %v3267
    %v3269 = vlaneseq
    %v3270 = vshrl.u32 %v3269, 7
    %v3271 = vsub.s32 0, %v3270
    %v3272 = vrot.slane %v3108, %v3271
    %v3273 = vlaneseq
    %v3274 = vshrl.u32 %v3273, 7
    %v3275 = vsub.s32 0, %v3274
    %v3276 = vrot.slane %v3091, %v3275
    %v3277 = vlaneseq
    %v3278 = vshrl.u32 %v3277, 7
    %v3279 = vsub.s32 0, %v3278
    %v3280 = vrot.slane %v3105, %v3279
    %v3281 = vlaneseq
    %v3282 = vshrl.u32 %v3281, 7
    %v3283 = vsub.s32 0, %v3282
    %v3284 = vrot.slane %v3107, %v3283
    %v3285 = vlaneseq
    %v3286 = vshrl.u32 %v3285, 7
    %v3287 = vsub.s32 0, %v3286
    %v3288 = vrot.slane %v3109, %v3287
    %v3289 = vlaneseq
    %v3290 = vshrl.u32 %v3289, 7
    %v3291 = vsub.s32 0, %v3290
    %v3292 = vrot.slane %v3133, %v3291
    %v3293 = vlaneseq
    %v3294 = vshrl.u32 %v3293, 7
    %v3295 = vsub.s32 0, %v3294
    %v3296 = vrot.slane %v3147, %v3295
    %v3297 = vlaneseq
    %v3298 = vshrl.u32 %v3297, 7
    %v3299 = vsub.s32 0, %v3298
    %v3300 = vrot.slane %v3155, %v3299
    %v3301 = vlaneseq
    %v3302 = vshrl.u32 %v3301, 7
    %v3303 = vsub.s32 0, %v3302
    %v3304 = vrot.slane %v3157, %v3303
    %v3305 = vlaneseq
    %v3306 = vshrl.u32 %v3305, 7
    %v3307 = vsub.s32 0, %v3306
    %v3308 = vrot.slane %v3140, %v3307
    %v3309 = vlaneseq
    %v3310 = vshrl.u32 %v3309, 7
    %v3311 = vsub.s32 0, %v3310
    %v3312 = vrot.slane %v3154, %v3311
    %v3313 = vlaneseq
    %v3314 = vshrl.u32 %v3313, 7
    %v3315 = vsub.s32 0, %v3314
    %v3316 = vrot.slane %v3156, %v3315
    %v3317 = vlaneseq
    %v3318 = vshrl.u32 %v3317, 7
    %v3319 = vsub.s32 0, %v3318
    %v3320 = vrot.slane %v3158, %v3319
    %v3321 = vlaneseq
    %v3322 = vshrl.u32 %v3321, 7
    %v3323 = vsub.s32 0, %v3322
    %v3324 = vrot.slane %v3182, %v3323
    %v3325 = vlaneseq
    %v3326 = vshrl.u32 %v3325, 7
    %v3327 = vsub.s32 0, %v3326
    %v3328 = vrot.slane %v3196, %v3327
    %v3329 = vlaneseq
    %v3330 = vshrl.u32 %v3329, 7
    %v3331 = vsub.s32 0, %v3330
    %v3332 = vrot.slane %v3204, %v3331
    %v3333 = vlaneseq
    %v3334 = vshrl.u32 %v3333, 7
    %v3335 = vsub.s32 0, %v3334
    %v3336 = vrot.slane %v3206, %v3335
    %v3337 = vlaneseq
    %v3338 = vshrl.u32 %v3337, 7
    %v3339 = vsub.s32 0, %v3338
    %v3340 = vrot.slane %v3189, %v3339
    %v3341 = vlaneseq
    %v3342 = vshrl.u32 %v3341, 7
    %v3343 = vsub.s32 0, %v3342
    %v3344 = vrot.slane %v3203, %v3343
    %v3345 = vlaneseq
    %v3346 = vshrl.u32 %v3345, 7
    %v3347 = vsub.s32 0, %v3346
    %v3348 = vrot.slane %v3205, %v3347
    %v3349 = vlaneseq
    %v3350 = vshrl.u32 %v3349, 7
    %v3351 = vsub.s32 0, %v3350
    %v3352 = vrot.slane %v3207, %v3351
    %v3353 = vlaneseq
    %v3354 = vshrl.u32 %v3353, 7
    %v3355 = vsub.s32 0, %v3354
    %v3356 = vrot.slane %v3231, %v3355
    %v3357 = vlaneseq
    %v3358 = vshrl.u32 %v3357, 7
    %v3359 = vsub.s32 0, %v3358
    %v3360 = vrot.slane %v3245, %v3359
    %v3361 = vlaneseq
    %v3362 = vshrl.u32 %v3361, 7
    %v3363 = vsub.s32 0, %v3362
    %v3364 = vrot.slane %v3253, %v3363
    %v3365 = vlaneseq
    %v3366 = vshrl.u32 %v3365, 7
    %v3367 = vsub.s32 0, %v3366
    %v3368 = vrot.slane %v3255, %v3367
    %v3369 = vlaneseq
    %v3370 = vshrl.u32 %v3369, 7
    %v3371 = vsub.s32 0, %v3370
    %v3372 = vrot.slane %v3238, %v3371
    %v3373 = vlaneseq
    %v3374 = vshrl.u32 %v3373, 7
    %v3375 = vsub.s32 0, %v3374
    %v3376 = vrot.slane %v3252, %v3375
    %v3377 = vlaneseq
    %v3378 = vshrl.u32 %v3377, 7
    %v3379 = vsub.s32 0, %v3378
    %v3380 = vrot.slane %v3254, %v3379
    %v3381 = vlaneseq
    %v3382 = vshrl.u32 %v3381, 7
    %v3383 = vsub.s32 0, %v3382
    %v3384 = vrot.slane %v3256, %v3383
    %v3417 = vadd.f32 %v3260, %v2945
    %v3418 = vadd.f32 %v3260, %v2950
    %v3419 = vadd.f32 %v3260, %v2955
    %v3420 = vadd.f32 %v3260, %v2960
    %v3421 = vadd.f32 %v3264, %v2945
    %v3422 = vadd.f32 %v3264, %v2950
    %v3423 = vadd.f32 %v3264, %v2955
    %v3424 = vadd.f32 %v3264, %v2960
    %v3425 = vadd.f32 %v3268, %v2945
    %v3426 = vadd.f32 %v3268, %v2950
    %v3427 = vadd.f32 %v3268, %v2955
    %v3428 = vadd.f32 %v3268, %v2960
    %v3429 = vadd.f32 %v3272, %v2945
    %v3430 = vadd.f32 %v3272, %v2950
    %v3431 = vadd.f32 %v3272, %v2955
    %v3432 = vadd.f32 %v3272, %v2960
    %v3433 = vadd.f32 %v3276, %v2945
    %v3434 = vadd.f32 %v3276, %v2950
    %v3435 = vadd.f32 %v3276, %v2955
    %v3436 = vadd.f32 %v3276, %v2960
    %v3437 = vadd.f32 %v3280, %v2945
    %v3438 = vadd.f32 %v3280, %v2950
    %v3439 = vadd.f32 %v3280, %v2955
    %v3440 = vadd.f32 %v3280, %v2960
    %v3441 = vadd.f32 %v3284, %v2945
    %v3442 = vadd.f32 %v3284, %v2950
    %v3443 = vadd.f32 %v3284, %v2955
    %v3444 = vadd.f32 %v3284, %v2960
    %v3445 = vadd.f32 %v3288, %v2945
    %v3446 = vadd.f32 %v3288, %v2950
    %v3447 = vadd.f32 %v3288, %v2955
    %v3448 = vadd.f32 %v3288, %v2960
    %v3449 = vadd.f32 %v3292, %v2945
    %v3450 = vadd.f32 %v3292, %v2950
    %v3451 = vadd.f32 %v3292, %v2955
    %v3452 = vadd.f32 %v3292, %v2960
    %v3453 = vadd.f32 %v3296, %v2945
    %v3454 = vadd.f32 %v3296, %v2950
    %v3455 = vadd.f32 %v3296, %v2955
    %v3456 = vadd.f32 %v3296, %v2960
    %v3457 = vadd.f32 %v3300, %v2945
    %v3458 = vadd.f32 %v3300, %v2950
    %v3459 = vadd.f32 %v3300, %v2955
    %v3460 = vadd.f32 %v3300, %v2960
    %v3461 = vadd.f32 %v3304, %v2945
    %v3462 = vadd.f32 %v3304, %v2950
    %v3463 = vadd.f32 %v3304, %v2955
    %v3464 = vadd.f32 %v3304, %v2960
    %v3465 = vadd.f32 %v3308, %v2945
    %v3466 = vadd.f32 %v3308, %v2950
    %v3467 = vadd.f32 %v3308, %v2955
    %v3468 = vadd.f32 %v3308, %v2960
    %v3469 = vadd.f32 %v3312, %v2945
    %v3470 = vadd.f32 %v3312, %v2950
    %v3471 = vadd.f32 %v3312, %v2955
    %v3472 = vadd.f32 %v3312, %v2960
    %v3473 = vadd.f32 %v3316, %v2945
    %v3474 = vadd.f32 %v3316, %v2950
    %v3475 = vadd.f32 %v3316, %v2955
    %v3476 = vadd.f32 %v3316, %v2960
    %v3477 = vadd.f32 %v3320, %v2945
    %v3478 = vadd.f32 %v3320, %v2950
    %v3479 = vadd.f32 %v3320, %v2955
    %v3480 = vadd.f32 %v3320, %v2960
    %v3481 = vadd.f32 %v3324, %v2945
    %v3482 = vadd.f32 %v3324, %v2950
    %v3483 = vadd.f32 %v3324, %v2955
    %v3484 = vadd.f32 %v3324, %v2960
    %v3485 = vadd.f32 %v3328, %v2945
    %v3486 = vadd.f32 %v3328, %v2950
    %v3487 = vadd.f32 %v3328, %v2955
    %v3488 = vadd.f32 %v3328, %v2960
    %v3489 = vadd.f32 %v3332, %v2945
    %v3490 = vadd.f32 %v3332, %v2950
    %v3491 = vadd.f32 %v3332, %v2955
    %v3492 = vadd.f32 %v3332, %v2960
    %v3493 = vadd.f32 %v3336, %v2945
    %v3494 = vadd.f32 %v3336, %v2950
    %v3495 = vadd.f32 %v3336, %v2955
    %v3496 = vadd.f32 %v3336, %v2960
    %v3497 = vadd.f32 %v3340, %v2945
    %v3498 = vadd.f32 %v3340, %v2950
    %v3499 = vadd.f32 %v3340, %v2955
    %v3500 = vadd.f32 %v3340, %v2960
    %v3501 = vadd.f32 %v3344, %v2945
    %v3502 = vadd.f32 %v3344, %v2950
    %v3503 = vadd.f32 %v3344, %v2955
    %v3504 = vadd.f32 %v3344, %v2960
    %v3505 = vadd.f32 %v3348, %v2945
    %v3506 = vadd.f32 %v3348, %v2950
    %v3507 = vadd.f32 %v3348, %v2955
    %v3508 = vadd.f32 %v3348, %v2960
    %v3509 = vadd.f32 %v3352, %v2945
    %v3510 = vadd.f32 %v3352, %v2950
    %v3511 = vadd.f32 %v3352, %v2955
    %v3512 = vadd.f32 %v3352, %v2960
    %v3513 = vadd.f32 %v3356, %v2945
    %v3514 = vadd.f32 %v3356, %v2950
    %v3515 = vadd.f32 %v3356, %v2955
    %v3516 = vadd.f32 %v3356, %v2960
    %v3517 = vadd.f32 %v3360, %v2945
    %v3518 = vadd.f32 %v3360, %v2950
    %v3519 = vadd.f32 %v3360, %v2955
    %v3520 = vadd.f32 %v3360, %v2960
    %v3521 = vadd.f32 %v3364, %v2945
    %v3522 = vadd.f32 %v3364, %v2950
    %v3523 = vadd.f32 %v3364, %v2955
    %v3524 = vadd.f32 %v3364, %v2960
    %v3525 = vadd.f32 %v3368, %v2945
    %v3526 = vadd.f32 %v3368, %v2950
    %v3527 = vadd.f32 %v3368, %v2955
    %v3528 = vadd.f32 %v3368, %v2960
    %v3529 = vadd.f32 %v3372, %v2945
    %v3530 = vadd.f32 %v3372, %v2950
    %v3531 = vadd.f32 %v3372, %v2955
    %v3532 = vadd.f32 %v3372, %v2960
    %v3533 = vadd.f32 %v3376, %v2945
    %v3534 = vadd.f32 %v3376, %v2950
    %v3535 = vadd.f32 %v3376, %v2955
    %v3536 = vadd.f32 %v3376, %v2960
    %v3537 = vadd.f32 %v3380, %v2945
    %v3538 = vadd.f32 %v3380, %v2950
    %v3539 = vadd.f32 %v3380, %v2955
    %v3540 = vadd.f32 %v3380, %v2960
    %v3541 = vadd.f32 %v3384, %v2945
    %v3542 = vadd.f32 %v3384, %v2950
    %v3543 = vadd.f32 %v3384, %v2955
    %v3544 = vadd.f32 %v3384, %v2960
    %v3545 = vld [vmem:[%s65] sm:$0x1]
    %vm3546 = vcmp.gt.f32.partialorder %v3417, 0.0
    %vm3547 = vcmp.gt.f32.partialorder %v3418, 0.0
    %vm3548 = vcmp.gt.f32.partialorder %v3419, 0.0
    %vm3549 = vcmp.gt.f32.partialorder %v3420, 0.0
    %vm3550 = vcmp.gt.f32.partialorder %v3421, 0.0
    %vm3551 = vcmp.gt.f32.partialorder %v3422, 0.0
    %vm3552 = vcmp.gt.f32.partialorder %v3423, 0.0
    %vm3553 = vcmp.gt.f32.partialorder %v3424, 0.0
    %vm3554 = vcmp.gt.f32.partialorder %v3425, 0.0
    %vm3555 = vcmp.gt.f32.partialorder %v3426, 0.0
    %vm3556 = vcmp.gt.f32.partialorder %v3427, 0.0
    %vm3557 = vcmp.gt.f32.partialorder %v3428, 0.0
    %vm3558 = vcmp.gt.f32.partialorder %v3429, 0.0
    %vm3559 = vcmp.gt.f32.partialorder %v3430, 0.0
    %vm3560 = vcmp.gt.f32.partialorder %v3431, 0.0
    %vm3561 = vcmp.gt.f32.partialorder %v3432, 0.0
    %vm3562 = vcmp.gt.f32.partialorder %v3433, 0.0
    %vm3563 = vcmp.gt.f32.partialorder %v3434, 0.0
    %vm3564 = vcmp.gt.f32.partialorder %v3435, 0.0
    %vm3565 = vcmp.gt.f32.partialorder %v3436, 0.0
    %vm3566 = vcmp.gt.f32.partialorder %v3437, 0.0
    %vm3567 = vcmp.gt.f32.partialorder %v3438, 0.0
    %vm3568 = vcmp.gt.f32.partialorder %v3439, 0.0
    %vm3569 = vcmp.gt.f32.partialorder %v3440, 0.0
    %vm3570 = vcmp.gt.f32.partialorder %v3441, 0.0
    %vm3571 = vcmp.gt.f32.partialorder %v3442, 0.0
    %vm3572 = vcmp.gt.f32.partialorder %v3443, 0.0
    %vm3573 = vcmp.gt.f32.partialorder %v3444, 0.0
    %vm3574 = vcmp.gt.f32.partialorder %v3445, 0.0
    %vm3575 = vcmp.gt.f32.partialorder %v3446, 0.0
    %vm3576 = vcmp.gt.f32.partialorder %v3447, 0.0
    %vm3577 = vcmp.gt.f32.partialorder %v3448, 0.0
    %vm3578 = vcmp.gt.f32.partialorder %v3449, 0.0
    %vm3579 = vcmp.gt.f32.partialorder %v3450, 0.0
    %vm3580 = vcmp.gt.f32.partialorder %v3451, 0.0
    %vm3581 = vcmp.gt.f32.partialorder %v3452, 0.0
    %vm3582 = vcmp.gt.f32.partialorder %v3453, 0.0
    %vm3583 = vcmp.gt.f32.partialorder %v3454, 0.0
    %vm3584 = vcmp.gt.f32.partialorder %v3455, 0.0
    %vm3585 = vcmp.gt.f32.partialorder %v3456, 0.0
    %vm3586 = vcmp.gt.f32.partialorder %v3457, 0.0
    %vm3587 = vcmp.gt.f32.partialorder %v3458, 0.0
    %vm3588 = vcmp.gt.f32.partialorder %v3459, 0.0
    %vm3589 = vcmp.gt.f32.partialorder %v3460, 0.0
    %vm3590 = vcmp.gt.f32.partialorder %v3461, 0.0
    %vm3591 = vcmp.gt.f32.partialorder %v3462, 0.0
    %vm3592 = vcmp.gt.f32.partialorder %v3463, 0.0
    %vm3593 = vcmp.gt.f32.partialorder %v3464, 0.0
    %vm3594 = vcmp.gt.f32.partialorder %v3465, 0.0
    %vm3595 = vcmp.gt.f32.partialorder %v3466, 0.0
    %vm3596 = vcmp.gt.f32.partialorder %v3467, 0.0
    %vm3597 = vcmp.gt.f32.partialorder %v3468, 0.0
    %vm3598 = vcmp.gt.f32.partialorder %v3469, 0.0
    %vm3599 = vcmp.gt.f32.partialorder %v3470, 0.0
    %vm3600 = vcmp.gt.f32.partialorder %v3471, 0.0
    %vm3601 = vcmp.gt.f32.partialorder %v3472, 0.0
    %vm3602 = vcmp.gt.f32.partialorder %v3473, 0.0
    %vm3603 = vcmp.gt.f32.partialorder %v3474, 0.0
    %vm3604 = vcmp.gt.f32.partialorder %v3475, 0.0
    %vm3605 = vcmp.gt.f32.partialorder %v3476, 0.0
    %vm3606 = vcmp.gt.f32.partialorder %v3477, 0.0
    %vm3607 = vcmp.gt.f32.partialorder %v3478, 0.0
    %vm3608 = vcmp.gt.f32.partialorder %v3479, 0.0
    %vm3609 = vcmp.gt.f32.partialorder %v3480, 0.0
    %vm3610 = vcmp.gt.f32.partialorder %v3481, 0.0
    %vm3611 = vcmp.gt.f32.partialorder %v3482, 0.0
    %vm3612 = vcmp.gt.f32.partialorder %v3483, 0.0
    %vm3613 = vcmp.gt.f32.partialorder %v3484, 0.0
    %vm3614 = vcmp.gt.f32.partialorder %v3485, 0.0
    %vm3615 = vcmp.gt.f32.partialorder %v3486, 0.0
    %vm3616 = vcmp.gt.f32.partialorder %v3487, 0.0
    %vm3617 = vcmp.gt.f32.partialorder %v3488, 0.0
    %vm3618 = vcmp.gt.f32.partialorder %v3489, 0.0
    %vm3619 = vcmp.gt.f32.partialorder %v3490, 0.0
    %vm3620 = vcmp.gt.f32.partialorder %v3491, 0.0
    %vm3621 = vcmp.gt.f32.partialorder %v3492, 0.0
    %vm3622 = vcmp.gt.f32.partialorder %v3493, 0.0
    %vm3623 = vcmp.gt.f32.partialorder %v3494, 0.0
    %vm3624 = vcmp.gt.f32.partialorder %v3495, 0.0
    %vm3625 = vcmp.gt.f32.partialorder %v3496, 0.0
    %vm3626 = vcmp.gt.f32.partialorder %v3497, 0.0
    %vm3627 = vcmp.gt.f32.partialorder %v3498, 0.0
    %vm3628 = vcmp.gt.f32.partialorder %v3499, 0.0
    %vm3629 = vcmp.gt.f32.partialorder %v3500, 0.0
    %vm3630 = vcmp.gt.f32.partialorder %v3501, 0.0
    %vm3631 = vcmp.gt.f32.partialorder %v3502, 0.0
    %vm3632 = vcmp.gt.f32.partialorder %v3503, 0.0
    %vm3633 = vcmp.gt.f32.partialorder %v3504, 0.0
    %vm3634 = vcmp.gt.f32.partialorder %v3505, 0.0
    %vm3635 = vcmp.gt.f32.partialorder %v3506, 0.0
    %vm3636 = vcmp.gt.f32.partialorder %v3507, 0.0
    %vm3637 = vcmp.gt.f32.partialorder %v3508, 0.0
    %vm3638 = vcmp.gt.f32.partialorder %v3509, 0.0
    %vm3639 = vcmp.gt.f32.partialorder %v3510, 0.0
    %vm3640 = vcmp.gt.f32.partialorder %v3511, 0.0
    %vm3641 = vcmp.gt.f32.partialorder %v3512, 0.0
    %vm3642 = vcmp.gt.f32.partialorder %v3513, 0.0
    %vm3643 = vcmp.gt.f32.partialorder %v3514, 0.0
    %vm3644 = vcmp.gt.f32.partialorder %v3515, 0.0
    %vm3645 = vcmp.gt.f32.partialorder %v3516, 0.0
    %vm3646 = vcmp.gt.f32.partialorder %v3517, 0.0
    %vm3647 = vcmp.gt.f32.partialorder %v3518, 0.0
    %vm3648 = vcmp.gt.f32.partialorder %v3519, 0.0
    %vm3649 = vcmp.gt.f32.partialorder %v3520, 0.0
    %vm3650 = vcmp.gt.f32.partialorder %v3521, 0.0
    %vm3651 = vcmp.gt.f32.partialorder %v3522, 0.0
    %vm3652 = vcmp.gt.f32.partialorder %v3523, 0.0
    %vm3653 = vcmp.gt.f32.partialorder %v3524, 0.0
    %vm3654 = vcmp.gt.f32.partialorder %v3525, 0.0
    %vm3655 = vcmp.gt.f32.partialorder %v3526, 0.0
    %vm3656 = vcmp.gt.f32.partialorder %v3527, 0.0
    %vm3657 = vcmp.gt.f32.partialorder %v3528, 0.0
    %vm3658 = vcmp.gt.f32.partialorder %v3529, 0.0
    %vm3659 = vcmp.gt.f32.partialorder %v3530, 0.0
    %vm3660 = vcmp.gt.f32.partialorder %v3531, 0.0
    %vm3661 = vcmp.gt.f32.partialorder %v3532, 0.0
    %vm3662 = vcmp.gt.f32.partialorder %v3533, 0.0
    %vm3663 = vcmp.gt.f32.partialorder %v3534, 0.0
    %vm3664 = vcmp.gt.f32.partialorder %v3535, 0.0
    %vm3665 = vcmp.gt.f32.partialorder %v3536, 0.0
    %vm3666 = vcmp.gt.f32.partialorder %v3537, 0.0
    %vm3667 = vcmp.gt.f32.partialorder %v3538, 0.0
    %vm3668 = vcmp.gt.f32.partialorder %v3539, 0.0
    %vm3669 = vcmp.gt.f32.partialorder %v3540, 0.0
    %vm3670 = vcmp.gt.f32.partialorder %v3541, 0.0
    %vm3671 = vcmp.gt.f32.partialorder %v3542, 0.0
    %vm3672 = vcmp.gt.f32.partialorder %v3543, 0.0
    %vm3673 = vcmp.gt.f32.partialorder %v3544, 0.0
    %v3675 = vlaneseq
    %v3676 = vshrl.u32 %v3675, 7
    %v3677 = vsub.s32 0, %v3676
    %v3678 = vrot.slane %v3545, %v3677
    %v3680 = vmul.f32 %v3678, %v3417
    %v3681 = vmul.f32 %v3678, %v3418
    %v3682 = vmul.f32 %v3678, %v3419
    %v3683 = vmul.f32 %v3678, %v3420
    %v3684 = vmul.f32 %v3678, %v3421
    %v3685 = vmul.f32 %v3678, %v3422
    %v3686 = vmul.f32 %v3678, %v3423
    %v3687 = vmul.f32 %v3678, %v3424
    %v3688 = vmul.f32 %v3678, %v3425
    %v3689 = vmul.f32 %v3678, %v3426
    %v3690 = vmul.f32 %v3678, %v3427
    %v3691 = vmul.f32 %v3678, %v3428
    %v3692 = vmul.f32 %v3678, %v3429
    %v3693 = vmul.f32 %v3678, %v3430
    %v3694 = vmul.f32 %v3678, %v3431
    %v3695 = vmul.f32 %v3678, %v3432
    %v3696 = vmul.f32 %v3678, %v3433
    %v3697 = vmul.f32 %v3678, %v3434
    %v3698 = vmul.f32 %v3678, %v3435
    %v3699 = vmul.f32 %v3678, %v3436
    %v3700 = vmul.f32 %v3678, %v3437
    %v3701 = vmul.f32 %v3678, %v3438
    %v3702 = vmul.f32 %v3678, %v3439
    %v3703 = vmul.f32 %v3678, %v3440
    %v3704 = vmul.f32 %v3678, %v3441
    %v3705 = vmul.f32 %v3678, %v3442
    %v3706 = vmul.f32 %v3678, %v3443
    %v3707 = vmul.f32 %v3678, %v3444
    %v3708 = vmul.f32 %v3678, %v3445
    %v3709 = vmul.f32 %v3678, %v3446
    %v3710 = vmul.f32 %v3678, %v3447
    %v3711 = vmul.f32 %v3678, %v3448
    %v3712 = vmul.f32 %v3678, %v3449
    %v3713 = vmul.f32 %v3678, %v3450
    %v3714 = vmul.f32 %v3678, %v3451
    %v3715 = vmul.f32 %v3678, %v3452
    %v3716 = vmul.f32 %v3678, %v3453
    %v3717 = vmul.f32 %v3678, %v3454
    %v3718 = vmul.f32 %v3678, %v3455
    %v3719 = vmul.f32 %v3678, %v3456
    %v3720 = vmul.f32 %v3678, %v3457
    %v3721 = vmul.f32 %v3678, %v3458
    %v3722 = vmul.f32 %v3678, %v3459
    %v3723 = vmul.f32 %v3678, %v3460
    %v3724 = vmul.f32 %v3678, %v3461
    %v3725 = vmul.f32 %v3678, %v3462
    %v3726 = vmul.f32 %v3678, %v3463
    %v3727 = vmul.f32 %v3678, %v3464
    %v3728 = vmul.f32 %v3678, %v3465
    %v3729 = vmul.f32 %v3678, %v3466
    %v3730 = vmul.f32 %v3678, %v3467
    %v3731 = vmul.f32 %v3678, %v3468
    %v3732 = vmul.f32 %v3678, %v3469
    %v3733 = vmul.f32 %v3678, %v3470
    %v3734 = vmul.f32 %v3678, %v3471
    %v3735 = vmul.f32 %v3678, %v3472
    %v3736 = vmul.f32 %v3678, %v3473
    %v3737 = vmul.f32 %v3678, %v3474
    %v3738 = vmul.f32 %v3678, %v3475
    %v3739 = vmul.f32 %v3678, %v3476
    %v3740 = vmul.f32 %v3678, %v3477
    %v3741 = vmul.f32 %v3678, %v3478
    %v3742 = vmul.f32 %v3678, %v3479
    %v3743 = vmul.f32 %v3678, %v3480
    %v3744 = vmul.f32 %v3678, %v3481
    %v3745 = vmul.f32 %v3678, %v3482
    %v3746 = vmul.f32 %v3678, %v3483
    %v3747 = vmul.f32 %v3678, %v3484
    %v3748 = vmul.f32 %v3678, %v3485
    %v3749 = vmul.f32 %v3678, %v3486
    %v3750 = vmul.f32 %v3678, %v3487
    %v3751 = vmul.f32 %v3678, %v3488
    %v3752 = vmul.f32 %v3678, %v3489
    %v3753 = vmul.f32 %v3678, %v3490
    %v3754 = vmul.f32 %v3678, %v3491
    %v3755 = vmul.f32 %v3678, %v3492
    %v3756 = vmul.f32 %v3678, %v3493
    %v3757 = vmul.f32 %v3678, %v3494
    %v3758 = vmul.f32 %v3678, %v3495
    %v3759 = vmul.f32 %v3678, %v3496
    %v3760 = vmul.f32 %v3678, %v3497
    %v3761 = vmul.f32 %v3678, %v3498
    %v3762 = vmul.f32 %v3678, %v3499
    %v3763 = vmul.f32 %v3678, %v3500
    %v3764 = vmul.f32 %v3678, %v3501
    %v3765 = vmul.f32 %v3678, %v3502
    %v3766 = vmul.f32 %v3678, %v3503
    %v3767 = vmul.f32 %v3678, %v3504
    %v3768 = vmul.f32 %v3678, %v3505
    %v3769 = vmul.f32 %v3678, %v3506
    %v3770 = vmul.f32 %v3678, %v3507
    %v3771 = vmul.f32 %v3678, %v3508
    %v3772 = vmul.f32 %v3678, %v3509
    %v3773 = vmul.f32 %v3678, %v3510
    %v3774 = vmul.f32 %v3678, %v3511
    %v3775 = vmul.f32 %v3678, %v3512
    %v3776 = vmul.f32 %v3678, %v3513
    %v3777 = vmul.f32 %v3678, %v3514
    %v3778 = vmul.f32 %v3678, %v3515
    %v3779 = vmul.f32 %v3678, %v3516
    %v3780 = vmul.f32 %v3678, %v3517
    %v3781 = vmul.f32 %v3678, %v3518
    %v3782 = vmul.f32 %v3678, %v3519
    %v3783 = vmul.f32 %v3678, %v3520
    %v3784 = vmul.f32 %v3678, %v3521
    %v3785 = vmul.f32 %v3678, %v3522
    %v3786 = vmul.f32 %v3678, %v3523
    %v3787 = vmul.f32 %v3678, %v3524
    %v3788 = vmul.f32 %v3678, %v3525
    %v3789 = vmul.f32 %v3678, %v3526
    %v3790 = vmul.f32 %v3678, %v3527
    %v3791 = vmul.f32 %v3678, %v3528
    %v3792 = vmul.f32 %v3678, %v3529
    %v3793 = vmul.f32 %v3678, %v3530
    %v3794 = vmul.f32 %v3678, %v3531
    %v3795 = vmul.f32 %v3678, %v3532
    %v3796 = vmul.f32 %v3678, %v3533
    %v3797 = vmul.f32 %v3678, %v3534
    %v3798 = vmul.f32 %v3678, %v3535
    %v3799 = vmul.f32 %v3678, %v3536
    %v3800 = vmul.f32 %v3678, %v3537
    %v3801 = vmul.f32 %v3678, %v3538
    %v3802 = vmul.f32 %v3678, %v3539
    %v3803 = vmul.f32 %v3678, %v3540
    %v3804 = vmul.f32 %v3678, %v3541
    %v3805 = vmul.f32 %v3678, %v3542
    %v3806 = vmul.f32 %v3678, %v3543
    %v3807 = vmul.f32 %v3678, %v3544
    %v3808 = vsel %vm3546, %v3417, %v3680
    %v3809 = vsel %vm3547, %v3418, %v3681
    %v3810 = vsel %vm3548, %v3419, %v3682
    %v3811 = vsel %vm3549, %v3420, %v3683
    %v3812 = vsel %vm3550, %v3421, %v3684
    %v3813 = vsel %vm3551, %v3422, %v3685
    %v3814 = vsel %vm3552, %v3423, %v3686
    %v3815 = vsel %vm3553, %v3424, %v3687
    %v3816 = vsel %vm3554, %v3425, %v3688
    %v3817 = vsel %vm3555, %v3426, %v3689
    %v3818 = vsel %vm3556, %v3427, %v3690
    %v3819 = vsel %vm3557, %v3428, %v3691
    %v3820 = vsel %vm3558, %v3429, %v3692
    %v3821 = vsel %vm3559, %v3430, %v3693
    %v3822 = vsel %vm3560, %v3431, %v3694
    %v3823 = vsel %vm3561, %v3432, %v3695
    %v3824 = vsel %vm3562, %v3433, %v3696
    %v3825 = vsel %vm3563, %v3434, %v3697
    %v3826 = vsel %vm3564, %v3435, %v3698
    %v3827 = vsel %vm3565, %v3436, %v3699
    %v3828 = vsel %vm3566, %v3437, %v3700
    %v3829 = vsel %vm3567, %v3438, %v3701
    %v3830 = vsel %vm3568, %v3439, %v3702
    %v3831 = vsel %vm3569, %v3440, %v3703
    %v3832 = vsel %vm3570, %v3441, %v3704
    %v3833 = vsel %vm3571, %v3442, %v3705
    %v3834 = vsel %vm3572, %v3443, %v3706
    %v3835 = vsel %vm3573, %v3444, %v3707
    %v3836 = vsel %vm3574, %v3445, %v3708
    %v3837 = vsel %vm3575, %v3446, %v3709
    %v3838 = vsel %vm3576, %v3447, %v3710
    %v3839 = vsel %vm3577, %v3448, %v3711
    %v3840 = vsel %vm3578, %v3449, %v3712
    %v3841 = vsel %vm3579, %v3450, %v3713
    %v3842 = vsel %vm3580, %v3451, %v3714
    %v3843 = vsel %vm3581, %v3452, %v3715
    %v3844 = vsel %vm3582, %v3453, %v3716
    %v3845 = vsel %vm3583, %v3454, %v3717
    %v3846 = vsel %vm3584, %v3455, %v3718
    %v3847 = vsel %vm3585, %v3456, %v3719
    %v3848 = vsel %vm3586, %v3457, %v3720
    %v3849 = vsel %vm3587, %v3458, %v3721
    %v3850 = vsel %vm3588, %v3459, %v3722
    %v3851 = vsel %vm3589, %v3460, %v3723
    %v3852 = vsel %vm3590, %v3461, %v3724
    %v3853 = vsel %vm3591, %v3462, %v3725
    %v3854 = vsel %vm3592, %v3463, %v3726
    %v3855 = vsel %vm3593, %v3464, %v3727
    %v3856 = vsel %vm3594, %v3465, %v3728
    %v3857 = vsel %vm3595, %v3466, %v3729
    %v3858 = vsel %vm3596, %v3467, %v3730
    %v3859 = vsel %vm3597, %v3468, %v3731
    %v3860 = vsel %vm3598, %v3469, %v3732
    %v3861 = vsel %vm3599, %v3470, %v3733
    %v3862 = vsel %vm3600, %v3471, %v3734
    %v3863 = vsel %vm3601, %v3472, %v3735
    %v3864 = vsel %vm3602, %v3473, %v3736
    %v3865 = vsel %vm3603, %v3474, %v3737
    %v3866 = vsel %vm3604, %v3475, %v3738
    %v3867 = vsel %vm3605, %v3476, %v3739
    %v3868 = vsel %vm3606, %v3477, %v3740
    %v3869 = vsel %vm3607, %v3478, %v3741
    %v3870 = vsel %vm3608, %v3479, %v3742
    %v3871 = vsel %vm3609, %v3480, %v3743
    %v3872 = vsel %vm3610, %v3481, %v3744
    %v3873 = vsel %vm3611, %v3482, %v3745
    %v3874 = vsel %vm3612, %v3483, %v3746
    %v3875 = vsel %vm3613, %v3484, %v3747
    %v3876 = vsel %vm3614, %v3485, %v3748
    %v3877 = vsel %vm3615, %v3486, %v3749
    %v3878 = vsel %vm3616, %v3487, %v3750
    %v3879 = vsel %vm3617, %v3488, %v3751
    %v3880 = vsel %vm3618, %v3489, %v3752
    %v3881 = vsel %vm3619, %v3490, %v3753
    %v3882 = vsel %vm3620, %v3491, %v3754
    %v3883 = vsel %vm3621, %v3492, %v3755
    %v3884 = vsel %vm3622, %v3493, %v3756
    %v3885 = vsel %vm3623, %v3494, %v3757
    %v3886 = vsel %vm3624, %v3495, %v3758
    %v3887 = vsel %vm3625, %v3496, %v3759
    %v3888 = vsel %vm3626, %v3497, %v3760
    %v3889 = vsel %vm3627, %v3498, %v3761
    %v3890 = vsel %vm3628, %v3499, %v3762
    %v3891 = vsel %vm3629, %v3500, %v3763
    %v3892 = vsel %vm3630, %v3501, %v3764
    %v3893 = vsel %vm3631, %v3502, %v3765
    %v3894 = vsel %vm3632, %v3503, %v3766
    %v3895 = vsel %vm3633, %v3504, %v3767
    %v3896 = vsel %vm3634, %v3505, %v3768
    %v3897 = vsel %vm3635, %v3506, %v3769
    %v3898 = vsel %vm3636, %v3507, %v3770
    %v3899 = vsel %vm3637, %v3508, %v3771
    %v3900 = vsel %vm3638, %v3509, %v3772
    %v3901 = vsel %vm3639, %v3510, %v3773
    %v3902 = vsel %vm3640, %v3511, %v3774
    %v3903 = vsel %vm3641, %v3512, %v3775
    %v3904 = vsel %vm3642, %v3513, %v3776
    %v3905 = vsel %vm3643, %v3514, %v3777
    %v3906 = vsel %vm3644, %v3515, %v3778
    %v3907 = vsel %vm3645, %v3516, %v3779
    %v3908 = vsel %vm3646, %v3517, %v3780
    %v3909 = vsel %vm3647, %v3518, %v3781
    %v3910 = vsel %vm3648, %v3519, %v3782
    %v3911 = vsel %vm3649, %v3520, %v3783
    %v3912 = vsel %vm3650, %v3521, %v3784
    %v3913 = vsel %vm3651, %v3522, %v3785
    %v3914 = vsel %vm3652, %v3523, %v3786
    %v3915 = vsel %vm3653, %v3524, %v3787
    %v3916 = vsel %vm3654, %v3525, %v3788
    %v3917 = vsel %vm3655, %v3526, %v3789
    %v3918 = vsel %vm3656, %v3527, %v3790
    %v3919 = vsel %vm3657, %v3528, %v3791
    %v3920 = vsel %vm3658, %v3529, %v3792
    %v3921 = vsel %vm3659, %v3530, %v3793
    %v3922 = vsel %vm3660, %v3531, %v3794
    %v3923 = vsel %vm3661, %v3532, %v3795
    %v3924 = vsel %vm3662, %v3533, %v3796
    %v3925 = vsel %vm3663, %v3534, %v3797
    %v3926 = vsel %vm3664, %v3535, %v3798
    %v3927 = vsel %vm3665, %v3536, %v3799
    %v3928 = vsel %vm3666, %v3537, %v3800
    %v3929 = vsel %vm3667, %v3538, %v3801
    %v3930 = vsel %vm3668, %v3539, %v3802
    %v3931 = vsel %vm3669, %v3540, %v3803
    %v3932 = vsel %vm3670, %v3541, %v3804
    %v3933 = vsel %vm3671, %v3542, %v3805
    %v3934 = vsel %vm3672, %v3543, %v3806
    %v3935 = vsel %vm3673, %v3544, %v3807
    %v3936 = vld [vmem:[%s67] sm:$0xff]
    %v3937 = vld [vmem:[%s67 + $0x8] sm:$0xff]
    %v3938 = vld [vmem:[%s69] sm:$0x1]
    %v3940 = vlaneseq
    %v3941 = vshrl.u32 %v3940, 7
    %v3942 = vsub.s32 0, %v3941
    %v3943 = vrot.slane %v3938, %v3942
    %v3946 = vsel %vm2196, %v3808, 0
    %v3949 = vsel %vm2196, %v3809, 0
    %v3952 = vsel %vm2196, %v3810, 0
    %v3955 = vsel %vm2196, %v3811, 0
    %v3958 = vsel %vm2196, %v3812, 0
    %v3961 = vsel %vm2196, %v3813, 0
    %v3964 = vsel %vm2196, %v3814, 0
    %v3967 = vsel %vm2196, %v3815, 0
    %v3970 = vsel %vm2196, %v3816, 0
    %v3973 = vsel %vm2196, %v3817, 0
    %v3976 = vsel %vm2196, %v3818, 0
    %v3979 = vsel %vm2196, %v3819, 0
    %v3982 = vsel %vm2196, %v3820, 0
    %v3985 = vsel %vm2196, %v3821, 0
    %v3988 = vsel %vm2196, %v3822, 0
    %v3991 = vsel %vm2196, %v3823, 0
    %v3994 = vsel %vm2196, %v3824, 0
    %v3997 = vsel %vm2196, %v3825, 0
    %v4000 = vsel %vm2196, %v3826, 0
    %v4003 = vsel %vm2196, %v3827, 0
    %v4006 = vsel %vm2196, %v3828, 0
    %v4009 = vsel %vm2196, %v3829, 0
    %v4012 = vsel %vm2196, %v3830, 0
    %v4015 = vsel %vm2196, %v3831, 0
    %v4018 = vsel %vm2196, %v3832, 0
    %v4021 = vsel %vm2196, %v3833, 0
    %v4024 = vsel %vm2196, %v3834, 0
    %v4027 = vsel %vm2196, %v3835, 0
    %v4030 = vsel %vm2196, %v3836, 0
    %v4033 = vsel %vm2196, %v3837, 0
    %v4036 = vsel %vm2196, %v3838, 0
    %v4039 = vsel %vm2196, %v3839, 0
    %v4042 = vsel %vm2196, %v3840, 0
    %v4045 = vsel %vm2196, %v3841, 0
    %v4048 = vsel %vm2196, %v3842, 0
    %v4051 = vsel %vm2196, %v3843, 0
    %v4054 = vsel %vm2196, %v3844, 0
    %v4057 = vsel %vm2196, %v3845, 0
    %v4060 = vsel %vm2196, %v3846, 0
    %v4063 = vsel %vm2196, %v3847, 0
    %v4066 = vsel %vm2196, %v3848, 0
    %v4069 = vsel %vm2196, %v3849, 0
    %v4072 = vsel %vm2196, %v3850, 0
    %v4075 = vsel %vm2196, %v3851, 0
    %v4078 = vsel %vm2196, %v3852, 0
    %v4081 = vsel %vm2196, %v3853, 0
    %v4084 = vsel %vm2196, %v3854, 0
    %v4087 = vsel %vm2196, %v3855, 0
    %v4090 = vsel %vm2196, %v3856, 0
    %v4093 = vsel %vm2196, %v3857, 0
    %v4096 = vsel %vm2196, %v3858, 0
    %v4099 = vsel %vm2196, %v3859, 0
    %v4102 = vsel %vm2196, %v3860, 0
    %v4105 = vsel %vm2196, %v3861, 0
    %v4108 = vsel %vm2196, %v3862, 0
    %v4111 = vsel %vm2196, %v3863, 0
    %v4114 = vsel %vm2196, %v3864, 0
    %v4117 = vsel %vm2196, %v3865, 0
    %v4120 = vsel %vm2196, %v3866, 0
    %v4123 = vsel %vm2196, %v3867, 0
    %v4126 = vsel %vm2196, %v3868, 0
    %v4129 = vsel %vm2196, %v3869, 0
    %v4132 = vsel %vm2196, %v3870, 0
    %v4135 = vsel %vm2196, %v3871, 0
    %v4138 = vsel %vm2196, %v3872, 0
    %v4141 = vsel %vm2196, %v3873, 0
    %v4144 = vsel %vm2196, %v3874, 0
    %v4147 = vsel %vm2196, %v3875, 0
    %v4150 = vsel %vm2196, %v3876, 0
    %v4153 = vsel %vm2196, %v3877, 0
    %v4156 = vsel %vm2196, %v3878, 0
    %v4159 = vsel %vm2196, %v3879, 0
    %v4162 = vsel %vm2196, %v3880, 0
    %v4165 = vsel %vm2196, %v3881, 0
    %v4168 = vsel %vm2196, %v3882, 0
    %v4171 = vsel %vm2196, %v3883, 0
    %v4174 = vsel %vm2196, %v3884, 0
    %v4177 = vsel %vm2196, %v3885, 0
    %v4180 = vsel %vm2196, %v3886, 0
    %v4183 = vsel %vm2196, %v3887, 0
    %v4186 = vsel %vm2196, %v3888, 0
    %v4189 = vsel %vm2196, %v3889, 0
    %v4192 = vsel %vm2196, %v3890, 0
    %v4195 = vsel %vm2196, %v3891, 0
    %v4198 = vsel %vm2196, %v3892, 0
    %v4201 = vsel %vm2196, %v3893, 0
    %v4204 = vsel %vm2196, %v3894, 0
    %v4207 = vsel %vm2196, %v3895, 0
    %v4210 = vsel %vm2196, %v3896, 0
    %v4213 = vsel %vm2196, %v3897, 0
    %v4216 = vsel %vm2196, %v3898, 0
    %v4219 = vsel %vm2196, %v3899, 0
    %v4222 = vsel %vm2196, %v3900, 0
    %v4225 = vsel %vm2196, %v3901, 0
    %v4228 = vsel %vm2196, %v3902, 0
    %v4231 = vsel %vm2196, %v3903, 0
    %v4234 = vsel %vm2196, %v3904, 0
    %v4237 = vsel %vm2196, %v3905, 0
    %v4240 = vsel %vm2196, %v3906, 0
    %v4243 = vsel %vm2196, %v3907, 0
    %v4246 = vsel %vm2196, %v3908, 0
    %v4249 = vsel %vm2196, %v3909, 0
    %v4252 = vsel %vm2196, %v3910, 0
    %v4255 = vsel %vm2196, %v3911, 0
    %v4258 = vsel %vm2196, %v3912, 0
    %v4261 = vsel %vm2196, %v3913, 0
    %v4264 = vsel %vm2196, %v3914, 0
    %v4267 = vsel %vm2196, %v3915, 0
    %v4270 = vsel %vm2196, %v3916, 0
    %v4273 = vsel %vm2196, %v3917, 0
    %v4276 = vsel %vm2196, %v3918, 0
    %v4279 = vsel %vm2196, %v3919, 0
    %v4282 = vsel %vm2196, %v3920, 0
    %v4285 = vsel %vm2196, %v3921, 0
    %v4288 = vsel %vm2196, %v3922, 0
    %v4291 = vsel %vm2196, %v3923, 0
    %v4294 = vsel %vm2196, %v3924, 0
    %v4297 = vsel %vm2196, %v3925, 0
    %v4300 = vsel %vm2196, %v3926, 0
    %v4303 = vsel %vm2196, %v3927, 0
    %v4306 = vsel %vm2196, %v3928, 0
    %v4309 = vsel %vm2196, %v3929, 0
    %v4312 = vsel %vm2196, %v3930, 0
    %v4315 = vsel %vm2196, %v3931, 0
    %v4318 = vsel %vm2196, %v3932, 0
    %v4321 = vsel %vm2196, %v3933, 0
    %v4324 = vsel %vm2196, %v3934, 0
    %v4327 = vsel %vm2196, %v3935, 0
    %4329 = vmatprep.subr.mxu0 0.0
    %4330 = vmatpush1.msra.mxu0 0.0
    %4331 = vmatprep.subr.mxu0 0.0
    %4332 = vmatpush1.msra.mxu0 0.0
    %4333 = vmatprep.subr.mxu0 0.0
    %4334 = vmatpush1.msra.mxu0 0.0
    %4335 = vmatprep.subr.mxu0 0.0
    %4336 = vmatpush1.msra.mxu0 0.0
    %4337 = vmatprep.subr.mxu0 0.0
    %4338 = vmatpush1.msra.mxu0 0.0
    %4339 = vmatprep.subr.mxu0 0.0
    %4340 = vmatpush1.msra.mxu0 0.0
    %4341 = vmatprep.subr.mxu0 0.0
    %4342 = vmatpush1.msra.mxu0 0.0
    %4343 = vmatprep.subr.mxu0 0.0
    %4344 = vmatpush1.msra.mxu0 0.0
    %4345 = vmatprep.subr.mxu0 0.0
    %4346 = vmatpush1.msra.mxu0 0.0
    %4347 = vmatprep.subr.mxu0 0.0
    %4348 = vmatpush1.msra.mxu0 0.0
    %4349 = vmatprep.subr.mxu0 0.0
    %4350 = vmatpush1.msra.mxu0 0.0
    %4351 = vmatprep.subr.mxu0 0.0
    %4352 = vmatpush1.msra.mxu0 0.0
    %4353 = vmatprep.subr.mxu0 0.0
    %4354 = vmatpush1.msra.mxu0 0.0
    %4355 = vmatprep.subr.mxu0 0.0
    %4356 = vmatpush1.msra.mxu0 0.0
    %4357 = vmatprep.subr.mxu0 0.0
    %4358 = vmatpush1.msra.mxu0 %v3937
    %4359 = vmatprep.subr.mxu0 0.0
    %4360 = vmatpush1.msra.mxu0 %v3936
    %4361 = vmatprep.subr.mxu0 0.0
    %4362 = vmatpush2.msra.mxu0 0.0
    %4363 = vmatprep.subr.mxu0 0.0
    %4364 = vmatpush2.msra.mxu0 0.0
    %4365 = vmatprep.subr.mxu0 0.0
    %4366 = vmatpush2.msra.mxu0 0.0
    %4367 = vmatprep.subr.mxu0 0.0
    %4368 = vmatpush2.msra.mxu0 0.0
    %4369 = vmatprep.subr.mxu0 0.0
    %4370 = vmatpush2.msra.mxu0 0.0
    %4371 = vmatprep.subr.mxu0 0.0
    %4372 = vmatpush2.msra.mxu0 0.0
    %4373 = vmatprep.subr.mxu0 0.0
    %4374 = vmatpush2.msra.mxu0 0.0
    %4375 = vmatprep.subr.mxu0 0.0
    %4376 = vmatpush2.msra.mxu0 0.0
    %4377 = vmatprep.subr.mxu0 0.0
    %4378 = vmatpush2.msra.mxu0 0.0
    %4379 = vmatprep.subr.mxu0 0.0
    %4380 = vmatpush2.msra.mxu0 0.0
    %4381 = vmatprep.subr.mxu0 0.0
    %4382 = vmatpush2.msra.mxu0 0.0
    %4383 = vmatprep.subr.mxu0 0.0
    %4384 = vmatpush2.msra.mxu0 0.0
    %4385 = vmatprep.subr.mxu0 0.0
    %4386 = vmatpush2.msra.mxu0 0.0
    %4387 = vmatprep.subr.mxu0 0.0
    %4388 = vmatpush2.msra.mxu0 0.0
    %4389 = vmatprep.subr.mxu0 0.0
    %4390 = vmatpush2.msra.mxu0 0.0
    %4391 = vmatprep.subr.mxu0 0.0
    %4392 = vmatpush2.msra.mxu0 0.0
    %4393 = vmatprep.mubr.f32.mxu0 0.0
    %4394 = vmatmul.mubr.f32.gmra.mxu0 %v3946
    %v4395 = vpop.f32.mrf.mxu0
    %v4396 = vadd.f32 %v3943, %v4395
    %v4397 = vpop.f32.mrf.mxu0
    %4398 = vmatprep.mubr.f32.mxu0 0.0
    %4399 = vmatmul.mubr.f32.gmra.mxu0 %v3949
    %v4400 = vpop.f32.mrf.mxu0
    %v4401 = vadd.f32 %v3943, %v4400
    %v4402 = vpop.f32.mrf.mxu0
    %4403 = vmatprep.mubr.f32.mxu0 0.0
    %4404 = vmatmul.mubr.f32.gmra.mxu0 %v3952
    %v4405 = vpop.f32.mrf.mxu0
    %v4406 = vadd.f32 %v3943, %v4405
    %v4407 = vpop.f32.mrf.mxu0
    %4408 = vmatprep.mubr.f32.mxu0 0.0
    %4409 = vmatmul.mubr.f32.gmra.mxu0 %v3955
    %v4410 = vpop.f32.mrf.mxu0
    %v4411 = vadd.f32 %v3943, %v4410
    %v4412 = vpop.f32.mrf.mxu0
    %4413 = vmatprep.mubr.f32.mxu0 0.0
    %4414 = vmatmul.mubr.f32.gmra.mxu0 %v3958
    %v4415 = vpop.f32.mrf.mxu0
    %v4416 = vadd.f32 %v3943, %v4415
    %v4417 = vpop.f32.mrf.mxu0
    %4418 = vmatprep.mubr.f32.mxu0 0.0
    %4419 = vmatmul.mubr.f32.gmra.mxu0 %v3961
    %v4420 = vpop.f32.mrf.mxu0
    %v4421 = vadd.f32 %v3943, %v4420
    %v4422 = vpop.f32.mrf.mxu0
    %4423 = vmatprep.mubr.f32.mxu0 0.0
    %4424 = vmatmul.mubr.f32.gmra.mxu0 %v3964
    %v4425 = vpop.f32.mrf.mxu0
    %v4426 = vadd.f32 %v3943, %v4425
    %v4427 = vpop.f32.mrf.mxu0
    %4428 = vmatprep.mubr.f32.mxu0 0.0
    %4429 = vmatmul.mubr.f32.gmra.mxu0 %v3967
    %v4430 = vpop.f32.mrf.mxu0
    %v4431 = vadd.f32 %v3943, %v4430
    %v4432 = vpop.f32.mrf.mxu0
    %4433 = vmatprep.mubr.f32.mxu0 0.0
    %4434 = vmatmul.mubr.f32.gmra.mxu0 %v3970
    %v4435 = vpop.f32.mrf.mxu0
    %v4436 = vadd.f32 %v3943, %v4435
    %v4437 = vpop.f32.mrf.mxu0
    %4438 = vmatprep.mubr.f32.mxu0 0.0
    %4439 = vmatmul.mubr.f32.gmra.mxu0 %v3973
    %v4440 = vpop.f32.mrf.mxu0
    %v4441 = vadd.f32 %v3943, %v4440
    %v4442 = vpop.f32.mrf.mxu0
    %4443 = vmatprep.mubr.f32.mxu0 0.0
    %4444 = vmatmul.mubr.f32.gmra.mxu0 %v3976
    %v4445 = vpop.f32.mrf.mxu0
    %v4446 = vadd.f32 %v3943, %v4445
    %v4447 = vpop.f32.mrf.mxu0
    %4448 = vmatprep.mubr.f32.mxu0 0.0
    %4449 = vmatmul.mubr.f32.gmra.mxu0 %v3979
    %v4450 = vpop.f32.mrf.mxu0
    %v4451 = vadd.f32 %v3943, %v4450
    %v4452 = vpop.f32.mrf.mxu0
    %4453 = vmatprep.mubr.f32.mxu0 0.0
    %4454 = vmatmul.mubr.f32.gmra.mxu0 %v3982
    %v4455 = vpop.f32.mrf.mxu0
    %v4456 = vadd.f32 %v3943, %v4455
    %v4457 = vpop.f32.mrf.mxu0
    %4458 = vmatprep.mubr.f32.mxu0 0.0
    %4459 = vmatmul.mubr.f32.gmra.mxu0 %v3985
    %v4460 = vpop.f32.mrf.mxu0
    %v4461 = vadd.f32 %v3943, %v4460
    %v4462 = vpop.f32.mrf.mxu0
    %4463 = vmatprep.mubr.f32.mxu0 0.0
    %4464 = vmatmul.mubr.f32.gmra.mxu0 %v3988
    %v4465 = vpop.f32.mrf.mxu0
    %v4466 = vadd.f32 %v3943, %v4465
    %v4467 = vpop.f32.mrf.mxu0
    %4468 = vmatprep.mubr.f32.mxu0 0.0
    %4469 = vmatmul.mubr.f32.gmra.mxu0 %v3991
    %v4470 = vpop.f32.mrf.mxu0
    %v4471 = vadd.f32 %v3943, %v4470
    %v4472 = vpop.f32.mrf.mxu0
    %4473 = vmatprep.mubr.f32.mxu0 0.0
    %4474 = vmatmul.mubr.f32.gmra.mxu0 %v3994
    %v4475 = vpop.f32.mrf.mxu0
    %v4476 = vadd.f32 %v3943, %v4475
    %v4477 = vpop.f32.mrf.mxu0
    %4478 = vmatprep.mubr.f32.mxu0 0.0
    %4479 = vmatmul.mubr.f32.gmra.mxu0 %v3997
    %v4480 = vpop.f32.mrf.mxu0
    %v4481 = vadd.f32 %v3943, %v4480
    %v4482 = vpop.f32.mrf.mxu0
    %4483 = vmatprep.mubr.f32.mxu0 0.0
    %4484 = vmatmul.mubr.f32.gmra.mxu0 %v4000
    %v4485 = vpop.f32.mrf.mxu0
    %v4486 = vadd.f32 %v3943, %v4485
    %v4487 = vpop.f32.mrf.mxu0
    %4488 = vmatprep.mubr.f32.mxu0 0.0
    %4489 = vmatmul.mubr.f32.gmra.mxu0 %v4003
    %v4490 = vpop.f32.mrf.mxu0
    %v4491 = vadd.f32 %v3943, %v4490
    %v4492 = vpop.f32.mrf.mxu0
    %4493 = vmatprep.mubr.f32.mxu0 0.0
    %4494 = vmatmul.mubr.f32.gmra.mxu0 %v4006
    %v4495 = vpop.f32.mrf.mxu0
    %v4496 = vadd.f32 %v3943, %v4495
    %v4497 = vpop.f32.mrf.mxu0
    %4498 = vmatprep.mubr.f32.mxu0 0.0
    %4499 = vmatmul.mubr.f32.gmra.mxu0 %v4009
    %v4500 = vpop.f32.mrf.mxu0
    %v4501 = vadd.f32 %v3943, %v4500
    %v4502 = vpop.f32.mrf.mxu0
    %4503 = vmatprep.mubr.f32.mxu0 0.0
    %4504 = vmatmul.mubr.f32.gmra.mxu0 %v4012
    %v4505 = vpop.f32.mrf.mxu0
    %v4506 = vadd.f32 %v3943, %v4505
    %v4507 = vpop.f32.mrf.mxu0
    %4508 = vmatprep.mubr.f32.mxu0 0.0
    %4509 = vmatmul.mubr.f32.gmra.mxu0 %v4015
    %v4510 = vpop.f32.mrf.mxu0
    %v4511 = vadd.f32 %v3943, %v4510
    %v4512 = vpop.f32.mrf.mxu0
    %4513 = vmatprep.mubr.f32.mxu0 0.0
    %4514 = vmatmul.mubr.f32.gmra.mxu0 %v4018
    %v4515 = vpop.f32.mrf.mxu0
    %v4516 = vadd.f32 %v3943, %v4515
    %v4517 = vpop.f32.mrf.mxu0
    %4518 = vmatprep.mubr.f32.mxu0 0.0
    %4519 = vmatmul.mubr.f32.gmra.mxu0 %v4021
    %v4520 = vpop.f32.mrf.mxu0
    %v4521 = vadd.f32 %v3943, %v4520
    %v4522 = vpop.f32.mrf.mxu0
    %4523 = vmatprep.mubr.f32.mxu0 0.0
    %4524 = vmatmul.mubr.f32.gmra.mxu0 %v4024
    %v4525 = vpop.f32.mrf.mxu0
    %v4526 = vadd.f32 %v3943, %v4525
    %v4527 = vpop.f32.mrf.mxu0
    %4528 = vmatprep.mubr.f32.mxu0 0.0
    %4529 = vmatmul.mubr.f32.gmra.mxu0 %v4027
    %v4530 = vpop.f32.mrf.mxu0
    %v4531 = vadd.f32 %v3943, %v4530
    %v4532 = vpop.f32.mrf.mxu0
    %4533 = vmatprep.mubr.f32.mxu0 0.0
    %4534 = vmatmul.mubr.f32.gmra.mxu0 %v4030
    %v4535 = vpop.f32.mrf.mxu0
    %v4536 = vadd.f32 %v3943, %v4535
    %v4537 = vpop.f32.mrf.mxu0
    %4538 = vmatprep.mubr.f32.mxu0 0.0
    %4539 = vmatmul.mubr.f32.gmra.mxu0 %v4033
    %v4540 = vpop.f32.mrf.mxu0
    %v4541 = vadd.f32 %v3943, %v4540
    %v4542 = vpop.f32.mrf.mxu0
    %4543 = vmatprep.mubr.f32.mxu0 0.0
    %4544 = vmatmul.mubr.f32.gmra.mxu0 %v4036
    %v4545 = vpop.f32.mrf.mxu0
    %v4546 = vadd.f32 %v3943, %v4545
    %v4547 = vpop.f32.mrf.mxu0
    %4548 = vmatprep.mubr.f32.mxu0 0.0
    %4549 = vmatmul.mubr.f32.gmra.mxu0 %v4039
    %v4550 = vpop.f32.mrf.mxu0
    %v4551 = vadd.f32 %v3943, %v4550
    %v4552 = vpop.f32.mrf.mxu0
    %4553 = vmatprep.mubr.f32.mxu0 0.0
    %4554 = vmatmul.mubr.f32.gmra.mxu0 %v4042
    %v4555 = vpop.f32.mrf.mxu0
    %v4556 = vadd.f32 %v3943, %v4555
    %v4557 = vpop.f32.mrf.mxu0
    %4558 = vmatprep.mubr.f32.mxu0 0.0
    %4559 = vmatmul.mubr.f32.gmra.mxu0 %v4045
    %v4560 = vpop.f32.mrf.mxu0
    %v4561 = vadd.f32 %v3943, %v4560
    %v4562 = vpop.f32.mrf.mxu0
    %4563 = vmatprep.mubr.f32.mxu0 0.0
    %4564 = vmatmul.mubr.f32.gmra.mxu0 %v4048
    %v4565 = vpop.f32.mrf.mxu0
    %v4566 = vadd.f32 %v3943, %v4565
    %v4567 = vpop.f32.mrf.mxu0
    %4568 = vmatprep.mubr.f32.mxu0 0.0
    %4569 = vmatmul.mubr.f32.gmra.mxu0 %v4051
    %v4570 = vpop.f32.mrf.mxu0
    %v4571 = vadd.f32 %v3943, %v4570
    %v4572 = vpop.f32.mrf.mxu0
    %4573 = vmatprep.mubr.f32.mxu0 0.0
    %4574 = vmatmul.mubr.f32.gmra.mxu0 %v4054
    %v4575 = vpop.f32.mrf.mxu0
    %v4576 = vadd.f32 %v3943, %v4575
    %v4577 = vpop.f32.mrf.mxu0
    %4578 = vmatprep.mubr.f32.mxu0 0.0
    %4579 = vmatmul.mubr.f32.gmra.mxu0 %v4057
    %v4580 = vpop.f32.mrf.mxu0
    %v4581 = vadd.f32 %v3943, %v4580
    %v4582 = vpop.f32.mrf.mxu0
    %4583 = vmatprep.mubr.f32.mxu0 0.0
    %4584 = vmatmul.mubr.f32.gmra.mxu0 %v4060
    %v4585 = vpop.f32.mrf.mxu0
    %v4586 = vadd.f32 %v3943, %v4585
    %v4587 = vpop.f32.mrf.mxu0
    %4588 = vmatprep.mubr.f32.mxu0 0.0
    %4589 = vmatmul.mubr.f32.gmra.mxu0 %v4063
    %v4590 = vpop.f32.mrf.mxu0
    %v4591 = vadd.f32 %v3943, %v4590
    %v4592 = vpop.f32.mrf.mxu0
    %4593 = vmatprep.mubr.f32.mxu0 0.0
    %4594 = vmatmul.mubr.f32.gmra.mxu0 %v4066
    %v4595 = vpop.f32.mrf.mxu0
    %v4596 = vadd.f32 %v3943, %v4595
    %v4597 = vpop.f32.mrf.mxu0
    %4598 = vmatprep.mubr.f32.mxu0 0.0
    %4599 = vmatmul.mubr.f32.gmra.mxu0 %v4069
    %v4600 = vpop.f32.mrf.mxu0
    %v4601 = vadd.f32 %v3943, %v4600
    %v4602 = vpop.f32.mrf.mxu0
    %4603 = vmatprep.mubr.f32.mxu0 0.0
    %4604 = vmatmul.mubr.f32.gmra.mxu0 %v4072
    %v4605 = vpop.f32.mrf.mxu0
    %v4606 = vadd.f32 %v3943, %v4605
    %v4607 = vpop.f32.mrf.mxu0
    %4608 = vmatprep.mubr.f32.mxu0 0.0
    %4609 = vmatmul.mubr.f32.gmra.mxu0 %v4075
    %v4610 = vpop.f32.mrf.mxu0
    %v4611 = vadd.f32 %v3943, %v4610
    %v4612 = vpop.f32.mrf.mxu0
    %4613 = vmatprep.mubr.f32.mxu0 0.0
    %4614 = vmatmul.mubr.f32.gmra.mxu0 %v4078
    %v4615 = vpop.f32.mrf.mxu0
    %v4616 = vadd.f32 %v3943, %v4615
    %v4617 = vpop.f32.mrf.mxu0
    %4618 = vmatprep.mubr.f32.mxu0 0.0
    %4619 = vmatmul.mubr.f32.gmra.mxu0 %v4081
    %v4620 = vpop.f32.mrf.mxu0
    %v4621 = vadd.f32 %v3943, %v4620
    %v4622 = vpop.f32.mrf.mxu0
    %4623 = vmatprep.mubr.f32.mxu0 0.0
    %4624 = vmatmul.mubr.f32.gmra.mxu0 %v4084
    %v4625 = vpop.f32.mrf.mxu0
    %v4626 = vadd.f32 %v3943, %v4625
    %v4627 = vpop.f32.mrf.mxu0
    %4628 = vmatprep.mubr.f32.mxu0 0.0
    %4629 = vmatmul.mubr.f32.gmra.mxu0 %v4087
    %v4630 = vpop.f32.mrf.mxu0
    %v4631 = vadd.f32 %v3943, %v4630
    %v4632 = vpop.f32.mrf.mxu0
    %4633 = vmatprep.mubr.f32.mxu0 0.0
    %4634 = vmatmul.mubr.f32.gmra.mxu0 %v4090
    %v4635 = vpop.f32.mrf.mxu0
    %v4636 = vadd.f32 %v3943, %v4635
    %v4637 = vpop.f32.mrf.mxu0
    %4638 = vmatprep.mubr.f32.mxu0 0.0
    %4639 = vmatmul.mubr.f32.gmra.mxu0 %v4093
    %v4640 = vpop.f32.mrf.mxu0
    %v4641 = vadd.f32 %v3943, %v4640
    %v4642 = vpop.f32.mrf.mxu0
    %4643 = vmatprep.mubr.f32.mxu0 0.0
    %4644 = vmatmul.mubr.f32.gmra.mxu0 %v4096
    %v4645 = vpop.f32.mrf.mxu0
    %v4646 = vadd.f32 %v3943, %v4645
    %v4647 = vpop.f32.mrf.mxu0
    %4648 = vmatprep.mubr.f32.mxu0 0.0
    %4649 = vmatmul.mubr.f32.gmra.mxu0 %v4099
    %v4650 = vpop.f32.mrf.mxu0
    %v4651 = vadd.f32 %v3943, %v4650
    %v4652 = vpop.f32.mrf.mxu0
    %4653 = vmatprep.mubr.f32.mxu0 0.0
    %4654 = vmatmul.mubr.f32.gmra.mxu0 %v4102
    %v4655 = vpop.f32.mrf.mxu0
    %v4656 = vadd.f32 %v3943, %v4655
    %v4657 = vpop.f32.mrf.mxu0
    %4658 = vmatprep.mubr.f32.mxu0 0.0
    %4659 = vmatmul.mubr.f32.gmra.mxu0 %v4105
    %v4660 = vpop.f32.mrf.mxu0
    %v4661 = vadd.f32 %v3943, %v4660
    %v4662 = vpop.f32.mrf.mxu0
    %4663 = vmatprep.mubr.f32.mxu0 0.0
    %4664 = vmatmul.mubr.f32.gmra.mxu0 %v4108
    %v4665 = vpop.f32.mrf.mxu0
    %v4666 = vadd.f32 %v3943, %v4665
    %v4667 = vpop.f32.mrf.mxu0
    %4668 = vmatprep.mubr.f32.mxu0 0.0
    %4669 = vmatmul.mubr.f32.gmra.mxu0 %v4111
    %v4670 = vpop.f32.mrf.mxu0
    %v4671 = vadd.f32 %v3943, %v4670
    %v4672 = vpop.f32.mrf.mxu0
    %4673 = vmatprep.mubr.f32.mxu0 0.0
    %4674 = vmatmul.mubr.f32.gmra.mxu0 %v4114
    %v4675 = vpop.f32.mrf.mxu0
    %v4676 = vadd.f32 %v3943, %v4675
    %v4677 = vpop.f32.mrf.mxu0
    %4678 = vmatprep.mubr.f32.mxu0 0.0
    %4679 = vmatmul.mubr.f32.gmra.mxu0 %v4117
    %v4680 = vpop.f32.mrf.mxu0
    %v4681 = vadd.f32 %v3943, %v4680
    %v4682 = vpop.f32.mrf.mxu0
    %4683 = vmatprep.mubr.f32.mxu0 0.0
    %4684 = vmatmul.mubr.f32.gmra.mxu0 %v4120
    %v4685 = vpop.f32.mrf.mxu0
    %v4686 = vadd.f32 %v3943, %v4685
    %v4687 = vpop.f32.mrf.mxu0
    %4688 = vmatprep.mubr.f32.mxu0 0.0
    %4689 = vmatmul.mubr.f32.gmra.mxu0 %v4123
    %v4690 = vpop.f32.mrf.mxu0
    %v4691 = vadd.f32 %v3943, %v4690
    %v4692 = vpop.f32.mrf.mxu0
    %4693 = vmatprep.mubr.f32.mxu0 0.0
    %4694 = vmatmul.mubr.f32.gmra.mxu0 %v4126
    %v4695 = vpop.f32.mrf.mxu0
    %v4696 = vadd.f32 %v3943, %v4695
    %v4697 = vpop.f32.mrf.mxu0
    %4698 = vmatprep.mubr.f32.mxu0 0.0
    %4699 = vmatmul.mubr.f32.gmra.mxu0 %v4129
    %v4700 = vpop.f32.mrf.mxu0
    %v4701 = vadd.f32 %v3943, %v4700
    %v4702 = vpop.f32.mrf.mxu0
    %4703 = vmatprep.mubr.f32.mxu0 0.0
    %4704 = vmatmul.mubr.f32.gmra.mxu0 %v4132
    %v4705 = vpop.f32.mrf.mxu0
    %v4706 = vadd.f32 %v3943, %v4705
    %v4707 = vpop.f32.mrf.mxu0
    %4708 = vmatprep.mubr.f32.mxu0 0.0
    %4709 = vmatmul.mubr.f32.gmra.mxu0 %v4135
    %v4710 = vpop.f32.mrf.mxu0
    %v4711 = vadd.f32 %v3943, %v4710
    %v4712 = vpop.f32.mrf.mxu0
    %4713 = vmatprep.mubr.f32.mxu0 0.0
    %4714 = vmatmul.mubr.f32.gmra.mxu0 %v4138
    %v4715 = vpop.f32.mrf.mxu0
    %v4716 = vadd.f32 %v3943, %v4715
    %v4717 = vpop.f32.mrf.mxu0
    %4718 = vmatprep.mubr.f32.mxu0 0.0
    %4719 = vmatmul.mubr.f32.gmra.mxu0 %v4141
    %v4720 = vpop.f32.mrf.mxu0
    %v4721 = vadd.f32 %v3943, %v4720
    %v4722 = vpop.f32.mrf.mxu0
    %4723 = vmatprep.mubr.f32.mxu0 0.0
    %4724 = vmatmul.mubr.f32.gmra.mxu0 %v4144
    %v4725 = vpop.f32.mrf.mxu0
    %v4726 = vadd.f32 %v3943, %v4725
    %v4727 = vpop.f32.mrf.mxu0
    %4728 = vmatprep.mubr.f32.mxu0 0.0
    %4729 = vmatmul.mubr.f32.gmra.mxu0 %v4147
    %v4730 = vpop.f32.mrf.mxu0
    %v4731 = vadd.f32 %v3943, %v4730
    %v4732 = vpop.f32.mrf.mxu0
    %4733 = vmatprep.mubr.f32.mxu0 0.0
    %4734 = vmatmul.mubr.f32.gmra.mxu0 %v4150
    %v4735 = vpop.f32.mrf.mxu0
    %v4736 = vadd.f32 %v3943, %v4735
    %v4737 = vpop.f32.mrf.mxu0
    %4738 = vmatprep.mubr.f32.mxu0 0.0
    %4739 = vmatmul.mubr.f32.gmra.mxu0 %v4153
    %v4740 = vpop.f32.mrf.mxu0
    %v4741 = vadd.f32 %v3943, %v4740
    %v4742 = vpop.f32.mrf.mxu0
    %4743 = vmatprep.mubr.f32.mxu0 0.0
    %4744 = vmatmul.mubr.f32.gmra.mxu0 %v4156
    %v4745 = vpop.f32.mrf.mxu0
    %v4746 = vadd.f32 %v3943, %v4745
    %v4747 = vpop.f32.mrf.mxu0
    %4748 = vmatprep.mubr.f32.mxu0 0.0
    %4749 = vmatmul.mubr.f32.gmra.mxu0 %v4159
    %v4750 = vpop.f32.mrf.mxu0
    %v4751 = vadd.f32 %v3943, %v4750
    %v4752 = vpop.f32.mrf.mxu0
    %4753 = vmatprep.mubr.f32.mxu0 0.0
    %4754 = vmatmul.mubr.f32.gmra.mxu0 %v4162
    %v4755 = vpop.f32.mrf.mxu0
    %v4756 = vadd.f32 %v3943, %v4755
    %v4757 = vpop.f32.mrf.mxu0
    %4758 = vmatprep.mubr.f32.mxu0 0.0
    %4759 = vmatmul.mubr.f32.gmra.mxu0 %v4165
    %v4760 = vpop.f32.mrf.mxu0
    %v4761 = vadd.f32 %v3943, %v4760
    %v4762 = vpop.f32.mrf.mxu0
    %4763 = vmatprep.mubr.f32.mxu0 0.0
    %4764 = vmatmul.mubr.f32.gmra.mxu0 %v4168
    %v4765 = vpop.f32.mrf.mxu0
    %v4766 = vadd.f32 %v3943, %v4765
    %v4767 = vpop.f32.mrf.mxu0
    %4768 = vmatprep.mubr.f32.mxu0 0.0
    %4769 = vmatmul.mubr.f32.gmra.mxu0 %v4171
    %v4770 = vpop.f32.mrf.mxu0
    %v4771 = vadd.f32 %v3943, %v4770
    %v4772 = vpop.f32.mrf.mxu0
    %4773 = vmatprep.mubr.f32.mxu0 0.0
    %4774 = vmatmul.mubr.f32.gmra.mxu0 %v4174
    %v4775 = vpop.f32.mrf.mxu0
    %v4776 = vadd.f32 %v3943, %v4775
    %v4777 = vpop.f32.mrf.mxu0
    %4778 = vmatprep.mubr.f32.mxu0 0.0
    %4779 = vmatmul.mubr.f32.gmra.mxu0 %v4177
    %v4780 = vpop.f32.mrf.mxu0
    %v4781 = vadd.f32 %v3943, %v4780
    %v4782 = vpop.f32.mrf.mxu0
    %4783 = vmatprep.mubr.f32.mxu0 0.0
    %4784 = vmatmul.mubr.f32.gmra.mxu0 %v4180
    %v4785 = vpop.f32.mrf.mxu0
    %v4786 = vadd.f32 %v3943, %v4785
    %v4787 = vpop.f32.mrf.mxu0
    %4788 = vmatprep.mubr.f32.mxu0 0.0
    %4789 = vmatmul.mubr.f32.gmra.mxu0 %v4183
    %v4790 = vpop.f32.mrf.mxu0
    %v4791 = vadd.f32 %v3943, %v4790
    %v4792 = vpop.f32.mrf.mxu0
    %4793 = vmatprep.mubr.f32.mxu0 0.0
    %4794 = vmatmul.mubr.f32.gmra.mxu0 %v4186
    %v4795 = vpop.f32.mrf.mxu0
    %v4796 = vadd.f32 %v3943, %v4795
    %v4797 = vpop.f32.mrf.mxu0
    %4798 = vmatprep.mubr.f32.mxu0 0.0
    %4799 = vmatmul.mubr.f32.gmra.mxu0 %v4189
    %v4800 = vpop.f32.mrf.mxu0
    %v4801 = vadd.f32 %v3943, %v4800
    %v4802 = vpop.f32.mrf.mxu0
    %4803 = vmatprep.mubr.f32.mxu0 0.0
    %4804 = vmatmul.mubr.f32.gmra.mxu0 %v4192
    %v4805 = vpop.f32.mrf.mxu0
    %v4806 = vadd.f32 %v3943, %v4805
    %v4807 = vpop.f32.mrf.mxu0
    %4808 = vmatprep.mubr.f32.mxu0 0.0
    %4809 = vmatmul.mubr.f32.gmra.mxu0 %v4195
    %v4810 = vpop.f32.mrf.mxu0
    %v4811 = vadd.f32 %v3943, %v4810
    %v4812 = vpop.f32.mrf.mxu0
    %4813 = vmatprep.mubr.f32.mxu0 0.0
    %4814 = vmatmul.mubr.f32.gmra.mxu0 %v4198
    %v4815 = vpop.f32.mrf.mxu0
    %v4816 = vadd.f32 %v3943, %v4815
    %v4817 = vpop.f32.mrf.mxu0
    %4818 = vmatprep.mubr.f32.mxu0 0.0
    %4819 = vmatmul.mubr.f32.gmra.mxu0 %v4201
    %v4820 = vpop.f32.mrf.mxu0
    %v4821 = vadd.f32 %v3943, %v4820
    %v4822 = vpop.f32.mrf.mxu0
    %4823 = vmatprep.mubr.f32.mxu0 0.0
    %4824 = vmatmul.mubr.f32.gmra.mxu0 %v4204
    %v4825 = vpop.f32.mrf.mxu0
    %v4826 = vadd.f32 %v3943, %v4825
    %v4827 = vpop.f32.mrf.mxu0
    %4828 = vmatprep.mubr.f32.mxu0 0.0
    %4829 = vmatmul.mubr.f32.gmra.mxu0 %v4207
    %v4830 = vpop.f32.mrf.mxu0
    %v4831 = vadd.f32 %v3943, %v4830
    %v4832 = vpop.f32.mrf.mxu0
    %4833 = vmatprep.mubr.f32.mxu0 0.0
    %4834 = vmatmul.mubr.f32.gmra.mxu0 %v4210
    %v4835 = vpop.f32.mrf.mxu0
    %v4836 = vadd.f32 %v3943, %v4835
    %v4837 = vpop.f32.mrf.mxu0
    %4838 = vmatprep.mubr.f32.mxu0 0.0
    %4839 = vmatmul.mubr.f32.gmra.mxu0 %v4213
    %v4840 = vpop.f32.mrf.mxu0
    %v4841 = vadd.f32 %v3943, %v4840
    %v4842 = vpop.f32.mrf.mxu0
    %4843 = vmatprep.mubr.f32.mxu0 0.0
    %4844 = vmatmul.mubr.f32.gmra.mxu0 %v4216
    %v4845 = vpop.f32.mrf.mxu0
    %v4846 = vadd.f32 %v3943, %v4845
    %v4847 = vpop.f32.mrf.mxu0
    %4848 = vmatprep.mubr.f32.mxu0 0.0
    %4849 = vmatmul.mubr.f32.gmra.mxu0 %v4219
    %v4850 = vpop.f32.mrf.mxu0
    %v4851 = vadd.f32 %v3943, %v4850
    %v4852 = vpop.f32.mrf.mxu0
    %4853 = vmatprep.mubr.f32.mxu0 0.0
    %4854 = vmatmul.mubr.f32.gmra.mxu0 %v4222
    %v4855 = vpop.f32.mrf.mxu0
    %v4856 = vadd.f32 %v3943, %v4855
    %v4857 = vpop.f32.mrf.mxu0
    %4858 = vmatprep.mubr.f32.mxu0 0.0
    %4859 = vmatmul.mubr.f32.gmra.mxu0 %v4225
    %v4860 = vpop.f32.mrf.mxu0
    %v4861 = vadd.f32 %v3943, %v4860
    %v4862 = vpop.f32.mrf.mxu0
    %4863 = vmatprep.mubr.f32.mxu0 0.0
    %4864 = vmatmul.mubr.f32.gmra.mxu0 %v4228
    %v4865 = vpop.f32.mrf.mxu0
    %v4866 = vadd.f32 %v3943, %v4865
    %v4867 = vpop.f32.mrf.mxu0
    %4868 = vmatprep.mubr.f32.mxu0 0.0
    %4869 = vmatmul.mubr.f32.gmra.mxu0 %v4231
    %v4870 = vpop.f32.mrf.mxu0
    %v4871 = vadd.f32 %v3943, %v4870
    %v4872 = vpop.f32.mrf.mxu0
    %4873 = vmatprep.mubr.f32.mxu0 0.0
    %4874 = vmatmul.mubr.f32.gmra.mxu0 %v4234
    %v4875 = vpop.f32.mrf.mxu0
    %v4876 = vadd.f32 %v3943, %v4875
    %v4877 = vpop.f32.mrf.mxu0
    %4878 = vmatprep.mubr.f32.mxu0 0.0
    %4879 = vmatmul.mubr.f32.gmra.mxu0 %v4237
    %v4880 = vpop.f32.mrf.mxu0
    %v4881 = vadd.f32 %v3943, %v4880
    %v4882 = vpop.f32.mrf.mxu0
    %4883 = vmatprep.mubr.f32.mxu0 0.0
    %4884 = vmatmul.mubr.f32.gmra.mxu0 %v4240
    %v4885 = vpop.f32.mrf.mxu0
    %v4886 = vadd.f32 %v3943, %v4885
    %v4887 = vpop.f32.mrf.mxu0
    %4888 = vmatprep.mubr.f32.mxu0 0.0
    %4889 = vmatmul.mubr.f32.gmra.mxu0 %v4243
    %v4890 = vpop.f32.mrf.mxu0
    %v4891 = vadd.f32 %v3943, %v4890
    %v4892 = vpop.f32.mrf.mxu0
    %4893 = vmatprep.mubr.f32.mxu0 0.0
    %4894 = vmatmul.mubr.f32.gmra.mxu0 %v4246
    %v4895 = vpop.f32.mrf.mxu0
    %v4896 = vadd.f32 %v3943, %v4895
    %v4897 = vpop.f32.mrf.mxu0
    %4898 = vmatprep.mubr.f32.mxu0 0.0
    %4899 = vmatmul.mubr.f32.gmra.mxu0 %v4249
    %v4900 = vpop.f32.mrf.mxu0
    %v4901 = vadd.f32 %v3943, %v4900
    %v4902 = vpop.f32.mrf.mxu0
    %4903 = vmatprep.mubr.f32.mxu0 0.0
    %4904 = vmatmul.mubr.f32.gmra.mxu0 %v4252
    %v4905 = vpop.f32.mrf.mxu0
    %v4906 = vadd.f32 %v3943, %v4905
    %v4907 = vpop.f32.mrf.mxu0
    %4908 = vmatprep.mubr.f32.mxu0 0.0
    %4909 = vmatmul.mubr.f32.gmra.mxu0 %v4255
    %v4910 = vpop.f32.mrf.mxu0
    %v4911 = vadd.f32 %v3943, %v4910
    %v4912 = vpop.f32.mrf.mxu0
    %4913 = vmatprep.mubr.f32.mxu0 0.0
    %4914 = vmatmul.mubr.f32.gmra.mxu0 %v4258
    %v4915 = vpop.f32.mrf.mxu0
    %v4916 = vadd.f32 %v3943, %v4915
    %v4917 = vpop.f32.mrf.mxu0
    %4918 = vmatprep.mubr.f32.mxu0 0.0
    %4919 = vmatmul.mubr.f32.gmra.mxu0 %v4261
    %v4920 = vpop.f32.mrf.mxu0
    %v4921 = vadd.f32 %v3943, %v4920
    %v4922 = vpop.f32.mrf.mxu0
    %4923 = vmatprep.mubr.f32.mxu0 0.0
    %4924 = vmatmul.mubr.f32.gmra.mxu0 %v4264
    %v4925 = vpop.f32.mrf.mxu0
    %v4926 = vadd.f32 %v3943, %v4925
    %v4927 = vpop.f32.mrf.mxu0
    %4928 = vmatprep.mubr.f32.mxu0 0.0
    %4929 = vmatmul.mubr.f32.gmra.mxu0 %v4267
    %v4930 = vpop.f32.mrf.mxu0
    %v4931 = vadd.f32 %v3943, %v4930
    %v4932 = vpop.f32.mrf.mxu0
    %4933 = vmatprep.mubr.f32.mxu0 0.0
    %4934 = vmatmul.mubr.f32.gmra.mxu0 %v4270
    %v4935 = vpop.f32.mrf.mxu0
    %v4936 = vadd.f32 %v3943, %v4935
    %v4937 = vpop.f32.mrf.mxu0
    %4938 = vmatprep.mubr.f32.mxu0 0.0
    %4939 = vmatmul.mubr.f32.gmra.mxu0 %v4273
    %v4940 = vpop.f32.mrf.mxu0
    %v4941 = vadd.f32 %v3943, %v4940
    %v4942 = vpop.f32.mrf.mxu0
    %4943 = vmatprep.mubr.f32.mxu0 0.0
    %4944 = vmatmul.mubr.f32.gmra.mxu0 %v4276
    %v4945 = vpop.f32.mrf.mxu0
    %v4946 = vadd.f32 %v3943, %v4945
    %v4947 = vpop.f32.mrf.mxu0
    %4948 = vmatprep.mubr.f32.mxu0 0.0
    %4949 = vmatmul.mubr.f32.gmra.mxu0 %v4279
    %v4950 = vpop.f32.mrf.mxu0
    %v4951 = vadd.f32 %v3943, %v4950
    %v4952 = vpop.f32.mrf.mxu0
    %4953 = vmatprep.mubr.f32.mxu0 0.0
    %4954 = vmatmul.mubr.f32.gmra.mxu0 %v4282
    %v4955 = vpop.f32.mrf.mxu0
    %v4956 = vadd.f32 %v3943, %v4955
    %v4957 = vpop.f32.mrf.mxu0
    %4958 = vmatprep.mubr.f32.mxu0 0.0
    %4959 = vmatmul.mubr.f32.gmra.mxu0 %v4285
    %v4960 = vpop.f32.mrf.mxu0
    %v4961 = vadd.f32 %v3943, %v4960
    %v4962 = vpop.f32.mrf.mxu0
    %4963 = vmatprep.mubr.f32.mxu0 0.0
    %4964 = vmatmul.mubr.f32.gmra.mxu0 %v4288
    %v4965 = vpop.f32.mrf.mxu0
    %v4966 = vadd.f32 %v3943, %v4965
    %v4967 = vpop.f32.mrf.mxu0
    %4968 = vmatprep.mubr.f32.mxu0 0.0
    %4969 = vmatmul.mubr.f32.gmra.mxu0 %v4291
    %v4970 = vpop.f32.mrf.mxu0
    %v4971 = vadd.f32 %v3943, %v4970
    %v4972 = vpop.f32.mrf.mxu0
    %4973 = vmatprep.mubr.f32.mxu0 0.0
    %4974 = vmatmul.mubr.f32.gmra.mxu0 %v4294
    %v4975 = vpop.f32.mrf.mxu0
    %v4976 = vadd.f32 %v3943, %v4975
    %v4977 = vpop.f32.mrf.mxu0
    %4978 = vmatprep.mubr.f32.mxu0 0.0
    %4979 = vmatmul.mubr.f32.gmra.mxu0 %v4297
    %v4980 = vpop.f32.mrf.mxu0
    %v4981 = vadd.f32 %v3943, %v4980
    %v4982 = vpop.f32.mrf.mxu0
    %4983 = vmatprep.mubr.f32.mxu0 0.0
    %4984 = vmatmul.mubr.f32.gmra.mxu0 %v4300
    %v4985 = vpop.f32.mrf.mxu0
    %v4986 = vadd.f32 %v3943, %v4985
    %v4987 = vpop.f32.mrf.mxu0
    %4988 = vmatprep.mubr.f32.mxu0 0.0
    %4989 = vmatmul.mubr.f32.gmra.mxu0 %v4303
    %v4990 = vpop.f32.mrf.mxu0
    %v4991 = vadd.f32 %v3943, %v4990
    %v4992 = vpop.f32.mrf.mxu0
    %4993 = vmatprep.mubr.f32.mxu0 0.0
    %4994 = vmatmul.mubr.f32.gmra.mxu0 %v4306
    %v4995 = vpop.f32.mrf.mxu0
    %v4996 = vadd.f32 %v3943, %v4995
    %v4997 = vpop.f32.mrf.mxu0
    %4998 = vmatprep.mubr.f32.mxu0 0.0
    %4999 = vmatmul.mubr.f32.gmra.mxu0 %v4309
    %v5000 = vpop.f32.mrf.mxu0
    %v5001 = vadd.f32 %v3943, %v5000
    %v5002 = vpop.f32.mrf.mxu0
    %5003 = vmatprep.mubr.f32.mxu0 0.0
    %5004 = vmatmul.mubr.f32.gmra.mxu0 %v4312
    %v5005 = vpop.f32.mrf.mxu0
    %v5006 = vadd.f32 %v3943, %v5005
    %v5007 = vpop.f32.mrf.mxu0
    %5008 = vmatprep.mubr.f32.mxu0 0.0
    %5009 = vmatmul.mubr.f32.gmra.mxu0 %v4315
    %v5010 = vpop.f32.mrf.mxu0
    %v5011 = vadd.f32 %v3943, %v5010
    %v5012 = vpop.f32.mrf.mxu0
    %5013 = vmatprep.mubr.f32.mxu0 0.0
    %5014 = vmatmul.mubr.f32.gmra.mxu0 %v4318
    %v5015 = vpop.f32.mrf.mxu0
    %v5016 = vadd.f32 %v3943, %v5015
    %v5017 = vpop.f32.mrf.mxu0
    %5018 = vmatprep.mubr.f32.mxu0 0.0
    %5019 = vmatmul.mubr.f32.gmra.mxu0 %v4321
    %v5020 = vpop.f32.mrf.mxu0
    %v5021 = vadd.f32 %v3943, %v5020
    %v5022 = vpop.f32.mrf.mxu0
    %5023 = vmatprep.mubr.f32.mxu0 0.0
    %5024 = vmatmul.mubr.f32.gmra.mxu0 %v4324
    %v5025 = vpop.f32.mrf.mxu0
    %v5026 = vadd.f32 %v3943, %v5025
    %v5027 = vpop.f32.mrf.mxu0
    %5028 = vmatprep.mubr.f32.mxu0 0.0
    %5029 = vmatmul.mubr.f32.gmra.mxu0 %v4327
    %v5030 = vpop.f32.mrf.mxu0
    %v5031 = vadd.f32 %v3943, %v5030
    %v5032 = vpop.f32.mrf.mxu0
    %5033 = vdwg.mxu0
    %v5034 = vld [vmem:[%s71] sm:$0x1]
    %vm5035 = vcmp.gt.f32.partialorder %v4396, 0.0
    %vm5036 = vcmp.gt.f32.partialorder %v4401, 0.0
    %vm5037 = vcmp.gt.f32.partialorder %v4406, 0.0
    %vm5038 = vcmp.gt.f32.partialorder %v4411, 0.0
    %vm5039 = vcmp.gt.f32.partialorder %v4416, 0.0
    %vm5040 = vcmp.gt.f32.partialorder %v4421, 0.0
    %vm5041 = vcmp.gt.f32.partialorder %v4426, 0.0
    %vm5042 = vcmp.gt.f32.partialorder %v4431, 0.0
    %vm5043 = vcmp.gt.f32.partialorder %v4436, 0.0
    %vm5044 = vcmp.gt.f32.partialorder %v4441, 0.0
    %vm5045 = vcmp.gt.f32.partialorder %v4446, 0.0
    %vm5046 = vcmp.gt.f32.partialorder %v4451, 0.0
    %vm5047 = vcmp.gt.f32.partialorder %v4456, 0.0
    %vm5048 = vcmp.gt.f32.partialorder %v4461, 0.0
    %vm5049 = vcmp.gt.f32.partialorder %v4466, 0.0
    %vm5050 = vcmp.gt.f32.partialorder %v4471, 0.0
    %vm5051 = vcmp.gt.f32.partialorder %v4476, 0.0
    %vm5052 = vcmp.gt.f32.partialorder %v4481, 0.0
    %vm5053 = vcmp.gt.f32.partialorder %v4486, 0.0
    %vm5054 = vcmp.gt.f32.partialorder %v4491, 0.0
    %vm5055 = vcmp.gt.f32.partialorder %v4496, 0.0
    %vm5056 = vcmp.gt.f32.partialorder %v4501, 0.0
    %vm5057 = vcmp.gt.f32.partialorder %v4506, 0.0
    %vm5058 = vcmp.gt.f32.partialorder %v4511, 0.0
    %vm5059 = vcmp.gt.f32.partialorder %v4516, 0.0
    %vm5060 = vcmp.gt.f32.partialorder %v4521, 0.0
    %vm5061 = vcmp.gt.f32.partialorder %v4526, 0.0
    %vm5062 = vcmp.gt.f32.partialorder %v4531, 0.0
    %vm5063 = vcmp.gt.f32.partialorder %v4536, 0.0
    %vm5064 = vcmp.gt.f32.partialorder %v4541, 0.0
    %vm5065 = vcmp.gt.f32.partialorder %v4546, 0.0
    %vm5066 = vcmp.gt.f32.partialorder %v4551, 0.0
    %vm5067 = vcmp.gt.f32.partialorder %v4556, 0.0
    %vm5068 = vcmp.gt.f32.partialorder %v4561, 0.0
    %vm5069 = vcmp.gt.f32.partialorder %v4566, 0.0
    %vm5070 = vcmp.gt.f32.partialorder %v4571, 0.0
    %vm5071 = vcmp.gt.f32.partialorder %v4576, 0.0
    %vm5072 = vcmp.gt.f32.partialorder %v4581, 0.0
    %vm5073 = vcmp.gt.f32.partialorder %v4586, 0.0
    %vm5074 = vcmp.gt.f32.partialorder %v4591, 0.0
    %vm5075 = vcmp.gt.f32.partialorder %v4596, 0.0
    %vm5076 = vcmp.gt.f32.partialorder %v4601, 0.0
    %vm5077 = vcmp.gt.f32.partialorder %v4606, 0.0
    %vm5078 = vcmp.gt.f32.partialorder %v4611, 0.0
    %vm5079 = vcmp.gt.f32.partialorder %v4616, 0.0
    %vm5080 = vcmp.gt.f32.partialorder %v4621, 0.0
    %vm5081 = vcmp.gt.f32.partialorder %v4626, 0.0
    %vm5082 = vcmp.gt.f32.partialorder %v4631, 0.0
    %vm5083 = vcmp.gt.f32.partialorder %v4636, 0.0
    %vm5084 = vcmp.gt.f32.partialorder %v4641, 0.0
    %vm5085 = vcmp.gt.f32.partialorder %v4646, 0.0
    %vm5086 = vcmp.gt.f32.partialorder %v4651, 0.0
    %vm5087 = vcmp.gt.f32.partialorder %v4656, 0.0
    %vm5088 = vcmp.gt.f32.partialorder %v4661, 0.0
    %vm5089 = vcmp.gt.f32.partialorder %v4666, 0.0
    %vm5090 = vcmp.gt.f32.partialorder %v4671, 0.0
    %vm5091 = vcmp.gt.f32.partialorder %v4676, 0.0
    %vm5092 = vcmp.gt.f32.partialorder %v4681, 0.0
    %vm5093 = vcmp.gt.f32.partialorder %v4686, 0.0
    %vm5094 = vcmp.gt.f32.partialorder %v4691, 0.0
    %vm5095 = vcmp.gt.f32.partialorder %v4696, 0.0
    %vm5096 = vcmp.gt.f32.partialorder %v4701, 0.0
    %vm5097 = vcmp.gt.f32.partialorder %v4706, 0.0
    %vm5098 = vcmp.gt.f32.partialorder %v4711, 0.0
    %vm5099 = vcmp.gt.f32.partialorder %v4716, 0.0
    %vm5100 = vcmp.gt.f32.partialorder %v4721, 0.0
    %vm5101 = vcmp.gt.f32.partialorder %v4726, 0.0
    %vm5102 = vcmp.gt.f32.partialorder %v4731, 0.0
    %vm5103 = vcmp.gt.f32.partialorder %v4736, 0.0
    %vm5104 = vcmp.gt.f32.partialorder %v4741, 0.0
    %vm5105 = vcmp.gt.f32.partialorder %v4746, 0.0
    %vm5106 = vcmp.gt.f32.partialorder %v4751, 0.0
    %vm5107 = vcmp.gt.f32.partialorder %v4756, 0.0
    %vm5108 = vcmp.gt.f32.partialorder %v4761, 0.0
    %vm5109 = vcmp.gt.f32.partialorder %v4766, 0.0
    %vm5110 = vcmp.gt.f32.partialorder %v4771, 0.0
    %vm5111 = vcmp.gt.f32.partialorder %v4776, 0.0
    %vm5112 = vcmp.gt.f32.partialorder %v4781, 0.0
    %vm5113 = vcmp.gt.f32.partialorder %v4786, 0.0
    %vm5114 = vcmp.gt.f32.partialorder %v4791, 0.0
    %vm5115 = vcmp.gt.f32.partialorder %v4796, 0.0
    %vm5116 = vcmp.gt.f32.partialorder %v4801, 0.0
    %vm5117 = vcmp.gt.f32.partialorder %v4806, 0.0
    %vm5118 = vcmp.gt.f32.partialorder %v4811, 0.0
    %vm5119 = vcmp.gt.f32.partialorder %v4816, 0.0
    %vm5120 = vcmp.gt.f32.partialorder %v4821, 0.0
    %vm5121 = vcmp.gt.f32.partialorder %v4826, 0.0
    %vm5122 = vcmp.gt.f32.partialorder %v4831, 0.0
    %vm5123 = vcmp.gt.f32.partialorder %v4836, 0.0
    %vm5124 = vcmp.gt.f32.partialorder %v4841, 0.0
    %vm5125 = vcmp.gt.f32.partialorder %v4846, 0.0
    %vm5126 = vcmp.gt.f32.partialorder %v4851, 0.0
    %vm5127 = vcmp.gt.f32.partialorder %v4856, 0.0
    %vm5128 = vcmp.gt.f32.partialorder %v4861, 0.0
    %vm5129 = vcmp.gt.f32.partialorder %v4866, 0.0
    %vm5130 = vcmp.gt.f32.partialorder %v4871, 0.0
    %vm5131 = vcmp.gt.f32.partialorder %v4876, 0.0
    %vm5132 = vcmp.gt.f32.partialorder %v4881, 0.0
    %vm5133 = vcmp.gt.f32.partialorder %v4886, 0.0
    %vm5134 = vcmp.gt.f32.partialorder %v4891, 0.0
    %vm5135 = vcmp.gt.f32.partialorder %v4896, 0.0
    %vm5136 = vcmp.gt.f32.partialorder %v4901, 0.0
    %vm5137 = vcmp.gt.f32.partialorder %v4906, 0.0
    %vm5138 = vcmp.gt.f32.partialorder %v4911, 0.0
    %vm5139 = vcmp.gt.f32.partialorder %v4916, 0.0
    %vm5140 = vcmp.gt.f32.partialorder %v4921, 0.0
    %vm5141 = vcmp.gt.f32.partialorder %v4926, 0.0
    %vm5142 = vcmp.gt.f32.partialorder %v4931, 0.0
    %vm5143 = vcmp.gt.f32.partialorder %v4936, 0.0
    %vm5144 = vcmp.gt.f32.partialorder %v4941, 0.0
    %vm5145 = vcmp.gt.f32.partialorder %v4946, 0.0
    %vm5146 = vcmp.gt.f32.partialorder %v4951, 0.0
    %vm5147 = vcmp.gt.f32.partialorder %v4956, 0.0
    %vm5148 = vcmp.gt.f32.partialorder %v4961, 0.0
    %vm5149 = vcmp.gt.f32.partialorder %v4966, 0.0
    %vm5150 = vcmp.gt.f32.partialorder %v4971, 0.0
    %vm5151 = vcmp.gt.f32.partialorder %v4976, 0.0
    %vm5152 = vcmp.gt.f32.partialorder %v4981, 0.0
    %vm5153 = vcmp.gt.f32.partialorder %v4986, 0.0
    %vm5154 = vcmp.gt.f32.partialorder %v4991, 0.0
    %vm5155 = vcmp.gt.f32.partialorder %v4996, 0.0
    %vm5156 = vcmp.gt.f32.partialorder %v5001, 0.0
    %vm5157 = vcmp.gt.f32.partialorder %v5006, 0.0
    %vm5158 = vcmp.gt.f32.partialorder %v5011, 0.0
    %vm5159 = vcmp.gt.f32.partialorder %v5016, 0.0
    %vm5160 = vcmp.gt.f32.partialorder %v5021, 0.0
    %vm5161 = vcmp.gt.f32.partialorder %v5026, 0.0
    %vm5162 = vcmp.gt.f32.partialorder %v5031, 0.0
    %v5164 = vlaneseq
    %v5165 = vshrl.u32 %v5164, 7
    %v5166 = vsub.s32 0, %v5165
    %v5167 = vrot.slane %v5034, %v5166
    %v5169 = vmul.f32 %v5167, %v4396
    %v5170 = vmul.f32 %v5167, %v4401
    %v5171 = vmul.f32 %v5167, %v4406
    %v5172 = vmul.f32 %v5167, %v4411
    %v5173 = vmul.f32 %v5167, %v4416
    %v5174 = vmul.f32 %v5167, %v4421
    %v5175 = vmul.f32 %v5167, %v4426
    %v5176 = vmul.f32 %v5167, %v4431
    %v5177 = vmul.f32 %v5167, %v4436
    %v5178 = vmul.f32 %v5167, %v4441
    %v5179 = vmul.f32 %v5167, %v4446
    %v5180 = vmul.f32 %v5167, %v4451
    %v5181 = vmul.f32 %v5167, %v4456
    %v5182 = vmul.f32 %v5167, %v4461
    %v5183 = vmul.f32 %v5167, %v4466
    %v5184 = vmul.f32 %v5167, %v4471
    %v5185 = vmul.f32 %v5167, %v4476
    %v5186 = vmul.f32 %v5167, %v4481
    %v5187 = vmul.f32 %v5167, %v4486
    %v5188 = vmul.f32 %v5167, %v4491
    %v5189 = vmul.f32 %v5167, %v4496
    %v5190 = vmul.f32 %v5167, %v4501
    %v5191 = vmul.f32 %v5167, %v4506
    %v5192 = vmul.f32 %v5167, %v4511
    %v5193 = vmul.f32 %v5167, %v4516
    %v5194 = vmul.f32 %v5167, %v4521
    %v5195 = vmul.f32 %v5167, %v4526
    %v5196 = vmul.f32 %v5167, %v4531
    %v5197 = vmul.f32 %v5167, %v4536
    %v5198 = vmul.f32 %v5167, %v4541
    %v5199 = vmul.f32 %v5167, %v4546
    %v5200 = vmul.f32 %v5167, %v4551
    %v5201 = vmul.f32 %v5167, %v4556
    %v5202 = vmul.f32 %v5167, %v4561
    %v5203 = vmul.f32 %v5167, %v4566
    %v5204 = vmul.f32 %v5167, %v4571
    %v5205 = vmul.f32 %v5167, %v4576
    %v5206 = vmul.f32 %v5167, %v4581
    %v5207 = vmul.f32 %v5167, %v4586
    %v5208 = vmul.f32 %v5167, %v4591
    %v5209 = vmul.f32 %v5167, %v4596
    %v5210 = vmul.f32 %v5167, %v4601
    %v5211 = vmul.f32 %v5167, %v4606
    %v5212 = vmul.f32 %v5167, %v4611
    %v5213 = vmul.f32 %v5167, %v4616
    %v5214 = vmul.f32 %v5167, %v4621
    %v5215 = vmul.f32 %v5167, %v4626
    %v5216 = vmul.f32 %v5167, %v4631
    %v5217 = vmul.f32 %v5167, %v4636
    %v5218 = vmul.f32 %v5167, %v4641
    %v5219 = vmul.f32 %v5167, %v4646
    %v5220 = vmul.f32 %v5167, %v4651
    %v5221 = vmul.f32 %v5167, %v4656
    %v5222 = vmul.f32 %v5167, %v4661
    %v5223 = vmul.f32 %v5167, %v4666
    %v5224 = vmul.f32 %v5167, %v4671
    %v5225 = vmul.f32 %v5167, %v4676
    %v5226 = vmul.f32 %v5167, %v4681
    %v5227 = vmul.f32 %v5167, %v4686
    %v5228 = vmul.f32 %v5167, %v4691
    %v5229 = vmul.f32 %v5167, %v4696
    %v5230 = vmul.f32 %v5167, %v4701
    %v5231 = vmul.f32 %v5167, %v4706
    %v5232 = vmul.f32 %v5167, %v4711
    %v5233 = vmul.f32 %v5167, %v4716
    %v5234 = vmul.f32 %v5167, %v4721
    %v5235 = vmul.f32 %v5167, %v4726
    %v5236 = vmul.f32 %v5167, %v4731
    %v5237 = vmul.f32 %v5167, %v4736
    %v5238 = vmul.f32 %v5167, %v4741
    %v5239 = vmul.f32 %v5167, %v4746
    %v5240 = vmul.f32 %v5167, %v4751
    %v5241 = vmul.f32 %v5167, %v4756
    %v5242 = vmul.f32 %v5167, %v4761
    %v5243 = vmul.f32 %v5167, %v4766
    %v5244 = vmul.f32 %v5167, %v4771
    %v5245 = vmul.f32 %v5167, %v4776
    %v5246 = vmul.f32 %v5167, %v4781
    %v5247 = vmul.f32 %v5167, %v4786
    %v5248 = vmul.f32 %v5167, %v4791
    %v5249 = vmul.f32 %v5167, %v4796
    %v5250 = vmul.f32 %v5167, %v4801
    %v5251 = vmul.f32 %v5167, %v4806
    %v5252 = vmul.f32 %v5167, %v4811
    %v5253 = vmul.f32 %v5167, %v4816
    %v5254 = vmul.f32 %v5167, %v4821
    %v5255 = vmul.f32 %v5167, %v4826
    %v5256 = vmul.f32 %v5167, %v4831
    %v5257 = vmul.f32 %v5167, %v4836
    %v5258 = vmul.f32 %v5167, %v4841
    %v5259 = vmul.f32 %v5167, %v4846
    %v5260 = vmul.f32 %v5167, %v4851
    %v5261 = vmul.f32 %v5167, %v4856
    %v5262 = vmul.f32 %v5167, %v4861
    %v5263 = vmul.f32 %v5167, %v4866
    %v5264 = vmul.f32 %v5167, %v4871
    %v5265 = vmul.f32 %v5167, %v4876
    %v5266 = vmul.f32 %v5167, %v4881
    %v5267 = vmul.f32 %v5167, %v4886
    %v5268 = vmul.f32 %v5167, %v4891
    %v5269 = vmul.f32 %v5167, %v4896
    %v5270 = vmul.f32 %v5167, %v4901
    %v5271 = vmul.f32 %v5167, %v4906
    %v5272 = vmul.f32 %v5167, %v4911
    %v5273 = vmul.f32 %v5167, %v4916
    %v5274 = vmul.f32 %v5167, %v4921
    %v5275 = vmul.f32 %v5167, %v4926
    %v5276 = vmul.f32 %v5167, %v4931
    %v5277 = vmul.f32 %v5167, %v4936
    %v5278 = vmul.f32 %v5167, %v4941
    %v5279 = vmul.f32 %v5167, %v4946
    %v5280 = vmul.f32 %v5167, %v4951
    %v5281 = vmul.f32 %v5167, %v4956
    %v5282 = vmul.f32 %v5167, %v4961
    %v5283 = vmul.f32 %v5167, %v4966
    %v5284 = vmul.f32 %v5167, %v4971
    %v5285 = vmul.f32 %v5167, %v4976
    %v5286 = vmul.f32 %v5167, %v4981
    %v5287 = vmul.f32 %v5167, %v4986
    %v5288 = vmul.f32 %v5167, %v4991
    %v5289 = vmul.f32 %v5167, %v4996
    %v5290 = vmul.f32 %v5167, %v5001
    %v5291 = vmul.f32 %v5167, %v5006
    %v5292 = vmul.f32 %v5167, %v5011
    %v5293 = vmul.f32 %v5167, %v5016
    %v5294 = vmul.f32 %v5167, %v5021
    %v5295 = vmul.f32 %v5167, %v5026
    %v5296 = vmul.f32 %v5167, %v5031
    %v5297 = vsel %vm5035, %v4396, %v5169
    %v5298 = vsel %vm5036, %v4401, %v5170
    %v5299 = vsel %vm5037, %v4406, %v5171
    %v5300 = vsel %vm5038, %v4411, %v5172
    %v5301 = vsel %vm5039, %v4416, %v5173
    %v5302 = vsel %vm5040, %v4421, %v5174
    %v5303 = vsel %vm5041, %v4426, %v5175
    %v5304 = vsel %vm5042, %v4431, %v5176
    %v5305 = vsel %vm5043, %v4436, %v5177
    %v5306 = vsel %vm5044, %v4441, %v5178
    %v5307 = vsel %vm5045, %v4446, %v5179
    %v5308 = vsel %vm5046, %v4451, %v5180
    %v5309 = vsel %vm5047, %v4456, %v5181
    %v5310 = vsel %vm5048, %v4461, %v5182
    %v5311 = vsel %vm5049, %v4466, %v5183
    %v5312 = vsel %vm5050, %v4471, %v5184
    %v5313 = vsel %vm5051, %v4476, %v5185
    %v5314 = vsel %vm5052, %v4481, %v5186
    %v5315 = vsel %vm5053, %v4486, %v5187
    %v5316 = vsel %vm5054, %v4491, %v5188
    %v5317 = vsel %vm5055, %v4496, %v5189
    %v5318 = vsel %vm5056, %v4501, %v5190
    %v5319 = vsel %vm5057, %v4506, %v5191
    %v5320 = vsel %vm5058, %v4511, %v5192
    %v5321 = vsel %vm5059, %v4516, %v5193
    %v5322 = vsel %vm5060, %v4521, %v5194
    %v5323 = vsel %vm5061, %v4526, %v5195
    %v5324 = vsel %vm5062, %v4531, %v5196
    %v5325 = vsel %vm5063, %v4536, %v5197
    %v5326 = vsel %vm5064, %v4541, %v5198
    %v5327 = vsel %vm5065, %v4546, %v5199
    %v5328 = vsel %vm5066, %v4551, %v5200
    %v5329 = vsel %vm5067, %v4556, %v5201
    %v5330 = vsel %vm5068, %v4561, %v5202
    %v5331 = vsel %vm5069, %v4566, %v5203
    %v5332 = vsel %vm5070, %v4571, %v5204
    %v5333 = vsel %vm5071, %v4576, %v5205
    %v5334 = vsel %vm5072, %v4581, %v5206
    %v5335 = vsel %vm5073, %v4586, %v5207
    %v5336 = vsel %vm5074, %v4591, %v5208
    %v5337 = vsel %vm5075, %v4596, %v5209
    %v5338 = vsel %vm5076, %v4601, %v5210
    %v5339 = vsel %vm5077, %v4606, %v5211
    %v5340 = vsel %vm5078, %v4611, %v5212
    %v5341 = vsel %vm5079, %v4616, %v5213
    %v5342 = vsel %vm5080, %v4621, %v5214
    %v5343 = vsel %vm5081, %v4626, %v5215
    %v5344 = vsel %vm5082, %v4631, %v5216
    %v5345 = vsel %vm5083, %v4636, %v5217
    %v5346 = vsel %vm5084, %v4641, %v5218
    %v5347 = vsel %vm5085, %v4646, %v5219
    %v5348 = vsel %vm5086, %v4651, %v5220
    %v5349 = vsel %vm5087, %v4656, %v5221
    %v5350 = vsel %vm5088, %v4661, %v5222
    %v5351 = vsel %vm5089, %v4666, %v5223
    %v5352 = vsel %vm5090, %v4671, %v5224
    %v5353 = vsel %vm5091, %v4676, %v5225
    %v5354 = vsel %vm5092, %v4681, %v5226
    %v5355 = vsel %vm5093, %v4686, %v5227
    %v5356 = vsel %vm5094, %v4691, %v5228
    %v5357 = vsel %vm5095, %v4696, %v5229
    %v5358 = vsel %vm5096, %v4701, %v5230
    %v5359 = vsel %vm5097, %v4706, %v5231
    %v5360 = vsel %vm5098, %v4711, %v5232
    %v5361 = vsel %vm5099, %v4716, %v5233
    %v5362 = vsel %vm5100, %v4721, %v5234
    %v5363 = vsel %vm5101, %v4726, %v5235
    %v5364 = vsel %vm5102, %v4731, %v5236
    %v5365 = vsel %vm5103, %v4736, %v5237
    %v5366 = vsel %vm5104, %v4741, %v5238
    %v5367 = vsel %vm5105, %v4746, %v5239
    %v5368 = vsel %vm5106, %v4751, %v5240
    %v5369 = vsel %vm5107, %v4756, %v5241
    %v5370 = vsel %vm5108, %v4761, %v5242
    %v5371 = vsel %vm5109, %v4766, %v5243
    %v5372 = vsel %vm5110, %v4771, %v5244
    %v5373 = vsel %vm5111, %v4776, %v5245
    %v5374 = vsel %vm5112, %v4781, %v5246
    %v5375 = vsel %vm5113, %v4786, %v5247
    %v5376 = vsel %vm5114, %v4791, %v5248
    %v5377 = vsel %vm5115, %v4796, %v5249
    %v5378 = vsel %vm5116, %v4801, %v5250
    %v5379 = vsel %vm5117, %v4806, %v5251
    %v5380 = vsel %vm5118, %v4811, %v5252
    %v5381 = vsel %vm5119, %v4816, %v5253
    %v5382 = vsel %vm5120, %v4821, %v5254
    %v5383 = vsel %vm5121, %v4826, %v5255
    %v5384 = vsel %vm5122, %v4831, %v5256
    %v5385 = vsel %vm5123, %v4836, %v5257
    %v5386 = vsel %vm5124, %v4841, %v5258
    %v5387 = vsel %vm5125, %v4846, %v5259
    %v5388 = vsel %vm5126, %v4851, %v5260
    %v5389 = vsel %vm5127, %v4856, %v5261
    %v5390 = vsel %vm5128, %v4861, %v5262
    %v5391 = vsel %vm5129, %v4866, %v5263
    %v5392 = vsel %vm5130, %v4871, %v5264
    %v5393 = vsel %vm5131, %v4876, %v5265
    %v5394 = vsel %vm5132, %v4881, %v5266
    %v5395 = vsel %vm5133, %v4886, %v5267
    %v5396 = vsel %vm5134, %v4891, %v5268
    %v5397 = vsel %vm5135, %v4896, %v5269
    %v5398 = vsel %vm5136, %v4901, %v5270
    %v5399 = vsel %vm5137, %v4906, %v5271
    %v5400 = vsel %vm5138, %v4911, %v5272
    %v5401 = vsel %vm5139, %v4916, %v5273
    %v5402 = vsel %vm5140, %v4921, %v5274
    %v5403 = vsel %vm5141, %v4926, %v5275
    %v5404 = vsel %vm5142, %v4931, %v5276
    %v5405 = vsel %vm5143, %v4936, %v5277
    %v5406 = vsel %vm5144, %v4941, %v5278
    %v5407 = vsel %vm5145, %v4946, %v5279
    %v5408 = vsel %vm5146, %v4951, %v5280
    %v5409 = vsel %vm5147, %v4956, %v5281
    %v5410 = vsel %vm5148, %v4961, %v5282
    %v5411 = vsel %vm5149, %v4966, %v5283
    %v5412 = vsel %vm5150, %v4971, %v5284
    %v5413 = vsel %vm5151, %v4976, %v5285
    %v5414 = vsel %vm5152, %v4981, %v5286
    %v5415 = vsel %vm5153, %v4986, %v5287
    %v5416 = vsel %vm5154, %v4991, %v5288
    %v5417 = vsel %vm5155, %v4996, %v5289
    %v5418 = vsel %vm5156, %v5001, %v5290
    %v5419 = vsel %vm5157, %v5006, %v5291
    %v5420 = vsel %vm5158, %v5011, %v5292
    %v5421 = vsel %vm5159, %v5016, %v5293
    %v5422 = vsel %vm5160, %v5021, %v5294
    %v5423 = vsel %vm5161, %v5026, %v5295
    %v5424 = vsel %vm5162, %v5031, %v5296
    %v5425 = vld [vmem:[%s73] sm:$0x3]
    %v5426 = vld [vmem:[%s75] sm:$0x3]
    %5428 = vset.pattern.permute.xlu0 0
    %5429 = vperm.xlu0 %5428, %v5426
    %v5430 = vpop.permute.xlu0 %5429
    %v5433 = vsel %vm2196, %v5425, 0
    %v5436 = vsel %vm2196, %v5297, 0
    %v5439 = vsel %vm2196, %v5298, 0
    %v5442 = vsel %vm2196, %v5299, 0
    %v5445 = vsel %vm2196, %v5300, 0
    %v5448 = vsel %vm2196, %v5301, 0
    %v5451 = vsel %vm2196, %v5302, 0
    %v5454 = vsel %vm2196, %v5303, 0
    %v5457 = vsel %vm2196, %v5304, 0
    %v5460 = vsel %vm2196, %v5305, 0
    %v5463 = vsel %vm2196, %v5306, 0
    %v5466 = vsel %vm2196, %v5307, 0
    %v5469 = vsel %vm2196, %v5308, 0
    %v5472 = vsel %vm2196, %v5309, 0
    %v5475 = vsel %vm2196, %v5310, 0
    %v5478 = vsel %vm2196, %v5311, 0
    %v5481 = vsel %vm2196, %v5312, 0
    %v5484 = vsel %vm2196, %v5313, 0
    %v5487 = vsel %vm2196, %v5314, 0
    %v5490 = vsel %vm2196, %v5315, 0
    %v5493 = vsel %vm2196, %v5316, 0
    %v5496 = vsel %vm2196, %v5317, 0
    %v5499 = vsel %vm2196, %v5318, 0
    %v5502 = vsel %vm2196, %v5319, 0
    %v5505 = vsel %vm2196, %v5320, 0
    %v5508 = vsel %vm2196, %v5321, 0
    %v5511 = vsel %vm2196, %v5322, 0
    %v5514 = vsel %vm2196, %v5323, 0
    %v5517 = vsel %vm2196, %v5324, 0
    %v5520 = vsel %vm2196, %v5325, 0
    %v5523 = vsel %vm2196, %v5326, 0
    %v5526 = vsel %vm2196, %v5327, 0
    %v5529 = vsel %vm2196, %v5328, 0
    %v5532 = vsel %vm2196, %v5329, 0
    %v5535 = vsel %vm2196, %v5330, 0
    %v5538 = vsel %vm2196, %v5331, 0
    %v5541 = vsel %vm2196, %v5332, 0
    %v5544 = vsel %vm2196, %v5333, 0
    %v5547 = vsel %vm2196, %v5334, 0
    %v5550 = vsel %vm2196, %v5335, 0
    %v5553 = vsel %vm2196, %v5336, 0
    %v5556 = vsel %vm2196, %v5337, 0
    %v5559 = vsel %vm2196, %v5338, 0
    %v5562 = vsel %vm2196, %v5339, 0
    %v5565 = vsel %vm2196, %v5340, 0
    %v5568 = vsel %vm2196, %v5341, 0
    %v5571 = vsel %vm2196, %v5342, 0
    %v5574 = vsel %vm2196, %v5343, 0
    %v5577 = vsel %vm2196, %v5344, 0
    %v5580 = vsel %vm2196, %v5345, 0
    %v5583 = vsel %vm2196, %v5346, 0
    %v5586 = vsel %vm2196, %v5347, 0
    %v5589 = vsel %vm2196, %v5348, 0
    %v5592 = vsel %vm2196, %v5349, 0
    %v5595 = vsel %vm2196, %v5350, 0
    %v5598 = vsel %vm2196, %v5351, 0
    %v5601 = vsel %vm2196, %v5352, 0
    %v5604 = vsel %vm2196, %v5353, 0
    %v5607 = vsel %vm2196, %v5354, 0
    %v5610 = vsel %vm2196, %v5355, 0
    %v5613 = vsel %vm2196, %v5356, 0
    %v5616 = vsel %vm2196, %v5357, 0
    %v5619 = vsel %vm2196, %v5358, 0
    %v5622 = vsel %vm2196, %v5359, 0
    %v5625 = vsel %vm2196, %v5360, 0
    %v5628 = vsel %vm2196, %v5361, 0
    %v5631 = vsel %vm2196, %v5362, 0
    %v5634 = vsel %vm2196, %v5363, 0
    %v5637 = vsel %vm2196, %v5364, 0
    %v5640 = vsel %vm2196, %v5365, 0
    %v5643 = vsel %vm2196, %v5366, 0
    %v5646 = vsel %vm2196, %v5367, 0
    %v5649 = vsel %vm2196, %v5368, 0
    %v5652 = vsel %vm2196, %v5369, 0
    %v5655 = vsel %vm2196, %v5370, 0
    %v5658 = vsel %vm2196, %v5371, 0
    %v5661 = vsel %vm2196, %v5372, 0
    %v5664 = vsel %vm2196, %v5373, 0
    %v5667 = vsel %vm2196, %v5374, 0
    %v5670 = vsel %vm2196, %v5375, 0
    %v5673 = vsel %vm2196, %v5376, 0
    %v5676 = vsel %vm2196, %v5377, 0
    %v5679 = vsel %vm2196, %v5378, 0
    %v5682 = vsel %vm2196, %v5379, 0
    %v5685 = vsel %vm2196, %v5380, 0
    %v5688 = vsel %vm2196, %v5381, 0
    %v5691 = vsel %vm2196, %v5382, 0
    %v5694 = vsel %vm2196, %v5383, 0
    %v5697 = vsel %vm2196, %v5384, 0
    %v5700 = vsel %vm2196, %v5385, 0
    %v5703 = vsel %vm2196, %v5386, 0
    %v5706 = vsel %vm2196, %v5387, 0
    %v5709 = vsel %vm2196, %v5388, 0
    %v5712 = vsel %vm2196, %v5389, 0
    %v5715 = vsel %vm2196, %v5390, 0
    %v5718 = vsel %vm2196, %v5391, 0
    %v5721 = vsel %vm2196, %v5392, 0
    %v5724 = vsel %vm2196, %v5393, 0
    %v5727 = vsel %vm2196, %v5394, 0
    %v5730 = vsel %vm2196, %v5395, 0
    %v5733 = vsel %vm2196, %v5396, 0
    %v5736 = vsel %vm2196, %v5397, 0
    %v5739 = vsel %vm2196, %v5398, 0
    %v5742 = vsel %vm2196, %v5399, 0
    %v5745 = vsel %vm2196, %v5400, 0
    %v5748 = vsel %vm2196, %v5401, 0
    %v5751 = vsel %vm2196, %v5402, 0
    %v5754 = vsel %vm2196, %v5403, 0
    %v5757 = vsel %vm2196, %v5404, 0
    %v5760 = vsel %vm2196, %v5405, 0
    %v5763 = vsel %vm2196, %v5406, 0
    %v5766 = vsel %vm2196, %v5407, 0
    %v5769 = vsel %vm2196, %v5408, 0
    %v5772 = vsel %vm2196, %v5409, 0
    %v5775 = vsel %vm2196, %v5410, 0
    %v5778 = vsel %vm2196, %v5411, 0
    %v5781 = vsel %vm2196, %v5412, 0
    %v5784 = vsel %vm2196, %v5413, 0
    %v5787 = vsel %vm2196, %v5414, 0
    %v5790 = vsel %vm2196, %v5415, 0
    %v5793 = vsel %vm2196, %v5416, 0
    %v5796 = vsel %vm2196, %v5417, 0
    %v5799 = vsel %vm2196, %v5418, 0
    %v5802 = vsel %vm2196, %v5419, 0
    %v5805 = vsel %vm2196, %v5420, 0
    %v5808 = vsel %vm2196, %v5421, 0
    %v5811 = vsel %vm2196, %v5422, 0
    %v5814 = vsel %vm2196, %v5423, 0
    %v5817 = vsel %vm2196, %v5424, 0
    %5819 = vmatprep.subr.mxu0 0.0
    %5820 = vmatpush1.xpose.msra.mxu0 %v5481
    %5821 = vmatprep.subr.mxu0 0.0
    %5822 = vmatpush1.xpose.msra.mxu0 %v5478
    %5823 = vmatprep.subr.mxu0 0.0
    %5824 = vmatpush1.xpose.msra.mxu0 %v5475
    %5825 = vmatprep.subr.mxu0 0.0
    %5826 = vmatpush1.xpose.msra.mxu0 %v5472
    %5827 = vmatprep.subr.mxu0 0.0
    %5828 = vmatpush1.xpose.msra.mxu0 %v5469
    %5829 = vmatprep.subr.mxu0 0.0
    %5830 = vmatpush1.xpose.msra.mxu0 %v5466
    %5831 = vmatprep.subr.mxu0 0.0
    %5832 = vmatpush1.xpose.msra.mxu0 %v5463
    %5833 = vmatprep.subr.mxu0 0.0
    %5834 = vmatpush1.xpose.msra.mxu0 %v5460
    %5835 = vmatprep.subr.mxu0 0.0
    %5836 = vmatpush1.xpose.msra.mxu0 %v5457
    %5837 = vmatprep.subr.mxu0 0.0
    %5838 = vmatpush1.xpose.msra.mxu0 %v5454
    %5839 = vmatprep.subr.mxu0 0.0
    %5840 = vmatpush1.xpose.msra.mxu0 %v5451
    %5841 = vmatprep.subr.mxu0 0.0
    %5842 = vmatpush1.xpose.msra.mxu0 %v5448
    %5843 = vmatprep.subr.mxu0 0.0
    %5844 = vmatpush1.xpose.msra.mxu0 %v5445
    %5845 = vmatprep.subr.mxu0 0.0
    %5846 = vmatpush1.xpose.msra.mxu0 %v5442
    %5847 = vmatprep.subr.mxu0 0.0
    %5848 = vmatpush1.xpose.msra.mxu0 %v5439
    %5849 = vmatprep.subr.mxu0 0.0
    %5850 = vmatpush1.xpose.msra.mxu0 %v5436
    %5851 = vmatprep.subr.mxu0 0.0
    %5852 = vmatpush2.xpose.msra.mxu0 %v5529
    %5853 = vmatprep.subr.mxu0 0.0
    %5854 = vmatpush2.xpose.msra.mxu0 %v5526
    %5855 = vmatprep.subr.mxu0 0.0
    %5856 = vmatpush2.xpose.msra.mxu0 %v5523
    %5857 = vmatprep.subr.mxu0 0.0
    %5858 = vmatpush2.xpose.msra.mxu0 %v5520
    %5859 = vmatprep.subr.mxu0 0.0
    %5860 = vmatpush2.xpose.msra.mxu0 %v5517
    %5861 = vmatprep.subr.mxu0 0.0
    %5862 = vmatpush2.xpose.msra.mxu0 %v5514
    %5863 = vmatprep.subr.mxu0 0.0
    %5864 = vmatpush2.xpose.msra.mxu0 %v5511
    %5865 = vmatprep.subr.mxu0 0.0
    %5866 = vmatpush2.xpose.msra.mxu0 %v5508
    %5867 = vmatprep.subr.mxu0 0.0
    %5868 = vmatpush2.xpose.msra.mxu0 %v5505
    %5869 = vmatprep.subr.mxu0 0.0
    %5870 = vmatpush2.xpose.msra.mxu0 %v5502
    %5871 = vmatprep.subr.mxu0 0.0
    %5872 = vmatpush2.xpose.msra.mxu0 %v5499
    %5873 = vmatprep.subr.mxu0 0.0
    %5874 = vmatpush2.xpose.msra.mxu0 %v5496
    %5875 = vmatprep.subr.mxu0 0.0
    %5876 = vmatpush2.xpose.msra.mxu0 %v5493
    %5877 = vmatprep.subr.mxu0 0.0
    %5878 = vmatpush2.xpose.msra.mxu0 %v5490
    %5879 = vmatprep.subr.mxu0 0.0
    %5880 = vmatpush2.xpose.msra.mxu0 %v5487
    %5881 = vmatprep.subr.mxu0 0.0
    %5882 = vmatpush2.xpose.msra.mxu0 %v5484
    %5883 = vmatprep.mubr.f32.mxu0 0.0
    %5884 = vmatmul.mubr.f32.gmra.mxu0 %v5433
    %v5885 = vpop.f32.mrf.mxu0
    %v5886 = vadd.f32 %v5430, %v5885
    %v5887 = vpop.f32.mrf.mxu0
    %v5888 = vadd.f32 %v5430, %v5887
    %5889 = vdwg.mxu0
    %5890 = vmatprep.subr.mxu0 0.0
    %5891 = vmatpush1.xpose.msra.mxu0 %v5577
    %5892 = vmatprep.subr.mxu0 0.0
    %5893 = vmatpush1.xpose.msra.mxu0 %v5574
    %5894 = vmatprep.subr.mxu0 0.0
    %5895 = vmatpush1.xpose.msra.mxu0 %v5571
    %5896 = vmatprep.subr.mxu0 0.0
    %5897 = vmatpush1.xpose.msra.mxu0 %v5568
    %5898 = vmatprep.subr.mxu0 0.0
    %5899 = vmatpush1.xpose.msra.mxu0 %v5565
    %5900 = vmatprep.subr.mxu0 0.0
    %5901 = vmatpush1.xpose.msra.mxu0 %v5562
    %5902 = vmatprep.subr.mxu0 0.0
    %5903 = vmatpush1.xpose.msra.mxu0 %v5559
    %5904 = vmatprep.subr.mxu0 0.0
    %5905 = vmatpush1.xpose.msra.mxu0 %v5556
    %5906 = vmatprep.subr.mxu0 0.0
    %5907 = vmatpush1.xpose.msra.mxu0 %v5553
    %5908 = vmatprep.subr.mxu0 0.0
    %5909 = vmatpush1.xpose.msra.mxu0 %v5550
    %5910 = vmatprep.subr.mxu0 0.0
    %5911 = vmatpush1.xpose.msra.mxu0 %v5547
    %5912 = vmatprep.subr.mxu0 0.0
    %5913 = vmatpush1.xpose.msra.mxu0 %v5544
    %5914 = vmatprep.subr.mxu0 0.0
    %5915 = vmatpush1.xpose.msra.mxu0 %v5541
    %5916 = vmatprep.subr.mxu0 0.0
    %5917 = vmatpush1.xpose.msra.mxu0 %v5538
    %5918 = vmatprep.subr.mxu0 0.0
    %5919 = vmatpush1.xpose.msra.mxu0 %v5535
    %5920 = vmatprep.subr.mxu0 0.0
    %5921 = vmatpush1.xpose.msra.mxu0 %v5532
    %5922 = vmatprep.subr.mxu0 0.0
    %5923 = vmatpush2.xpose.msra.mxu0 %v5625
    %5924 = vmatprep.subr.mxu0 0.0
    %5925 = vmatpush2.xpose.msra.mxu0 %v5622
    %5926 = vmatprep.subr.mxu0 0.0
    %5927 = vmatpush2.xpose.msra.mxu0 %v5619
    %5928 = vmatprep.subr.mxu0 0.0
    %5929 = vmatpush2.xpose.msra.mxu0 %v5616
    %5930 = vmatprep.subr.mxu0 0.0
    %5931 = vmatpush2.xpose.msra.mxu0 %v5613
    %5932 = vmatprep.subr.mxu0 0.0
    %5933 = vmatpush2.xpose.msra.mxu0 %v5610
    %5934 = vmatprep.subr.mxu0 0.0
    %5935 = vmatpush2.xpose.msra.mxu0 %v5607
    %5936 = vmatprep.subr.mxu0 0.0
    %5937 = vmatpush2.xpose.msra.mxu0 %v5604
    %5938 = vmatprep.subr.mxu0 0.0
    %5939 = vmatpush2.xpose.msra.mxu0 %v5601
    %5940 = vmatprep.subr.mxu0 0.0
    %5941 = vmatpush2.xpose.msra.mxu0 %v5598
    %5942 = vmatprep.subr.mxu0 0.0
    %5943 = vmatpush2.xpose.msra.mxu0 %v5595
    %5944 = vmatprep.subr.mxu0 0.0
    %5945 = vmatpush2.xpose.msra.mxu0 %v5592
    %5946 = vmatprep.subr.mxu0 0.0
    %5947 = vmatpush2.xpose.msra.mxu0 %v5589
    %5948 = vmatprep.subr.mxu0 0.0
    %5949 = vmatpush2.xpose.msra.mxu0 %v5586
    %5950 = vmatprep.subr.mxu0 0.0
    %5951 = vmatpush2.xpose.msra.mxu0 %v5583
    %5952 = vmatprep.subr.mxu0 0.0
    %5953 = vmatpush2.xpose.msra.mxu0 %v5580
    %5954 = vmatprep.mubr.f32.mxu0 0.0
    %5955 = vmatmul.mubr.f32.gmra.mxu0 %v5433
    %v5956 = vpop.f32.mrf.mxu0
    %v5957 = vadd.f32 %v5430, %v5956
    %v5958 = vpop.f32.mrf.mxu0
    %v5959 = vadd.f32 %v5430, %v5958
    %5960 = vdwg.mxu0
    %5961 = vmatprep.subr.mxu0 0.0
    %5962 = vmatpush1.xpose.msra.mxu0 %v5673
    %5963 = vmatprep.subr.mxu0 0.0
    %5964 = vmatpush1.xpose.msra.mxu0 %v5670
    %5965 = vmatprep.subr.mxu0 0.0
    %5966 = vmatpush1.xpose.msra.mxu0 %v5667
    %5967 = vmatprep.subr.mxu0 0.0
    %5968 = vmatpush1.xpose.msra.mxu0 %v5664
    %5969 = vmatprep.subr.mxu0 0.0
    %5970 = vmatpush1.xpose.msra.mxu0 %v5661
    %5971 = vmatprep.subr.mxu0 0.0
    %5972 = vmatpush1.xpose.msra.mxu0 %v5658
    %5973 = vmatprep.subr.mxu0 0.0
    %5974 = vmatpush1.xpose.msra.mxu0 %v5655
    %5975 = vmatprep.subr.mxu0 0.0
    %5976 = vmatpush1.xpose.msra.mxu0 %v5652
    %5977 = vmatprep.subr.mxu0 0.0
    %5978 = vmatpush1.xpose.msra.mxu0 %v5649
    %5979 = vmatprep.subr.mxu0 0.0
    %5980 = vmatpush1.xpose.msra.mxu0 %v5646
    %5981 = vmatprep.subr.mxu0 0.0
    %5982 = vmatpush1.xpose.msra.mxu0 %v5643
    %5983 = vmatprep.subr.mxu0 0.0
    %5984 = vmatpush1.xpose.msra.mxu0 %v5640
    %5985 = vmatprep.subr.mxu0 0.0
    %5986 = vmatpush1.xpose.msra.mxu0 %v5637
    %5987 = vmatprep.subr.mxu0 0.0
    %5988 = vmatpush1.xpose.msra.mxu0 %v5634
    %5989 = vmatprep.subr.mxu0 0.0
    %5990 = vmatpush1.xpose.msra.mxu0 %v5631
    %5991 = vmatprep.subr.mxu0 0.0
    %5992 = vmatpush1.xpose.msra.mxu0 %v5628
    %5993 = vmatprep.subr.mxu0 0.0
    %5994 = vmatpush2.xpose.msra.mxu0 %v5721
    %5995 = vmatprep.subr.mxu0 0.0
    %5996 = vmatpush2.xpose.msra.mxu0 %v5718
    %5997 = vmatprep.subr.mxu0 0.0
    %5998 = vmatpush2.xpose.msra.mxu0 %v5715
    %5999 = vmatprep.subr.mxu0 0.0
    %6000 = vmatpush2.xpose.msra.mxu0 %v5712
    %6001 = vmatprep.subr.mxu0 0.0
    %6002 = vmatpush2.xpose.msra.mxu0 %v5709
    %6003 = vmatprep.subr.mxu0 0.0
    %6004 = vmatpush2.xpose.msra.mxu0 %v5706
    %6005 = vmatprep.subr.mxu0 0.0
    %6006 = vmatpush2.xpose.msra.mxu0 %v5703
    %6007 = vmatprep.subr.mxu0 0.0
    %6008 = vmatpush2.xpose.msra.mxu0 %v5700
    %6009 = vmatprep.subr.mxu0 0.0
    %6010 = vmatpush2.xpose.msra.mxu0 %v5697
    %6011 = vmatprep.subr.mxu0 0.0
    %6012 = vmatpush2.xpose.msra.mxu0 %v5694
    %6013 = vmatprep.subr.mxu0 0.0
    %6014 = vmatpush2.xpose.msra.mxu0 %v5691
    %6015 = vmatprep.subr.mxu0 0.0
    %6016 = vmatpush2.xpose.msra.mxu0 %v5688
    %6017 = vmatprep.subr.mxu0 0.0
    %6018 = vmatpush2.xpose.msra.mxu0 %v5685
    %6019 = vmatprep.subr.mxu0 0.0
    %6020 = vmatpush2.xpose.msra.mxu0 %v5682
    %6021 = vmatprep.subr.mxu0 0.0
    %6022 = vmatpush2.xpose.msra.mxu0 %v5679
    %6023 = vmatprep.subr.mxu0 0.0
    %6024 = vmatpush2.xpose.msra.mxu0 %v5676
    %6025 = vmatprep.mubr.f32.mxu0 0.0
    %6026 = vmatmul.mubr.f32.gmra.mxu0 %v5433
    %v6027 = vpop.f32.mrf.mxu0
    %v6028 = vadd.f32 %v5430, %v6027
    %v6029 = vpop.f32.mrf.mxu0
    %v6030 = vadd.f32 %v5430, %v6029
    %6031 = vdwg.mxu0
    %6032 = vmatprep.subr.mxu0 0.0
    %6033 = vmatpush1.xpose.msra.mxu0 %v5769
    %6034 = vmatprep.subr.mxu0 0.0
    %6035 = vmatpush1.xpose.msra.mxu0 %v5766
    %6036 = vmatprep.subr.mxu0 0.0
    %6037 = vmatpush1.xpose.msra.mxu0 %v5763
    %6038 = vmatprep.subr.mxu0 0.0
    %6039 = vmatpush1.xpose.msra.mxu0 %v5760
    %6040 = vmatprep.subr.mxu0 0.0
    %6041 = vmatpush1.xpose.msra.mxu0 %v5757
    %6042 = vmatprep.subr.mxu0 0.0
    %6043 = vmatpush1.xpose.msra.mxu0 %v5754
    %6044 = vmatprep.subr.mxu0 0.0
    %6045 = vmatpush1.xpose.msra.mxu0 %v5751
    %6046 = vmatprep.subr.mxu0 0.0
    %6047 = vmatpush1.xpose.msra.mxu0 %v5748
    %6048 = vmatprep.subr.mxu0 0.0
    %6049 = vmatpush1.xpose.msra.mxu0 %v5745
    %6050 = vmatprep.subr.mxu0 0.0
    %6051 = vmatpush1.xpose.msra.mxu0 %v5742
    %6052 = vmatprep.subr.mxu0 0.0
    %6053 = vmatpush1.xpose.msra.mxu0 %v5739
    %6054 = vmatprep.subr.mxu0 0.0
    %6055 = vmatpush1.xpose.msra.mxu0 %v5736
    %6056 = vmatprep.subr.mxu0 0.0
    %6057 = vmatpush1.xpose.msra.mxu0 %v5733
    %6058 = vmatprep.subr.mxu0 0.0
    %6059 = vmatpush1.xpose.msra.mxu0 %v5730
    %6060 = vmatprep.subr.mxu0 0.0
    %6061 = vmatpush1.xpose.msra.mxu0 %v5727
    %6062 = vmatprep.subr.mxu0 0.0
    %6063 = vmatpush1.xpose.msra.mxu0 %v5724
    %6064 = vmatprep.subr.mxu0 0.0
    %6065 = vmatpush2.xpose.msra.mxu0 %v5817
    %6066 = vmatprep.subr.mxu0 0.0
    %6067 = vmatpush2.xpose.msra.mxu0 %v5814
    %6068 = vmatprep.subr.mxu0 0.0
    %6069 = vmatpush2.xpose.msra.mxu0 %v5811
    %6070 = vmatprep.subr.mxu0 0.0
    %6071 = vmatpush2.xpose.msra.mxu0 %v5808
    %6072 = vmatprep.subr.mxu0 0.0
    %6073 = vmatpush2.xpose.msra.mxu0 %v5805
    %6074 = vmatprep.subr.mxu0 0.0
    %6075 = vmatpush2.xpose.msra.mxu0 %v5802
    %6076 = vmatprep.subr.mxu0 0.0
    %6077 = vmatpush2.xpose.msra.mxu0 %v5799
    %6078 = vmatprep.subr.mxu0 0.0
    %6079 = vmatpush2.xpose.msra.mxu0 %v5796
    %6080 = vmatprep.subr.mxu0 0.0
    %6081 = vmatpush2.xpose.msra.mxu0 %v5793
    %6082 = vmatprep.subr.mxu0 0.0
    %6083 = vmatpush2.xpose.msra.mxu0 %v5790
    %6084 = vmatprep.subr.mxu0 0.0
    %6085 = vmatpush2.xpose.msra.mxu0 %v5787
    %6086 = vmatprep.subr.mxu0 0.0
    %6087 = vmatpush2.xpose.msra.mxu0 %v5784
    %6088 = vmatprep.subr.mxu0 0.0
    %6089 = vmatpush2.xpose.msra.mxu0 %v5781
    %6090 = vmatprep.subr.mxu0 0.0
    %6091 = vmatpush2.xpose.msra.mxu0 %v5778
    %6092 = vmatprep.subr.mxu0 0.0
    %6093 = vmatpush2.xpose.msra.mxu0 %v5775
    %6094 = vmatprep.subr.mxu0 0.0
    %6095 = vmatpush2.xpose.msra.mxu0 %v5772
    %6096 = vmatprep.mubr.f32.mxu0 0.0
    %6097 = vmatmul.mubr.f32.gmra.mxu0 %v5433
    %v6098 = vpop.f32.mrf.mxu0
    %v6099 = vadd.f32 %v5430, %v6098
    %v6100 = vpop.f32.mrf.mxu0
    %v6101 = vadd.f32 %v5430, %v6100
    %6102 = vdwg.mxu0
    %v6111 = vcombine.low %v5886, %v5888
    %v6112 = vcombine.low %v5957, %v5959
    %v6114 = vunpack.c.l.s4 1983009808
    %v6115 = vunpack.c.0.s8 %v6114
    %v6116 = vlaneseq
    %v6117 = vshrl.u32 %v6116, 7
    %v6118 = vsub.s32 %v6115, %v6117
    %v6119 = vrot.slane %v6111, %v6118
    %v6121 = vunpack.c.l.s4 1983009808
    %v6122 = vunpack.c.0.s8 %v6121
    %v6123 = vlaneseq
    %v6124 = vshrl.u32 %v6123, 7
    %v6125 = vsub.s32 %v6122, %v6124
    %v6126 = vrot.slane %v6112, %v6125
    %v6127 = vcombine.low %v6119, %v6126
    %v6128 = vcombine.low %v6028, %v6030
    %v6129 = vcombine.low %v6099, %v6101
    %v6131 = vunpack.c.l.s4 1983009808
    %v6132 = vunpack.c.0.s8 %v6131
    %v6133 = vlaneseq
    %v6134 = vshrl.u32 %v6133, 7
    %v6135 = vsub.s32 %v6132, %v6134
    %v6136 = vrot.slane %v6128, %v6135
    %v6138 = vunpack.c.l.s4 1983009808
    %v6139 = vunpack.c.0.s8 %v6138
    %v6140 = vlaneseq
    %v6141 = vshrl.u32 %v6140, 7
    %v6142 = vsub.s32 %v6139, %v6141
    %v6143 = vrot.slane %v6129, %v6142
    %v6144 = vcombine.low %v6136, %v6143
    %6147 = vst [vmem:[%s79] sm:$0xff] %v6127
    %6148 = vst [vmem:[%s79 + $0x8] sm:$0xff] %v6144
    %v6149 = vrot.slane %v5886, 7
    %v6150 = vrot.slane %v5888, 7
    %v6151 = vrot.slane %v5957, 7
    %v6152 = vrot.slane %v5959, 7
    %v6153 = vrot.slane %v6028, 7
    %v6154 = vrot.slane %v6030, 7
    %v6155 = vrot.slane %v6099, 7
    %v6156 = vrot.slane %v6101, 7
    %v6165 = vsub.f32 %v5886, %v6149
    %v6166 = vsub.f32 %v5888, %v6150
    %v6167 = vsub.f32 %v5957, %v6151
    %v6168 = vsub.f32 %v5959, %v6152
    %v6169 = vsub.f32 %v6028, %v6153
    %v6170 = vsub.f32 %v6030, %v6154
    %v6171 = vsub.f32 %v6099, %v6155
    %v6172 = vsub.f32 %v6101, %v6156
    %v6173 = vmul.f32 %v6165, 0.5
    %v6174 = vmul.f32 %v6166, 0.5
    %v6175 = vmul.f32 %v6167, 0.5
    %v6176 = vmul.f32 %v6168, 0.5
    %v6177 = vmul.f32 %v6169, 0.5
    %v6178 = vmul.f32 %v6170, 0.5
    %v6179 = vmul.f32 %v6171, 0.5
    %v6180 = vmul.f32 %v6172, 0.5
    %v6181 = vtanh.pop %v6173
    %v6182 = vtanh.pop %v6174
    %v6183 = vtanh.pop %v6175
    %v6184 = vtanh.pop %v6176
    %v6185 = vtanh.pop %v6177
    %v6186 = vtanh.pop %v6178
    %v6187 = vtanh.pop %v6179
    %v6188 = vtanh.pop %v6180
    %v6189 = vsub.f32 1.0, %v6181
    %v6190 = vsub.f32 1.0, %v6182
    %v6191 = vsub.f32 1.0, %v6183
    %v6192 = vsub.f32 1.0, %v6184
    %v6193 = vsub.f32 1.0, %v6185
    %v6194 = vsub.f32 1.0, %v6186
    %v6195 = vsub.f32 1.0, %v6187
    %v6196 = vsub.f32 1.0, %v6188
    %v6197 = vmul.f32 %v6189, 0.5
    %v6198 = vmul.f32 %v6190, 0.5
    %v6199 = vmul.f32 %v6191, 0.5
    %v6200 = vmul.f32 %v6192, 0.5
    %v6201 = vmul.f32 %v6193, 0.5
    %v6202 = vmul.f32 %v6194, 0.5
    %v6203 = vmul.f32 %v6195, 0.5
    %v6204 = vmul.f32 %v6196, 0.5
    %v6213 = vcombine.low %v6197, %v6198
    %v6214 = vcombine.low %v6199, %v6200
    %v6215 = vcombine.low %v6201, %v6202
    %v6216 = vcombine.low %v6203, %v6204
    %v6218 = vunpack.c.l.s4 1966171168
    %v6219 = vunpack.c.0.s8 %v6218
    %v6220 = vlaneseq
    %v6221 = vshrl.u32 %v6220, 7
    %v6222 = vsub.s32 %v6219, %v6221
    %v6223 = vrot.slane %v6213, %v6222
    %v6225 = vunpack.c.l.s4 1966171168
    %v6226 = vunpack.c.0.s8 %v6225
    %v6227 = vlaneseq
    %v6228 = vshrl.u32 %v6227, 7
    %v6229 = vsub.s32 %v6226, %v6228
    %v6230 = vrot.slane %v6214, %v6229
    %v6232 = vunpack.c.l.s4 1966171168
    %v6233 = vunpack.c.0.s8 %v6232
    %v6234 = vlaneseq
    %v6235 = vshrl.u32 %v6234, 7
    %v6236 = vsub.s32 %v6233, %v6235
    %v6237 = vrot.slane %v6215, %v6236
    %v6239 = vunpack.c.l.s4 1966171168
    %v6240 = vunpack.c.0.s8 %v6239
    %v6241 = vlaneseq
    %v6242 = vshrl.u32 %v6241, 7
    %v6243 = vsub.s32 %v6240, %v6242
    %v6244 = vrot.slane %v6216, %v6243
    %v6245 = vcombine.high %v6223, %v6230
    %v6246 = vcombine.high %v6237, %v6244
    %v6248 = vunpack.c.l.s4 1966171168
    %v6249 = vunpack.c.0.s8 %v6248
    %v6250 = vlaneseq
    %v6251 = vshrl.u32 %v6250, 7
    %v6252 = vsub.s32 %v6249, %v6251
    %v6253 = vrot.slane %v6245, %v6252
    %v6255 = vunpack.c.l.s4 1966171168
    %v6256 = vunpack.c.0.s8 %v6255
    %v6257 = vlaneseq
    %v6258 = vshrl.u32 %v6257, 7
    %v6259 = vsub.s32 %v6256, %v6258
    %v6260 = vrot.slane %v6246, %v6259
    %v6261 = vcombine.low %v6253, %v6260
    %6263 = vst [vmem:[%s81] ss:$2 sm:$0xff] %v6261
    %v6264 = vadd.f32 %v6181, 1.0
    %v6265 = vadd.f32 %v6182, 1.0
    %v6266 = vadd.f32 %v6183, 1.0
    %v6267 = vadd.f32 %v6184, 1.0
    %v6268 = vadd.f32 %v6185, 1.0
    %v6269 = vadd.f32 %v6186, 1.0
    %v6270 = vadd.f32 %v6187, 1.0
    %v6271 = vadd.f32 %v6188, 1.0
    %v6272 = vmul.f32 %v6264, 0.5
    %v6273 = vmul.f32 %v6265, 0.5
    %v6274 = vmul.f32 %v6266, 0.5
    %v6275 = vmul.f32 %v6267, 0.5
    %v6276 = vmul.f32 %v6268, 0.5
    %v6277 = vmul.f32 %v6269, 0.5
    %v6278 = vmul.f32 %v6270, 0.5
    %v6279 = vmul.f32 %v6271, 0.5
    %v6288 = vcombine.low %v6272, %v6273
    %v6289 = vcombine.low %v6274, %v6275
    %v6290 = vcombine.low %v6276, %v6277
    %v6291 = vcombine.low %v6278, %v6279
    %v6293 = vunpack.c.l.s4 1966171168
    %v6294 = vunpack.c.0.s8 %v6293
    %v6295 = vlaneseq
    %v6296 = vshrl.u32 %v6295, 7
    %v6297 = vsub.s32 %v6294, %v6296
    %v6298 = vrot.slane %v6288, %v6297
    %v6300 = vunpack.c.l.s4 1966171168
    %v6301 = vunpack.c.0.s8 %v6300
    %v6302 = vlaneseq
    %v6303 = vshrl.u32 %v6302, 7
    %v6304 = vsub.s32 %v6301, %v6303
    %v6305 = vrot.slane %v6289, %v6304
    %v6307 = vunpack.c.l.s4 1966171168
    %v6308 = vunpack.c.0.s8 %v6307
    %v6309 = vlaneseq
    %v6310 = vshrl.u32 %v6309, 7
    %v6311 = vsub.s32 %v6308, %v6310
    %v6312 = vrot.slane %v6290, %v6311
    %v6314 = vunpack.c.l.s4 1966171168
    %v6315 = vunpack.c.0.s8 %v6314
    %v6316 = vlaneseq
    %v6317 = vshrl.u32 %v6316, 7
    %v6318 = vsub.s32 %v6315, %v6317
    %v6319 = vrot.slane %v6291, %v6318
    %v6320 = vcombine.high %v6298, %v6305
    %v6321 = vcombine.high %v6312, %v6319
    %v6323 = vunpack.c.l.s4 1966171168
    %v6324 = vunpack.c.0.s8 %v6323
    %v6325 = vlaneseq
    %v6326 = vshrl.u32 %v6325, 7
    %v6327 = vsub.s32 %v6324, %v6326
    %v6328 = vrot.slane %v6320, %v6327
    %v6330 = vunpack.c.l.s4 1966171168
    %v6331 = vunpack.c.0.s8 %v6330
    %v6332 = vlaneseq
    %v6333 = vshrl.u32 %v6332, 7
    %v6334 = vsub.s32 %v6331, %v6333
    %v6335 = vrot.slane %v6321, %v6334
    %v6336 = vcombine.low %v6328, %v6335
    %s6338 = scalar_lea.vmem %s81, 1
    %6339 = vst [vmem:[%s6338] ss:$2 sm:$0xff] %v6336
    %v6340 = vld [vmem:[%s5] sm:$0xff]
    %v6341 = vld [vmem:[%s7] sm:$0xff]
    %v6342 = vmul.f32 %v6340, %v6341
    %v6351 = vcombine.low %v6181, %v6182
    %v6352 = vcombine.low %v6183, %v6184
    %v6353 = vcombine.low %v6185, %v6186
    %v6354 = vcombine.low %v6187, %v6188
    %v6356 = vunpack.c.l.s4 1966171168
    %v6357 = vunpack.c.0.s8 %v6356
    %v6358 = vlaneseq
    %v6359 = vshrl.u32 %v6358, 7
    %v6360 = vsub.s32 %v6357, %v6359
    %v6361 = vrot.slane %v6351, %v6360
    %v6363 = vunpack.c.l.s4 1966171168
    %v6364 = vunpack.c.0.s8 %v6363
    %v6365 = vlaneseq
    %v6366 = vshrl.u32 %v6365, 7
    %v6367 = vsub.s32 %v6364, %v6366
    %v6368 = vrot.slane %v6352, %v6367
    %v6370 = vunpack.c.l.s4 1966171168
    %v6371 = vunpack.c.0.s8 %v6370
    %v6372 = vlaneseq
    %v6373 = vshrl.u32 %v6372, 7
    %v6374 = vsub.s32 %v6371, %v6373
    %v6375 = vrot.slane %v6353, %v6374
    %v6377 = vunpack.c.l.s4 1966171168
    %v6378 = vunpack.c.0.s8 %v6377
    %v6379 = vlaneseq
    %v6380 = vshrl.u32 %v6379, 7
    %v6381 = vsub.s32 %v6378, %v6380
    %v6382 = vrot.slane %v6354, %v6381
    %v6383 = vcombine.high %v6361, %v6368
    %v6384 = vcombine.high %v6375, %v6382
    %v6386 = vunpack.c.l.s4 1966171168
    %v6387 = vunpack.c.0.s8 %v6386
    %v6388 = vlaneseq
    %v6389 = vshrl.u32 %v6388, 7
    %v6390 = vsub.s32 %v6387, %v6389
    %v6391 = vrot.slane %v6383, %v6390
    %v6393 = vunpack.c.l.s4 1966171168
    %v6394 = vunpack.c.0.s8 %v6393
    %v6395 = vlaneseq
    %v6396 = vshrl.u32 %v6395, 7
    %v6397 = vsub.s32 %v6394, %v6396
    %v6398 = vrot.slane %v6384, %v6397
    %v6399 = vcombine.low %v6391, %v6398
    %v6401 = vmul.f32 %v6342, %v6399
    %v6402 = vlaneseq
    %v6403 = vshrl.u32 %v6402, 7
    %v6404 = vadd.s32 %v6403, 8
    %v6405 = vadd.s32 %v6403, 16
    %v6406 = vadd.s32 %v6403, 24
    %v6407 = vadd.s32 %v6403, 32
    %v6408 = vadd.s32 %v6403, 40
    %v6409 = vadd.s32 %v6403, 48
    %v6410 = vadd.s32 %v6403, 56
    %v6411 = vadd.s32 %v6403, 64
    %v6412 = vadd.s32 %v6403, 72
    %v6413 = vadd.s32 %v6403, 80
    %v6414 = vadd.s32 %v6403, 88
    %v6415 = vadd.s32 %v6403, 96
    %v6416 = vadd.s32 %v6403, 104
    %v6417 = vadd.s32 %v6403, 112
    %v6418 = vadd.s32 %v6403, 120
    %v6419 = vadd.s32 %v6403, 128
    %v6420 = vadd.s32 %v6403, 136
    %v6421 = vadd.s32 %v6403, 144
    %v6422 = vadd.s32 %v6403, 152
    %v6423 = vadd.s32 %v6403, 160
    %v6424 = vadd.s32 %v6403, 168
    %v6425 = vadd.s32 %v6403, 176
    %v6426 = vadd.s32 %v6403, 184
    %v6427 = vadd.s32 %v6403, 192
    %v6428 = vadd.s32 %v6403, 200
    %v6429 = vadd.s32 %v6403, 208
    %v6430 = vadd.s32 %v6403, 216
    %v6431 = vadd.s32 %v6403, 224
    %v6432 = vadd.s32 %v6403, 232
    %v6433 = vadd.s32 %v6403, 240
    %v6434 = vadd.s32 %v6403, 248
    %v6435 = vadd.s32 %v6403, 256
    %v6436 = vadd.s32 %v6403, 264
    %v6437 = vadd.s32 %v6403, 272
    %v6438 = vadd.s32 %v6403, 280
    %v6439 = vadd.s32 %v6403, 288
    %v6440 = vadd.s32 %v6403, 296
    %v6441 = vadd.s32 %v6403, 304
    %v6442 = vadd.s32 %v6403, 312
    %v6443 = vadd.s32 %v6403, 320
    %v6444 = vadd.s32 %v6403, 328
    %v6445 = vadd.s32 %v6403, 336
    %v6446 = vadd.s32 %v6403, 344
    %v6447 = vadd.s32 %v6403, 352
    %v6448 = vadd.s32 %v6403, 360
    %v6449 = vadd.s32 %v6403, 368
    %v6450 = vadd.s32 %v6403, 376
    %v6451 = vadd.s32 %v6403, 384
    %v6452 = vadd.s32 %v6403, 392
    %v6453 = vadd.s32 %v6403, 400
    %v6454 = vadd.s32 %v6403, 408
    %v6455 = vadd.s32 %v6403, 416
    %v6456 = vadd.s32 %v6403, 424
    %v6457 = vadd.s32 %v6403, 432
    %v6458 = vadd.s32 %v6403, 440
    %v6459 = vadd.s32 %v6403, 448
    %v6460 = vadd.s32 %v6403, 456
    %v6461 = vadd.s32 %v6403, 464
    %v6462 = vadd.s32 %v6403, 472
    %v6463 = vadd.s32 %v6403, 480
    %v6464 = vadd.s32 %v6403, 488
    %v6465 = vadd.s32 %v6403, 496
    %v6466 = vadd.s32 %v6403, 504
    %v6467 = vadd.s32 %v6403, 512
    %v6468 = vadd.s32 %v6403, 520
    %v6469 = vadd.s32 %v6403, 528
    %v6470 = vadd.s32 %v6403, 536
    %v6471 = vadd.s32 %v6403, 544
    %v6472 = vadd.s32 %v6403, 552
    %v6473 = vadd.s32 %v6403, 560
    %v6474 = vadd.s32 %v6403, 568
    %v6475 = vadd.s32 %v6403, 576
    %v6476 = vadd.s32 %v6403, 584
    %v6477 = vadd.s32 %v6403, 592
    %v6478 = vadd.s32 %v6403, 600
    %v6479 = vadd.s32 %v6403, 608
    %v6480 = vadd.s32 %v6403, 616
    %v6481 = vadd.s32 %v6403, 624
    %v6482 = vadd.s32 %v6403, 632
    %v6483 = vadd.s32 %v6403, 640
    %v6484 = vadd.s32 %v6403, 648
    %v6485 = vadd.s32 %v6403, 656
    %v6486 = vadd.s32 %v6403, 664
    %v6487 = vadd.s32 %v6403, 672
    %v6488 = vadd.s32 %v6403, 680
    %v6489 = vadd.s32 %v6403, 688
    %v6490 = vadd.s32 %v6403, 696
    %v6491 = vadd.s32 %v6403, 704
    %v6492 = vadd.s32 %v6403, 712
    %v6493 = vadd.s32 %v6403, 720
    %v6494 = vadd.s32 %v6403, 728
    %v6495 = vadd.s32 %v6403, 736
    %v6496 = vadd.s32 %v6403, 744
    %v6497 = vadd.s32 %v6403, 752
    %v6498 = vadd.s32 %v6403, 760
    %v6499 = vadd.s32 %v6403, 768
    %v6500 = vadd.s32 %v6403, 776
    %v6501 = vadd.s32 %v6403, 784
    %v6502 = vadd.s32 %v6403, 792
    %v6503 = vadd.s32 %v6403, 800
    %v6504 = vadd.s32 %v6403, 808
    %v6505 = vadd.s32 %v6403, 816
    %v6506 = vadd.s32 %v6403, 824
    %v6507 = vadd.s32 %v6403, 832
    %v6508 = vadd.s32 %v6403, 840
    %v6509 = vadd.s32 %v6403, 848
    %v6510 = vadd.s32 %v6403, 856
    %v6511 = vadd.s32 %v6403, 864
    %v6512 = vadd.s32 %v6403, 872
    %v6513 = vadd.s32 %v6403, 880
    %v6514 = vadd.s32 %v6403, 888
    %v6515 = vadd.s32 %v6403, 896
    %v6516 = vadd.s32 %v6403, 904
    %v6517 = vadd.s32 %v6403, 912
    %v6518 = vadd.s32 %v6403, 920
    %v6519 = vadd.s32 %v6403, 928
    %v6520 = vadd.s32 %v6403, 936
    %v6521 = vadd.s32 %v6403, 944
    %v6522 = vadd.s32 %v6403, 952
    %v6523 = vadd.s32 %v6403, 960
    %v6524 = vadd.s32 %v6403, 968
    %v6525 = vadd.s32 %v6403, 976
    %v6526 = vadd.s32 %v6403, 984
    %v6527 = vadd.s32 %v6403, 992
    %v6528 = vadd.s32 %v6403, 1000
    %v6529 = vadd.s32 %v6403, 1008
    %v6530 = vadd.s32 %v6403, 1016
    %v6531 = vlaneseq
    %v6532 = vand.u32 %v6531, 127
    %v6533 = vmul.u32 %v6532, 32
    %vm6534 = vcmp.ge.s32.totalorder %v6403, %v6533
    %vm6535 = vcmp.ge.s32.totalorder %v6404, %v6533
    %vm6536 = vcmp.ge.s32.totalorder %v6405, %v6533
    %vm6537 = vcmp.ge.s32.totalorder %v6406, %v6533
    %vm6538 = vcmp.ge.s32.totalorder %v6407, %v6533
    %vm6539 = vcmp.ge.s32.totalorder %v6408, %v6533
    %vm6540 = vcmp.ge.s32.totalorder %v6409, %v6533
    %vm6541 = vcmp.ge.s32.totalorder %v6410, %v6533
    %vm6542 = vcmp.ge.s32.totalorder %v6411, %v6533
    %vm6543 = vcmp.ge.s32.totalorder %v6412, %v6533
    %vm6544 = vcmp.ge.s32.totalorder %v6413, %v6533
    %vm6545 = vcmp.ge.s32.totalorder %v6414, %v6533
    %vm6546 = vcmp.ge.s32.totalorder %v6415, %v6533
    %vm6547 = vcmp.ge.s32.totalorder %v6416, %v6533
    %vm6548 = vcmp.ge.s32.totalorder %v6417, %v6533
    %vm6549 = vcmp.ge.s32.totalorder %v6418, %v6533
    %vm6550 = vcmp.ge.s32.totalorder %v6419, %v6533
    %vm6551 = vcmp.ge.s32.totalorder %v6420, %v6533
    %vm6552 = vcmp.ge.s32.totalorder %v6421, %v6533
    %vm6553 = vcmp.ge.s32.totalorder %v6422, %v6533
    %vm6554 = vcmp.ge.s32.totalorder %v6423, %v6533
    %vm6555 = vcmp.ge.s32.totalorder %v6424, %v6533
    %vm6556 = vcmp.ge.s32.totalorder %v6425, %v6533
    %vm6557 = vcmp.ge.s32.totalorder %v6426, %v6533
    %vm6558 = vcmp.ge.s32.totalorder %v6427, %v6533
    %vm6559 = vcmp.ge.s32.totalorder %v6428, %v6533
    %vm6560 = vcmp.ge.s32.totalorder %v6429, %v6533
    %vm6561 = vcmp.ge.s32.totalorder %v6430, %v6533
    %vm6562 = vcmp.ge.s32.totalorder %v6431, %v6533
    %vm6563 = vcmp.ge.s32.totalorder %v6432, %v6533
    %vm6564 = vcmp.ge.s32.totalorder %v6433, %v6533
    %vm6565 = vcmp.ge.s32.totalorder %v6434, %v6533
    %vm6566 = vcmp.ge.s32.totalorder %v6435, %v6533
    %vm6567 = vcmp.ge.s32.totalorder %v6436, %v6533
    %vm6568 = vcmp.ge.s32.totalorder %v6437, %v6533
    %vm6569 = vcmp.ge.s32.totalorder %v6438, %v6533
    %vm6570 = vcmp.ge.s32.totalorder %v6439, %v6533
    %vm6571 = vcmp.ge.s32.totalorder %v6440, %v6533
    %vm6572 = vcmp.ge.s32.totalorder %v6441, %v6533
    %vm6573 = vcmp.ge.s32.totalorder %v6442, %v6533
    %vm6574 = vcmp.ge.s32.totalorder %v6443, %v6533
    %vm6575 = vcmp.ge.s32.totalorder %v6444, %v6533
    %vm6576 = vcmp.ge.s32.totalorder %v6445, %v6533
    %vm6577 = vcmp.ge.s32.totalorder %v6446, %v6533
    %vm6578 = vcmp.ge.s32.totalorder %v6447, %v6533
    %vm6579 = vcmp.ge.s32.totalorder %v6448, %v6533
    %vm6580 = vcmp.ge.s32.totalorder %v6449, %v6533
    %vm6581 = vcmp.ge.s32.totalorder %v6450, %v6533
    %vm6582 = vcmp.ge.s32.totalorder %v6451, %v6533
    %vm6583 = vcmp.ge.s32.totalorder %v6452, %v6533
    %vm6584 = vcmp.ge.s32.totalorder %v6453, %v6533
    %vm6585 = vcmp.ge.s32.totalorder %v6454, %v6533
    %vm6586 = vcmp.ge.s32.totalorder %v6455, %v6533
    %vm6587 = vcmp.ge.s32.totalorder %v6456, %v6533
    %vm6588 = vcmp.ge.s32.totalorder %v6457, %v6533
    %vm6589 = vcmp.ge.s32.totalorder %v6458, %v6533
    %vm6590 = vcmp.ge.s32.totalorder %v6459, %v6533
    %vm6591 = vcmp.ge.s32.totalorder %v6460, %v6533
    %vm6592 = vcmp.ge.s32.totalorder %v6461, %v6533
    %vm6593 = vcmp.ge.s32.totalorder %v6462, %v6533
    %vm6594 = vcmp.ge.s32.totalorder %v6463, %v6533
    %vm6595 = vcmp.ge.s32.totalorder %v6464, %v6533
    %vm6596 = vcmp.ge.s32.totalorder %v6465, %v6533
    %vm6597 = vcmp.ge.s32.totalorder %v6466, %v6533
    %vm6598 = vcmp.ge.s32.totalorder %v6467, %v6533
    %vm6599 = vcmp.ge.s32.totalorder %v6468, %v6533
    %vm6600 = vcmp.ge.s32.totalorder %v6469, %v6533
    %vm6601 = vcmp.ge.s32.totalorder %v6470, %v6533
    %vm6602 = vcmp.ge.s32.totalorder %v6471, %v6533
    %vm6603 = vcmp.ge.s32.totalorder %v6472, %v6533
    %vm6604 = vcmp.ge.s32.totalorder %v6473, %v6533
    %vm6605 = vcmp.ge.s32.totalorder %v6474, %v6533
    %vm6606 = vcmp.ge.s32.totalorder %v6475, %v6533
    %vm6607 = vcmp.ge.s32.totalorder %v6476, %v6533
    %vm6608 = vcmp.ge.s32.totalorder %v6477, %v6533
    %vm6609 = vcmp.ge.s32.totalorder %v6478, %v6533
    %vm6610 = vcmp.ge.s32.totalorder %v6479, %v6533
    %vm6611 = vcmp.ge.s32.totalorder %v6480, %v6533
    %vm6612 = vcmp.ge.s32.totalorder %v6481, %v6533
    %vm6613 = vcmp.ge.s32.totalorder %v6482, %v6533
    %vm6614 = vcmp.ge.s32.totalorder %v6483, %v6533
    %vm6615 = vcmp.ge.s32.totalorder %v6484, %v6533
    %vm6616 = vcmp.ge.s32.totalorder %v6485, %v6533
    %vm6617 = vcmp.ge.s32.totalorder %v6486, %v6533
    %vm6618 = vcmp.ge.s32.totalorder %v6487, %v6533
    %vm6619 = vcmp.ge.s32.totalorder %v6488, %v6533
    %vm6620 = vcmp.ge.s32.totalorder %v6489, %v6533
    %vm6621 = vcmp.ge.s32.totalorder %v6490, %v6533
    %vm6622 = vcmp.ge.s32.totalorder %v6491, %v6533
    %vm6623 = vcmp.ge.s32.totalorder %v6492, %v6533
    %vm6624 = vcmp.ge.s32.totalorder %v6493, %v6533
    %vm6625 = vcmp.ge.s32.totalorder %v6494, %v6533
    %vm6626 = vcmp.ge.s32.totalorder %v6495, %v6533
    %vm6627 = vcmp.ge.s32.totalorder %v6496, %v6533
    %vm6628 = vcmp.ge.s32.totalorder %v6497, %v6533
    %vm6629 = vcmp.ge.s32.totalorder %v6498, %v6533
    %vm6630 = vcmp.ge.s32.totalorder %v6499, %v6533
    %vm6631 = vcmp.ge.s32.totalorder %v6500, %v6533
    %vm6632 = vcmp.ge.s32.totalorder %v6501, %v6533
    %vm6633 = vcmp.ge.s32.totalorder %v6502, %v6533
    %vm6634 = vcmp.ge.s32.totalorder %v6503, %v6533
    %vm6635 = vcmp.ge.s32.totalorder %v6504, %v6533
    %vm6636 = vcmp.ge.s32.totalorder %v6505, %v6533
    %vm6637 = vcmp.ge.s32.totalorder %v6506, %v6533
    %vm6638 = vcmp.ge.s32.totalorder %v6507, %v6533
    %vm6639 = vcmp.ge.s32.totalorder %v6508, %v6533
    %vm6640 = vcmp.ge.s32.totalorder %v6509, %v6533
    %vm6641 = vcmp.ge.s32.totalorder %v6510, %v6533
    %vm6642 = vcmp.ge.s32.totalorder %v6511, %v6533
    %vm6643 = vcmp.ge.s32.totalorder %v6512, %v6533
    %vm6644 = vcmp.ge.s32.totalorder %v6513, %v6533
    %vm6645 = vcmp.ge.s32.totalorder %v6514, %v6533
    %vm6646 = vcmp.ge.s32.totalorder %v6515, %v6533
    %vm6647 = vcmp.ge.s32.totalorder %v6516, %v6533
    %vm6648 = vcmp.ge.s32.totalorder %v6517, %v6533
    %vm6649 = vcmp.ge.s32.totalorder %v6518, %v6533
    %vm6650 = vcmp.ge.s32.totalorder %v6519, %v6533
    %vm6651 = vcmp.ge.s32.totalorder %v6520, %v6533
    %vm6652 = vcmp.ge.s32.totalorder %v6521, %v6533
    %vm6653 = vcmp.ge.s32.totalorder %v6522, %v6533
    %vm6654 = vcmp.ge.s32.totalorder %v6523, %v6533
    %vm6655 = vcmp.ge.s32.totalorder %v6524, %v6533
    %vm6656 = vcmp.ge.s32.totalorder %v6525, %v6533
    %vm6657 = vcmp.ge.s32.totalorder %v6526, %v6533
    %vm6658 = vcmp.ge.s32.totalorder %v6527, %v6533
    %vm6659 = vcmp.ge.s32.totalorder %v6528, %v6533
    %vm6660 = vcmp.ge.s32.totalorder %v6529, %v6533
    %vm6661 = vcmp.ge.s32.totalorder %v6530, %v6533
    %v6662 = vadd.s32 %v6533, 32
    %vm6663 = vcmp.lt.s32.totalorder %v6403, %v6662
    %vm6664 = vcmp.lt.s32.totalorder %v6404, %v6662
    %vm6665 = vcmp.lt.s32.totalorder %v6405, %v6662
    %vm6666 = vcmp.lt.s32.totalorder %v6406, %v6662
    %vm6667 = vcmp.lt.s32.totalorder %v6407, %v6662
    %vm6668 = vcmp.lt.s32.totalorder %v6408, %v6662
    %vm6669 = vcmp.lt.s32.totalorder %v6409, %v6662
    %vm6670 = vcmp.lt.s32.totalorder %v6410, %v6662
    %vm6671 = vcmp.lt.s32.totalorder %v6411, %v6662
    %vm6672 = vcmp.lt.s32.totalorder %v6412, %v6662
    %vm6673 = vcmp.lt.s32.totalorder %v6413, %v6662
    %vm6674 = vcmp.lt.s32.totalorder %v6414, %v6662
    %vm6675 = vcmp.lt.s32.totalorder %v6415, %v6662
    %vm6676 = vcmp.lt.s32.totalorder %v6416, %v6662
    %vm6677 = vcmp.lt.s32.totalorder %v6417, %v6662
    %vm6678 = vcmp.lt.s32.totalorder %v6418, %v6662
    %vm6679 = vcmp.lt.s32.totalorder %v6419, %v6662
    %vm6680 = vcmp.lt.s32.totalorder %v6420, %v6662
    %vm6681 = vcmp.lt.s32.totalorder %v6421, %v6662
    %vm6682 = vcmp.lt.s32.totalorder %v6422, %v6662
    %vm6683 = vcmp.lt.s32.totalorder %v6423, %v6662
    %vm6684 = vcmp.lt.s32.totalorder %v6424, %v6662
    %vm6685 = vcmp.lt.s32.totalorder %v6425, %v6662
    %vm6686 = vcmp.lt.s32.totalorder %v6426, %v6662
    %vm6687 = vcmp.lt.s32.totalorder %v6427, %v6662
    %vm6688 = vcmp.lt.s32.totalorder %v6428, %v6662
    %vm6689 = vcmp.lt.s32.totalorder %v6429, %v6662
    %vm6690 = vcmp.lt.s32.totalorder %v6430, %v6662
    %vm6691 = vcmp.lt.s32.totalorder %v6431, %v6662
    %vm6692 = vcmp.lt.s32.totalorder %v6432, %v6662
    %vm6693 = vcmp.lt.s32.totalorder %v6433, %v6662
    %vm6694 = vcmp.lt.s32.totalorder %v6434, %v6662
    %vm6695 = vcmp.lt.s32.totalorder %v6435, %v6662
    %vm6696 = vcmp.lt.s32.totalorder %v6436, %v6662
    %vm6697 = vcmp.lt.s32.totalorder %v6437, %v6662
    %vm6698 = vcmp.lt.s32.totalorder %v6438, %v6662
    %vm6699 = vcmp.lt.s32.totalorder %v6439, %v6662
    %vm6700 = vcmp.lt.s32.totalorder %v6440, %v6662
    %vm6701 = vcmp.lt.s32.totalorder %v6441, %v6662
    %vm6702 = vcmp.lt.s32.totalorder %v6442, %v6662
    %vm6703 = vcmp.lt.s32.totalorder %v6443, %v6662
    %vm6704 = vcmp.lt.s32.totalorder %v6444, %v6662
    %vm6705 = vcmp.lt.s32.totalorder %v6445, %v6662
    %vm6706 = vcmp.lt.s32.totalorder %v6446, %v6662
    %vm6707 = vcmp.lt.s32.totalorder %v6447, %v6662
    %vm6708 = vcmp.lt.s32.totalorder %v6448, %v6662
    %vm6709 = vcmp.lt.s32.totalorder %v6449, %v6662
    %vm6710 = vcmp.lt.s32.totalorder %v6450, %v6662
    %vm6711 = vcmp.lt.s32.totalorder %v6451, %v6662
    %vm6712 = vcmp.lt.s32.totalorder %v6452, %v6662
    %vm6713 = vcmp.lt.s32.totalorder %v6453, %v6662
    %vm6714 = vcmp.lt.s32.totalorder %v6454, %v6662
    %vm6715 = vcmp.lt.s32.totalorder %v6455, %v6662
    %vm6716 = vcmp.lt.s32.totalorder %v6456, %v6662
    %vm6717 = vcmp.lt.s32.totalorder %v6457, %v6662
    %vm6718 = vcmp.lt.s32.totalorder %v6458, %v6662
    %vm6719 = vcmp.lt.s32.totalorder %v6459, %v6662
    %vm6720 = vcmp.lt.s32.totalorder %v6460, %v6662
    %vm6721 = vcmp.lt.s32.totalorder %v6461, %v6662
    %vm6722 = vcmp.lt.s32.totalorder %v6462, %v6662
    %vm6723 = vcmp.lt.s32.totalorder %v6463, %v6662
    %vm6724 = vcmp.lt.s32.totalorder %v6464, %v6662
    %vm6725 = vcmp.lt.s32.totalorder %v6465, %v6662
    %vm6726 = vcmp.lt.s32.totalorder %v6466, %v6662
    %vm6727 = vcmp.lt.s32.totalorder %v6467, %v6662
    %vm6728 = vcmp.lt.s32.totalorder %v6468, %v6662
    %vm6729 = vcmp.lt.s32.totalorder %v6469, %v6662
    %vm6730 = vcmp.lt.s32.totalorder %v6470, %v6662
    %vm6731 = vcmp.lt.s32.totalorder %v6471, %v6662
    %vm6732 = vcmp.lt.s32.totalorder %v6472, %v6662
    %vm6733 = vcmp.lt.s32.totalorder %v6473, %v6662
    %vm6734 = vcmp.lt.s32.totalorder %v6474, %v6662
    %vm6735 = vcmp.lt.s32.totalorder %v6475, %v6662
    %vm6736 = vcmp.lt.s32.totalorder %v6476, %v6662
    %vm6737 = vcmp.lt.s32.totalorder %v6477, %v6662
    %vm6738 = vcmp.lt.s32.totalorder %v6478, %v6662
    %vm6739 = vcmp.lt.s32.totalorder %v6479, %v6662
    %vm6740 = vcmp.lt.s32.totalorder %v6480, %v6662
    %vm6741 = vcmp.lt.s32.totalorder %v6481, %v6662
    %vm6742 = vcmp.lt.s32.totalorder %v6482, %v6662
    %vm6743 = vcmp.lt.s32.totalorder %v6483, %v6662
    %vm6744 = vcmp.lt.s32.totalorder %v6484, %v6662
    %vm6745 = vcmp.lt.s32.totalorder %v6485, %v6662
    %vm6746 = vcmp.lt.s32.totalorder %v6486, %v6662
    %vm6747 = vcmp.lt.s32.totalorder %v6487, %v6662
    %vm6748 = vcmp.lt.s32.totalorder %v6488, %v6662
    %vm6749 = vcmp.lt.s32.totalorder %v6489, %v6662
    %vm6750 = vcmp.lt.s32.totalorder %v6490, %v6662
    %vm6751 = vcmp.lt.s32.totalorder %v6491, %v6662
    %vm6752 = vcmp.lt.s32.totalorder %v6492, %v6662
    %vm6753 = vcmp.lt.s32.totalorder %v6493, %v6662
    %vm6754 = vcmp.lt.s32.totalorder %v6494, %v6662
    %vm6755 = vcmp.lt.s32.totalorder %v6495, %v6662
    %vm6756 = vcmp.lt.s32.totalorder %v6496, %v6662
    %vm6757 = vcmp.lt.s32.totalorder %v6497, %v6662
    %vm6758 = vcmp.lt.s32.totalorder %v6498, %v6662
    %vm6759 = vcmp.lt.s32.totalorder %v6499, %v6662
    %vm6760 = vcmp.lt.s32.totalorder %v6500, %v6662
    %vm6761 = vcmp.lt.s32.totalorder %v6501, %v6662
    %vm6762 = vcmp.lt.s32.totalorder %v6502, %v6662
    %vm6763 = vcmp.lt.s32.totalorder %v6503, %v6662
    %vm6764 = vcmp.lt.s32.totalorder %v6504, %v6662
    %vm6765 = vcmp.lt.s32.totalorder %v6505, %v6662
    %vm6766 = vcmp.lt.s32.totalorder %v6506, %v6662
    %vm6767 = vcmp.lt.s32.totalorder %v6507, %v6662
    %vm6768 = vcmp.lt.s32.totalorder %v6508, %v6662
    %vm6769 = vcmp.lt.s32.totalorder %v6509, %v6662
    %vm6770 = vcmp.lt.s32.totalorder %v6510, %v6662
    %vm6771 = vcmp.lt.s32.totalorder %v6511, %v6662
    %vm6772 = vcmp.lt.s32.totalorder %v6512, %v6662
    %vm6773 = vcmp.lt.s32.totalorder %v6513, %v6662
    %vm6774 = vcmp.lt.s32.totalorder %v6514, %v6662
    %vm6775 = vcmp.lt.s32.totalorder %v6515, %v6662
    %vm6776 = vcmp.lt.s32.totalorder %v6516, %v6662
    %vm6777 = vcmp.lt.s32.totalorder %v6517, %v6662
    %vm6778 = vcmp.lt.s32.totalorder %v6518, %v6662
    %vm6779 = vcmp.lt.s32.totalorder %v6519, %v6662
    %vm6780 = vcmp.lt.s32.totalorder %v6520, %v6662
    %vm6781 = vcmp.lt.s32.totalorder %v6521, %v6662
    %vm6782 = vcmp.lt.s32.totalorder %v6522, %v6662
    %vm6783 = vcmp.lt.s32.totalorder %v6523, %v6662
    %vm6784 = vcmp.lt.s32.totalorder %v6524, %v6662
    %vm6785 = vcmp.lt.s32.totalorder %v6525, %v6662
    %vm6786 = vcmp.lt.s32.totalorder %v6526, %v6662
    %vm6787 = vcmp.lt.s32.totalorder %v6527, %v6662
    %vm6788 = vcmp.lt.s32.totalorder %v6528, %v6662
    %vm6789 = vcmp.lt.s32.totalorder %v6529, %v6662
    %vm6790 = vcmp.lt.s32.totalorder %v6530, %v6662
    %vm6791 = vmand %vm6534, %vm6663
    %vm6792 = vmand %vm6535, %vm6664
    %vm6793 = vmand %vm6536, %vm6665
    %vm6794 = vmand %vm6537, %vm6666
    %vm6795 = vmand %vm6538, %vm6667
    %vm6796 = vmand %vm6539, %vm6668
    %vm6797 = vmand %vm6540, %vm6669
    %vm6798 = vmand %vm6541, %vm6670
    %vm6799 = vmand %vm6542, %vm6671
    %vm6800 = vmand %vm6543, %vm6672
    %vm6801 = vmand %vm6544, %vm6673
    %vm6802 = vmand %vm6545, %vm6674
    %vm6803 = vmand %vm6546, %vm6675
    %vm6804 = vmand %vm6547, %vm6676
    %vm6805 = vmand %vm6548, %vm6677
    %vm6806 = vmand %vm6549, %vm6678
    %vm6807 = vmand %vm6550, %vm6679
    %vm6808 = vmand %vm6551, %vm6680
    %vm6809 = vmand %vm6552, %vm6681
    %vm6810 = vmand %vm6553, %vm6682
    %vm6811 = vmand %vm6554, %vm6683
    %vm6812 = vmand %vm6555, %vm6684
    %vm6813 = vmand %vm6556, %vm6685
    %vm6814 = vmand %vm6557, %vm6686
    %vm6815 = vmand %vm6558, %vm6687
    %vm6816 = vmand %vm6559, %vm6688
    %vm6817 = vmand %vm6560, %vm6689
    %vm6818 = vmand %vm6561, %vm6690
    %vm6819 = vmand %vm6562, %vm6691
    %vm6820 = vmand %vm6563, %vm6692
    %vm6821 = vmand %vm6564, %vm6693
    %vm6822 = vmand %vm6565, %vm6694
    %vm6823 = vmand %vm6566, %vm6695
    %vm6824 = vmand %vm6567, %vm6696
    %vm6825 = vmand %vm6568, %vm6697
    %vm6826 = vmand %vm6569, %vm6698
    %vm6827 = vmand %vm6570, %vm6699
    %vm6828 = vmand %vm6571, %vm6700
    %vm6829 = vmand %vm6572, %vm6701
    %vm6830 = vmand %vm6573, %vm6702
    %vm6831 = vmand %vm6574, %vm6703
    %vm6832 = vmand %vm6575, %vm6704
    %vm6833 = vmand %vm6576, %vm6705
    %vm6834 = vmand %vm6577, %vm6706
    %vm6835 = vmand %vm6578, %vm6707
    %vm6836 = vmand %vm6579, %vm6708
    %vm6837 = vmand %vm6580, %vm6709
    %vm6838 = vmand %vm6581, %vm6710
    %vm6839 = vmand %vm6582, %vm6711
    %vm6840 = vmand %vm6583, %vm6712
    %vm6841 = vmand %vm6584, %vm6713
    %vm6842 = vmand %vm6585, %vm6714
    %vm6843 = vmand %vm6586, %vm6715
    %vm6844 = vmand %vm6587, %vm6716
    %vm6845 = vmand %vm6588, %vm6717
    %vm6846 = vmand %vm6589, %vm6718
    %vm6847 = vmand %vm6590, %vm6719
    %vm6848 = vmand %vm6591, %vm6720
    %vm6849 = vmand %vm6592, %vm6721
    %vm6850 = vmand %vm6593, %vm6722
    %vm6851 = vmand %vm6594, %vm6723
    %vm6852 = vmand %vm6595, %vm6724
    %vm6853 = vmand %vm6596, %vm6725
    %vm6854 = vmand %vm6597, %vm6726
    %vm6855 = vmand %vm6598, %vm6727
    %vm6856 = vmand %vm6599, %vm6728
    %vm6857 = vmand %vm6600, %vm6729
    %vm6858 = vmand %vm6601, %vm6730
    %vm6859 = vmand %vm6602, %vm6731
    %vm6860 = vmand %vm6603, %vm6732
    %vm6861 = vmand %vm6604, %vm6733
    %vm6862 = vmand %vm6605, %vm6734
    %vm6863 = vmand %vm6606, %vm6735
    %vm6864 = vmand %vm6607, %vm6736
    %vm6865 = vmand %vm6608, %vm6737
    %vm6866 = vmand %vm6609, %vm6738
    %vm6867 = vmand %vm6610, %vm6739
    %vm6868 = vmand %vm6611, %vm6740
    %vm6869 = vmand %vm6612, %vm6741
    %vm6870 = vmand %vm6613, %vm6742
    %vm6871 = vmand %vm6614, %vm6743
    %vm6872 = vmand %vm6615, %vm6744
    %vm6873 = vmand %vm6616, %vm6745
    %vm6874 = vmand %vm6617, %vm6746
    %vm6875 = vmand %vm6618, %vm6747
    %vm6876 = vmand %vm6619, %vm6748
    %vm6877 = vmand %vm6620, %vm6749
    %vm6878 = vmand %vm6621, %vm6750
    %vm6879 = vmand %vm6622, %vm6751
    %vm6880 = vmand %vm6623, %vm6752
    %vm6881 = vmand %vm6624, %vm6753
    %vm6882 = vmand %vm6625, %vm6754
    %vm6883 = vmand %vm6626, %vm6755
    %vm6884 = vmand %vm6627, %vm6756
    %vm6885 = vmand %vm6628, %vm6757
    %vm6886 = vmand %vm6629, %vm6758
    %vm6887 = vmand %vm6630, %vm6759
    %vm6888 = vmand %vm6631, %vm6760
    %vm6889 = vmand %vm6632, %vm6761
    %vm6890 = vmand %vm6633, %vm6762
    %vm6891 = vmand %vm6634, %vm6763
    %vm6892 = vmand %vm6635, %vm6764
    %vm6893 = vmand %vm6636, %vm6765
    %vm6894 = vmand %vm6637, %vm6766
    %vm6895 = vmand %vm6638, %vm6767
    %vm6896 = vmand %vm6639, %vm6768
    %vm6897 = vmand %vm6640, %vm6769
    %vm6898 = vmand %vm6641, %vm6770
    %vm6899 = vmand %vm6642, %vm6771
    %vm6900 = vmand %vm6643, %vm6772
    %vm6901 = vmand %vm6644, %vm6773
    %vm6902 = vmand %vm6645, %vm6774
    %vm6903 = vmand %vm6646, %vm6775
    %vm6904 = vmand %vm6647, %vm6776
    %vm6905 = vmand %vm6648, %vm6777
    %vm6906 = vmand %vm6649, %vm6778
    %vm6907 = vmand %vm6650, %vm6779
    %vm6908 = vmand %vm6651, %vm6780
    %vm6909 = vmand %vm6652, %vm6781
    %vm6910 = vmand %vm6653, %vm6782
    %vm6911 = vmand %vm6654, %vm6783
    %vm6912 = vmand %vm6655, %vm6784
    %vm6913 = vmand %vm6656, %vm6785
    %vm6914 = vmand %vm6657, %vm6786
    %vm6915 = vmand %vm6658, %vm6787
    %vm6916 = vmand %vm6659, %vm6788
    %vm6917 = vmand %vm6660, %vm6789
    %vm6918 = vmand %vm6661, %vm6790
    %v6919 = vsel %vm6791, 1, 0
    %v6920 = vsel %vm6792, 1, 0
    %v6921 = vsel %vm6793, 1, 0
    %v6922 = vsel %vm6794, 1, 0
    %v6923 = vsel %vm6795, 1, 0
    %v6924 = vsel %vm6796, 1, 0
    %v6925 = vsel %vm6797, 1, 0
    %v6926 = vsel %vm6798, 1, 0
    %v6927 = vsel %vm6799, 1, 0
    %v6928 = vsel %vm6800, 1, 0
    %v6929 = vsel %vm6801, 1, 0
    %v6930 = vsel %vm6802, 1, 0
    %v6931 = vsel %vm6803, 1, 0
    %v6932 = vsel %vm6804, 1, 0
    %v6933 = vsel %vm6805, 1, 0
    %v6934 = vsel %vm6806, 1, 0
    %v6935 = vsel %vm6807, 1, 0
    %v6936 = vsel %vm6808, 1, 0
    %v6937 = vsel %vm6809, 1, 0
    %v6938 = vsel %vm6810, 1, 0
    %v6939 = vsel %vm6811, 1, 0
    %v6940 = vsel %vm6812, 1, 0
    %v6941 = vsel %vm6813, 1, 0
    %v6942 = vsel %vm6814, 1, 0
    %v6943 = vsel %vm6815, 1, 0
    %v6944 = vsel %vm6816, 1, 0
    %v6945 = vsel %vm6817, 1, 0
    %v6946 = vsel %vm6818, 1, 0
    %v6947 = vsel %vm6819, 1, 0
    %v6948 = vsel %vm6820, 1, 0
    %v6949 = vsel %vm6821, 1, 0
    %v6950 = vsel %vm6822, 1, 0
    %v6951 = vsel %vm6823, 1, 0
    %v6952 = vsel %vm6824, 1, 0
    %v6953 = vsel %vm6825, 1, 0
    %v6954 = vsel %vm6826, 1, 0
    %v6955 = vsel %vm6827, 1, 0
    %v6956 = vsel %vm6828, 1, 0
    %v6957 = vsel %vm6829, 1, 0
    %v6958 = vsel %vm6830, 1, 0
    %v6959 = vsel %vm6831, 1, 0
    %v6960 = vsel %vm6832, 1, 0
    %v6961 = vsel %vm6833, 1, 0
    %v6962 = vsel %vm6834, 1, 0
    %v6963 = vsel %vm6835, 1, 0
    %v6964 = vsel %vm6836, 1, 0
    %v6965 = vsel %vm6837, 1, 0
    %v6966 = vsel %vm6838, 1, 0
    %v6967 = vsel %vm6839, 1, 0
    %v6968 = vsel %vm6840, 1, 0
    %v6969 = vsel %vm6841, 1, 0
    %v6970 = vsel %vm6842, 1, 0
    %v6971 = vsel %vm6843, 1, 0
    %v6972 = vsel %vm6844, 1, 0
    %v6973 = vsel %vm6845, 1, 0
    %v6974 = vsel %vm6846, 1, 0
    %v6975 = vsel %vm6847, 1, 0
    %v6976 = vsel %vm6848, 1, 0
    %v6977 = vsel %vm6849, 1, 0
    %v6978 = vsel %vm6850, 1, 0
    %v6979 = vsel %vm6851, 1, 0
    %v6980 = vsel %vm6852, 1, 0
    %v6981 = vsel %vm6853, 1, 0
    %v6982 = vsel %vm6854, 1, 0
    %v6983 = vsel %vm6855, 1, 0
    %v6984 = vsel %vm6856, 1, 0
    %v6985 = vsel %vm6857, 1, 0
    %v6986 = vsel %vm6858, 1, 0
    %v6987 = vsel %vm6859, 1, 0
    %v6988 = vsel %vm6860, 1, 0
    %v6989 = vsel %vm6861, 1, 0
    %v6990 = vsel %vm6862, 1, 0
    %v6991 = vsel %vm6863, 1, 0
    %v6992 = vsel %vm6864, 1, 0
    %v6993 = vsel %vm6865, 1, 0
    %v6994 = vsel %vm6866, 1, 0
    %v6995 = vsel %vm6867, 1, 0
    %v6996 = vsel %vm6868, 1, 0
    %v6997 = vsel %vm6869, 1, 0
    %v6998 = vsel %vm6870, 1, 0
    %v6999 = vsel %vm6871, 1, 0
    %v7000 = vsel %vm6872, 1, 0
    %v7001 = vsel %vm6873, 1, 0
    %v7002 = vsel %vm6874, 1, 0
    %v7003 = vsel %vm6875, 1, 0
    %v7004 = vsel %vm6876, 1, 0
    %v7005 = vsel %vm6877, 1, 0
    %v7006 = vsel %vm6878, 1, 0
    %v7007 = vsel %vm6879, 1, 0
    %v7008 = vsel %vm6880, 1, 0
    %v7009 = vsel %vm6881, 1, 0
    %v7010 = vsel %vm6882, 1, 0
    %v7011 = vsel %vm6883, 1, 0
    %v7012 = vsel %vm6884, 1, 0
    %v7013 = vsel %vm6885, 1, 0
    %v7014 = vsel %vm6886, 1, 0
    %v7015 = vsel %vm6887, 1, 0
    %v7016 = vsel %vm6888, 1, 0
    %v7017 = vsel %vm6889, 1, 0
    %v7018 = vsel %vm6890, 1, 0
    %v7019 = vsel %vm6891, 1, 0
    %v7020 = vsel %vm6892, 1, 0
    %v7021 = vsel %vm6893, 1, 0
    %v7022 = vsel %vm6894, 1, 0
    %v7023 = vsel %vm6895, 1, 0
    %v7024 = vsel %vm6896, 1, 0
    %v7025 = vsel %vm6897, 1, 0
    %v7026 = vsel %vm6898, 1, 0
    %v7027 = vsel %vm6899, 1, 0
    %v7028 = vsel %vm6900, 1, 0
    %v7029 = vsel %vm6901, 1, 0
    %v7030 = vsel %vm6902, 1, 0
    %v7031 = vsel %vm6903, 1, 0
    %v7032 = vsel %vm6904, 1, 0
    %v7033 = vsel %vm6905, 1, 0
    %v7034 = vsel %vm6906, 1, 0
    %v7035 = vsel %vm6907, 1, 0
    %v7036 = vsel %vm6908, 1, 0
    %v7037 = vsel %vm6909, 1, 0
    %v7038 = vsel %vm6910, 1, 0
    %v7039 = vsel %vm6911, 1, 0
    %v7040 = vsel %vm6912, 1, 0
    %v7041 = vsel %vm6913, 1, 0
    %v7042 = vsel %vm6914, 1, 0
    %v7043 = vsel %vm6915, 1, 0
    %v7044 = vsel %vm6916, 1, 0
    %v7045 = vsel %vm6917, 1, 0
    %v7046 = vsel %vm6918, 1, 0
    %v7047 = vcvt.s32.f32 %v6919
    %v7048 = vcvt.s32.f32 %v6920
    %v7049 = vcvt.s32.f32 %v6921
    %v7050 = vcvt.s32.f32 %v6922
    %v7051 = vcvt.s32.f32 %v6923
    %v7052 = vcvt.s32.f32 %v6924
    %v7053 = vcvt.s32.f32 %v6925
    %v7054 = vcvt.s32.f32 %v6926
    %v7055 = vcvt.s32.f32 %v6927
    %v7056 = vcvt.s32.f32 %v6928
    %v7057 = vcvt.s32.f32 %v6929
    %v7058 = vcvt.s32.f32 %v6930
    %v7059 = vcvt.s32.f32 %v6931
    %v7060 = vcvt.s32.f32 %v6932
    %v7061 = vcvt.s32.f32 %v6933
    %v7062 = vcvt.s32.f32 %v6934
    %v7063 = vcvt.s32.f32 %v6935
    %v7064 = vcvt.s32.f32 %v6936
    %v7065 = vcvt.s32.f32 %v6937
    %v7066 = vcvt.s32.f32 %v6938
    %v7067 = vcvt.s32.f32 %v6939
    %v7068 = vcvt.s32.f32 %v6940
    %v7069 = vcvt.s32.f32 %v6941
    %v7070 = vcvt.s32.f32 %v6942
    %v7071 = vcvt.s32.f32 %v6943
    %v7072 = vcvt.s32.f32 %v6944
    %v7073 = vcvt.s32.f32 %v6945
    %v7074 = vcvt.s32.f32 %v6946
    %v7075 = vcvt.s32.f32 %v6947
    %v7076 = vcvt.s32.f32 %v6948
    %v7077 = vcvt.s32.f32 %v6949
    %v7078 = vcvt.s32.f32 %v6950
    %v7079 = vcvt.s32.f32 %v6951
    %v7080 = vcvt.s32.f32 %v6952
    %v7081 = vcvt.s32.f32 %v6953
    %v7082 = vcvt.s32.f32 %v6954
    %v7083 = vcvt.s32.f32 %v6955
    %v7084 = vcvt.s32.f32 %v6956
    %v7085 = vcvt.s32.f32 %v6957
    %v7086 = vcvt.s32.f32 %v6958
    %v7087 = vcvt.s32.f32 %v6959
    %v7088 = vcvt.s32.f32 %v6960
    %v7089 = vcvt.s32.f32 %v6961
    %v7090 = vcvt.s32.f32 %v6962
    %v7091 = vcvt.s32.f32 %v6963
    %v7092 = vcvt.s32.f32 %v6964
    %v7093 = vcvt.s32.f32 %v6965
    %v7094 = vcvt.s32.f32 %v6966
    %v7095 = vcvt.s32.f32 %v6967
    %v7096 = vcvt.s32.f32 %v6968
    %v7097 = vcvt.s32.f32 %v6969
    %v7098 = vcvt.s32.f32 %v6970
    %v7099 = vcvt.s32.f32 %v6971
    %v7100 = vcvt.s32.f32 %v6972
    %v7101 = vcvt.s32.f32 %v6973
    %v7102 = vcvt.s32.f32 %v6974
    %v7103 = vcvt.s32.f32 %v6975
    %v7104 = vcvt.s32.f32 %v6976
    %v7105 = vcvt.s32.f32 %v6977
    %v7106 = vcvt.s32.f32 %v6978
    %v7107 = vcvt.s32.f32 %v6979
    %v7108 = vcvt.s32.f32 %v6980
    %v7109 = vcvt.s32.f32 %v6981
    %v7110 = vcvt.s32.f32 %v6982
    %v7111 = vcvt.s32.f32 %v6983
    %v7112 = vcvt.s32.f32 %v6984
    %v7113 = vcvt.s32.f32 %v6985
    %v7114 = vcvt.s32.f32 %v6986
    %v7115 = vcvt.s32.f32 %v6987
    %v7116 = vcvt.s32.f32 %v6988
    %v7117 = vcvt.s32.f32 %v6989
    %v7118 = vcvt.s32.f32 %v6990
    %v7119 = vcvt.s32.f32 %v6991
    %v7120 = vcvt.s32.f32 %v6992
    %v7121 = vcvt.s32.f32 %v6993
    %v7122 = vcvt.s32.f32 %v6994
    %v7123 = vcvt.s32.f32 %v6995
    %v7124 = vcvt.s32.f32 %v6996
    %v7125 = vcvt.s32.f32 %v6997
    %v7126 = vcvt.s32.f32 %v6998
    %v7127 = vcvt.s32.f32 %v6999
    %v7128 = vcvt.s32.f32 %v7000
    %v7129 = vcvt.s32.f32 %v7001
    %v7130 = vcvt.s32.f32 %v7002
    %v7131 = vcvt.s32.f32 %v7003
    %v7132 = vcvt.s32.f32 %v7004
    %v7133 = vcvt.s32.f32 %v7005
    %v7134 = vcvt.s32.f32 %v7006
    %v7135 = vcvt.s32.f32 %v7007
    %v7136 = vcvt.s32.f32 %v7008
    %v7137 = vcvt.s32.f32 %v7009
    %v7138 = vcvt.s32.f32 %v7010
    %v7139 = vcvt.s32.f32 %v7011
    %v7140 = vcvt.s32.f32 %v7012
    %v7141 = vcvt.s32.f32 %v7013
    %v7142 = vcvt.s32.f32 %v7014
    %v7143 = vcvt.s32.f32 %v7015
    %v7144 = vcvt.s32.f32 %v7016
    %v7145 = vcvt.s32.f32 %v7017
    %v7146 = vcvt.s32.f32 %v7018
    %v7147 = vcvt.s32.f32 %v7019
    %v7148 = vcvt.s32.f32 %v7020
    %v7149 = vcvt.s32.f32 %v7021
    %v7150 = vcvt.s32.f32 %v7022
    %v7151 = vcvt.s32.f32 %v7023
    %v7152 = vcvt.s32.f32 %v7024
    %v7153 = vcvt.s32.f32 %v7025
    %v7154 = vcvt.s32.f32 %v7026
    %v7155 = vcvt.s32.f32 %v7027
    %v7156 = vcvt.s32.f32 %v7028
    %v7157 = vcvt.s32.f32 %v7029
    %v7158 = vcvt.s32.f32 %v7030
    %v7159 = vcvt.s32.f32 %v7031
    %v7160 = vcvt.s32.f32 %v7032
    %v7161 = vcvt.s32.f32 %v7033
    %v7162 = vcvt.s32.f32 %v7034
    %v7163 = vcvt.s32.f32 %v7035
    %v7164 = vcvt.s32.f32 %v7036
    %v7165 = vcvt.s32.f32 %v7037
    %v7166 = vcvt.s32.f32 %v7038
    %v7167 = vcvt.s32.f32 %v7039
    %v7168 = vcvt.s32.f32 %v7040
    %v7169 = vcvt.s32.f32 %v7041
    %v7170 = vcvt.s32.f32 %v7042
    %v7171 = vcvt.s32.f32 %v7043
    %v7172 = vcvt.s32.f32 %v7044
    %v7173 = vcvt.s32.f32 %v7045
    %v7174 = vcvt.s32.f32 %v7046
    %v7176 = vlaneseq
    %v7177 = vshrl.u32 %v7176, 7
    %v7178 = vsub.s32 0, %v7177
    %v7179 = vrot.slane %v6401, %v7178
    %v7180 = vlaneseq
    %v7181 = vshrl.u32 %v7180, 7
    %v7182 = vsub.s32 1, %v7181
    %v7183 = vrot.slane %v6401, %v7182
    %v7184 = vlaneseq
    %v7185 = vshrl.u32 %v7184, 7
    %v7186 = vsub.s32 2, %v7185
    %v7187 = vrot.slane %v6401, %v7186
    %v7188 = vlaneseq
    %v7189 = vshrl.u32 %v7188, 7
    %v7190 = vsub.s32 3, %v7189
    %v7191 = vrot.slane %v6401, %v7190
    %v7192 = vlaneseq
    %v7193 = vshrl.u32 %v7192, 7
    %v7194 = vsub.s32 4, %v7193
    %v7195 = vrot.slane %v6401, %v7194
    %v7196 = vlaneseq
    %v7197 = vshrl.u32 %v7196, 7
    %v7198 = vsub.s32 5, %v7197
    %v7199 = vrot.slane %v6401, %v7198
    %v7200 = vlaneseq
    %v7201 = vshrl.u32 %v7200, 7
    %v7202 = vsub.s32 6, %v7201
    %v7203 = vrot.slane %v6401, %v7202
    %v7204 = vlaneseq
    %v7205 = vshrl.u32 %v7204, 7
    %v7206 = vsub.s32 7, %v7205
    %v7207 = vrot.slane %v6401, %v7206
    %7216 = vmatprep.subr.mxu0 0.0
    %7217 = vmatpush1.msra.mxu0 %v7062
    %7218 = vmatprep.subr.mxu0 0.0
    %7219 = vmatpush1.msra.mxu0 %v7061
    %7220 = vmatprep.subr.mxu0 0.0
    %7221 = vmatpush1.msra.mxu0 %v7060
    %7222 = vmatprep.subr.mxu0 0.0
    %7223 = vmatpush1.msra.mxu0 %v7059
    %7224 = vmatprep.subr.mxu0 0.0
    %7225 = vmatpush1.msra.mxu0 %v7058
    %7226 = vmatprep.subr.mxu0 0.0
    %7227 = vmatpush1.msra.mxu0 %v7057
    %7228 = vmatprep.subr.mxu0 0.0
    %7229 = vmatpush1.msra.mxu0 %v7056
    %7230 = vmatprep.subr.mxu0 0.0
    %7231 = vmatpush1.msra.mxu0 %v7055
    %7232 = vmatprep.subr.mxu0 0.0
    %7233 = vmatpush1.msra.mxu0 %v7054
    %7234 = vmatprep.subr.mxu0 0.0
    %7235 = vmatpush1.msra.mxu0 %v7053
    %7236 = vmatprep.subr.mxu0 0.0
    %7237 = vmatpush1.msra.mxu0 %v7052
    %7238 = vmatprep.subr.mxu0 0.0
    %7239 = vmatpush1.msra.mxu0 %v7051
    %7240 = vmatprep.subr.mxu0 0.0
    %7241 = vmatpush1.msra.mxu0 %v7050
    %7242 = vmatprep.subr.mxu0 0.0
    %7243 = vmatpush1.msra.mxu0 %v7049
    %7244 = vmatprep.subr.mxu0 0.0
    %7245 = vmatpush1.msra.mxu0 %v7048
    %7246 = vmatprep.subr.mxu0 0.0
    %7247 = vmatpush1.msra.mxu0 %v7047
    %7248 = vmatprep.subr.mxu0 0.0
    %7249 = vmatpush2.msra.mxu0 %v7078
    %7250 = vmatprep.subr.mxu0 0.0
    %7251 = vmatpush2.msra.mxu0 %v7077
    %7252 = vmatprep.subr.mxu0 0.0
    %7253 = vmatpush2.msra.mxu0 %v7076
    %7254 = vmatprep.subr.mxu0 0.0
    %7255 = vmatpush2.msra.mxu0 %v7075
    %7256 = vmatprep.subr.mxu0 0.0
    %7257 = vmatpush2.msra.mxu0 %v7074
    %7258 = vmatprep.subr.mxu0 0.0
    %7259 = vmatpush2.msra.mxu0 %v7073
    %7260 = vmatprep.subr.mxu0 0.0
    %7261 = vmatpush2.msra.mxu0 %v7072
    %7262 = vmatprep.subr.mxu0 0.0
    %7263 = vmatpush2.msra.mxu0 %v7071
    %7264 = vmatprep.subr.mxu0 0.0
    %7265 = vmatpush2.msra.mxu0 %v7070
    %7266 = vmatprep.subr.mxu0 0.0
    %7267 = vmatpush2.msra.mxu0 %v7069
    %7268 = vmatprep.subr.mxu0 0.0
    %7269 = vmatpush2.msra.mxu0 %v7068
    %7270 = vmatprep.subr.mxu0 0.0
    %7271 = vmatpush2.msra.mxu0 %v7067
    %7272 = vmatprep.subr.mxu0 0.0
    %7273 = vmatpush2.msra.mxu0 %v7066
    %7274 = vmatprep.subr.mxu0 0.0
    %7275 = vmatpush2.msra.mxu0 %v7065
    %7276 = vmatprep.subr.mxu0 0.0
    %7277 = vmatpush2.msra.mxu0 %v7064
    %7278 = vmatprep.subr.mxu0 0.0
    %7279 = vmatpush2.msra.mxu0 %v7063
    %7280 = vmatprep.mubr.f32.mxu0 %v7183
    %7281 = vmatmul.mubr.f32.gmra.mxu0 %v7179
    %v7282 = vpop.f32.mrf.mxu0
    %v7283 = vadd.f32 0.0, %v7282
    %v7284 = vpop.f32.mrf.mxu0
    %7285 = vdwg.mxu0
    %7286 = vmatprep.subr.mxu0 0.0
    %7287 = vmatpush1.msra.mxu0 %v7094
    %7288 = vmatprep.subr.mxu0 0.0
    %7289 = vmatpush1.msra.mxu0 %v7093
    %7290 = vmatprep.subr.mxu0 0.0
    %7291 = vmatpush1.msra.mxu0 %v7092
    %7292 = vmatprep.subr.mxu0 0.0
    %7293 = vmatpush1.msra.mxu0 %v7091
    %7294 = vmatprep.subr.mxu0 0.0
    %7295 = vmatpush1.msra.mxu0 %v7090
    %7296 = vmatprep.subr.mxu0 0.0
    %7297 = vmatpush1.msra.mxu0 %v7089
    %7298 = vmatprep.subr.mxu0 0.0
    %7299 = vmatpush1.msra.mxu0 %v7088
    %7300 = vmatprep.subr.mxu0 0.0
    %7301 = vmatpush1.msra.mxu0 %v7087
    %7302 = vmatprep.subr.mxu0 0.0
    %7303 = vmatpush1.msra.mxu0 %v7086
    %7304 = vmatprep.subr.mxu0 0.0
    %7305 = vmatpush1.msra.mxu0 %v7085
    %7306 = vmatprep.subr.mxu0 0.0
    %7307 = vmatpush1.msra.mxu0 %v7084
    %7308 = vmatprep.subr.mxu0 0.0
    %7309 = vmatpush1.msra.mxu0 %v7083
    %7310 = vmatprep.subr.mxu0 0.0
    %7311 = vmatpush1.msra.mxu0 %v7082
    %7312 = vmatprep.subr.mxu0 0.0
    %7313 = vmatpush1.msra.mxu0 %v7081
    %7314 = vmatprep.subr.mxu0 0.0
    %7315 = vmatpush1.msra.mxu0 %v7080
    %7316 = vmatprep.subr.mxu0 0.0
    %7317 = vmatpush1.msra.mxu0 %v7079
    %7318 = vmatprep.subr.mxu0 0.0
    %7319 = vmatpush2.msra.mxu0 %v7110
    %7320 = vmatprep.subr.mxu0 0.0
    %7321 = vmatpush2.msra.mxu0 %v7109
    %7322 = vmatprep.subr.mxu0 0.0
    %7323 = vmatpush2.msra.mxu0 %v7108
    %7324 = vmatprep.subr.mxu0 0.0
    %7325 = vmatpush2.msra.mxu0 %v7107
    %7326 = vmatprep.subr.mxu0 0.0
    %7327 = vmatpush2.msra.mxu0 %v7106
    %7328 = vmatprep.subr.mxu0 0.0
    %7329 = vmatpush2.msra.mxu0 %v7105
    %7330 = vmatprep.subr.mxu0 0.0
    %7331 = vmatpush2.msra.mxu0 %v7104
    %7332 = vmatprep.subr.mxu0 0.0
    %7333 = vmatpush2.msra.mxu0 %v7103
    %7334 = vmatprep.subr.mxu0 0.0
    %7335 = vmatpush2.msra.mxu0 %v7102
    %7336 = vmatprep.subr.mxu0 0.0
    %7337 = vmatpush2.msra.mxu0 %v7101
    %7338 = vmatprep.subr.mxu0 0.0
    %7339 = vmatpush2.msra.mxu0 %v7100
    %7340 = vmatprep.subr.mxu0 0.0
    %7341 = vmatpush2.msra.mxu0 %v7099
    %7342 = vmatprep.subr.mxu0 0.0
    %7343 = vmatpush2.msra.mxu0 %v7098
    %7344 = vmatprep.subr.mxu0 0.0
    %7345 = vmatpush2.msra.mxu0 %v7097
    %7346 = vmatprep.subr.mxu0 0.0
    %7347 = vmatpush2.msra.mxu0 %v7096
    %7348 = vmatprep.subr.mxu0 0.0
    %7349 = vmatpush2.msra.mxu0 %v7095
    %7350 = vmatprep.mubr.f32.mxu0 %v7191
    %7351 = vmatmul.mubr.f32.gmra.mxu0 %v7187
    %v7352 = vpop.f32.mrf.mxu0
    %v7353 = vadd.f32 %v7283, %v7352
    %v7354 = vpop.f32.mrf.mxu0
    %7355 = vdwg.mxu0
    %7356 = vmatprep.subr.mxu0 0.0
    %7357 = vmatpush1.msra.mxu0 %v7126
    %7358 = vmatprep.subr.mxu0 0.0
    %7359 = vmatpush1.msra.mxu0 %v7125
    %7360 = vmatprep.subr.mxu0 0.0
    %7361 = vmatpush1.msra.mxu0 %v7124
    %7362 = vmatprep.subr.mxu0 0.0
    %7363 = vmatpush1.msra.mxu0 %v7123
    %7364 = vmatprep.subr.mxu0 0.0
    %7365 = vmatpush1.msra.mxu0 %v7122
    %7366 = vmatprep.subr.mxu0 0.0
    %7367 = vmatpush1.msra.mxu0 %v7121
    %7368 = vmatprep.subr.mxu0 0.0
    %7369 = vmatpush1.msra.mxu0 %v7120
    %7370 = vmatprep.subr.mxu0 0.0
    %7371 = vmatpush1.msra.mxu0 %v7119
    %7372 = vmatprep.subr.mxu0 0.0
    %7373 = vmatpush1.msra.mxu0 %v7118
    %7374 = vmatprep.subr.mxu0 0.0
    %7375 = vmatpush1.msra.mxu0 %v7117
    %7376 = vmatprep.subr.mxu0 0.0
    %7377 = vmatpush1.msra.mxu0 %v7116
    %7378 = vmatprep.subr.mxu0 0.0
    %7379 = vmatpush1.msra.mxu0 %v7115
    %7380 = vmatprep.subr.mxu0 0.0
    %7381 = vmatpush1.msra.mxu0 %v7114
    %7382 = vmatprep.subr.mxu0 0.0
    %7383 = vmatpush1.msra.mxu0 %v7113
    %7384 = vmatprep.subr.mxu0 0.0
    %7385 = vmatpush1.msra.mxu0 %v7112
    %7386 = vmatprep.subr.mxu0 0.0
    %7387 = vmatpush1.msra.mxu0 %v7111
    %7388 = vmatprep.subr.mxu0 0.0
    %7389 = vmatpush2.msra.mxu0 %v7142
    %7390 = vmatprep.subr.mxu0 0.0
    %7391 = vmatpush2.msra.mxu0 %v7141
    %7392 = vmatprep.subr.mxu0 0.0
    %7393 = vmatpush2.msra.mxu0 %v7140
    %7394 = vmatprep.subr.mxu0 0.0
    %7395 = vmatpush2.msra.mxu0 %v7139
    %7396 = vmatprep.subr.mxu0 0.0
    %7397 = vmatpush2.msra.mxu0 %v7138
    %7398 = vmatprep.subr.mxu0 0.0
    %7399 = vmatpush2.msra.mxu0 %v7137
    %7400 = vmatprep.subr.mxu0 0.0
    %7401 = vmatpush2.msra.mxu0 %v7136
    %7402 = vmatprep.subr.mxu0 0.0
    %7403 = vmatpush2.msra.mxu0 %v7135
    %7404 = vmatprep.subr.mxu0 0.0
    %7405 = vmatpush2.msra.mxu0 %v7134
    %7406 = vmatprep.subr.mxu0 0.0
    %7407 = vmatpush2.msra.mxu0 %v7133
    %7408 = vmatprep.subr.mxu0 0.0
    %7409 = vmatpush2.msra.mxu0 %v7132
    %7410 = vmatprep.subr.mxu0 0.0
    %7411 = vmatpush2.msra.mxu0 %v7131
    %7412 = vmatprep.subr.mxu0 0.0
    %7413 = vmatpush2.msra.mxu0 %v7130
    %7414 = vmatprep.subr.mxu0 0.0
    %7415 = vmatpush2.msra.mxu0 %v7129
    %7416 = vmatprep.subr.mxu0 0.0
    %7417 = vmatpush2.msra.mxu0 %v7128
    %7418 = vmatprep.subr.mxu0 0.0
    %7419 = vmatpush2.msra.mxu0 %v7127
    %7420 = vmatprep.mubr.f32.mxu0 %v7199
    %7421 = vmatmul.mubr.f32.gmra.mxu0 %v7195
    %v7422 = vpop.f32.mrf.mxu0
    %v7423 = vadd.f32 %v7353, %v7422
    %v7424 = vpop.f32.mrf.mxu0
    %7425 = vdwg.mxu0
    %7426 = vmatprep.subr.mxu0 0.0
    %7427 = vmatpush1.msra.mxu0 %v7158
    %7428 = vmatprep.subr.mxu0 0.0
    %7429 = vmatpush1.msra.mxu0 %v7157
    %7430 = vmatprep.subr.mxu0 0.0
    %7431 = vmatpush1.msra.mxu0 %v7156
    %7432 = vmatprep.subr.mxu0 0.0
    %7433 = vmatpush1.msra.mxu0 %v7155
    %7434 = vmatprep.subr.mxu0 0.0
    %7435 = vmatpush1.msra.mxu0 %v7154
    %7436 = vmatprep.subr.mxu0 0.0
    %7437 = vmatpush1.msra.mxu0 %v7153
    %7438 = vmatprep.subr.mxu0 0.0
    %7439 = vmatpush1.msra.mxu0 %v7152
    %7440 = vmatprep.subr.mxu0 0.0
    %7441 = vmatpush1.msra.mxu0 %v7151
    %7442 = vmatprep.subr.mxu0 0.0
    %7443 = vmatpush1.msra.mxu0 %v7150
    %7444 = vmatprep.subr.mxu0 0.0
    %7445 = vmatpush1.msra.mxu0 %v7149
    %7446 = vmatprep.subr.mxu0 0.0
    %7447 = vmatpush1.msra.mxu0 %v7148
    %7448 = vmatprep.subr.mxu0 0.0
    %7449 = vmatpush1.msra.mxu0 %v7147
    %7450 = vmatprep.subr.mxu0 0.0
    %7451 = vmatpush1.msra.mxu0 %v7146
    %7452 = vmatprep.subr.mxu0 0.0
    %7453 = vmatpush1.msra.mxu0 %v7145
    %7454 = vmatprep.subr.mxu0 0.0
    %7455 = vmatpush1.msra.mxu0 %v7144
    %7456 = vmatprep.subr.mxu0 0.0
    %7457 = vmatpush1.msra.mxu0 %v7143
    %7458 = vmatprep.subr.mxu0 0.0
    %7459 = vmatpush2.msra.mxu0 %v7174
    %7460 = vmatprep.subr.mxu0 0.0
    %7461 = vmatpush2.msra.mxu0 %v7173
    %7462 = vmatprep.subr.mxu0 0.0
    %7463 = vmatpush2.msra.mxu0 %v7172
    %7464 = vmatprep.subr.mxu0 0.0
    %7465 = vmatpush2.msra.mxu0 %v7171
    %7466 = vmatprep.subr.mxu0 0.0
    %7467 = vmatpush2.msra.mxu0 %v7170
    %7468 = vmatprep.subr.mxu0 0.0
    %7469 = vmatpush2.msra.mxu0 %v7169
    %7470 = vmatprep.subr.mxu0 0.0
    %7471 = vmatpush2.msra.mxu0 %v7168
    %7472 = vmatprep.subr.mxu0 0.0
    %7473 = vmatpush2.msra.mxu0 %v7167
    %7474 = vmatprep.subr.mxu0 0.0
    %7475 = vmatpush2.msra.mxu0 %v7166
    %7476 = vmatprep.subr.mxu0 0.0
    %7477 = vmatpush2.msra.mxu0 %v7165
    %7478 = vmatprep.subr.mxu0 0.0
    %7479 = vmatpush2.msra.mxu0 %v7164
    %7480 = vmatprep.subr.mxu0 0.0
    %7481 = vmatpush2.msra.mxu0 %v7163
    %7482 = vmatprep.subr.mxu0 0.0
    %7483 = vmatpush2.msra.mxu0 %v7162
    %7484 = vmatprep.subr.mxu0 0.0
    %7485 = vmatpush2.msra.mxu0 %v7161
    %7486 = vmatprep.subr.mxu0 0.0
    %7487 = vmatpush2.msra.mxu0 %v7160
    %7488 = vmatprep.subr.mxu0 0.0
    %7489 = vmatpush2.msra.mxu0 %v7159
    %7490 = vmatprep.mubr.f32.mxu0 %v7207
    %7491 = vmatmul.mubr.f32.gmra.mxu0 %v7203
    %v7492 = vpop.f32.mrf.mxu0
    %v7493 = vadd.f32 %v7423, %v7492
    %v7494 = vpop.f32.mrf.mxu0
    %7495 = vdwg.mxu0
    %v7497 = vlaneseq
    %v7498 = vshrl.u32 %v7497, 7
    %v7499 = vsub.s32 0, %v7498
    %v7500 = vrot.slane %v6341, %v7499
    %v7501 = vlaneseq
    %v7502 = vshrl.u32 %v7501, 7
    %v7503 = vsub.s32 1, %v7502
    %v7504 = vrot.slane %v6341, %v7503
    %v7505 = vlaneseq
    %v7506 = vshrl.u32 %v7505, 7
    %v7507 = vsub.s32 2, %v7506
    %v7508 = vrot.slane %v6341, %v7507
    %v7509 = vlaneseq
    %v7510 = vshrl.u32 %v7509, 7
    %v7511 = vsub.s32 3, %v7510
    %v7512 = vrot.slane %v6341, %v7511
    %v7513 = vlaneseq
    %v7514 = vshrl.u32 %v7513, 7
    %v7515 = vsub.s32 4, %v7514
    %v7516 = vrot.slane %v6341, %v7515
    %v7517 = vlaneseq
    %v7518 = vshrl.u32 %v7517, 7
    %v7519 = vsub.s32 5, %v7518
    %v7520 = vrot.slane %v6341, %v7519
    %v7521 = vlaneseq
    %v7522 = vshrl.u32 %v7521, 7
    %v7523 = vsub.s32 6, %v7522
    %v7524 = vrot.slane %v6341, %v7523
    %v7525 = vlaneseq
    %v7526 = vshrl.u32 %v7525, 7
    %v7527 = vsub.s32 7, %v7526
    %v7528 = vrot.slane %v6341, %v7527
    %7537 = vmatprep.subr.mxu0 0.0
    %7538 = vmatpush1.msra.mxu0 %v7062
    %7539 = vmatprep.subr.mxu0 0.0
    %7540 = vmatpush1.msra.mxu0 %v7061
    %7541 = vmatprep.subr.mxu0 0.0
    %7542 = vmatpush1.msra.mxu0 %v7060
    %7543 = vmatprep.subr.mxu0 0.0
    %7544 = vmatpush1.msra.mxu0 %v7059
    %7545 = vmatprep.subr.mxu0 0.0
    %7546 = vmatpush1.msra.mxu0 %v7058
    %7547 = vmatprep.subr.mxu0 0.0
    %7548 = vmatpush1.msra.mxu0 %v7057
    %7549 = vmatprep.subr.mxu0 0.0
    %7550 = vmatpush1.msra.mxu0 %v7056
    %7551 = vmatprep.subr.mxu0 0.0
    %7552 = vmatpush1.msra.mxu0 %v7055
    %7553 = vmatprep.subr.mxu0 0.0
    %7554 = vmatpush1.msra.mxu0 %v7054
    %7555 = vmatprep.subr.mxu0 0.0
    %7556 = vmatpush1.msra.mxu0 %v7053
    %7557 = vmatprep.subr.mxu0 0.0
    %7558 = vmatpush1.msra.mxu0 %v7052
    %7559 = vmatprep.subr.mxu0 0.0
    %7560 = vmatpush1.msra.mxu0 %v7051
    %7561 = vmatprep.subr.mxu0 0.0
    %7562 = vmatpush1.msra.mxu0 %v7050
    %7563 = vmatprep.subr.mxu0 0.0
    %7564 = vmatpush1.msra.mxu0 %v7049
    %7565 = vmatprep.subr.mxu0 0.0
    %7566 = vmatpush1.msra.mxu0 %v7048
    %7567 = vmatprep.subr.mxu0 0.0
    %7568 = vmatpush1.msra.mxu0 %v7047
    %7569 = vmatprep.subr.mxu0 0.0
    %7570 = vmatpush2.msra.mxu0 %v7078
    %7571 = vmatprep.subr.mxu0 0.0
    %7572 = vmatpush2.msra.mxu0 %v7077
    %7573 = vmatprep.subr.mxu0 0.0
    %7574 = vmatpush2.msra.mxu0 %v7076
    %7575 = vmatprep.subr.mxu0 0.0
    %7576 = vmatpush2.msra.mxu0 %v7075
    %7577 = vmatprep.subr.mxu0 0.0
    %7578 = vmatpush2.msra.mxu0 %v7074
    %7579 = vmatprep.subr.mxu0 0.0
    %7580 = vmatpush2.msra.mxu0 %v7073
    %7581 = vmatprep.subr.mxu0 0.0
    %7582 = vmatpush2.msra.mxu0 %v7072
    %7583 = vmatprep.subr.mxu0 0.0
    %7584 = vmatpush2.msra.mxu0 %v7071
    %7585 = vmatprep.subr.mxu0 0.0
    %7586 = vmatpush2.msra.mxu0 %v7070
    %7587 = vmatprep.subr.mxu0 0.0
    %7588 = vmatpush2.msra.mxu0 %v7069
    %7589 = vmatprep.subr.mxu0 0.0
    %7590 = vmatpush2.msra.mxu0 %v7068
    %7591 = vmatprep.subr.mxu0 0.0
    %7592 = vmatpush2.msra.mxu0 %v7067
    %7593 = vmatprep.subr.mxu0 0.0
    %7594 = vmatpush2.msra.mxu0 %v7066
    %7595 = vmatprep.subr.mxu0 0.0
    %7596 = vmatpush2.msra.mxu0 %v7065
    %7597 = vmatprep.subr.mxu0 0.0
    %7598 = vmatpush2.msra.mxu0 %v7064
    %7599 = vmatprep.subr.mxu0 0.0
    %7600 = vmatpush2.msra.mxu0 %v7063
    %7601 = vmatprep.mubr.f32.mxu0 %v7504
    %7602 = vmatmul.mubr.f32.gmra.mxu0 %v7500
    %v7603 = vpop.f32.mrf.mxu0
    %v7604 = vadd.f32 0.0, %v7603
    %v7605 = vpop.f32.mrf.mxu0
    %7606 = vdwg.mxu0
    %7607 = vmatprep.subr.mxu0 0.0
    %7608 = vmatpush1.msra.mxu0 %v7094
    %7609 = vmatprep.subr.mxu0 0.0
    %7610 = vmatpush1.msra.mxu0 %v7093
    %7611 = vmatprep.subr.mxu0 0.0
    %7612 = vmatpush1.msra.mxu0 %v7092
    %7613 = vmatprep.subr.mxu0 0.0
    %7614 = vmatpush1.msra.mxu0 %v7091
    %7615 = vmatprep.subr.mxu0 0.0
    %7616 = vmatpush1.msra.mxu0 %v7090
    %7617 = vmatprep.subr.mxu0 0.0
    %7618 = vmatpush1.msra.mxu0 %v7089
    %7619 = vmatprep.subr.mxu0 0.0
    %7620 = vmatpush1.msra.mxu0 %v7088
    %7621 = vmatprep.subr.mxu0 0.0
    %7622 = vmatpush1.msra.mxu0 %v7087
    %7623 = vmatprep.subr.mxu0 0.0
    %7624 = vmatpush1.msra.mxu0 %v7086
    %7625 = vmatprep.subr.mxu0 0.0
    %7626 = vmatpush1.msra.mxu0 %v7085
    %7627 = vmatprep.subr.mxu0 0.0
    %7628 = vmatpush1.msra.mxu0 %v7084
    %7629 = vmatprep.subr.mxu0 0.0
    %7630 = vmatpush1.msra.mxu0 %v7083
    %7631 = vmatprep.subr.mxu0 0.0
    %7632 = vmatpush1.msra.mxu0 %v7082
    %7633 = vmatprep.subr.mxu0 0.0
    %7634 = vmatpush1.msra.mxu0 %v7081
    %7635 = vmatprep.subr.mxu0 0.0
    %7636 = vmatpush1.msra.mxu0 %v7080
    %7637 = vmatprep.subr.mxu0 0.0
    %7638 = vmatpush1.msra.mxu0 %v7079
    %7639 = vmatprep.subr.mxu0 0.0
    %7640 = vmatpush2.msra.mxu0 %v7110
    %7641 = vmatprep.subr.mxu0 0.0
    %7642 = vmatpush2.msra.mxu0 %v7109
    %7643 = vmatprep.subr.mxu0 0.0
    %7644 = vmatpush2.msra.mxu0 %v7108
    %7645 = vmatprep.subr.mxu0 0.0
    %7646 = vmatpush2.msra.mxu0 %v7107
    %7647 = vmatprep.subr.mxu0 0.0
    %7648 = vmatpush2.msra.mxu0 %v7106
    %7649 = vmatprep.subr.mxu0 0.0
    %7650 = vmatpush2.msra.mxu0 %v7105
    %7651 = vmatprep.subr.mxu0 0.0
    %7652 = vmatpush2.msra.mxu0 %v7104
    %7653 = vmatprep.subr.mxu0 0.0
    %7654 = vmatpush2.msra.mxu0 %v7103
    %7655 = vmatprep.subr.mxu0 0.0
    %7656 = vmatpush2.msra.mxu0 %v7102
    %7657 = vmatprep.subr.mxu0 0.0
    %7658 = vmatpush2.msra.mxu0 %v7101
    %7659 = vmatprep.subr.mxu0 0.0
    %7660 = vmatpush2.msra.mxu0 %v7100
    %7661 = vmatprep.subr.mxu0 0.0
    %7662 = vmatpush2.msra.mxu0 %v7099
    %7663 = vmatprep.subr.mxu0 0.0
    %7664 = vmatpush2.msra.mxu0 %v7098
    %7665 = vmatprep.subr.mxu0 0.0
    %7666 = vmatpush2.msra.mxu0 %v7097
    %7667 = vmatprep.subr.mxu0 0.0
    %7668 = vmatpush2.msra.mxu0 %v7096
    %7669 = vmatprep.subr.mxu0 0.0
    %7670 = vmatpush2.msra.mxu0 %v7095
    %7671 = vmatprep.mubr.f32.mxu0 %v7512
    %7672 = vmatmul.mubr.f32.gmra.mxu0 %v7508
    %v7673 = vpop.f32.mrf.mxu0
    %v7674 = vadd.f32 %v7604, %v7673
    %v7675 = vpop.f32.mrf.mxu0
    %7676 = vdwg.mxu0
    %7677 = vmatprep.subr.mxu0 0.0
    %7678 = vmatpush1.msra.mxu0 %v7126
    %7679 = vmatprep.subr.mxu0 0.0
    %7680 = vmatpush1.msra.mxu0 %v7125
    %7681 = vmatprep.subr.mxu0 0.0
    %7682 = vmatpush1.msra.mxu0 %v7124
    %7683 = vmatprep.subr.mxu0 0.0
    %7684 = vmatpush1.msra.mxu0 %v7123
    %7685 = vmatprep.subr.mxu0 0.0
    %7686 = vmatpush1.msra.mxu0 %v7122
    %7687 = vmatprep.subr.mxu0 0.0
    %7688 = vmatpush1.msra.mxu0 %v7121
    %7689 = vmatprep.subr.mxu0 0.0
    %7690 = vmatpush1.msra.mxu0 %v7120
    %7691 = vmatprep.subr.mxu0 0.0
    %7692 = vmatpush1.msra.mxu0 %v7119
    %7693 = vmatprep.subr.mxu0 0.0
    %7694 = vmatpush1.msra.mxu0 %v7118
    %7695 = vmatprep.subr.mxu0 0.0
    %7696 = vmatpush1.msra.mxu0 %v7117
    %7697 = vmatprep.subr.mxu0 0.0
    %7698 = vmatpush1.msra.mxu0 %v7116
    %7699 = vmatprep.subr.mxu0 0.0
    %7700 = vmatpush1.msra.mxu0 %v7115
    %7701 = vmatprep.subr.mxu0 0.0
    %7702 = vmatpush1.msra.mxu0 %v7114
    %7703 = vmatprep.subr.mxu0 0.0
    %7704 = vmatpush1.msra.mxu0 %v7113
    %7705 = vmatprep.subr.mxu0 0.0
    %7706 = vmatpush1.msra.mxu0 %v7112
    %7707 = vmatprep.subr.mxu0 0.0
    %7708 = vmatpush1.msra.mxu0 %v7111
    %7709 = vmatprep.subr.mxu0 0.0
    %7710 = vmatpush2.msra.mxu0 %v7142
    %7711 = vmatprep.subr.mxu0 0.0
    %7712 = vmatpush2.msra.mxu0 %v7141
    %7713 = vmatprep.subr.mxu0 0.0
    %7714 = vmatpush2.msra.mxu0 %v7140
    %7715 = vmatprep.subr.mxu0 0.0
    %7716 = vmatpush2.msra.mxu0 %v7139
    %7717 = vmatprep.subr.mxu0 0.0
    %7718 = vmatpush2.msra.mxu0 %v7138
    %7719 = vmatprep.subr.mxu0 0.0
    %7720 = vmatpush2.msra.mxu0 %v7137
    %7721 = vmatprep.subr.mxu0 0.0
    %7722 = vmatpush2.msra.mxu0 %v7136
    %7723 = vmatprep.subr.mxu0 0.0
    %7724 = vmatpush2.msra.mxu0 %v7135
    %7725 = vmatprep.subr.mxu0 0.0
    %7726 = vmatpush2.msra.mxu0 %v7134
    %7727 = vmatprep.subr.mxu0 0.0
    %7728 = vmatpush2.msra.mxu0 %v7133
    %7729 = vmatprep.subr.mxu0 0.0
    %7730 = vmatpush2.msra.mxu0 %v7132
    %7731 = vmatprep.subr.mxu0 0.0
    %7732 = vmatpush2.msra.mxu0 %v7131
    %7733 = vmatprep.subr.mxu0 0.0
    %7734 = vmatpush2.msra.mxu0 %v7130
    %7735 = vmatprep.subr.mxu0 0.0
    %7736 = vmatpush2.msra.mxu0 %v7129
    %7737 = vmatprep.subr.mxu0 0.0
    %7738 = vmatpush2.msra.mxu0 %v7128
    %7739 = vmatprep.subr.mxu0 0.0
    %7740 = vmatpush2.msra.mxu0 %v7127
    %7741 = vmatprep.mubr.f32.mxu0 %v7520
    %7742 = vmatmul.mubr.f32.gmra.mxu0 %v7516
    %v7743 = vpop.f32.mrf.mxu0
    %v7744 = vadd.f32 %v7674, %v7743
    %v7745 = vpop.f32.mrf.mxu0
    %7746 = vdwg.mxu0
    %7747 = vmatprep.subr.mxu0 0.0
    %7748 = vmatpush1.msra.mxu0 %v7158
    %7749 = vmatprep.subr.mxu0 0.0
    %7750 = vmatpush1.msra.mxu0 %v7157
    %7751 = vmatprep.subr.mxu0 0.0
    %7752 = vmatpush1.msra.mxu0 %v7156
    %7753 = vmatprep.subr.mxu0 0.0
    %7754 = vmatpush1.msra.mxu0 %v7155
    %7755 = vmatprep.subr.mxu0 0.0
    %7756 = vmatpush1.msra.mxu0 %v7154
    %7757 = vmatprep.subr.mxu0 0.0
    %7758 = vmatpush1.msra.mxu0 %v7153
    %7759 = vmatprep.subr.mxu0 0.0
    %7760 = vmatpush1.msra.mxu0 %v7152
    %7761 = vmatprep.subr.mxu0 0.0
    %7762 = vmatpush1.msra.mxu0 %v7151
    %7763 = vmatprep.subr.mxu0 0.0
    %7764 = vmatpush1.msra.mxu0 %v7150
    %7765 = vmatprep.subr.mxu0 0.0
    %7766 = vmatpush1.msra.mxu0 %v7149
    %7767 = vmatprep.subr.mxu0 0.0
    %7768 = vmatpush1.msra.mxu0 %v7148
    %7769 = vmatprep.subr.mxu0 0.0
    %7770 = vmatpush1.msra.mxu0 %v7147
    %7771 = vmatprep.subr.mxu0 0.0
    %7772 = vmatpush1.msra.mxu0 %v7146
    %7773 = vmatprep.subr.mxu0 0.0
    %7774 = vmatpush1.msra.mxu0 %v7145
    %7775 = vmatprep.subr.mxu0 0.0
    %7776 = vmatpush1.msra.mxu0 %v7144
    %7777 = vmatprep.subr.mxu0 0.0
    %7778 = vmatpush1.msra.mxu0 %v7143
    %7779 = vmatprep.subr.mxu0 0.0
    %7780 = vmatpush2.msra.mxu0 %v7174
    %7781 = vmatprep.subr.mxu0 0.0
    %7782 = vmatpush2.msra.mxu0 %v7173
    %7783 = vmatprep.subr.mxu0 0.0
    %7784 = vmatpush2.msra.mxu0 %v7172
    %7785 = vmatprep.subr.mxu0 0.0
    %7786 = vmatpush2.msra.mxu0 %v7171
    %7787 = vmatprep.subr.mxu0 0.0
    %7788 = vmatpush2.msra.mxu0 %v7170
    %7789 = vmatprep.subr.mxu0 0.0
    %7790 = vmatpush2.msra.mxu0 %v7169
    %7791 = vmatprep.subr.mxu0 0.0
    %7792 = vmatpush2.msra.mxu0 %v7168
    %7793 = vmatprep.subr.mxu0 0.0
    %7794 = vmatpush2.msra.mxu0 %v7167
    %7795 = vmatprep.subr.mxu0 0.0
    %7796 = vmatpush2.msra.mxu0 %v7166
    %7797 = vmatprep.subr.mxu0 0.0
    %7798 = vmatpush2.msra.mxu0 %v7165
    %7799 = vmatprep.subr.mxu0 0.0
    %7800 = vmatpush2.msra.mxu0 %v7164
    %7801 = vmatprep.subr.mxu0 0.0
    %7802 = vmatpush2.msra.mxu0 %v7163
    %7803 = vmatprep.subr.mxu0 0.0
    %7804 = vmatpush2.msra.mxu0 %v7162
    %7805 = vmatprep.subr.mxu0 0.0
    %7806 = vmatpush2.msra.mxu0 %v7161
    %7807 = vmatprep.subr.mxu0 0.0
    %7808 = vmatpush2.msra.mxu0 %v7160
    %7809 = vmatprep.subr.mxu0 0.0
    %7810 = vmatpush2.msra.mxu0 %v7159
    %7811 = vmatprep.mubr.f32.mxu0 %v7528
    %7812 = vmatmul.mubr.f32.gmra.mxu0 %v7524
    %v7813 = vpop.f32.mrf.mxu0
    %v7814 = vadd.f32 %v7744, %v7813
    %v7815 = vpop.f32.mrf.mxu0
    %7816 = vdwg.mxu0
    %vm7817 = vcmp.gt.f32.partialorder %v7814, 0.0
    %v7818 = vmax.f32 %v7814, 1.0
    %v7819 = vrcp.pop %v7818
    %v7820 = vmul.f32 %v7493, %v7819
    %v7821 = vsel %vm7817, %v7820, 0.0
    %vm7822 = vcmask 253952
    %7823 = vst.msk [vmem:[#allocation2] sm:$0x1] %vm7822, %v7821
    // Predicated region
    $region154: #{sharc_forward.1} parent=1 // pred_check
      _
    $region155: #{sharc_forward.1} parent=1 // pred_check_branch
      %7825 = sbr.rel (0) target = $region157
    $region156: #{sharc_forward.1} parent=1 // pred_region
      _
    $region157: #{sharc_forward.1} parent=1 // pred_fallthru
      _
    // Predicated region
    $region158: #{sharc_forward.1} parent=1 // pred_check
      _
    $region159: #{sharc_forward.1} parent=1 // pred_check_branch
      %7827 = sbr.rel (0) target = $region161
    $region160: #{sharc_forward.1} parent=1 // pred_region
      _
    $region161: #{sharc_forward.1} parent=1 // pred_fallthru
      _
    // Predicated region
    $region162: #{sharc_forward.1} parent=1 // pred_check
      _
    $region163: #{sharc_forward.1} parent=1 // pred_check_branch
      %7829 = sbr.rel (0) target = $region165
    $region164: #{sharc_forward.1} parent=1 // pred_region
      _
    $region165: #{sharc_forward.1} parent=1 // pred_fallthru
      _
    // Predicated region
    $region166: #{sharc_forward.1} parent=1 // pred_check
      _
    $region167: #{sharc_forward.1} parent=1 // pred_check_branch
      %7831 = sbr.rel (0) target = $region169
    $region168: #{sharc_forward.1} parent=1 // pred_region
      %s7833 = ssub.s32 16, 16
      %7834 = vsyncadd [#allocation3], %s7833
      %s7836 = sshll.u32 [#allocation2], 4
      %s7837 = int_to_ptr.vmem [resolvable:$true] %s7836
      %7839 = dma.vmem_to_hbm [thread:$0]  %s7837, 16, %s83, [#allocation3]
    $region169: #{sharc_forward.1} parent=1 // pred_fallthru
      _
    // Predicated region
    $region170: #{sharc_forward.1} parent=1 // pred_check
      _
    $region171: #{sharc_forward.1} parent=1 // pred_check_branch
      %7841 = sbr.rel (0) target = $region173
    $region172: #{sharc_forward.1} parent=1 // pred_region
      _
    $region173: #{sharc_forward.1} parent=1 // pred_fallthru
      _
    // Predicated region
    $region174: #{sharc_forward.1} parent=1 // pred_check
      _
    $region175: #{sharc_forward.1} parent=1 // pred_check_branch
      %7843 = sbr.rel (0) target = $region177
    $region176: #{sharc_forward.1} parent=1 // pred_region
      _
    $region177: #{sharc_forward.1} parent=1 // pred_fallthru
      _
    // Predicated region
    $region178: #{sharc_forward.1} parent=1 // pred_check
      _
    $region179: #{sharc_forward.1} parent=1 // pred_check_branch
      %7845 = sbr.rel (0) target = $region181
    $region180: #{sharc_forward.1} parent=1 // pred_region
      _
    $region181: #{sharc_forward.1} parent=1 // pred_fallthru
      _
    // Predicated region
    $region182: #{sharc_forward.1} parent=1 // pred_check
      _
    $region183: #{sharc_forward.1} parent=1 // pred_check_branch
      %7847 = sbr.rel (0) target = $region185
    $region184: #{sharc_forward.1} parent=1 // pred_region
      %7848 = dma.done [#allocation3], 16
    $region185: #{sharc_forward.1} parent=1 // pred_fallthru
      _
    %7849 = vsyncpa [#allocation3], 1

</llo_original>
